<compile_context>
chip_gen: v6e
topology: v6e:2x2x1
jax: 0.10.0
libtpu: 0.0.40
codegen_flags: <defaults>
</compile_context>

<pallas_src>
import math
import functools

import jax
import jax.numpy as jnp
from jax.experimental import pallas as pl
from jax.experimental.pallas import tpu as pltpu

_HIGHEST = jax.lax.Precision.HIGHEST


# -----------------------------------------------------------------------------
# Pallas kernel: fused bidirectional GRU recurrence, chunked over time
# -----------------------------------------------------------------------------
def _gru_seq_kernel(*refs, num_dir, t_chunk, t_real, n_chunks):
    """Grid = (n_chunks,) — sequential; hidden state carried in VMEM scratch.

    refs layout:
      refs[0:num_dir]                 gi per direction, (Tc, 3, B, H)
                                      (direction 1's block is the time-reversed chunk)
      refs[num_dir]                   whh, (num_dir, 3, H, H)
      refs[num_dir + 1]               bhh_n pre-broadcast, (num_dir, B, H)
      refs[num_dir+2 : 2*num_dir+2]   out per direction, (Tc, B, H)
      refs[-1]                        h scratch, (num_dir, B, H) VMEM
    """
    gi_refs = refs[:num_dir]
    whh_ref = refs[num_dir]
    bhhn_ref = refs[num_dir + 1]
    out_refs = refs[num_dir + 2: 2 * num_dir + 2]
    h_ref = refs[-1]

    c = pl.program_id(0)
    Tc = t_chunk
    t_padded = n_chunks * Tc
    # First padded in-chunk row of the last time chunk (the only padded chunk).
    pad_start = t_real - (n_chunks - 1) * Tc

    @pl.when(c == 0)
    def _init():
        h_ref[...] = jnp.zeros(h_ref.shape, h_ref.dtype)

    # Hoist weights / biases (and their broadcasts) out of the unrolled loop.
    w = [[whh_ref[d, g] for g in range(3)] for d in range(num_dir)]
    bn = [bhhn_ref[d] for d in range(num_dir)]
    h = [h_ref[d] for d in range(num_dir)]

    # Scalar blend factor used to skip padded rows of the reverse chain: the
    # padded rows live in the last time chunk, which the reverse direction
    # visits at grid step c == 0.
    keep_pad = (c > 0).astype(jnp.float32)

    dot = functools.partial(jnp.dot, preferred_element_type=jnp.float32,
                            precision=_HIGHEST)

    # Statically unrolled over the chunk; the fwd and bwd steps are interleaved
    # each iteration so the scheduler can overlap one direction's MXU pushes
    # with the other's gate math.
    # TODO(synk): for very large Tc*B*H, switch to lax.fori_loop with a small
    # unroll factor + pl.multiple_of to bound live ranges / vreg pressure.
    for i in range(Tc):
        for d in range(num_dir):
            reverse = d == 1
            row = Tc - 1 - i if reverse else i
            gi = gi_refs[d]
            # Gate-aligned layout: static leading-axis selects, no lane slices.
            gh_r = dot(h[d], w[d][0])
            gh_z = dot(h[d], w[d][1])
            gh_n = dot(h[d], w[d][2])
            r = jax.nn.sigmoid(gi[row, 0] + gh_r)
            z = jax.nn.sigmoid(gi[row, 1] + gh_z)
            n = jnp.tanh(gi[row, 2] + r * (gh_n + bn[d]))
            h_new = (1.0 - z) * n + z * h[d]
            if reverse and t_padded != t_real and row >= pad_start:
                # Padded row: keep the previous (zero-initialized) state so the
                # reverse chain really starts at the true last time step.
                h_new = keep_pad * h_new + (1.0 - keep_pad) * h[d]
            h[d] = h_new
            out_refs[d][row] = h_new.astype(out_refs[d].dtype)

    for d in range(num_dir):
        h_ref[d] = h[d]


def gru_recurrence(gi, whh3, bhh_n, *, max_chunk=32):
    """Sequential (bi)GRU over pre-projected inputs.

    gi    : (num_dir, T, 3, B, H)  x @ W_ih + b_ih (+ b_hh folded for r, z),
            gate-major layout.  Direction 1 (if present) runs time-reversed.
    whh3  : (num_dir, 3, H, H)     recurrent weights, gate-major.
    bhh_n : (num_dir, B, H)        b_hh of the n gate, pre-broadcast over B.
    Returns a list of num_dir arrays, each (T, B, H).
    """
    num_dir, t_real, _, B, H = gi.shape
    Tc = max(1, min(max_chunk, t_real))
    NC = -(-t_real // Tc)                 # ceil-div: no divisor degeneracy
    Tp = NC * Tc
    if Tp != t_real:
        gi = jnp.pad(gi, ((0, 0), (0, Tp - t_real), (0, 0), (0, 0), (0, 0)))

    def gi_map(d):
        if d == 0:
            return lambda c: (0, c, 0, 0, 0)
        return lambda c: (1, NC - 1 - c, 0, 0, 0)

    def out_map(d):
        if d == 0:
            return lambda c: (c, 0, 0)
        return lambda c: (NC - 1 - c, 0, 0)

    in_specs = [pl.BlockSpec((None, Tc, 3, B, H), gi_map(d))
                for d in range(num_dir)]
    in_specs += [
        # TODO(synk): for large H on v7x use pipeline_mode=pl.Buffered(1) here;
        # the weight / bias block index never changes across the grid.
        pl.BlockSpec((num_dir, 3, H, H), lambda c: (0, 0, 0, 0)),
        pl.BlockSpec((num_dir, B, H), lambda c: (0, 0, 0)),
    ]
    out_specs = [pl.BlockSpec((Tc, B, H), out_map(d)) for d in range(num_dir)]
    out_shapes = tuple(jax.ShapeDtypeStruct((Tp, B, H), gi.dtype)
                       for _ in range(num_dir))

    # Explicit VMEM budget: double-buffered gi/out chunks + resident weights,
    # capped at 64 MiB so the same configuration also fits v7x's per-core VMEM.
    need = 4 * (num_dir * 2 * Tc * 3 * B * H      # gi blocks (double-buffered)
                + 2 * num_dir * 3 * H * H         # whh
                + 2 * num_dir * B * H             # bhh_n
                + num_dir * 2 * Tc * B * H        # out blocks
                + num_dir * B * H)                # h scratch
    vmem_limit = int(min(max(2 * need, 32 * 1024 * 1024), 64 * 1024 * 1024))

    kernel = functools.partial(_gru_seq_kernel, num_dir=num_dir, t_chunk=Tc,
                               t_real=t_real, n_chunks=NC)

    outs = pl.pallas_call(
        kernel,
        out_shape=out_shapes,
        grid_spec=pltpu.PrefetchScalarGridSpec(
            num_scalar_prefetch=0,
            grid=(NC,),
            in_specs=in_specs,
            out_specs=out_specs,
            scratch_shapes=[pltpu.VMEM((num_dir, B, H), jnp.float32)],
        ),
        compiler_params=pltpu.CompilerParams(
            # The single grid axis carries the hidden state -> serial.
            dimension_semantics=("arbitrary",),
            vmem_limit_bytes=vmem_limit,
        ),
    )(*([gi] * num_dir + [whh3, bhh_n]))

    return [o[:t_real] for o in outs]


# -----------------------------------------------------------------------------
# Model forward (Pallas path)
# -----------------------------------------------------------------------------
def gru_cam_forward(params, x, hidden_size, bidirectional=True, max_chunk=32):
    """x: (B, T, input_size), batch_first.  Returns (output, gru_out)."""
    H = hidden_size
    num_dir = 2 if bidirectional else 1
    B = x.shape[0]
    # TODO(synk): at batch sizes this small the per-step (B,H)x(H,H) dot uses a
    # sliver of the MXU; batch multiple independent sequences along B for util.
    x_t = jnp.transpose(x, (1, 0, 2)).astype(jnp.float32)     # (T, B, D)

    prev = [x_t]                      # incoming feature groups, each (T, B, F)
    for dirs in params["gru"]:
        f_total = sum(p.shape[-1] for p in prev)
        # Pack per-direction weights in gate-major layout.
        wih = jnp.stack([d["wih"] for d in dirs])              # (num_dir, F, 3H)
        wih = wih.reshape(num_dir, f_total, 3, H)              # gate-major
        # Fold b_hh of r/z into the input-side bias (they sit outside r*(...)).
        b_fold = jnp.stack([
            d["bih"] + jnp.concatenate(
                [d["bhh"][:2 * H], jnp.zeros((H,), d["bhh"].dtype)])
            for d in dirs]).reshape(num_dir, 3, H)
        whh3 = jnp.stack([d["whh"].reshape(H, 3, H).transpose(1, 0, 2)
                          for d in dirs])                      # (num_dir, 3, H, H)
        bhh_n = jnp.stack([jnp.broadcast_to(d["bhh"][2 * H:][None, :], (B, H))
                           for d in dirs])                     # (num_dir, B, H)

        # Hoisted input projection (the bulk of the FLOPs) as batched GEMMs in
        # XLA; one term per incoming direction half -> no concatenate.
        gi = None
        off = 0
        for p in prev:
            f = p.shape[-1]
            contrib = jnp.einsum("tbf,dfgh->dtgbh", p, wih[:, off:off + f],
                                 precision=_HIGHEST)
            gi = contrib if gi is None else gi + contrib
            off += f
        gi = gi + b_fold[:, None, :, None, :]                  # (num_dir,T,3,B,H)

        prev = gru_recurrence(gi, whh3, bhh_n, max_chunk=max_chunk)

    # PyTorch model: gru_out[:, :, :H] + gru_out[:, :, H:]  ==  fwd + bwd.
    gru_sum = prev[0] + prev[1] if bidirectional else prev[0]  # (T, B, H)
    # TODO(synk): the last layer could write batch-major from the kernel to
    # drop this transpose for long sequences.
    gru_out = jnp.transpose(gru_sum, (1, 0, 2))                # (B, T, H)

    # Final fc on the last time step: far too small for a pallas_call to pay
    # off (pure launch/DMA overhead) -> plain XLA.
    output = jnp.dot(gru_out[:, -1, :], params["fc_w"],
                     precision=_HIGHEST) + params["fc_b"]
    return output, gru_out


def init_params(key, input_size, hidden_size, output_size, num_layers,
                bidirectional=True):
    """Deterministic PyTorch-style uniform(-1/sqrt(H), 1/sqrt(H)) init.

    Weights are stored pre-transposed for right multiplication:
      wih: (D_in, 3H), whh: (H, 3H), bih/bhh: (3H,), gate order [r | z | n].
    """
    H = hidden_size
    k = 1.0 / math.sqrt(H)
    num_dir = 2 if bidirectional else 1
    params = {"gru": []}
    for layer in range(num_layers):
        d_in = input_size if layer == 0 else H * num_dir
        dirs = []
        for _ in range(num_dir):
            key, k1, k2, k3, k4 = jax.random.split(key, 5)
            dirs.append(dict(
                wih=jax.random.uniform(k1, (d_in, 3 * H), jnp.float32, -k, k),
                whh=jax.random.uniform(k2, (H, 3 * H), jnp.float32, -k, k),
                bih=jax.random.uniform(k3, (3 * H,), jnp.float32, -k, k),
                bhh=jax.random.uniform(k4, (3 * H,), jnp.float32, -k, k),
            ))
        params["gru"].append(dirs)
    key, k1, k2 = jax.random.split(key, 3)
    kf = 1.0 / math.sqrt(H)   # fc in_features = H (see TODO at top)
    params["fc_w"] = jax.random.uniform(k1, (H, output_size), jnp.float32, -kf, kf)
    params["fc_b"] = jax.random.uniform(k2, (output_size,), jnp.float32, -kf, kf)
    return params


# -----------------------------------------------------------------------------
# Pure-JAX reference (lax.scan, standard PyTorch GRU formulation)
# -----------------------------------------------------------------------------
def _gru_ref_dir(x_tbd, wih, whh, bih, bhh):
    H = whh.shape[0]

    def step(h, x_step):
        gi = jnp.dot(x_step, wih, precision=_HIGHEST) + bih
        gh = jnp.dot(h, whh, precision=_HIGHEST) + bhh
        r = jax.nn.sigmoid(gi[:, :H] + gh[:, :H])
        z = jax.nn.sigmoid(gi[:, H:2 * H] + gh[:, H:2 * H])
        n = jnp.tanh(gi[:, 2 * H:] + r * gh[:, 2 * H:])
        h_new = (1.0 - z) * n + z * h
        return h_new, h_new

    h0 = jnp.zeros((x_tbd.shape[1], H), jnp.float32)
    _, ys = jax.lax.scan(step, h0, x_tbd)
    return ys


def gru_cam_forward_ref(params, x, hidden_size, bidirectional=True):
    H = hidden_size
    x_t = jnp.transpose(x, (1, 0, 2))
    layer_in = x_t
    for dirs in params["gru"]:
        fwd = _gru_ref_dir(layer_in, dirs[0]["wih"], dirs[0]["whh"],
                           dirs[0]["bih"], dirs[0]["bhh"])
        if bidirectional:
            bwd = jnp.flip(
                _gru_ref_dir(jnp.flip(layer_in, 0), dirs[1]["wih"],
                             dirs[1]["whh"], dirs[1]["bih"], dirs[1]["bhh"]), 0)
            layer_in = jnp.concatenate([fwd, bwd], axis=-1)
        else:
            layer_in = fwd
    gru_out = jnp.transpose(layer_in, (1, 0, 2))
    if bidirectional:
        gru_out = gru_out[:, :, :H] + gru_out[:, :, H:]
    output = jnp.dot(gru_out[:, -1, :], params["fc_w"],
                     precision=_HIGHEST) + params["fc_b"]
    return output, gru_out


# -----------------------------------------------------------------------------
if __name__ == "__main__":
    B, T = 2, 8
    input_size, hidden_size, output_size, num_layers = 4, 32, 3, 2
    bidirectional = True

    key = jax.random.PRNGKey(0)
    key, pkey, xkey = jax.random.split(key, 3)
    params = init_params(pkey, input_size, hidden_size, output_size,
                         num_layers, bidirectional)
    x = jax.random.normal(xkey, (B, T, input_size), jnp.float32)

    # max_chunk=3 -> T=8 is padded to 9 (3 chunks of 3), so the test exercises
    # the cross-chunk hidden-state carry, the reversed-chunk index_map AND the
    # padded-tail masking of the reverse chain.
    fwd = jax.jit(functools.partial(gru_cam_forward,
                                    hidden_size=hidden_size,
                                    bidirectional=bidirectional,
                                    max_chunk=3))
    out, gru_out = fwd(params, x)
    jax.block_until_ready((out, gru_out))

    out_ref, gru_out_ref = gru_cam_forward_ref(params, x, hidden_size,
                                               bidirectional)
    assert out.shape == (B, output_size)
    assert gru_out.shape == (B, T, hidden_size)
    assert jnp.allclose(out, out_ref, atol=1e-5, rtol=1e-5)
    assert jnp.allclose(gru_out, gru_out_ref, atol=1e-5, rtol=1e-5)

    print("KERNEL_OK")
</pallas_src>

<mosaic_0001>
module attributes {stable_mosaic.version = 11 : i64} {
  func.func @_gru_seq_kernel(%arg0: i32, %arg1: memref<1x3x3x2x32xf32, #tpu.memory_space<vmem>>, %arg2: memref<1x3x3x2x32xf32, #tpu.memory_space<vmem>>, %arg3: memref<2x3x32x32xf32, #tpu.memory_space<vmem>>, %arg4: memref<2x2x32xf32, #tpu.memory_space<vmem>>, %arg5: memref<3x2x32xf32, #tpu.memory_space<vmem>>, %arg6: memref<3x2x32xf32, #tpu.memory_space<vmem>>, %arg7: memref<2x2x32xf32, #tpu.memory_space<vmem>>) attributes {dimension_semantics = [#tpu.dimension_semantics<arbitrary>], iteration_bounds = array<i64: 3>, scalar_prefetch = 0 : i64, scratch_operands = 1 : i64, tpu.core_type = #tpu.core_type<tc>, window_params = [{transform_indices = @transform_0, window_bounds = array<i64: 1, 3, 3, 2, 32>}, {transform_indices = @transform_1, window_bounds = array<i64: 1, 3, 3, 2, 32>}, {pipeline_mode = #tpu.pipeline_mode<synchronous>, transform_indices = @transform_2, window_bounds = array<i64: 2, 3, 32, 32>}, {pipeline_mode = #tpu.pipeline_mode<synchronous>, transform_indices = @transform_3, window_bounds = array<i64: 2, 2, 32>}, {transform_indices = @transform_4, window_bounds = array<i64: 3, 2, 32>}, {transform_indices = @transform_5, window_bounds = array<i64: 3, 2, 32>}]} {
    %c0_i32 = arith.constant 0 : i32
    %0 = arith.cmpi eq, %arg0, %c0_i32 : i32
    %1 = arith.extui %0 : i1 to i32
    %c0_i32_0 = arith.constant 0 : i32
    %2 = arith.cmpi ne, %1, %c0_i32_0 : i32
    scf.if %2 {
      %cst_185 = arith.constant 0.000000e+00 : f32
      %236 = vector.broadcast %cst_185 : f32 to vector<2x2x32xf32>
      %c0_186 = arith.constant 0 : index
      %c0_187 = arith.constant 0 : index
      %c0_188 = arith.constant 0 : index
      %237 = vector.load %arg7[%c0_186, %c0_187, %c0_188] : memref<2x2x32xf32, #tpu.memory_space<vmem>>, vector<2x2x32xf32>
      tpu.vector_store %arg7[%c0_186, %c0_187, %c0_188], %236 {strides = array<i32>} : memref<2x2x32xf32, #tpu.memory_space<vmem>>, vector<2x2x32xf32>,
    } else {
    }
    %c0 = arith.constant 0 : index
    %c0_1 = arith.constant 0 : index
    %c0_2 = arith.constant 0 : index
    %c0_3 = arith.constant 0 : index
    %3 = vector.load %arg3[%c0, %c0_1, %c0_2, %c0_3] : memref<2x3x32x32xf32, #tpu.memory_space<vmem>>, vector<1x1x32x32xf32>
    %4 = vector.shape_cast %3 : vector<1x1x32x32xf32> to vector<32x32xf32>
    %c0_4 = arith.constant 0 : index
    %c1 = arith.constant 1 : index
    %c0_5 = arith.constant 0 : index
    %c0_6 = arith.constant 0 : index
    %5 = vector.load %arg3[%c0_4, %c1, %c0_5, %c0_6] : memref<2x3x32x32xf32, #tpu.memory_space<vmem>>, vector<1x1x32x32xf32>
    %6 = vector.shape_cast %5 : vector<1x1x32x32xf32> to vector<32x32xf32>
    %c0_7 = arith.constant 0 : index
    %c2 = arith.constant 2 : index
    %c0_8 = arith.constant 0 : index
    %c0_9 = arith.constant 0 : index
    %7 = vector.load %arg3[%c0_7, %c2, %c0_8, %c0_9] : memref<2x3x32x32xf32, #tpu.memory_space<vmem>>, vector<1x1x32x32xf32>
    %8 = vector.shape_cast %7 : vector<1x1x32x32xf32> to vector<32x32xf32>
    %c1_10 = arith.constant 1 : index
    %c0_11 = arith.constant 0 : index
    %c0_12 = arith.constant 0 : index
    %c0_13 = arith.constant 0 : index
    %9 = vector.load %arg3[%c1_10, %c0_11, %c0_12, %c0_13] : memref<2x3x32x32xf32, #tpu.memory_space<vmem>>, vector<1x1x32x32xf32>
    %10 = vector.shape_cast %9 : vector<1x1x32x32xf32> to vector<32x32xf32>
    %c1_14 = arith.constant 1 : index
    %c1_15 = arith.constant 1 : index
    %c0_16 = arith.constant 0 : index
    %c0_17 = arith.constant 0 : index
    %11 = vector.load %arg3[%c1_14, %c1_15, %c0_16, %c0_17] : memref<2x3x32x32xf32, #tpu.memory_space<vmem>>, vector<1x1x32x32xf32>
    %12 = vector.shape_cast %11 : vector<1x1x32x32xf32> to vector<32x32xf32>
    %c1_18 = arith.constant 1 : index
    %c2_19 = arith.constant 2 : index
    %c0_20 = arith.constant 0 : index
    %c0_21 = arith.constant 0 : index
    %13 = vector.load %arg3[%c1_18, %c2_19, %c0_20, %c0_21] : memref<2x3x32x32xf32, #tpu.memory_space<vmem>>, vector<1x1x32x32xf32>
    %14 = vector.shape_cast %13 : vector<1x1x32x32xf32> to vector<32x32xf32>
    %c0_22 = arith.constant 0 : index
    %c0_23 = arith.constant 0 : index
    %c0_24 = arith.constant 0 : index
    %15 = vector.load %arg4[%c0_22, %c0_23, %c0_24] : memref<2x2x32xf32, #tpu.memory_space<vmem>>, vector<1x2x32xf32>
    %16 = vector.shape_cast %15 : vector<1x2x32xf32> to vector<2x32xf32>
    %c1_25 = arith.constant 1 : index
    %c0_26 = arith.constant 0 : index
    %c0_27 = arith.constant 0 : index
    %17 = vector.load %arg4[%c1_25, %c0_26, %c0_27] : memref<2x2x32xf32, #tpu.memory_space<vmem>>, vector<1x2x32xf32>
    %18 = vector.shape_cast %17 : vector<1x2x32xf32> to vector<2x32xf32>
    %c0_28 = arith.constant 0 : index
    %c0_29 = arith.constant 0 : index
    %c0_30 = arith.constant 0 : index
    %19 = vector.load %arg7[%c0_28, %c0_29, %c0_30] : memref<2x2x32xf32, #tpu.memory_space<vmem>>, vector<1x2x32xf32>
    %20 = vector.shape_cast %19 : vector<1x2x32xf32> to vector<2x32xf32>
    %c1_31 = arith.constant 1 : index
    %c0_32 = arith.constant 0 : index
    %c0_33 = arith.constant 0 : index
    %21 = vector.load %arg7[%c1_31, %c0_32, %c0_33] : memref<2x2x32xf32, #tpu.memory_space<vmem>>, vector<1x2x32xf32>
    %22 = vector.shape_cast %21 : vector<1x2x32xf32> to vector<2x32xf32>
    %c0_i32_34 = arith.constant 0 : i32
    %23 = arith.cmpi sgt, %arg0, %c0_i32_34 : i32
    %24 = arith.extui %23 : i1 to i32
    %25 = arith.sitofp %24 : i32 to f32
    %cst = arith.constant dense<0.000000e+00> : vector<2x32xf32>
    %26 = tpu.matmul %20, %4, %cst {dimension_numbers = #tpu.dot_dimension_numbers<[1], [0], [0], [1], [0, 0, 1, 1], [], []>, precision = #tpu.contract_precision<fp32>} : vector<2x32xf32>, vector<32x32xf32>, vector<2x32xf32> -> vector<2x32xf32>
    %cst_35 = arith.constant dense<0.000000e+00> : vector<2x32xf32>
    %27 = tpu.matmul %20, %6, %cst_35 {dimension_numbers = #tpu.dot_dimension_numbers<[1], [0], [0], [1], [0, 0, 1, 1], [], []>, precision = #tpu.contract_precision<fp32>} : vector<2x32xf32>, vector<32x32xf32>, vector<2x32xf32> -> vector<2x32xf32>
    %cst_36 = arith.constant dense<0.000000e+00> : vector<2x32xf32>
    %28 = tpu.matmul %20, %8, %cst_36 {dimension_numbers = #tpu.dot_dimension_numbers<[1], [0], [0], [1], [0, 0, 1, 1], [], []>, precision = #tpu.contract_precision<fp32>} : vector<2x32xf32>, vector<32x32xf32>, vector<2x32xf32> -> vector<2x32xf32>
    %c0_37 = arith.constant 0 : index
    %c0_38 = arith.constant 0 : index
    %c0_39 = arith.constant 0 : index
    %c0_40 = arith.constant 0 : index
    %c0_41 = arith.constant 0 : index
    %29 = vector.load %arg1[%c0_37, %c0_38, %c0_39, %c0_40, %c0_41] : memref<1x3x3x2x32xf32, #tpu.memory_space<vmem>>, vector<1x1x1x2x32xf32>
    %30 = vector.shape_cast %29 : vector<1x1x1x2x32xf32> to vector<2x32xf32>
    %31 = arith.addf %30, %26 : vector<2x32xf32>
    %32 = arith.negf %31 : vector<2x32xf32>
    %33 = math.exp %32 : vector<2x32xf32>
    %cst_42 = arith.constant 1.000000e+00 : f32
    %34 = vector.broadcast %cst_42 : f32 to vector<2x32xf32>
    %35 = arith.addf %34, %33 : vector<2x32xf32>
    %36 = arith.divf %34, %35 : vector<2x32xf32>
    %c0_43 = arith.constant 0 : index
    %c0_44 = arith.constant 0 : index
    %c1_45 = arith.constant 1 : index
    %c0_46 = arith.constant 0 : index
    %c0_47 = arith.constant 0 : index
    %37 = vector.load %arg1[%c0_43, %c0_44, %c1_45, %c0_46, %c0_47] : memref<1x3x3x2x32xf32, #tpu.memory_space<vmem>>, vector<1x1x1x2x32xf32>
    %38 = vector.shape_cast %37 : vector<1x1x1x2x32xf32> to vector<2x32xf32>
    %39 = arith.addf %38, %27 : vector<2x32xf32>
    %40 = arith.negf %39 : vector<2x32xf32>
    %41 = math.exp %40 : vector<2x32xf32>
    %cst_48 = arith.constant 1.000000e+00 : f32
    %42 = vector.broadcast %cst_48 : f32 to vector<2x32xf32>
    %43 = arith.addf %42, %41 : vector<2x32xf32>
    %44 = arith.divf %42, %43 : vector<2x32xf32>
    %c0_49 = arith.constant 0 : index
    %c0_50 = arith.constant 0 : index
    %c2_51 = arith.constant 2 : index
    %c0_52 = arith.constant 0 : index
    %c0_53 = arith.constant 0 : index
    %45 = vector.load %arg1[%c0_49, %c0_50, %c2_51, %c0_52, %c0_53] : memref<1x3x3x2x32xf32, #tpu.memory_space<vmem>>, vector<1x1x1x2x32xf32>
    %46 = vector.shape_cast %45 : vector<1x1x1x2x32xf32> to vector<2x32xf32>
    %47 = arith.addf %28, %16 : vector<2x32xf32>
    %48 = arith.mulf %36, %47 : vector<2x32xf32>
    %49 = arith.addf %46, %48 : vector<2x32xf32>
    %50 = math.tanh %49 : vector<2x32xf32>
    %cst_54 = arith.constant 1.000000e+00 : f32
    %51 = vector.broadcast %cst_54 : f32 to vector<2x32xf32>
    %52 = arith.subf %51, %44 : vector<2x32xf32>
    %53 = arith.mulf %52, %50 : vector<2x32xf32>
    %54 = arith.mulf %44, %20 : vector<2x32xf32>
    %55 = arith.addf %53, %54 : vector<2x32xf32>
    %c0_55 = arith.constant 0 : index
    %c0_56 = arith.constant 0 : index
    %c0_57 = arith.constant 0 : index
    %56 = vector.load %arg5[%c0_55, %c0_56, %c0_57] : memref<3x2x32xf32, #tpu.memory_space<vmem>>, vector<1x2x32xf32>
    %57 = vector.shape_cast %56 : vector<1x2x32xf32> to vector<2x32xf32>
    %58 = vector.shape_cast %55 : vector<2x32xf32> to vector<1x2x32xf32>
    tpu.vector_store %arg5[%c0_55, %c0_56, %c0_57], %58 {strides = array<i32>} : memref<3x2x32xf32, #tpu.memory_space<vmem>>, vector<1x2x32xf32>,
    %cst_58 = arith.constant dense<0.000000e+00> : vector<2x32xf32>
    %59 = tpu.matmul %22, %10, %cst_58 {dimension_numbers = #tpu.dot_dimension_numbers<[1], [0], [0], [1], [0, 0, 1, 1], [], []>, precision = #tpu.contract_precision<fp32>} : vector<2x32xf32>, vector<32x32xf32>, vector<2x32xf32> -> vector<2x32xf32>
    %cst_59 = arith.constant dense<0.000000e+00> : vector<2x32xf32>
    %60 = tpu.matmul %22, %12, %cst_59 {dimension_numbers = #tpu.dot_dimension_numbers<[1], [0], [0], [1], [0, 0, 1, 1], [], []>, precision = #tpu.contract_precision<fp32>} : vector<2x32xf32>, vector<32x32xf32>, vector<2x32xf32> -> vector<2x32xf32>
    %cst_60 = arith.constant dense<0.000000e+00> : vector<2x32xf32>
    %61 = tpu.matmul %22, %14, %cst_60 {dimension_numbers = #tpu.dot_dimension_numbers<[1], [0], [0], [1], [0, 0, 1, 1], [], []>, precision = #tpu.contract_precision<fp32>} : vector<2x32xf32>, vector<32x32xf32>, vector<2x32xf32> -> vector<2x32xf32>
    %c0_61 = arith.constant 0 : index
    %c2_62 = arith.constant 2 : index
    %c0_63 = arith.constant 0 : index
    %c0_64 = arith.constant 0 : index
    %c0_65 = arith.constant 0 : index
    %62 = vector.load %arg2[%c0_61, %c2_62, %c0_63, %c0_64, %c0_65] : memref<1x3x3x2x32xf32, #tpu.memory_space<vmem>>, vector<1x1x1x2x32xf32>
    %63 = vector.shape_cast %62 : vector<1x1x1x2x32xf32> to vector<2x32xf32>
    %64 = arith.addf %63, %59 : vector<2x32xf32>
    %65 = arith.negf %64 : vector<2x32xf32>
    %66 = math.exp %65 : vector<2x32xf32>
    %cst_66 = arith.constant 1.000000e+00 : f32
    %67 = vector.broadcast %cst_66 : f32 to vector<2x32xf32>
    %68 = arith.addf %67, %66 : vector<2x32xf32>
    %69 = arith.divf %67, %68 : vector<2x32xf32>
    %c0_67 = arith.constant 0 : index
    %c2_68 = arith.constant 2 : index
    %c1_69 = arith.constant 1 : index
    %c0_70 = arith.constant 0 : index
    %c0_71 = arith.constant 0 : index
    %70 = vector.load %arg2[%c0_67, %c2_68, %c1_69, %c0_70, %c0_71] : memref<1x3x3x2x32xf32, #tpu.memory_space<vmem>>, vector<1x1x1x2x32xf32>
    %71 = vector.shape_cast %70 : vector<1x1x1x2x32xf32> to vector<2x32xf32>
    %72 = arith.addf %71, %60 : vector<2x32xf32>
    %73 = arith.negf %72 : vector<2x32xf32>
    %74 = math.exp %73 : vector<2x32xf32>
    %cst_72 = arith.constant 1.000000e+00 : f32
    %75 = vector.broadcast %cst_72 : f32 to vector<2x32xf32>
    %76 = arith.addf %75, %74 : vector<2x32xf32>
    %77 = arith.divf %75, %76 : vector<2x32xf32>
    %c0_73 = arith.constant 0 : index
    %c2_74 = arith.constant 2 : index
    %c2_75 = arith.constant 2 : index
    %c0_76 = arith.constant 0 : index
    %c0_77 = arith.constant 0 : index
    %78 = vector.load %arg2[%c0_73, %c2_74, %c2_75, %c0_76, %c0_77] : memref<1x3x3x2x32xf32, #tpu.memory_space<vmem>>, vector<1x1x1x2x32xf32>
    %79 = vector.shape_cast %78 : vector<1x1x1x2x32xf32> to vector<2x32xf32>
    %80 = arith.addf %61, %18 : vector<2x32xf32>
    %81 = arith.mulf %69, %80 : vector<2x32xf32>
    %82 = arith.addf %79, %81 : vector<2x32xf32>
    %83 = math.tanh %82 : vector<2x32xf32>
    %cst_78 = arith.constant 1.000000e+00 : f32
    %84 = vector.broadcast %cst_78 : f32 to vector<2x32xf32>
    %85 = arith.subf %84, %77 : vector<2x32xf32>
    %86 = arith.mulf %85, %83 : vector<2x32xf32>
    %87 = arith.mulf %77, %22 : vector<2x32xf32>
    %88 = arith.addf %86, %87 : vector<2x32xf32>
    %89 = vector.broadcast %25 : f32 to vector<2x32xf32>
    %90 = arith.mulf %89, %88 : vector<2x32xf32>
    %cst_79 = arith.constant 1.000000e+00 : f32
    %91 = arith.subf %cst_79, %25 : f32
    %92 = vector.broadcast %91 : f32 to vector<2x32xf32>
    %93 = arith.mulf %92, %22 : vector<2x32xf32>
    %94 = arith.addf %90, %93 : vector<2x32xf32>
    %c2_80 = arith.constant 2 : index
    %c0_81 = arith.constant 0 : index
    %c0_82 = arith.constant 0 : index
    %95 = vector.load %arg6[%c2_80, %c0_81, %c0_82] : memref<3x2x32xf32, #tpu.memory_space<vmem>>, vector<1x2x32xf32>
    %96 = vector.shape_cast %95 : vector<1x2x32xf32> to vector<2x32xf32>
    %97 = vector.shape_cast %94 : vector<2x32xf32> to vector<1x2x32xf32>
    tpu.vector_store %arg6[%c2_80, %c0_81, %c0_82], %97 {strides = array<i32>} : memref<3x2x32xf32, #tpu.memory_space<vmem>>, vector<1x2x32xf32>,
    %cst_83 = arith.constant dense<0.000000e+00> : vector<2x32xf32>
    %98 = tpu.matmul %55, %4, %cst_83 {dimension_numbers = #tpu.dot_dimension_numbers<[1], [0], [0], [1], [0, 0, 1, 1], [], []>, precision = #tpu.contract_precision<fp32>} : vector<2x32xf32>, vector<32x32xf32>, vector<2x32xf32> -> vector<2x32xf32>
    %cst_84 = arith.constant dense<0.000000e+00> : vector<2x32xf32>
    %99 = tpu.matmul %55, %6, %cst_84 {dimension_numbers = #tpu.dot_dimension_numbers<[1], [0], [0], [1], [0, 0, 1, 1], [], []>, precision = #tpu.contract_precision<fp32>} : vector<2x32xf32>, vector<32x32xf32>, vector<2x32xf32> -> vector<2x32xf32>
    %cst_85 = arith.constant dense<0.000000e+00> : vector<2x32xf32>
    %100 = tpu.matmul %55, %8, %cst_85 {dimension_numbers = #tpu.dot_dimension_numbers<[1], [0], [0], [1], [0, 0, 1, 1], [], []>, precision = #tpu.contract_precision<fp32>} : vector<2x32xf32>, vector<32x32xf32>, vector<2x32xf32> -> vector<2x32xf32>
    %c0_86 = arith.constant 0 : index
    %c1_87 = arith.constant 1 : index
    %c0_88 = arith.constant 0 : index
    %c0_89 = arith.constant 0 : index
    %c0_90 = arith.constant 0 : index
    %101 = vector.load %arg1[%c0_86, %c1_87, %c0_88, %c0_89, %c0_90] : memref<1x3x3x2x32xf32, #tpu.memory_space<vmem>>, vector<1x1x1x2x32xf32>
    %102 = vector.shape_cast %101 : vector<1x1x1x2x32xf32> to vector<2x32xf32>
    %103 = arith.addf %102, %98 : vector<2x32xf32>
    %104 = arith.negf %103 : vector<2x32xf32>
    %105 = math.exp %104 : vector<2x32xf32>
    %cst_91 = arith.constant 1.000000e+00 : f32
    %106 = vector.broadcast %cst_91 : f32 to vector<2x32xf32>
    %107 = arith.addf %106, %105 : vector<2x32xf32>
    %108 = arith.divf %106, %107 : vector<2x32xf32>
    %c0_92 = arith.constant 0 : index
    %c1_93 = arith.constant 1 : index
    %c1_94 = arith.constant 1 : index
    %c0_95 = arith.constant 0 : index
    %c0_96 = arith.constant 0 : index
    %109 = vector.load %arg1[%c0_92, %c1_93, %c1_94, %c0_95, %c0_96] : memref<1x3x3x2x32xf32, #tpu.memory_space<vmem>>, vector<1x1x1x2x32xf32>
    %110 = vector.shape_cast %109 : vector<1x1x1x2x32xf32> to vector<2x32xf32>
    %111 = arith.addf %110, %99 : vector<2x32xf32>
    %112 = arith.negf %111 : vector<2x32xf32>
    %113 = math.exp %112 : vector<2x32xf32>
    %cst_97 = arith.constant 1.000000e+00 : f32
    %114 = vector.broadcast %cst_97 : f32 to vector<2x32xf32>
    %115 = arith.addf %114, %113 : vector<2x32xf32>
    %116 = arith.divf %114, %115 : vector<2x32xf32>
    %c0_98 = arith.constant 0 : index
    %c1_99 = arith.constant 1 : index
    %c2_100 = arith.constant 2 : index
    %c0_101 = arith.constant 0 : index
    %c0_102 = arith.constant 0 : index
    %117 = vector.load %arg1[%c0_98, %c1_99, %c2_100, %c0_101, %c0_102] : memref<1x3x3x2x32xf32, #tpu.memory_space<vmem>>, vector<1x1x1x2x32xf32>
    %118 = vector.shape_cast %117 : vector<1x1x1x2x32xf32> to vector<2x32xf32>
    %119 = arith.addf %100, %16 : vector<2x32xf32>
    %120 = arith.mulf %108, %119 : vector<2x32xf32>
    %121 = arith.addf %118, %120 : vector<2x32xf32>
    %122 = math.tanh %121 : vector<2x32xf32>
    %cst_103 = arith.constant 1.000000e+00 : f32
    %123 = vector.broadcast %cst_103 : f32 to vector<2x32xf32>
    %124 = arith.subf %123, %116 : vector<2x32xf32>
    %125 = arith.mulf %124, %122 : vector<2x32xf32>
    %126 = arith.mulf %116, %55 : vector<2x32xf32>
    %127 = arith.addf %125, %126 : vector<2x32xf32>
    %c1_104 = arith.constant 1 : index
    %c0_105 = arith.constant 0 : index
    %c0_106 = arith.constant 0 : index
    %128 = vector.load %arg5[%c1_104, %c0_105, %c0_106] : memref<3x2x32xf32, #tpu.memory_space<vmem>>, vector<1x2x32xf32>
    %129 = vector.shape_cast %128 : vector<1x2x32xf32> to vector<2x32xf32>
    %130 = vector.shape_cast %127 : vector<2x32xf32> to vector<1x2x32xf32>
    tpu.vector_store %arg5[%c1_104, %c0_105, %c0_106], %130 {strides = array<i32>} : memref<3x2x32xf32, #tpu.memory_space<vmem>>, vector<1x2x32xf32>,
    %cst_107 = arith.constant dense<0.000000e+00> : vector<2x32xf32>
    %131 = tpu.matmul %94, %10, %cst_107 {dimension_numbers = #tpu.dot_dimension_numbers<[1], [0], [0], [1], [0, 0, 1, 1], [], []>, precision = #tpu.contract_precision<fp32>} : vector<2x32xf32>, vector<32x32xf32>, vector<2x32xf32> -> vector<2x32xf32>
    %cst_108 = arith.constant dense<0.000000e+00> : vector<2x32xf32>
    %132 = tpu.matmul %94, %12, %cst_108 {dimension_numbers = #tpu.dot_dimension_numbers<[1], [0], [0], [1], [0, 0, 1, 1], [], []>, precision = #tpu.contract_precision<fp32>} : vector<2x32xf32>, vector<32x32xf32>, vector<2x32xf32> -> vector<2x32xf32>
    %cst_109 = arith.constant dense<0.000000e+00> : vector<2x32xf32>
    %133 = tpu.matmul %94, %14, %cst_109 {dimension_numbers = #tpu.dot_dimension_numbers<[1], [0], [0], [1], [0, 0, 1, 1], [], []>, precision = #tpu.contract_precision<fp32>} : vector<2x32xf32>, vector<32x32xf32>, vector<2x32xf32> -> vector<2x32xf32>
    %c0_110 = arith.constant 0 : index
    %c1_111 = arith.constant 1 : index
    %c0_112 = arith.constant 0 : index
    %c0_113 = arith.constant 0 : index
    %c0_114 = arith.constant 0 : index
    %134 = vector.load %arg2[%c0_110, %c1_111, %c0_112, %c0_113, %c0_114] : memref<1x3x3x2x32xf32, #tpu.memory_space<vmem>>, vector<1x1x1x2x32xf32>
    %135 = vector.shape_cast %134 : vector<1x1x1x2x32xf32> to vector<2x32xf32>
    %136 = arith.addf %135, %131 : vector<2x32xf32>
    %137 = arith.negf %136 : vector<2x32xf32>
    %138 = math.exp %137 : vector<2x32xf32>
    %cst_115 = arith.constant 1.000000e+00 : f32
    %139 = vector.broadcast %cst_115 : f32 to vector<2x32xf32>
    %140 = arith.addf %139, %138 : vector<2x32xf32>
    %141 = arith.divf %139, %140 : vector<2x32xf32>
    %c0_116 = arith.constant 0 : index
    %c1_117 = arith.constant 1 : index
    %c1_118 = arith.constant 1 : index
    %c0_119 = arith.constant 0 : index
    %c0_120 = arith.constant 0 : index
    %142 = vector.load %arg2[%c0_116, %c1_117, %c1_118, %c0_119, %c0_120] : memref<1x3x3x2x32xf32, #tpu.memory_space<vmem>>, vector<1x1x1x2x32xf32>
    %143 = vector.shape_cast %142 : vector<1x1x1x2x32xf32> to vector<2x32xf32>
    %144 = arith.addf %143, %132 : vector<2x32xf32>
    %145 = arith.negf %144 : vector<2x32xf32>
    %146 = math.exp %145 : vector<2x32xf32>
    %cst_121 = arith.constant 1.000000e+00 : f32
    %147 = vector.broadcast %cst_121 : f32 to vector<2x32xf32>
    %148 = arith.addf %147, %146 : vector<2x32xf32>
    %149 = arith.divf %147, %148 : vector<2x32xf32>
    %c0_122 = arith.constant 0 : index
    %c1_123 = arith.constant 1 : index
    %c2_124 = arith.constant 2 : index
    %c0_125 = arith.constant 0 : index
    %c0_126 = arith.constant 0 : index
    %150 = vector.load %arg2[%c0_122, %c1_123, %c2_124, %c0_125, %c0_126] : memref<1x3x3x2x32xf32, #tpu.memory_space<vmem>>, vector<1x1x1x2x32xf32>
    %151 = vector.shape_cast %150 : vector<1x1x1x2x32xf32> to vector<2x32xf32>
    %152 = arith.addf %133, %18 : vector<2x32xf32>
    %153 = arith.mulf %141, %152 : vector<2x32xf32>
    %154 = arith.addf %151, %153 : vector<2x32xf32>
    %155 = math.tanh %154 : vector<2x32xf32>
    %cst_127 = arith.constant 1.000000e+00 : f32
    %156 = vector.broadcast %cst_127 : f32 to vector<2x32xf32>
    %157 = arith.subf %156, %149 : vector<2x32xf32>
    %158 = arith.mulf %157, %155 : vector<2x32xf32>
    %159 = arith.mulf %149, %94 : vector<2x32xf32>
    %160 = arith.addf %158, %159 : vector<2x32xf32>
    %c1_128 = arith.constant 1 : index
    %c0_129 = arith.constant 0 : index
    %c0_130 = arith.constant 0 : index
    %161 = vector.load %arg6[%c1_128, %c0_129, %c0_130] : memref<3x2x32xf32, #tpu.memory_space<vmem>>, vector<1x2x32xf32>
    %162 = vector.shape_cast %161 : vector<1x2x32xf32> to vector<2x32xf32>
    %163 = vector.shape_cast %160 : vector<2x32xf32> to vector<1x2x32xf32>
    tpu.vector_store %arg6[%c1_128, %c0_129, %c0_130], %163 {strides = array<i32>} : memref<3x2x32xf32, #tpu.memory_space<vmem>>, vector<1x2x32xf32>,
    %cst_131 = arith.constant dense<0.000000e+00> : vector<2x32xf32>
    %164 = tpu.matmul %127, %4, %cst_131 {dimension_numbers = #tpu.dot_dimension_numbers<[1], [0], [0], [1], [0, 0, 1, 1], [], []>, precision = #tpu.contract_precision<fp32>} : vector<2x32xf32>, vector<32x32xf32>, vector<2x32xf32> -> vector<2x32xf32>
    %cst_132 = arith.constant dense<0.000000e+00> : vector<2x32xf32>
    %165 = tpu.matmul %127, %6, %cst_132 {dimension_numbers = #tpu.dot_dimension_numbers<[1], [0], [0], [1], [0, 0, 1, 1], [], []>, precision = #tpu.contract_precision<fp32>} : vector<2x32xf32>, vector<32x32xf32>, vector<2x32xf32> -> vector<2x32xf32>
    %cst_133 = arith.constant dense<0.000000e+00> : vector<2x32xf32>
    %166 = tpu.matmul %127, %8, %cst_133 {dimension_numbers = #tpu.dot_dimension_numbers<[1], [0], [0], [1], [0, 0, 1, 1], [], []>, precision = #tpu.contract_precision<fp32>} : vector<2x32xf32>, vector<32x32xf32>, vector<2x32xf32> -> vector<2x32xf32>
    %c0_134 = arith.constant 0 : index
    %c2_135 = arith.constant 2 : index
    %c0_136 = arith.constant 0 : index
    %c0_137 = arith.constant 0 : index
    %c0_138 = arith.constant 0 : index
    %167 = vector.load %arg1[%c0_134, %c2_135, %c0_136, %c0_137, %c0_138] : memref<1x3x3x2x32xf32, #tpu.memory_space<vmem>>, vector<1x1x1x2x32xf32>
    %168 = vector.shape_cast %167 : vector<1x1x1x2x32xf32> to vector<2x32xf32>
    %169 = arith.addf %168, %164 : vector<2x32xf32>
    %170 = arith.negf %169 : vector<2x32xf32>
    %171 = math.exp %170 : vector<2x32xf32>
    %cst_139 = arith.constant 1.000000e+00 : f32
    %172 = vector.broadcast %cst_139 : f32 to vector<2x32xf32>
    %173 = arith.addf %172, %171 : vector<2x32xf32>
    %174 = arith.divf %172, %173 : vector<2x32xf32>
    %c0_140 = arith.constant 0 : index
    %c2_141 = arith.constant 2 : index
    %c1_142 = arith.constant 1 : index
    %c0_143 = arith.constant 0 : index
    %c0_144 = arith.constant 0 : index
    %175 = vector.load %arg1[%c0_140, %c2_141, %c1_142, %c0_143, %c0_144] : memref<1x3x3x2x32xf32, #tpu.memory_space<vmem>>, vector<1x1x1x2x32xf32>
    %176 = vector.shape_cast %175 : vector<1x1x1x2x32xf32> to vector<2x32xf32>
    %177 = arith.addf %176, %165 : vector<2x32xf32>
    %178 = arith.negf %177 : vector<2x32xf32>
    %179 = math.exp %178 : vector<2x32xf32>
    %cst_145 = arith.constant 1.000000e+00 : f32
    %180 = vector.broadcast %cst_145 : f32 to vector<2x32xf32>
    %181 = arith.addf %180, %179 : vector<2x32xf32>
    %182 = arith.divf %180, %181 : vector<2x32xf32>
    %c0_146 = arith.constant 0 : index
    %c2_147 = arith.constant 2 : index
    %c2_148 = arith.constant 2 : index
    %c0_149 = arith.constant 0 : index
    %c0_150 = arith.constant 0 : index
    %183 = vector.load %arg1[%c0_146, %c2_147, %c2_148, %c0_149, %c0_150] : memref<1x3x3x2x32xf32, #tpu.memory_space<vmem>>, vector<1x1x1x2x32xf32>
    %184 = vector.shape_cast %183 : vector<1x1x1x2x32xf32> to vector<2x32xf32>
    %185 = arith.addf %166, %16 : vector<2x32xf32>
    %186 = arith.mulf %174, %185 : vector<2x32xf32>
    %187 = arith.addf %184, %186 : vector<2x32xf32>
    %188 = math.tanh %187 : vector<2x32xf32>
    %cst_151 = arith.constant 1.000000e+00 : f32
    %189 = vector.broadcast %cst_151 : f32 to vector<2x32xf32>
    %190 = arith.subf %189, %182 : vector<2x32xf32>
    %191 = arith.mulf %190, %188 : vector<2x32xf32>
    %192 = arith.mulf %182, %127 : vector<2x32xf32>
    %193 = arith.addf %191, %192 : vector<2x32xf32>
    %c2_152 = arith.constant 2 : index
    %c0_153 = arith.constant 0 : index
    %c0_154 = arith.constant 0 : index
    %194 = vector.load %arg5[%c2_152, %c0_153, %c0_154] : memref<3x2x32xf32, #tpu.memory_space<vmem>>, vector<1x2x32xf32>
    %195 = vector.shape_cast %194 : vector<1x2x32xf32> to vector<2x32xf32>
    %196 = vector.shape_cast %193 : vector<2x32xf32> to vector<1x2x32xf32>
    tpu.vector_store %arg5[%c2_152, %c0_153, %c0_154], %196 {strides = array<i32>} : memref<3x2x32xf32, #tpu.memory_space<vmem>>, vector<1x2x32xf32>,
    %cst_155 = arith.constant dense<0.000000e+00> : vector<2x32xf32>
    %197 = tpu.matmul %160, %10, %cst_155 {dimension_numbers = #tpu.dot_dimension_numbers<[1], [0], [0], [1], [0, 0, 1, 1], [], []>, precision = #tpu.contract_precision<fp32>} : vector<2x32xf32>, vector<32x32xf32>, vector<2x32xf32> -> vector<2x32xf32>
    %cst_156 = arith.constant dense<0.000000e+00> : vector<2x32xf32>
    %198 = tpu.matmul %160, %12, %cst_156 {dimension_numbers = #tpu.dot_dimension_numbers<[1], [0], [0], [1], [0, 0, 1, 1], [], []>, precision = #tpu.contract_precision<fp32>} : vector<2x32xf32>, vector<32x32xf32>, vector<2x32xf32> -> vector<2x32xf32>
    %cst_157 = arith.constant dense<0.000000e+00> : vector<2x32xf32>
    %199 = tpu.matmul %160, %14, %cst_157 {dimension_numbers = #tpu.dot_dimension_numbers<[1], [0], [0], [1], [0, 0, 1, 1], [], []>, precision = #tpu.contract_precision<fp32>} : vector<2x32xf32>, vector<32x32xf32>, vector<2x32xf32> -> vector<2x32xf32>
    %c0_158 = arith.constant 0 : index
    %c0_159 = arith.constant 0 : index
    %c0_160 = arith.constant 0 : index
    %c0_161 = arith.constant 0 : index
    %c0_162 = arith.constant 0 : index
    %200 = vector.load %arg2[%c0_158, %c0_159, %c0_160, %c0_161, %c0_162] : memref<1x3x3x2x32xf32, #tpu.memory_space<vmem>>, vector<1x1x1x2x32xf32>
    %201 = vector.shape_cast %200 : vector<1x1x1x2x32xf32> to vector<2x32xf32>
    %202 = arith.addf %201, %197 : vector<2x32xf32>
    %203 = arith.negf %202 : vector<2x32xf32>
    %204 = math.exp %203 : vector<2x32xf32>
    %cst_163 = arith.constant 1.000000e+00 : f32
    %205 = vector.broadcast %cst_163 : f32 to vector<2x32xf32>
    %206 = arith.addf %205, %204 : vector<2x32xf32>
    %207 = arith.divf %205, %206 : vector<2x32xf32>
    %c0_164 = arith.constant 0 : index
    %c0_165 = arith.constant 0 : index
    %c1_166 = arith.constant 1 : index
    %c0_167 = arith.constant 0 : index
    %c0_168 = arith.constant 0 : index
    %208 = vector.load %arg2[%c0_164, %c0_165, %c1_166, %c0_167, %c0_168] : memref<1x3x3x2x32xf32, #tpu.memory_space<vmem>>, vector<1x1x1x2x32xf32>
    %209 = vector.shape_cast %208 : vector<1x1x1x2x32xf32> to vector<2x32xf32>
    %210 = arith.addf %209, %198 : vector<2x32xf32>
    %211 = arith.negf %210 : vector<2x32xf32>
    %212 = math.exp %211 : vector<2x32xf32>
    %cst_169 = arith.constant 1.000000e+00 : f32
    %213 = vector.broadcast %cst_169 : f32 to vector<2x32xf32>
    %214 = arith.addf %213, %212 : vector<2x32xf32>
    %215 = arith.divf %213, %214 : vector<2x32xf32>
    %c0_170 = arith.constant 0 : index
    %c0_171 = arith.constant 0 : index
    %c2_172 = arith.constant 2 : index
    %c0_173 = arith.constant 0 : index
    %c0_174 = arith.constant 0 : index
    %216 = vector.load %arg2[%c0_170, %c0_171, %c2_172, %c0_173, %c0_174] : memref<1x3x3x2x32xf32, #tpu.memory_space<vmem>>, vector<1x1x1x2x32xf32>
    %217 = vector.shape_cast %216 : vector<1x1x1x2x32xf32> to vector<2x32xf32>
    %218 = arith.addf %199, %18 : vector<2x32xf32>
    %219 = arith.mulf %207, %218 : vector<2x32xf32>
    %220 = arith.addf %217, %219 : vector<2x32xf32>
    %221 = math.tanh %220 : vector<2x32xf32>
    %cst_175 = arith.constant 1.000000e+00 : f32
    %222 = vector.broadcast %cst_175 : f32 to vector<2x32xf32>
    %223 = arith.subf %222, %215 : vector<2x32xf32>
    %224 = arith.mulf %223, %221 : vector<2x32xf32>
    %225 = arith.mulf %215, %160 : vector<2x32xf32>
    %226 = arith.addf %224, %225 : vector<2x32xf32>
    %c0_176 = arith.constant 0 : index
    %c0_177 = arith.constant 0 : index
    %c0_178 = arith.constant 0 : index
    %227 = vector.load %arg6[%c0_176, %c0_177, %c0_178] : memref<3x2x32xf32, #tpu.memory_space<vmem>>, vector<1x2x32xf32>
    %228 = vector.shape_cast %227 : vector<1x2x32xf32> to vector<2x32xf32>
    %229 = vector.shape_cast %226 : vector<2x32xf32> to vector<1x2x32xf32>
    tpu.vector_store %arg6[%c0_176, %c0_177, %c0_178], %229 {strides = array<i32>} : memref<3x2x32xf32, #tpu.memory_space<vmem>>, vector<1x2x32xf32>,
    %c0_179 = arith.constant 0 : index
    %c0_180 = arith.constant 0 : index
    %c0_181 = arith.constant 0 : index
    %230 = vector.load %arg7[%c0_179, %c0_180, %c0_181] : memref<2x2x32xf32, #tpu.memory_space<vmem>>, vector<1x2x32xf32>
    %231 = vector.shape_cast %230 : vector<1x2x32xf32> to vector<2x32xf32>
    %232 = vector.shape_cast %193 : vector<2x32xf32> to vector<1x2x32xf32>
    tpu.vector_store %arg7[%c0_179, %c0_180, %c0_181], %232 {strides = array<i32>} : memref<2x2x32xf32, #tpu.memory_space<vmem>>, vector<1x2x32xf32>,
    %c1_182 = arith.constant 1 : index
    %c0_183 = arith.constant 0 : index
    %c0_184 = arith.constant 0 : index
    %233 = vector.load %arg7[%c1_182, %c0_183, %c0_184] : memref<2x2x32xf32, #tpu.memory_space<vmem>>, vector<1x2x32xf32>
    %234 = vector.shape_cast %233 : vector<1x2x32xf32> to vector<2x32xf32>
    %235 = vector.shape_cast %226 : vector<2x32xf32> to vector<1x2x32xf32>
    tpu.vector_store %arg7[%c1_182, %c0_183, %c0_184], %235 {strides = array<i32>} : memref<2x2x32xf32, #tpu.memory_space<vmem>>, vector<1x2x32xf32>,
    return
  }
  func.func @transform_0(%arg0: i32) -> (i32, i32, i32, i32, i32) {
    %c0_i32 = arith.constant 0 : i32
    %c0_i32_0 = arith.constant 0 : i32
    %c0_i32_1 = arith.constant 0 : i32
    %c0_i32_2 = arith.constant 0 : i32
    %c0_i32_3 = arith.constant 0 : i32
    return %c0_i32, %arg0, %c0_i32_0, %c0_i32_1, %c0_i32_2 : i32, i32, i32, i32, i32
  }
  func.func @transform_1(%arg0: i32) -> (i32, i32, i32, i32, i32) {
    %c2_i32 = arith.constant 2 : i32
    %0 = arith.subi %c2_i32, %arg0 : i32
    %c1_i32 = arith.constant 1 : i32
    %c0_i32 = arith.constant 0 : i32
    %c0_i32_0 = arith.constant 0 : i32
    %c0_i32_1 = arith.constant 0 : i32
    %c0_i32_2 = arith.constant 0 : i32
    return %c1_i32, %0, %c0_i32, %c0_i32_0, %c0_i32_1 : i32, i32, i32, i32, i32
  }
  func.func @transform_2(%arg0: i32) -> (i32, i32, i32, i32) {
    %c0_i32 = arith.constant 0 : i32
    %c0_i32_0 = arith.constant 0 : i32
    %c0_i32_1 = arith.constant 0 : i32
    %c0_i32_2 = arith.constant 0 : i32
    %c0_i32_3 = arith.constant 0 : i32
    return %c0_i32, %c0_i32_0, %c0_i32_1, %c0_i32_2 : i32, i32, i32, i32
  }
  func.func @transform_3(%arg0: i32) -> (i32, i32, i32) {
    %c0_i32 = arith.constant 0 : i32
    %c0_i32_0 = arith.constant 0 : i32
    %c0_i32_1 = arith.constant 0 : i32
    %c0_i32_2 = arith.constant 0 : i32
    return %c0_i32, %c0_i32_0, %c0_i32_1 : i32, i32, i32
  }
  func.func @transform_4(%arg0: i32) -> (i32, i32, i32) {
    %c0_i32 = arith.constant 0 : i32
    %c0_i32_0 = arith.constant 0 : i32
    %c0_i32_1 = arith.constant 0 : i32
    return %arg0, %c0_i32, %c0_i32_0 : i32, i32, i32
  }
  func.func @transform_5(%arg0: i32) -> (i32, i32, i32) {
    %c2_i32 = arith.constant 2 : i32
    %0 = arith.subi %c2_i32, %arg0 : i32
    %c0_i32 = arith.constant 0 : i32
    %c0_i32_0 = arith.constant 0 : i32
    %c0_i32_1 = arith.constant 0 : i32
    return %0, %c0_i32, %c0_i32_0 : i32, i32, i32
  }
}

</mosaic_0001>

<llo_original>
// kernel: gru_cam_forward.2
$region0: #{gru_cam_forward.2}
  #allocation0 [shape = 'u32[]', space=smem, size = 0x4, offset = 0x4, fixed_abs, tag = 'smem constant byte address 0x4 - core index']
  #allocation1 [shape = 'u32[144,128]{1,0:T(1,128)}', space=vmem, size = 0x12000, scoped, tag = 'internal scratch']
  #allocation2 [shape = 'f32[2,2,32]{2,1,0:T(2,128)}', space=vmem, size = 0x800, scoped, tag = 'scratch operand']
  %s0 = inlined_call_operand.vmem [shape: f32[2,9,3,2,32], index: 0, kind: input, shape index: {}, may-alias: {0,1}]
  %s1 = inlined_call_operand.vmem [shape: f32[2,9,3,2,32], index: 1, kind: input, shape index: {}, may-alias: {0,1}]
  %s2 = inlined_call_operand.vmem [shape: f32[2,3,32,32], index: 2, kind: input, shape index: {}]
  %s3 = inlined_call_operand.vmem [shape: f32[2,2,32], index: 3, kind: input, shape index: {}]
  %s4 = inlined_call_operand.vmem [shape: f32[9,2,32], index: 4, kind: output, shape index: {0}]
  %s5 = inlined_call_operand.vmem [shape: f32[9,2,32], index: 5, kind: output, shape index: {1}]
  %6 = xla_tuple %s4, %s5
  %s7 = sld [smem:[#allocation0]]
  $region61: #{gru_cam_forward.2} parent=0
    _
  %s9 = ssub.s32 1, %s7
  %s10 = scalar_select 0, %s9, %s7
  loop: start=0, step=1, limit=5
  $region2: #{gru_cam_forward.2} parent=0 // loop_pre_header
    _
  $region3: #{gru_cam_forward.2} parent=0 // loop_header
    %s12 = sphi 0, %s16
    %p13 = scmp.ge.s32.totalorder %s12, 5
    %s22 = sphi 0, %s24
    %s25 = sphi 0, %s22
    %s26 = sphi 0, %s25
    %s42 = sphi 0, %s26
    %s50 = sphi 0, %s52
    %s53 = sphi 0, %s50
    %s54 = sphi 0, %s53
    %s70 = sphi 0, %s54
    %s74 = sphi 0, %s74
    %s76 = sphi 0, %s74
    %s77 = sphi 0, %s76
    %s91 = sphi 0, %s77
    %s95 = sphi 0, %s95
    %s97 = sphi 0, %s95
    %s98 = sphi 0, %s97
    %s112 = sphi 0, %s98
    %s118 = sphi 0, %s120
    %s121 = sphi 0, %s118
    %s122 = sphi 0, %s121
    %s138 = sphi 0, %s122
    %s146 = sphi 0, %s148
    %s149 = sphi 0, %s146
    %s150 = sphi 0, %s149
    %s166 = sphi 0, %s150
  $region4: #{gru_cam_forward.2} parent=0 // loop_header_branch
    %15 = sbr.rel (%p13) target = $region8
  $region5: #{gru_cam_forward.2} parent=0 // loop_body
    %s17 = ssub.s32 %s12, 1
    %s18 = ssub.s32 %s12, 2
    %s19 = sadd.s32 %s12, 1
    %s20 = ssub.s32 %s12, %s19
    %p21 = scmp.eq.s32.totalorder %s20, 0
    %s23 = sadd.s32 %s22, 1
    %s24 = scalar_select %p21, %s22, %s23
    %p27 = pneg %p21
    %p28 = scmp.eq.s32.totalorder %s12, 2
    %p29 = por %p27, %p28
    %p30 = scmp.ne.s32.totalorder %s22, %s25
    %p31 = scmp.eq.s32.totalorder %s12, 0
    %p32 = por %p30, %p31
    %p33 = scmp.ne.s32.totalorder %s22, %s25
    %p34 = scmp.eq.s32.totalorder %s17, 2
    %p35 = por %p33, %p34
    %p36 = scmp.ne.s32.totalorder %s25, %s26
    %p37 = scmp.eq.s32.totalorder %s17, 0
    %p38 = por %p36, %p37
    %p39 = scmp.ne.s32.totalorder %s25, %s26
    %p40 = scmp.eq.s32.totalorder %s18, 2
    %p41 = por %p39, %p40
    %p43 = scmp.ne.s32.totalorder %s26, %s42
    %p44 = scmp.eq.s32.totalorder %s18, 0
    %p45 = por %p43, %p44
    %s46 = ssub.s32 2, %s12
    %s47 = ssub.s32 2, %s19
    %s48 = ssub.s32 %s46, %s47
    %p49 = scmp.eq.s32.totalorder %s48, 0
    %s51 = sadd.s32 %s50, 1
    %s52 = scalar_select %p49, %s50, %s51
    %p55 = pneg %p49
    %p56 = scmp.eq.s32.totalorder %s12, 2
    %p57 = por %p55, %p56
    %p58 = scmp.ne.s32.totalorder %s50, %s53
    %p59 = scmp.eq.s32.totalorder %s12, 0
    %p60 = por %p58, %p59
    %p61 = scmp.ne.s32.totalorder %s50, %s53
    %p62 = scmp.eq.s32.totalorder %s17, 2
    %p63 = por %p61, %p62
    %p64 = scmp.ne.s32.totalorder %s53, %s54
    %p65 = scmp.eq.s32.totalorder %s17, 0
    %p66 = por %p64, %p65
    %p67 = scmp.ne.s32.totalorder %s53, %s54
    %p68 = scmp.eq.s32.totalorder %s18, 2
    %p69 = por %p67, %p68
    %p71 = scmp.ne.s32.totalorder %s54, %s70
    %p72 = scmp.eq.s32.totalorder %s18, 0
    %p73 = por %p71, %p72
    %s75 = sadd.s32 %s74, 1
    %p78 = scmp.eq.s32.totalorder %s12, 2
    %p79 = scmp.ne.s32.totalorder %s74, %s76
    %p80 = scmp.eq.s32.totalorder %s12, 0
    %p81 = por %p79, %p80
    %p82 = scmp.ne.s32.totalorder %s74, %s76
    %p83 = scmp.eq.s32.totalorder %s17, 2
    %p84 = por %p82, %p83
    %p85 = scmp.ne.s32.totalorder %s76, %s77
    %p86 = scmp.eq.s32.totalorder %s17, 0
    %p87 = por %p85, %p86
    %p88 = scmp.ne.s32.totalorder %s76, %s77
    %p89 = scmp.eq.s32.totalorder %s18, 2
    %p90 = por %p88, %p89
    %p92 = scmp.ne.s32.totalorder %s77, %s91
    %p93 = scmp.eq.s32.totalorder %s18, 0
    %p94 = por %p92, %p93
    %s96 = sadd.s32 %s95, 1
    %p99 = scmp.eq.s32.totalorder %s12, 2
    %p100 = scmp.ne.s32.totalorder %s95, %s97
    %p101 = scmp.eq.s32.totalorder %s12, 0
    %p102 = por %p100, %p101
    %p103 = scmp.ne.s32.totalorder %s95, %s97
    %p104 = scmp.eq.s32.totalorder %s17, 2
    %p105 = por %p103, %p104
    %p106 = scmp.ne.s32.totalorder %s97, %s98
    %p107 = scmp.eq.s32.totalorder %s17, 0
    %p108 = por %p106, %p107
    %p109 = scmp.ne.s32.totalorder %s97, %s98
    %p110 = scmp.eq.s32.totalorder %s18, 2
    %p111 = por %p109, %p110
    %p113 = scmp.ne.s32.totalorder %s98, %s112
    %p114 = scmp.eq.s32.totalorder %s18, 0
    %p115 = por %p113, %p114
    %s116 = ssub.s32 %s12, %s19
    %p117 = scmp.eq.s32.totalorder %s116, 0
    %s119 = sadd.s32 %s118, 1
    %s120 = scalar_select %p117, %s118, %s119
    %p123 = pneg %p117
    %p124 = scmp.eq.s32.totalorder %s12, 2
    %p125 = por %p123, %p124
    %p126 = scmp.ne.s32.totalorder %s118, %s121
    %p127 = scmp.eq.s32.totalorder %s12, 0
    %p128 = por %p126, %p127
    %p129 = scmp.ne.s32.totalorder %s118, %s121
    %p130 = scmp.eq.s32.totalorder %s17, 2
    %p131 = por %p129, %p130
    %p132 = scmp.ne.s32.totalorder %s121, %s122
    %p133 = scmp.eq.s32.totalorder %s17, 0
    %p134 = por %p132, %p133
    %p135 = scmp.ne.s32.totalorder %s121, %s122
    %p136 = scmp.eq.s32.totalorder %s18, 2
    %p137 = por %p135, %p136
    %p139 = scmp.ne.s32.totalorder %s122, %s138
    %p140 = scmp.eq.s32.totalorder %s18, 0
    %p141 = por %p139, %p140
    %s142 = ssub.s32 2, %s12
    %s143 = ssub.s32 2, %s19
    %s144 = ssub.s32 %s142, %s143
    %p145 = scmp.eq.s32.totalorder %s144, 0
    %s147 = sadd.s32 %s146, 1
    %s148 = scalar_select %p145, %s146, %s147
    %p151 = pneg %p145
    %p152 = scmp.eq.s32.totalorder %s12, 2
    %p153 = por %p151, %p152
    %p154 = scmp.ne.s32.totalorder %s146, %s149
    %p155 = scmp.eq.s32.totalorder %s12, 0
    %p156 = por %p154, %p155
    %p157 = scmp.ne.s32.totalorder %s146, %s149
    %p158 = scmp.eq.s32.totalorder %s17, 2
    %p159 = por %p157, %p158
    %p160 = scmp.ne.s32.totalorder %s149, %s150
    %p161 = scmp.eq.s32.totalorder %s17, 0
    %p162 = por %p160, %p161
    %p163 = scmp.ne.s32.totalorder %s149, %s150
    %p164 = scmp.eq.s32.totalorder %s18, 2
    %p165 = por %p163, %p164
    %p167 = scmp.ne.s32.totalorder %s150, %s166
    %p168 = scmp.eq.s32.totalorder %s18, 0
    %p169 = por %p167, %p168
    %p170 = scmp.le.s32.totalorder 1, %s12
    %p171 = scmp.lt.s32.totalorder %s12, 4
    %p172 = pnand %p170, %p171
    %p173 = pneg %p172
    // Predicated region
    $region9: #{gru_cam_forward.2} parent=5 // pred_check
      _
    $region10: #{gru_cam_forward.2} parent=5 // pred_check_branch
      %175 = sbr.rel (%p172) target = $region12
    $region11: #{gru_cam_forward.2} parent=5 // pred_region
      %s176 = ssub.s32 %s12, 1
      // Predicated region
      $region13: #{gru_cam_forward.2} parent=11 // pred_check
        %p177 = pneg %p87
      $region14: #{gru_cam_forward.2} parent=11 // pred_check_branch
        %179 = sbr.rel (%p177) target = $region16
      $region15: #{gru_cam_forward.2} parent=11 // pred_region
        _
      $region16: #{gru_cam_forward.2} parent=11 // pred_fallthru
        _
      // Predicated region
      $region17: #{gru_cam_forward.2} parent=11 // pred_check
        %p180 = pneg %p108
      $region18: #{gru_cam_forward.2} parent=11 // pred_check_branch
        %182 = sbr.rel (%p180) target = $region20
      $region19: #{gru_cam_forward.2} parent=11 // pred_region
        _
      $region20: #{gru_cam_forward.2} parent=11 // pred_fallthru
        _
    $region12: #{gru_cam_forward.2} parent=5 // pred_fallthru
      _
    %p183 = scmp.lt.s32.totalorder %s12, 3
    // Predicated region
    $region21: #{gru_cam_forward.2} parent=5 // pred_check
      %p184 = pneg %p183
    $region22: #{gru_cam_forward.2} parent=5 // pred_check_branch
      %186 = sbr.rel (%p184) target = $region24
    $region23: #{gru_cam_forward.2} parent=5 // pred_region
      // Predicated region
      $region25: #{gru_cam_forward.2} parent=23 // pred_check
        %p187 = pneg %p32
      $region26: #{gru_cam_forward.2} parent=23 // pred_check_branch
        %189 = sbr.rel (%p187) target = $region28
      $region27: #{gru_cam_forward.2} parent=23 // pred_region
        %s190 = smul.u32 3, %s12
        %p191 = scmp.lt.s32.totalorder %s190, 8
        %s192 = scalar_select %p191, %s190, 8
        %s193 = smul.addr %s192, 3
        %s194 = smul.addr %s193, 2
        %s195 = scalar_lea.vmem %s0, %s194
        %s196 = smul.u32 3, %s12
      $region28: #{gru_cam_forward.2} parent=23 // pred_fallthru
        _
      // Predicated region
      $region29: #{gru_cam_forward.2} parent=23 // pred_check
        %p197 = pneg %p60
      $region30: #{gru_cam_forward.2} parent=23 // pred_check_branch
        %199 = sbr.rel (%p197) target = $region32
      $region31: #{gru_cam_forward.2} parent=23 // pred_region
        %s200 = ssub.s32 2, %s12
        %s201 = smul.u32 3, %s200
        %p202 = scmp.lt.s32.totalorder %s201, 8
        %s203 = scalar_select %p202, %s201, 8
        %s204 = smul.addr %s203, 3
        %s205 = sadd.s32 %s204, 27
        %s206 = smul.addr %s205, 2
        %s207 = scalar_lea.vmem %s1, %s206
        %s208 = ssub.s32 2, %s12
        %s209 = smul.u32 3, %s208
      $region32: #{gru_cam_forward.2} parent=23 // pred_fallthru
        _
    $region24: #{gru_cam_forward.2} parent=5 // pred_fallthru
      _
    %p210 = scmp.le.s32.totalorder 1, %s12
    %p211 = scmp.lt.s32.totalorder %s12, 4
    %p212 = pnand %p210, %p211
    %p213 = pneg %p212
    // Predicated region
    $region33: #{gru_cam_forward.2} parent=5 // pred_check
      _
    $region34: #{gru_cam_forward.2} parent=5 // pred_check_branch
      %215 = sbr.rel (%p212) target = $region36
    $region35: #{gru_cam_forward.2} parent=5 // pred_region
      %s216 = ssub.s32 %s12, 1
      %s217 = smul.u32 3, %s17
      %p218 = scmp.lt.s32.totalorder %s217, 8
      %s219 = scalar_select %p218, %s217, 8
      %s220 = smul.addr %s219, 3
      %s221 = smul.addr %s220, 2
      %s222 = scalar_lea.vmem %s0, %s221
      %p223 = pneg %p38
      %p224 = pneg %p35
      %s225 = ssub.s32 2, %s17
      %s226 = smul.u32 3, %s225
      %p227 = scmp.lt.s32.totalorder %s226, 8
      %s228 = scalar_select %p227, %s226, 8
      %s229 = smul.addr %s228, 3
      %s230 = sadd.s32 %s229, 27
      %s231 = smul.addr %s230, 2
      %s232 = scalar_lea.vmem %s1, %s231
      %p233 = pneg %p66
      %p234 = pneg %p63
      %p235 = pneg %p87
      %p236 = pneg %p84
      %p237 = pneg %p108
      %p238 = pneg %p105
      %p239 = pneg %p134
      %p240 = pneg %p131
      %s241 = smul.u32 3, %s17
      %p242 = scmp.lt.s32.totalorder %s241, 8
      %s243 = scalar_select %p242, %s241, 8
      %s244 = smul.addr %s243, 2
      %s245 = scalar_lea.vmem %s4, %s244
      %p246 = pneg %p162
      %p247 = pneg %p159
      %s248 = ssub.s32 2, %s17
      %s249 = smul.u32 3, %s248
      %p250 = scmp.lt.s32.totalorder %s249, 8
      %s251 = scalar_select %p250, %s249, 8
      %s252 = smul.addr %s251, 2
      %s253 = scalar_lea.vmem %s5, %s252
      %s254 = smul.u32 3, %s17
      %p255 = scmp.lt.s32.totalorder %s254, 8
      %s256 = scalar_select %p255, %s254, 8
      %s257 = smul.addr %s256, 3
      %s258 = smul.addr %s257, 2
      %s259 = scalar_lea.vmem %s0, %s258
      %s260 = smul.u32 3, %s17
      %s261 = ssub.s32 2, %s17
      %s262 = smul.u32 3, %s261
      %p263 = scmp.lt.s32.totalorder %s262, 8
      %s264 = scalar_select %p263, %s262, 8
      %s265 = smul.addr %s264, 3
      %s266 = sadd.s32 %s265, 27
      %s267 = smul.addr %s266, 2
      %s268 = scalar_lea.vmem %s1, %s267
      %s269 = ssub.s32 2, %s17
      %s270 = smul.u32 3, %s269
      %s271 = smul.u32 3, %s17
      %p272 = scmp.lt.s32.totalorder %s271, 8
      %s273 = scalar_select %p272, %s271, 8
      %s274 = smul.addr %s273, 2
      %s275 = scalar_lea.vmem %s4, %s274
      %s276 = smul.u32 3, %s17
      %s277 = ssub.s32 2, %s17
      %s278 = smul.u32 3, %s277
      %p279 = scmp.lt.s32.totalorder %s278, 8
      %s280 = scalar_select %p279, %s278, 8
      %s281 = smul.addr %s280, 2
      %s282 = scalar_lea.vmem %s5, %s281
      %s283 = ssub.s32 2, %s17
      %s284 = smul.u32 3, %s283
      %p285 = scmp.eq.s32.totalorder %s17, 0
      // Predicated region
      $region37: #{gru_cam_forward.2} parent=35 // pred_check
        %p286 = pneg %p285
      $region38: #{gru_cam_forward.2} parent=35 // pred_check_branch
        %288 = sbr.rel (%p286) target = $region40
      $region39: #{gru_cam_forward.2} parent=35 // pred_region
        %vm289 = vcmask 254976
        %290 = vst.msk [vmem:[#allocation2] sm:$0x3] %vm289, 0.0
        %291 = vst.msk [vmem:[#allocation2 + $0x2] sm:$0x3] %vm289, 0.0
      $region40: #{gru_cam_forward.2} parent=35 // pred_fallthru
        _
      %v292 = vld [vmem:[%s2] sm:$0xff]
      %v293 = vld [vmem:[%s2 + $0x8] sm:$0xff]
      %v294 = vld [vmem:[%s2 + $0x10] sm:$0xff]
      %v295 = vld [vmem:[%s2 + $0x18] sm:$0xff]
      %s296 = scalar_lea.vmem %s2, 32
      %v297 = vld [vmem:[%s296] sm:$0xff]
      %v298 = vld [vmem:[%s296 + $0x8] sm:$0xff]
      %v299 = vld [vmem:[%s296 + $0x10] sm:$0xff]
      %v300 = vld [vmem:[%s296 + $0x18] sm:$0xff]
      %s301 = scalar_lea.vmem %s2, 64
      %v302 = vld [vmem:[%s301] sm:$0xff]
      %v303 = vld [vmem:[%s301 + $0x8] sm:$0xff]
      %v304 = vld [vmem:[%s301 + $0x10] sm:$0xff]
      %v305 = vld [vmem:[%s301 + $0x18] sm:$0xff]
      %s306 = scalar_lea.vmem %s2, 96
      %v307 = vld [vmem:[%s306] sm:$0xff]
      %v308 = vld [vmem:[%s306 + $0x8] sm:$0xff]
      %v309 = vld [vmem:[%s306 + $0x10] sm:$0xff]
      %v310 = vld [vmem:[%s306 + $0x18] sm:$0xff]
      %s311 = scalar_lea.vmem %s2, 128
      %v312 = vld [vmem:[%s311] sm:$0xff]
      %v313 = vld [vmem:[%s311 + $0x8] sm:$0xff]
      %v314 = vld [vmem:[%s311 + $0x10] sm:$0xff]
      %v315 = vld [vmem:[%s311 + $0x18] sm:$0xff]
      %s316 = scalar_lea.vmem %s2, 160
      %v317 = vld [vmem:[%s316] sm:$0xff]
      %v318 = vld [vmem:[%s316 + $0x8] sm:$0xff]
      %v319 = vld [vmem:[%s316 + $0x10] sm:$0xff]
      %v320 = vld [vmem:[%s316 + $0x18] sm:$0xff]
      %v321 = vld [vmem:[%s3] sm:$0x3]
      %s322 = scalar_lea.vmem %s3, 2
      %v323 = vld [vmem:[%s322] sm:$0x3]
      %v324 = vld [vmem:[#allocation2] sm:$0x3]
      %s325 = scalar_lea.vmem [#allocation2], 2
      %v326 = vld [vmem:[%s325] sm:$0x3]
      %p327 = scmp.gt.s32.totalorder %s17, 0
      %s328 = scalar_select %p327, 1, 0
      %s329 = scvt.s32.f32 %s328
      %vm330 = vcmask 261120
      %v332 = vsel %vm330, %v324, 0
      %334 = vmatprep.subr.mxu0 0.0
      %335 = vmatpush1.msra.mxu0 0.0
      %336 = vmatprep.subr.mxu0 0.0
      %337 = vmatpush1.msra.mxu0 0.0
      %338 = vmatprep.subr.mxu0 0.0
      %339 = vmatpush1.msra.mxu0 0.0
      %340 = vmatprep.subr.mxu0 0.0
      %341 = vmatpush1.msra.mxu0 0.0
      %342 = vmatprep.subr.mxu0 0.0
      %343 = vmatpush1.msra.mxu0 0.0
      %344 = vmatprep.subr.mxu0 0.0
      %345 = vmatpush1.msra.mxu0 0.0
      %346 = vmatprep.subr.mxu0 0.0
      %347 = vmatpush1.msra.mxu0 0.0
      %348 = vmatprep.subr.mxu0 0.0
      %349 = vmatpush1.msra.mxu0 0.0
      %350 = vmatprep.subr.mxu0 0.0
      %351 = vmatpush1.msra.mxu0 0.0
      %352 = vmatprep.subr.mxu0 0.0
      %353 = vmatpush1.msra.mxu0 0.0
      %354 = vmatprep.subr.mxu0 0.0
      %355 = vmatpush1.msra.mxu0 0.0
      %356 = vmatprep.subr.mxu0 0.0
      %357 = vmatpush1.msra.mxu0 0.0
      %358 = vmatprep.subr.mxu0 0.0
      %v359 = vand.u32 %v295, 4294901760
      %360 = vmatpush1.msra.mxu0 %v359
      %361 = vmatprep.subr.mxu0 0.0
      %v362 = vand.u32 %v294, 4294901760
      %363 = vmatpush1.msra.mxu0 %v362
      %364 = vmatprep.subr.mxu0 0.0
      %v365 = vand.u32 %v293, 4294901760
      %366 = vmatpush1.msra.mxu0 %v365
      %367 = vmatprep.subr.mxu0 0.0
      %v368 = vand.u32 %v292, 4294901760
      %369 = vmatpush1.msra.mxu0 %v368
      %370 = vmatprep.subr.mxu0 0.0
      %371 = vmatpush2.msra.mxu0 0.0
      %372 = vmatprep.subr.mxu0 0.0
      %373 = vmatpush2.msra.mxu0 0.0
      %374 = vmatprep.subr.mxu0 0.0
      %375 = vmatpush2.msra.mxu0 0.0
      %376 = vmatprep.subr.mxu0 0.0
      %377 = vmatpush2.msra.mxu0 0.0
      %378 = vmatprep.subr.mxu0 0.0
      %379 = vmatpush2.msra.mxu0 0.0
      %380 = vmatprep.subr.mxu0 0.0
      %381 = vmatpush2.msra.mxu0 0.0
      %382 = vmatprep.subr.mxu0 0.0
      %383 = vmatpush2.msra.mxu0 0.0
      %384 = vmatprep.subr.mxu0 0.0
      %385 = vmatpush2.msra.mxu0 0.0
      %386 = vmatprep.subr.mxu0 0.0
      %387 = vmatpush2.msra.mxu0 0.0
      %388 = vmatprep.subr.mxu0 0.0
      %389 = vmatpush2.msra.mxu0 0.0
      %390 = vmatprep.subr.mxu0 0.0
      %391 = vmatpush2.msra.mxu0 0.0
      %392 = vmatprep.subr.mxu0 0.0
      %393 = vmatpush2.msra.mxu0 0.0
      %394 = vmatprep.subr.mxu0 0.0
      %395 = vmatpush2.msra.mxu0 0.0
      %396 = vmatprep.subr.mxu0 0.0
      %397 = vmatpush2.msra.mxu0 0.0
      %398 = vmatprep.subr.mxu0 0.0
      %399 = vmatpush2.msra.mxu0 0.0
      %400 = vmatprep.subr.mxu0 0.0
      %401 = vmatpush2.msra.mxu0 0.0
      %402 = vmatprep.mubr.f32.mxu0 0.0
      %v403 = vand.u32 %v332, 4294901760
      %v404 = vsub.f32 %v332, %v403
      %v405 = vand.u32 %v404, 4294901760
      %v406 = vsub.f32 %v404, %v405
      %v407 = vand.u32 %v406, 4294901760
      %408 = vmatmul.mubr.f32.gmra.mxu0 %v407
      %v409 = vpop.f32.mrf.mxu0
      %v410 = vadd.f32 0.0, %v409
      %v411 = vpop.f32.mrf.mxu0
      %412 = vdwg.mxu0
      %413 = vmatprep.subr.mxu0 0.0
      %414 = vmatpush1.msra.mxu0 0.0
      %415 = vmatprep.subr.mxu0 0.0
      %416 = vmatpush1.msra.mxu0 0.0
      %417 = vmatprep.subr.mxu0 0.0
      %418 = vmatpush1.msra.mxu0 0.0
      %419 = vmatprep.subr.mxu0 0.0
      %420 = vmatpush1.msra.mxu0 0.0
      %421 = vmatprep.subr.mxu0 0.0
      %422 = vmatpush1.msra.mxu0 0.0
      %423 = vmatprep.subr.mxu0 0.0
      %424 = vmatpush1.msra.mxu0 0.0
      %425 = vmatprep.subr.mxu0 0.0
      %426 = vmatpush1.msra.mxu0 0.0
      %427 = vmatprep.subr.mxu0 0.0
      %428 = vmatpush1.msra.mxu0 0.0
      %429 = vmatprep.subr.mxu0 0.0
      %430 = vmatpush1.msra.mxu0 0.0
      %431 = vmatprep.subr.mxu0 0.0
      %432 = vmatpush1.msra.mxu0 0.0
      %433 = vmatprep.subr.mxu0 0.0
      %434 = vmatpush1.msra.mxu0 0.0
      %435 = vmatprep.subr.mxu0 0.0
      %436 = vmatpush1.msra.mxu0 0.0
      %437 = vmatprep.subr.mxu0 0.0
      %v438 = vand.u32 %v295, 4294901760
      %v439 = vsub.f32 %v295, %v438
      %v440 = vand.u32 %v439, 4294901760
      %v441 = vsub.f32 %v439, %v440
      %v442 = vand.u32 %v441, 4294901760
      %443 = vmatpush1.msra.mxu0 %v442
      %444 = vmatprep.subr.mxu0 0.0
      %v445 = vand.u32 %v294, 4294901760
      %v446 = vsub.f32 %v294, %v445
      %v447 = vand.u32 %v446, 4294901760
      %v448 = vsub.f32 %v446, %v447
      %v449 = vand.u32 %v448, 4294901760
      %450 = vmatpush1.msra.mxu0 %v449
      %451 = vmatprep.subr.mxu0 0.0
      %v452 = vand.u32 %v293, 4294901760
      %v453 = vsub.f32 %v293, %v452
      %v454 = vand.u32 %v453, 4294901760
      %v455 = vsub.f32 %v453, %v454
      %v456 = vand.u32 %v455, 4294901760
      %457 = vmatpush1.msra.mxu0 %v456
      %458 = vmatprep.subr.mxu0 0.0
      %v459 = vand.u32 %v292, 4294901760
      %v460 = vsub.f32 %v292, %v459
      %v461 = vand.u32 %v460, 4294901760
      %v462 = vsub.f32 %v460, %v461
      %v463 = vand.u32 %v462, 4294901760
      %464 = vmatpush1.msra.mxu0 %v463
      %465 = vmatprep.subr.mxu0 0.0
      %466 = vmatpush2.msra.mxu0 0.0
      %467 = vmatprep.subr.mxu0 0.0
      %468 = vmatpush2.msra.mxu0 0.0
      %469 = vmatprep.subr.mxu0 0.0
      %470 = vmatpush2.msra.mxu0 0.0
      %471 = vmatprep.subr.mxu0 0.0
      %472 = vmatpush2.msra.mxu0 0.0
      %473 = vmatprep.subr.mxu0 0.0
      %474 = vmatpush2.msra.mxu0 0.0
      %475 = vmatprep.subr.mxu0 0.0
      %476 = vmatpush2.msra.mxu0 0.0
      %477 = vmatprep.subr.mxu0 0.0
      %478 = vmatpush2.msra.mxu0 0.0
      %479 = vmatprep.subr.mxu0 0.0
      %480 = vmatpush2.msra.mxu0 0.0
      %481 = vmatprep.subr.mxu0 0.0
      %482 = vmatpush2.msra.mxu0 0.0
      %483 = vmatprep.subr.mxu0 0.0
      %484 = vmatpush2.msra.mxu0 0.0
      %485 = vmatprep.subr.mxu0 0.0
      %486 = vmatpush2.msra.mxu0 0.0
      %487 = vmatprep.subr.mxu0 0.0
      %488 = vmatpush2.msra.mxu0 0.0
      %489 = vmatprep.subr.mxu0 0.0
      %490 = vmatpush2.msra.mxu0 0.0
      %491 = vmatprep.subr.mxu0 0.0
      %492 = vmatpush2.msra.mxu0 0.0
      %493 = vmatprep.subr.mxu0 0.0
      %494 = vmatpush2.msra.mxu0 0.0
      %495 = vmatprep.subr.mxu0 0.0
      %496 = vmatpush2.msra.mxu0 0.0
      %497 = vmatprep.mubr.f32.mxu0 0.0
      %v498 = vand.u32 %v332, 4294901760
      %499 = vmatmul.mubr.f32.gmra.mxu0 %v498
      %v500 = vpop.f32.mrf.mxu0
      %v501 = vadd.f32 %v410, %v500
      %v502 = vpop.f32.mrf.mxu0
      %503 = vdwg.mxu0
      %504 = vmatprep.subr.mxu0 0.0
      %505 = vmatpush1.msra.mxu0 0.0
      %506 = vmatprep.subr.mxu0 0.0
      %507 = vmatpush1.msra.mxu0 0.0
      %508 = vmatprep.subr.mxu0 0.0
      %509 = vmatpush1.msra.mxu0 0.0
      %510 = vmatprep.subr.mxu0 0.0
      %511 = vmatpush1.msra.mxu0 0.0
      %512 = vmatprep.subr.mxu0 0.0
      %513 = vmatpush1.msra.mxu0 0.0
      %514 = vmatprep.subr.mxu0 0.0
      %515 = vmatpush1.msra.mxu0 0.0
      %516 = vmatprep.subr.mxu0 0.0
      %517 = vmatpush1.msra.mxu0 0.0
      %518 = vmatprep.subr.mxu0 0.0
      %519 = vmatpush1.msra.mxu0 0.0
      %520 = vmatprep.subr.mxu0 0.0
      %521 = vmatpush1.msra.mxu0 0.0
      %522 = vmatprep.subr.mxu0 0.0
      %523 = vmatpush1.msra.mxu0 0.0
      %524 = vmatprep.subr.mxu0 0.0
      %525 = vmatpush1.msra.mxu0 0.0
      %526 = vmatprep.subr.mxu0 0.0
      %527 = vmatpush1.msra.mxu0 0.0
      %528 = vmatprep.subr.mxu0 0.0
      %v529 = vand.u32 %v295, 4294901760
      %v530 = vsub.f32 %v295, %v529
      %531 = vmatpush1.msra.mxu0 %v530
      %532 = vmatprep.subr.mxu0 0.0
      %v533 = vand.u32 %v294, 4294901760
      %v534 = vsub.f32 %v294, %v533
      %535 = vmatpush1.msra.mxu0 %v534
      %536 = vmatprep.subr.mxu0 0.0
      %v537 = vand.u32 %v293, 4294901760
      %v538 = vsub.f32 %v293, %v537
      %539 = vmatpush1.msra.mxu0 %v538
      %540 = vmatprep.subr.mxu0 0.0
      %v541 = vand.u32 %v292, 4294901760
      %v542 = vsub.f32 %v292, %v541
      %543 = vmatpush1.msra.mxu0 %v542
      %544 = vmatprep.subr.mxu0 0.0
      %545 = vmatpush2.msra.mxu0 0.0
      %546 = vmatprep.subr.mxu0 0.0
      %547 = vmatpush2.msra.mxu0 0.0
      %548 = vmatprep.subr.mxu0 0.0
      %549 = vmatpush2.msra.mxu0 0.0
      %550 = vmatprep.subr.mxu0 0.0
      %551 = vmatpush2.msra.mxu0 0.0
      %552 = vmatprep.subr.mxu0 0.0
      %553 = vmatpush2.msra.mxu0 0.0
      %554 = vmatprep.subr.mxu0 0.0
      %555 = vmatpush2.msra.mxu0 0.0
      %556 = vmatprep.subr.mxu0 0.0
      %557 = vmatpush2.msra.mxu0 0.0
      %558 = vmatprep.subr.mxu0 0.0
      %559 = vmatpush2.msra.mxu0 0.0
      %560 = vmatprep.subr.mxu0 0.0
      %561 = vmatpush2.msra.mxu0 0.0
      %562 = vmatprep.subr.mxu0 0.0
      %563 = vmatpush2.msra.mxu0 0.0
      %564 = vmatprep.subr.mxu0 0.0
      %565 = vmatpush2.msra.mxu0 0.0
      %566 = vmatprep.subr.mxu0 0.0
      %567 = vmatpush2.msra.mxu0 0.0
      %568 = vmatprep.subr.mxu0 0.0
      %569 = vmatpush2.msra.mxu0 0.0
      %570 = vmatprep.subr.mxu0 0.0
      %571 = vmatpush2.msra.mxu0 0.0
      %572 = vmatprep.subr.mxu0 0.0
      %573 = vmatpush2.msra.mxu0 0.0
      %574 = vmatprep.subr.mxu0 0.0
      %575 = vmatpush2.msra.mxu0 0.0
      %576 = vmatprep.mubr.f32.mxu0 0.0
      %v577 = vand.u32 %v332, 4294901760
      %v578 = vsub.f32 %v332, %v577
      %579 = vmatmul.mubr.f32.gmra.mxu0 %v578
      %v580 = vpop.f32.mrf.mxu0
      %v581 = vadd.f32 %v501, %v580
      %v582 = vpop.f32.mrf.mxu0
      %583 = vdwg.mxu0
      %584 = vmatprep.subr.mxu0 0.0
      %585 = vmatpush1.msra.mxu0 0.0
      %586 = vmatprep.subr.mxu0 0.0
      %587 = vmatpush1.msra.mxu0 0.0
      %588 = vmatprep.subr.mxu0 0.0
      %589 = vmatpush1.msra.mxu0 0.0
      %590 = vmatprep.subr.mxu0 0.0
      %591 = vmatpush1.msra.mxu0 0.0
      %592 = vmatprep.subr.mxu0 0.0
      %593 = vmatpush1.msra.mxu0 0.0
      %594 = vmatprep.subr.mxu0 0.0
      %595 = vmatpush1.msra.mxu0 0.0
      %596 = vmatprep.subr.mxu0 0.0
      %597 = vmatpush1.msra.mxu0 0.0
      %598 = vmatprep.subr.mxu0 0.0
      %599 = vmatpush1.msra.mxu0 0.0
      %600 = vmatprep.subr.mxu0 0.0
      %601 = vmatpush1.msra.mxu0 0.0
      %602 = vmatprep.subr.mxu0 0.0
      %603 = vmatpush1.msra.mxu0 0.0
      %604 = vmatprep.subr.mxu0 0.0
      %605 = vmatpush1.msra.mxu0 0.0
      %606 = vmatprep.subr.mxu0 0.0
      %607 = vmatpush1.msra.mxu0 0.0
      %608 = vmatprep.subr.mxu0 0.0
      %v609 = vand.u32 %v295, 4294901760
      %610 = vmatpush1.msra.mxu0 %v609
      %611 = vmatprep.subr.mxu0 0.0
      %v612 = vand.u32 %v294, 4294901760
      %613 = vmatpush1.msra.mxu0 %v612
      %614 = vmatprep.subr.mxu0 0.0
      %v615 = vand.u32 %v293, 4294901760
      %616 = vmatpush1.msra.mxu0 %v615
      %617 = vmatprep.subr.mxu0 0.0
      %v618 = vand.u32 %v292, 4294901760
      %619 = vmatpush1.msra.mxu0 %v618
      %620 = vmatprep.subr.mxu0 0.0
      %621 = vmatpush2.msra.mxu0 0.0
      %622 = vmatprep.subr.mxu0 0.0
      %623 = vmatpush2.msra.mxu0 0.0
      %624 = vmatprep.subr.mxu0 0.0
      %625 = vmatpush2.msra.mxu0 0.0
      %626 = vmatprep.subr.mxu0 0.0
      %627 = vmatpush2.msra.mxu0 0.0
      %628 = vmatprep.subr.mxu0 0.0
      %629 = vmatpush2.msra.mxu0 0.0
      %630 = vmatprep.subr.mxu0 0.0
      %631 = vmatpush2.msra.mxu0 0.0
      %632 = vmatprep.subr.mxu0 0.0
      %633 = vmatpush2.msra.mxu0 0.0
      %634 = vmatprep.subr.mxu0 0.0
      %635 = vmatpush2.msra.mxu0 0.0
      %636 = vmatprep.subr.mxu0 0.0
      %637 = vmatpush2.msra.mxu0 0.0
      %638 = vmatprep.subr.mxu0 0.0
      %639 = vmatpush2.msra.mxu0 0.0
      %640 = vmatprep.subr.mxu0 0.0
      %641 = vmatpush2.msra.mxu0 0.0
      %642 = vmatprep.subr.mxu0 0.0
      %643 = vmatpush2.msra.mxu0 0.0
      %644 = vmatprep.subr.mxu0 0.0
      %645 = vmatpush2.msra.mxu0 0.0
      %646 = vmatprep.subr.mxu0 0.0
      %647 = vmatpush2.msra.mxu0 0.0
      %648 = vmatprep.subr.mxu0 0.0
      %649 = vmatpush2.msra.mxu0 0.0
      %650 = vmatprep.subr.mxu0 0.0
      %651 = vmatpush2.msra.mxu0 0.0
      %652 = vmatprep.mubr.f32.mxu0 0.0
      %v653 = vand.u32 %v332, 4294901760
      %v654 = vsub.f32 %v332, %v653
      %v655 = vand.u32 %v654, 4294901760
      %656 = vmatmul.mubr.f32.gmra.mxu0 %v655
      %v657 = vpop.f32.mrf.mxu0
      %v658 = vadd.f32 %v581, %v657
      %v659 = vpop.f32.mrf.mxu0
      %660 = vdwg.mxu0
      %661 = vmatprep.subr.mxu0 0.0
      %662 = vmatpush1.msra.mxu0 0.0
      %663 = vmatprep.subr.mxu0 0.0
      %664 = vmatpush1.msra.mxu0 0.0
      %665 = vmatprep.subr.mxu0 0.0
      %666 = vmatpush1.msra.mxu0 0.0
      %667 = vmatprep.subr.mxu0 0.0
      %668 = vmatpush1.msra.mxu0 0.0
      %669 = vmatprep.subr.mxu0 0.0
      %670 = vmatpush1.msra.mxu0 0.0
      %671 = vmatprep.subr.mxu0 0.0
      %672 = vmatpush1.msra.mxu0 0.0
      %673 = vmatprep.subr.mxu0 0.0
      %674 = vmatpush1.msra.mxu0 0.0
      %675 = vmatprep.subr.mxu0 0.0
      %676 = vmatpush1.msra.mxu0 0.0
      %677 = vmatprep.subr.mxu0 0.0
      %678 = vmatpush1.msra.mxu0 0.0
      %679 = vmatprep.subr.mxu0 0.0
      %680 = vmatpush1.msra.mxu0 0.0
      %681 = vmatprep.subr.mxu0 0.0
      %682 = vmatpush1.msra.mxu0 0.0
      %683 = vmatprep.subr.mxu0 0.0
      %684 = vmatpush1.msra.mxu0 0.0
      %685 = vmatprep.subr.mxu0 0.0
      %v686 = vand.u32 %v295, 4294901760
      %v687 = vsub.f32 %v295, %v686
      %v688 = vand.u32 %v687, 4294901760
      %689 = vmatpush1.msra.mxu0 %v688
      %690 = vmatprep.subr.mxu0 0.0
      %v691 = vand.u32 %v294, 4294901760
      %v692 = vsub.f32 %v294, %v691
      %v693 = vand.u32 %v692, 4294901760
      %694 = vmatpush1.msra.mxu0 %v693
      %695 = vmatprep.subr.mxu0 0.0
      %v696 = vand.u32 %v293, 4294901760
      %v697 = vsub.f32 %v293, %v696
      %v698 = vand.u32 %v697, 4294901760
      %699 = vmatpush1.msra.mxu0 %v698
      %700 = vmatprep.subr.mxu0 0.0
      %v701 = vand.u32 %v292, 4294901760
      %v702 = vsub.f32 %v292, %v701
      %v703 = vand.u32 %v702, 4294901760
      %704 = vmatpush1.msra.mxu0 %v703
      %705 = vmatprep.subr.mxu0 0.0
      %706 = vmatpush2.msra.mxu0 0.0
      %707 = vmatprep.subr.mxu0 0.0
      %708 = vmatpush2.msra.mxu0 0.0
      %709 = vmatprep.subr.mxu0 0.0
      %710 = vmatpush2.msra.mxu0 0.0
      %711 = vmatprep.subr.mxu0 0.0
      %712 = vmatpush2.msra.mxu0 0.0
      %713 = vmatprep.subr.mxu0 0.0
      %714 = vmatpush2.msra.mxu0 0.0
      %715 = vmatprep.subr.mxu0 0.0
      %716 = vmatpush2.msra.mxu0 0.0
      %717 = vmatprep.subr.mxu0 0.0
      %718 = vmatpush2.msra.mxu0 0.0
      %719 = vmatprep.subr.mxu0 0.0
      %720 = vmatpush2.msra.mxu0 0.0
      %721 = vmatprep.subr.mxu0 0.0
      %722 = vmatpush2.msra.mxu0 0.0
      %723 = vmatprep.subr.mxu0 0.0
      %724 = vmatpush2.msra.mxu0 0.0
      %725 = vmatprep.subr.mxu0 0.0
      %726 = vmatpush2.msra.mxu0 0.0
      %727 = vmatprep.subr.mxu0 0.0
      %728 = vmatpush2.msra.mxu0 0.0
      %729 = vmatprep.subr.mxu0 0.0
      %730 = vmatpush2.msra.mxu0 0.0
      %731 = vmatprep.subr.mxu0 0.0
      %732 = vmatpush2.msra.mxu0 0.0
      %733 = vmatprep.subr.mxu0 0.0
      %734 = vmatpush2.msra.mxu0 0.0
      %735 = vmatprep.subr.mxu0 0.0
      %736 = vmatpush2.msra.mxu0 0.0
      %737 = vmatprep.mubr.f32.mxu0 0.0
      %v738 = vand.u32 %v332, 4294901760
      %739 = vmatmul.mubr.f32.gmra.mxu0 %v738
      %v740 = vpop.f32.mrf.mxu0
      %v741 = vadd.f32 %v658, %v740
      %v742 = vpop.f32.mrf.mxu0
      %743 = vdwg.mxu0
      %744 = vmatprep.subr.mxu0 0.0
      %745 = vmatpush1.msra.mxu0 0.0
      %746 = vmatprep.subr.mxu0 0.0
      %747 = vmatpush1.msra.mxu0 0.0
      %748 = vmatprep.subr.mxu0 0.0
      %749 = vmatpush1.msra.mxu0 0.0
      %750 = vmatprep.subr.mxu0 0.0
      %751 = vmatpush1.msra.mxu0 0.0
      %752 = vmatprep.subr.mxu0 0.0
      %753 = vmatpush1.msra.mxu0 0.0
      %754 = vmatprep.subr.mxu0 0.0
      %755 = vmatpush1.msra.mxu0 0.0
      %756 = vmatprep.subr.mxu0 0.0
      %757 = vmatpush1.msra.mxu0 0.0
      %758 = vmatprep.subr.mxu0 0.0
      %759 = vmatpush1.msra.mxu0 0.0
      %760 = vmatprep.subr.mxu0 0.0
      %761 = vmatpush1.msra.mxu0 0.0
      %762 = vmatprep.subr.mxu0 0.0
      %763 = vmatpush1.msra.mxu0 0.0
      %764 = vmatprep.subr.mxu0 0.0
      %765 = vmatpush1.msra.mxu0 0.0
      %766 = vmatprep.subr.mxu0 0.0
      %767 = vmatpush1.msra.mxu0 0.0
      %768 = vmatprep.subr.mxu0 0.0
      %v769 = vand.u32 %v295, 4294901760
      %770 = vmatpush1.msra.mxu0 %v769
      %771 = vmatprep.subr.mxu0 0.0
      %v772 = vand.u32 %v294, 4294901760
      %773 = vmatpush1.msra.mxu0 %v772
      %774 = vmatprep.subr.mxu0 0.0
      %v775 = vand.u32 %v293, 4294901760
      %776 = vmatpush1.msra.mxu0 %v775
      %777 = vmatprep.subr.mxu0 0.0
      %v778 = vand.u32 %v292, 4294901760
      %779 = vmatpush1.msra.mxu0 %v778
      %780 = vmatprep.subr.mxu0 0.0
      %781 = vmatpush2.msra.mxu0 0.0
      %782 = vmatprep.subr.mxu0 0.0
      %783 = vmatpush2.msra.mxu0 0.0
      %784 = vmatprep.subr.mxu0 0.0
      %785 = vmatpush2.msra.mxu0 0.0
      %786 = vmatprep.subr.mxu0 0.0
      %787 = vmatpush2.msra.mxu0 0.0
      %788 = vmatprep.subr.mxu0 0.0
      %789 = vmatpush2.msra.mxu0 0.0
      %790 = vmatprep.subr.mxu0 0.0
      %791 = vmatpush2.msra.mxu0 0.0
      %792 = vmatprep.subr.mxu0 0.0
      %793 = vmatpush2.msra.mxu0 0.0
      %794 = vmatprep.subr.mxu0 0.0
      %795 = vmatpush2.msra.mxu0 0.0
      %796 = vmatprep.subr.mxu0 0.0
      %797 = vmatpush2.msra.mxu0 0.0
      %798 = vmatprep.subr.mxu0 0.0
      %799 = vmatpush2.msra.mxu0 0.0
      %800 = vmatprep.subr.mxu0 0.0
      %801 = vmatpush2.msra.mxu0 0.0
      %802 = vmatprep.subr.mxu0 0.0
      %803 = vmatpush2.msra.mxu0 0.0
      %804 = vmatprep.subr.mxu0 0.0
      %805 = vmatpush2.msra.mxu0 0.0
      %806 = vmatprep.subr.mxu0 0.0
      %807 = vmatpush2.msra.mxu0 0.0
      %808 = vmatprep.subr.mxu0 0.0
      %809 = vmatpush2.msra.mxu0 0.0
      %810 = vmatprep.subr.mxu0 0.0
      %811 = vmatpush2.msra.mxu0 0.0
      %812 = vmatprep.mubr.f32.mxu0 0.0
      %v813 = vand.u32 %v332, 4294901760
      %814 = vmatmul.mubr.f32.gmra.mxu0 %v813
      %v815 = vpop.f32.mrf.mxu0
      %v816 = vadd.f32 %v741, %v815
      %v817 = vpop.f32.mrf.mxu0
      %818 = vdwg.mxu0
      %819 = vmatprep.subr.mxu0 0.0
      %820 = vmatpush1.msra.mxu0 0.0
      %821 = vmatprep.subr.mxu0 0.0
      %822 = vmatpush1.msra.mxu0 0.0
      %823 = vmatprep.subr.mxu0 0.0
      %824 = vmatpush1.msra.mxu0 0.0
      %825 = vmatprep.subr.mxu0 0.0
      %826 = vmatpush1.msra.mxu0 0.0
      %827 = vmatprep.subr.mxu0 0.0
      %828 = vmatpush1.msra.mxu0 0.0
      %829 = vmatprep.subr.mxu0 0.0
      %830 = vmatpush1.msra.mxu0 0.0
      %831 = vmatprep.subr.mxu0 0.0
      %832 = vmatpush1.msra.mxu0 0.0
      %833 = vmatprep.subr.mxu0 0.0
      %834 = vmatpush1.msra.mxu0 0.0
      %835 = vmatprep.subr.mxu0 0.0
      %836 = vmatpush1.msra.mxu0 0.0
      %837 = vmatprep.subr.mxu0 0.0
      %838 = vmatpush1.msra.mxu0 0.0
      %839 = vmatprep.subr.mxu0 0.0
      %840 = vmatpush1.msra.mxu0 0.0
      %841 = vmatprep.subr.mxu0 0.0
      %842 = vmatpush1.msra.mxu0 0.0
      %843 = vmatprep.subr.mxu0 0.0
      %v844 = vand.u32 %v300, 4294901760
      %845 = vmatpush1.msra.mxu0 %v844
      %846 = vmatprep.subr.mxu0 0.0
      %v847 = vand.u32 %v299, 4294901760
      %848 = vmatpush1.msra.mxu0 %v847
      %849 = vmatprep.subr.mxu0 0.0
      %v850 = vand.u32 %v298, 4294901760
      %851 = vmatpush1.msra.mxu0 %v850
      %852 = vmatprep.subr.mxu0 0.0
      %v853 = vand.u32 %v297, 4294901760
      %854 = vmatpush1.msra.mxu0 %v853
      %855 = vmatprep.subr.mxu0 0.0
      %856 = vmatpush2.msra.mxu0 0.0
      %857 = vmatprep.subr.mxu0 0.0
      %858 = vmatpush2.msra.mxu0 0.0
      %859 = vmatprep.subr.mxu0 0.0
      %860 = vmatpush2.msra.mxu0 0.0
      %861 = vmatprep.subr.mxu0 0.0
      %862 = vmatpush2.msra.mxu0 0.0
      %863 = vmatprep.subr.mxu0 0.0
      %864 = vmatpush2.msra.mxu0 0.0
      %865 = vmatprep.subr.mxu0 0.0
      %866 = vmatpush2.msra.mxu0 0.0
      %867 = vmatprep.subr.mxu0 0.0
      %868 = vmatpush2.msra.mxu0 0.0
      %869 = vmatprep.subr.mxu0 0.0
      %870 = vmatpush2.msra.mxu0 0.0
      %871 = vmatprep.subr.mxu0 0.0
      %872 = vmatpush2.msra.mxu0 0.0
      %873 = vmatprep.subr.mxu0 0.0
      %874 = vmatpush2.msra.mxu0 0.0
      %875 = vmatprep.subr.mxu0 0.0
      %876 = vmatpush2.msra.mxu0 0.0
      %877 = vmatprep.subr.mxu0 0.0
      %878 = vmatpush2.msra.mxu0 0.0
      %879 = vmatprep.subr.mxu0 0.0
      %880 = vmatpush2.msra.mxu0 0.0
      %881 = vmatprep.subr.mxu0 0.0
      %882 = vmatpush2.msra.mxu0 0.0
      %883 = vmatprep.subr.mxu0 0.0
      %884 = vmatpush2.msra.mxu0 0.0
      %885 = vmatprep.subr.mxu0 0.0
      %886 = vmatpush2.msra.mxu0 0.0
      %887 = vmatprep.mubr.f32.mxu0 0.0
      %v888 = vand.u32 %v332, 4294901760
      %v889 = vsub.f32 %v332, %v888
      %v890 = vand.u32 %v889, 4294901760
      %v891 = vsub.f32 %v889, %v890
      %v892 = vand.u32 %v891, 4294901760
      %893 = vmatmul.mubr.f32.gmra.mxu0 %v892
      %v894 = vpop.f32.mrf.mxu0
      %v895 = vadd.f32 0.0, %v894
      %v896 = vpop.f32.mrf.mxu0
      %897 = vdwg.mxu0
      %898 = vmatprep.subr.mxu0 0.0
      %899 = vmatpush1.msra.mxu0 0.0
      %900 = vmatprep.subr.mxu0 0.0
      %901 = vmatpush1.msra.mxu0 0.0
      %902 = vmatprep.subr.mxu0 0.0
      %903 = vmatpush1.msra.mxu0 0.0
      %904 = vmatprep.subr.mxu0 0.0
      %905 = vmatpush1.msra.mxu0 0.0
      %906 = vmatprep.subr.mxu0 0.0
      %907 = vmatpush1.msra.mxu0 0.0
      %908 = vmatprep.subr.mxu0 0.0
      %909 = vmatpush1.msra.mxu0 0.0
      %910 = vmatprep.subr.mxu0 0.0
      %911 = vmatpush1.msra.mxu0 0.0
      %912 = vmatprep.subr.mxu0 0.0
      %913 = vmatpush1.msra.mxu0 0.0
      %914 = vmatprep.subr.mxu0 0.0
      %915 = vmatpush1.msra.mxu0 0.0
      %916 = vmatprep.subr.mxu0 0.0
      %917 = vmatpush1.msra.mxu0 0.0
      %918 = vmatprep.subr.mxu0 0.0
      %919 = vmatpush1.msra.mxu0 0.0
      %920 = vmatprep.subr.mxu0 0.0
      %921 = vmatpush1.msra.mxu0 0.0
      %922 = vmatprep.subr.mxu0 0.0
      %v923 = vand.u32 %v300, 4294901760
      %v924 = vsub.f32 %v300, %v923
      %v925 = vand.u32 %v924, 4294901760
      %v926 = vsub.f32 %v924, %v925
      %v927 = vand.u32 %v926, 4294901760
      %928 = vmatpush1.msra.mxu0 %v927
      %929 = vmatprep.subr.mxu0 0.0
      %v930 = vand.u32 %v299, 4294901760
      %v931 = vsub.f32 %v299, %v930
      %v932 = vand.u32 %v931, 4294901760
      %v933 = vsub.f32 %v931, %v932
      %v934 = vand.u32 %v933, 4294901760
      %935 = vmatpush1.msra.mxu0 %v934
      %936 = vmatprep.subr.mxu0 0.0
      %v937 = vand.u32 %v298, 4294901760
      %v938 = vsub.f32 %v298, %v937
      %v939 = vand.u32 %v938, 4294901760
      %v940 = vsub.f32 %v938, %v939
      %v941 = vand.u32 %v940, 4294901760
      %942 = vmatpush1.msra.mxu0 %v941
      %943 = vmatprep.subr.mxu0 0.0
      %v944 = vand.u32 %v297, 4294901760
      %v945 = vsub.f32 %v297, %v944
      %v946 = vand.u32 %v945, 4294901760
      %v947 = vsub.f32 %v945, %v946
      %v948 = vand.u32 %v947, 4294901760
      %949 = vmatpush1.msra.mxu0 %v948
      %950 = vmatprep.subr.mxu0 0.0
      %951 = vmatpush2.msra.mxu0 0.0
      %952 = vmatprep.subr.mxu0 0.0
      %953 = vmatpush2.msra.mxu0 0.0
      %954 = vmatprep.subr.mxu0 0.0
      %955 = vmatpush2.msra.mxu0 0.0
      %956 = vmatprep.subr.mxu0 0.0
      %957 = vmatpush2.msra.mxu0 0.0
      %958 = vmatprep.subr.mxu0 0.0
      %959 = vmatpush2.msra.mxu0 0.0
      %960 = vmatprep.subr.mxu0 0.0
      %961 = vmatpush2.msra.mxu0 0.0
      %962 = vmatprep.subr.mxu0 0.0
      %963 = vmatpush2.msra.mxu0 0.0
      %964 = vmatprep.subr.mxu0 0.0
      %965 = vmatpush2.msra.mxu0 0.0
      %966 = vmatprep.subr.mxu0 0.0
      %967 = vmatpush2.msra.mxu0 0.0
      %968 = vmatprep.subr.mxu0 0.0
      %969 = vmatpush2.msra.mxu0 0.0
      %970 = vmatprep.subr.mxu0 0.0
      %971 = vmatpush2.msra.mxu0 0.0
      %972 = vmatprep.subr.mxu0 0.0
      %973 = vmatpush2.msra.mxu0 0.0
      %974 = vmatprep.subr.mxu0 0.0
      %975 = vmatpush2.msra.mxu0 0.0
      %976 = vmatprep.subr.mxu0 0.0
      %977 = vmatpush2.msra.mxu0 0.0
      %978 = vmatprep.subr.mxu0 0.0
      %979 = vmatpush2.msra.mxu0 0.0
      %980 = vmatprep.subr.mxu0 0.0
      %981 = vmatpush2.msra.mxu0 0.0
      %982 = vmatprep.mubr.f32.mxu0 0.0
      %v983 = vand.u32 %v332, 4294901760
      %984 = vmatmul.mubr.f32.gmra.mxu0 %v983
      %v985 = vpop.f32.mrf.mxu0
      %v986 = vadd.f32 %v895, %v985
      %v987 = vpop.f32.mrf.mxu0
      %988 = vdwg.mxu0
      %989 = vmatprep.subr.mxu0 0.0
      %990 = vmatpush1.msra.mxu0 0.0
      %991 = vmatprep.subr.mxu0 0.0
      %992 = vmatpush1.msra.mxu0 0.0
      %993 = vmatprep.subr.mxu0 0.0
      %994 = vmatpush1.msra.mxu0 0.0
      %995 = vmatprep.subr.mxu0 0.0
      %996 = vmatpush1.msra.mxu0 0.0
      %997 = vmatprep.subr.mxu0 0.0
      %998 = vmatpush1.msra.mxu0 0.0
      %999 = vmatprep.subr.mxu0 0.0
      %1000 = vmatpush1.msra.mxu0 0.0
      %1001 = vmatprep.subr.mxu0 0.0
      %1002 = vmatpush1.msra.mxu0 0.0
      %1003 = vmatprep.subr.mxu0 0.0
      %1004 = vmatpush1.msra.mxu0 0.0
      %1005 = vmatprep.subr.mxu0 0.0
      %1006 = vmatpush1.msra.mxu0 0.0
      %1007 = vmatprep.subr.mxu0 0.0
      %1008 = vmatpush1.msra.mxu0 0.0
      %1009 = vmatprep.subr.mxu0 0.0
      %1010 = vmatpush1.msra.mxu0 0.0
      %1011 = vmatprep.subr.mxu0 0.0
      %1012 = vmatpush1.msra.mxu0 0.0
      %1013 = vmatprep.subr.mxu0 0.0
      %v1014 = vand.u32 %v300, 4294901760
      %v1015 = vsub.f32 %v300, %v1014
      %1016 = vmatpush1.msra.mxu0 %v1015
      %1017 = vmatprep.subr.mxu0 0.0
      %v1018 = vand.u32 %v299, 4294901760
      %v1019 = vsub.f32 %v299, %v1018
      %1020 = vmatpush1.msra.mxu0 %v1019
      %1021 = vmatprep.subr.mxu0 0.0
      %v1022 = vand.u32 %v298, 4294901760
      %v1023 = vsub.f32 %v298, %v1022
      %1024 = vmatpush1.msra.mxu0 %v1023
      %1025 = vmatprep.subr.mxu0 0.0
      %v1026 = vand.u32 %v297, 4294901760
      %v1027 = vsub.f32 %v297, %v1026
      %1028 = vmatpush1.msra.mxu0 %v1027
      %1029 = vmatprep.subr.mxu0 0.0
      %1030 = vmatpush2.msra.mxu0 0.0
      %1031 = vmatprep.subr.mxu0 0.0
      %1032 = vmatpush2.msra.mxu0 0.0
      %1033 = vmatprep.subr.mxu0 0.0
      %1034 = vmatpush2.msra.mxu0 0.0
      %1035 = vmatprep.subr.mxu0 0.0
      %1036 = vmatpush2.msra.mxu0 0.0
      %1037 = vmatprep.subr.mxu0 0.0
      %1038 = vmatpush2.msra.mxu0 0.0
      %1039 = vmatprep.subr.mxu0 0.0
      %1040 = vmatpush2.msra.mxu0 0.0
      %1041 = vmatprep.subr.mxu0 0.0
      %1042 = vmatpush2.msra.mxu0 0.0
      %1043 = vmatprep.subr.mxu0 0.0
      %1044 = vmatpush2.msra.mxu0 0.0
      %1045 = vmatprep.subr.mxu0 0.0
      %1046 = vmatpush2.msra.mxu0 0.0
      %1047 = vmatprep.subr.mxu0 0.0
      %1048 = vmatpush2.msra.mxu0 0.0
      %1049 = vmatprep.subr.mxu0 0.0
      %1050 = vmatpush2.msra.mxu0 0.0
      %1051 = vmatprep.subr.mxu0 0.0
      %1052 = vmatpush2.msra.mxu0 0.0
      %1053 = vmatprep.subr.mxu0 0.0
      %1054 = vmatpush2.msra.mxu0 0.0
      %1055 = vmatprep.subr.mxu0 0.0
      %1056 = vmatpush2.msra.mxu0 0.0
      %1057 = vmatprep.subr.mxu0 0.0
      %1058 = vmatpush2.msra.mxu0 0.0
      %1059 = vmatprep.subr.mxu0 0.0
      %1060 = vmatpush2.msra.mxu0 0.0
      %1061 = vmatprep.mubr.f32.mxu0 0.0
      %v1062 = vand.u32 %v332, 4294901760
      %v1063 = vsub.f32 %v332, %v1062
      %1064 = vmatmul.mubr.f32.gmra.mxu0 %v1063
      %v1065 = vpop.f32.mrf.mxu0
      %v1066 = vadd.f32 %v986, %v1065
      %v1067 = vpop.f32.mrf.mxu0
      %1068 = vdwg.mxu0
      %1069 = vmatprep.subr.mxu0 0.0
      %1070 = vmatpush1.msra.mxu0 0.0
      %1071 = vmatprep.subr.mxu0 0.0
      %1072 = vmatpush1.msra.mxu0 0.0
      %1073 = vmatprep.subr.mxu0 0.0
      %1074 = vmatpush1.msra.mxu0 0.0
      %1075 = vmatprep.subr.mxu0 0.0
      %1076 = vmatpush1.msra.mxu0 0.0
      %1077 = vmatprep.subr.mxu0 0.0
      %1078 = vmatpush1.msra.mxu0 0.0
      %1079 = vmatprep.subr.mxu0 0.0
      %1080 = vmatpush1.msra.mxu0 0.0
      %1081 = vmatprep.subr.mxu0 0.0
      %1082 = vmatpush1.msra.mxu0 0.0
      %1083 = vmatprep.subr.mxu0 0.0
      %1084 = vmatpush1.msra.mxu0 0.0
      %1085 = vmatprep.subr.mxu0 0.0
      %1086 = vmatpush1.msra.mxu0 0.0
      %1087 = vmatprep.subr.mxu0 0.0
      %1088 = vmatpush1.msra.mxu0 0.0
      %1089 = vmatprep.subr.mxu0 0.0
      %1090 = vmatpush1.msra.mxu0 0.0
      %1091 = vmatprep.subr.mxu0 0.0
      %1092 = vmatpush1.msra.mxu0 0.0
      %1093 = vmatprep.subr.mxu0 0.0
      %v1094 = vand.u32 %v300, 4294901760
      %1095 = vmatpush1.msra.mxu0 %v1094
      %1096 = vmatprep.subr.mxu0 0.0
      %v1097 = vand.u32 %v299, 4294901760
      %1098 = vmatpush1.msra.mxu0 %v1097
      %1099 = vmatprep.subr.mxu0 0.0
      %v1100 = vand.u32 %v298, 4294901760
      %1101 = vmatpush1.msra.mxu0 %v1100
      %1102 = vmatprep.subr.mxu0 0.0
      %v1103 = vand.u32 %v297, 4294901760
      %1104 = vmatpush1.msra.mxu0 %v1103
      %1105 = vmatprep.subr.mxu0 0.0
      %1106 = vmatpush2.msra.mxu0 0.0
      %1107 = vmatprep.subr.mxu0 0.0
      %1108 = vmatpush2.msra.mxu0 0.0
      %1109 = vmatprep.subr.mxu0 0.0
      %1110 = vmatpush2.msra.mxu0 0.0
      %1111 = vmatprep.subr.mxu0 0.0
      %1112 = vmatpush2.msra.mxu0 0.0
      %1113 = vmatprep.subr.mxu0 0.0
      %1114 = vmatpush2.msra.mxu0 0.0
      %1115 = vmatprep.subr.mxu0 0.0
      %1116 = vmatpush2.msra.mxu0 0.0
      %1117 = vmatprep.subr.mxu0 0.0
      %1118 = vmatpush2.msra.mxu0 0.0
      %1119 = vmatprep.subr.mxu0 0.0
      %1120 = vmatpush2.msra.mxu0 0.0
      %1121 = vmatprep.subr.mxu0 0.0
      %1122 = vmatpush2.msra.mxu0 0.0
      %1123 = vmatprep.subr.mxu0 0.0
      %1124 = vmatpush2.msra.mxu0 0.0
      %1125 = vmatprep.subr.mxu0 0.0
      %1126 = vmatpush2.msra.mxu0 0.0
      %1127 = vmatprep.subr.mxu0 0.0
      %1128 = vmatpush2.msra.mxu0 0.0
      %1129 = vmatprep.subr.mxu0 0.0
      %1130 = vmatpush2.msra.mxu0 0.0
      %1131 = vmatprep.subr.mxu0 0.0
      %1132 = vmatpush2.msra.mxu0 0.0
      %1133 = vmatprep.subr.mxu0 0.0
      %1134 = vmatpush2.msra.mxu0 0.0
      %1135 = vmatprep.subr.mxu0 0.0
      %1136 = vmatpush2.msra.mxu0 0.0
      %1137 = vmatprep.mubr.f32.mxu0 0.0
      %v1138 = vand.u32 %v332, 4294901760
      %v1139 = vsub.f32 %v332, %v1138
      %v1140 = vand.u32 %v1139, 4294901760
      %1141 = vmatmul.mubr.f32.gmra.mxu0 %v1140
      %v1142 = vpop.f32.mrf.mxu0
      %v1143 = vadd.f32 %v1066, %v1142
      %v1144 = vpop.f32.mrf.mxu0
      %1145 = vdwg.mxu0
      %1146 = vmatprep.subr.mxu0 0.0
      %1147 = vmatpush1.msra.mxu0 0.0
      %1148 = vmatprep.subr.mxu0 0.0
      %1149 = vmatpush1.msra.mxu0 0.0
      %1150 = vmatprep.subr.mxu0 0.0
      %1151 = vmatpush1.msra.mxu0 0.0
      %1152 = vmatprep.subr.mxu0 0.0
      %1153 = vmatpush1.msra.mxu0 0.0
      %1154 = vmatprep.subr.mxu0 0.0
      %1155 = vmatpush1.msra.mxu0 0.0
      %1156 = vmatprep.subr.mxu0 0.0
      %1157 = vmatpush1.msra.mxu0 0.0
      %1158 = vmatprep.subr.mxu0 0.0
      %1159 = vmatpush1.msra.mxu0 0.0
      %1160 = vmatprep.subr.mxu0 0.0
      %1161 = vmatpush1.msra.mxu0 0.0
      %1162 = vmatprep.subr.mxu0 0.0
      %1163 = vmatpush1.msra.mxu0 0.0
      %1164 = vmatprep.subr.mxu0 0.0
      %1165 = vmatpush1.msra.mxu0 0.0
      %1166 = vmatprep.subr.mxu0 0.0
      %1167 = vmatpush1.msra.mxu0 0.0
      %1168 = vmatprep.subr.mxu0 0.0
      %1169 = vmatpush1.msra.mxu0 0.0
      %1170 = vmatprep.subr.mxu0 0.0
      %v1171 = vand.u32 %v300, 4294901760
      %v1172 = vsub.f32 %v300, %v1171
      %v1173 = vand.u32 %v1172, 4294901760
      %1174 = vmatpush1.msra.mxu0 %v1173
      %1175 = vmatprep.subr.mxu0 0.0
      %v1176 = vand.u32 %v299, 4294901760
      %v1177 = vsub.f32 %v299, %v1176
      %v1178 = vand.u32 %v1177, 4294901760
      %1179 = vmatpush1.msra.mxu0 %v1178
      %1180 = vmatprep.subr.mxu0 0.0
      %v1181 = vand.u32 %v298, 4294901760
      %v1182 = vsub.f32 %v298, %v1181
      %v1183 = vand.u32 %v1182, 4294901760
      %1184 = vmatpush1.msra.mxu0 %v1183
      %1185 = vmatprep.subr.mxu0 0.0
      %v1186 = vand.u32 %v297, 4294901760
      %v1187 = vsub.f32 %v297, %v1186
      %v1188 = vand.u32 %v1187, 4294901760
      %1189 = vmatpush1.msra.mxu0 %v1188
      %1190 = vmatprep.subr.mxu0 0.0
      %1191 = vmatpush2.msra.mxu0 0.0
      %1192 = vmatprep.subr.mxu0 0.0
      %1193 = vmatpush2.msra.mxu0 0.0
      %1194 = vmatprep.subr.mxu0 0.0
      %1195 = vmatpush2.msra.mxu0 0.0
      %1196 = vmatprep.subr.mxu0 0.0
      %1197 = vmatpush2.msra.mxu0 0.0
      %1198 = vmatprep.subr.mxu0 0.0
      %1199 = vmatpush2.msra.mxu0 0.0
      %1200 = vmatprep.subr.mxu0 0.0
      %1201 = vmatpush2.msra.mxu0 0.0
      %1202 = vmatprep.subr.mxu0 0.0
      %1203 = vmatpush2.msra.mxu0 0.0
      %1204 = vmatprep.subr.mxu0 0.0
      %1205 = vmatpush2.msra.mxu0 0.0
      %1206 = vmatprep.subr.mxu0 0.0
      %1207 = vmatpush2.msra.mxu0 0.0
      %1208 = vmatprep.subr.mxu0 0.0
      %1209 = vmatpush2.msra.mxu0 0.0
      %1210 = vmatprep.subr.mxu0 0.0
      %1211 = vmatpush2.msra.mxu0 0.0
      %1212 = vmatprep.subr.mxu0 0.0
      %1213 = vmatpush2.msra.mxu0 0.0
      %1214 = vmatprep.subr.mxu0 0.0
      %1215 = vmatpush2.msra.mxu0 0.0
      %1216 = vmatprep.subr.mxu0 0.0
      %1217 = vmatpush2.msra.mxu0 0.0
      %1218 = vmatprep.subr.mxu0 0.0
      %1219 = vmatpush2.msra.mxu0 0.0
      %1220 = vmatprep.subr.mxu0 0.0
      %1221 = vmatpush2.msra.mxu0 0.0
      %1222 = vmatprep.mubr.f32.mxu0 0.0
      %v1223 = vand.u32 %v332, 4294901760
      %1224 = vmatmul.mubr.f32.gmra.mxu0 %v1223
      %v1225 = vpop.f32.mrf.mxu0
      %v1226 = vadd.f32 %v1143, %v1225
      %v1227 = vpop.f32.mrf.mxu0
      %1228 = vdwg.mxu0
      %1229 = vmatprep.subr.mxu0 0.0
      %1230 = vmatpush1.msra.mxu0 0.0
      %1231 = vmatprep.subr.mxu0 0.0
      %1232 = vmatpush1.msra.mxu0 0.0
      %1233 = vmatprep.subr.mxu0 0.0
      %1234 = vmatpush1.msra.mxu0 0.0
      %1235 = vmatprep.subr.mxu0 0.0
      %1236 = vmatpush1.msra.mxu0 0.0
      %1237 = vmatprep.subr.mxu0 0.0
      %1238 = vmatpush1.msra.mxu0 0.0
      %1239 = vmatprep.subr.mxu0 0.0
      %1240 = vmatpush1.msra.mxu0 0.0
      %1241 = vmatprep.subr.mxu0 0.0
      %1242 = vmatpush1.msra.mxu0 0.0
      %1243 = vmatprep.subr.mxu0 0.0
      %1244 = vmatpush1.msra.mxu0 0.0
      %1245 = vmatprep.subr.mxu0 0.0
      %1246 = vmatpush1.msra.mxu0 0.0
      %1247 = vmatprep.subr.mxu0 0.0
      %1248 = vmatpush1.msra.mxu0 0.0
      %1249 = vmatprep.subr.mxu0 0.0
      %1250 = vmatpush1.msra.mxu0 0.0
      %1251 = vmatprep.subr.mxu0 0.0
      %1252 = vmatpush1.msra.mxu0 0.0
      %1253 = vmatprep.subr.mxu0 0.0
      %v1254 = vand.u32 %v300, 4294901760
      %1255 = vmatpush1.msra.mxu0 %v1254
      %1256 = vmatprep.subr.mxu0 0.0
      %v1257 = vand.u32 %v299, 4294901760
      %1258 = vmatpush1.msra.mxu0 %v1257
      %1259 = vmatprep.subr.mxu0 0.0
      %v1260 = vand.u32 %v298, 4294901760
      %1261 = vmatpush1.msra.mxu0 %v1260
      %1262 = vmatprep.subr.mxu0 0.0
      %v1263 = vand.u32 %v297, 4294901760
      %1264 = vmatpush1.msra.mxu0 %v1263
      %1265 = vmatprep.subr.mxu0 0.0
      %1266 = vmatpush2.msra.mxu0 0.0
      %1267 = vmatprep.subr.mxu0 0.0
      %1268 = vmatpush2.msra.mxu0 0.0
      %1269 = vmatprep.subr.mxu0 0.0
      %1270 = vmatpush2.msra.mxu0 0.0
      %1271 = vmatprep.subr.mxu0 0.0
      %1272 = vmatpush2.msra.mxu0 0.0
      %1273 = vmatprep.subr.mxu0 0.0
      %1274 = vmatpush2.msra.mxu0 0.0
      %1275 = vmatprep.subr.mxu0 0.0
      %1276 = vmatpush2.msra.mxu0 0.0
      %1277 = vmatprep.subr.mxu0 0.0
      %1278 = vmatpush2.msra.mxu0 0.0
      %1279 = vmatprep.subr.mxu0 0.0
      %1280 = vmatpush2.msra.mxu0 0.0
      %1281 = vmatprep.subr.mxu0 0.0
      %1282 = vmatpush2.msra.mxu0 0.0
      %1283 = vmatprep.subr.mxu0 0.0
      %1284 = vmatpush2.msra.mxu0 0.0
      %1285 = vmatprep.subr.mxu0 0.0
      %1286 = vmatpush2.msra.mxu0 0.0
      %1287 = vmatprep.subr.mxu0 0.0
      %1288 = vmatpush2.msra.mxu0 0.0
      %1289 = vmatprep.subr.mxu0 0.0
      %1290 = vmatpush2.msra.mxu0 0.0
      %1291 = vmatprep.subr.mxu0 0.0
      %1292 = vmatpush2.msra.mxu0 0.0
      %1293 = vmatprep.subr.mxu0 0.0
      %1294 = vmatpush2.msra.mxu0 0.0
      %1295 = vmatprep.subr.mxu0 0.0
      %1296 = vmatpush2.msra.mxu0 0.0
      %1297 = vmatprep.mubr.f32.mxu0 0.0
      %v1298 = vand.u32 %v332, 4294901760
      %1299 = vmatmul.mubr.f32.gmra.mxu0 %v1298
      %v1300 = vpop.f32.mrf.mxu0
      %v1301 = vadd.f32 %v1226, %v1300
      %v1302 = vpop.f32.mrf.mxu0
      %1303 = vdwg.mxu0
      %v1304 = vld [vmem:[%s259] sm:$0x3]
      %v1305 = vadd.f32 %v1304, %v816
      %v1306 = vxor.u32 %v1305, 2147483648
      %v1307 = vmul.f32 %v1306, 1.442695
      %v1308 = vpow.pop %v1307
      %v1309 = vadd.f32 %v1308, 1.0
      %v1310 = vrcp.pop %v1309
      %v1311 = vmul.f32 1.0, %v1310
      %s1312 = scalar_lea.vmem %s259, 2
      %v1313 = vld [vmem:[%s1312] sm:$0x3]
      %v1314 = vadd.f32 %v1313, %v1301
      %v1315 = vxor.u32 %v1314, 2147483648
      %v1316 = vmul.f32 %v1315, 1.442695
      %v1317 = vpow.pop %v1316
      %v1318 = vadd.f32 %v1317, 1.0
      %v1319 = vrcp.pop %v1318
      %v1320 = vmul.f32 1.0, %v1319
      %s1321 = scalar_lea.vmem %s259, 4
      %v1322 = vld [vmem:[%s1321] sm:$0x3]
      %1323 = vmatprep.subr.mxu0 0.0
      %1324 = vmatpush1.msra.mxu0 0.0
      %1325 = vmatprep.subr.mxu0 0.0
      %1326 = vmatpush1.msra.mxu0 0.0
      %1327 = vmatprep.subr.mxu0 0.0
      %1328 = vmatpush1.msra.mxu0 0.0
      %1329 = vmatprep.subr.mxu0 0.0
      %1330 = vmatpush1.msra.mxu0 0.0
      %1331 = vmatprep.subr.mxu0 0.0
      %1332 = vmatpush1.msra.mxu0 0.0
      %1333 = vmatprep.subr.mxu0 0.0
      %1334 = vmatpush1.msra.mxu0 0.0
      %1335 = vmatprep.subr.mxu0 0.0
      %1336 = vmatpush1.msra.mxu0 0.0
      %1337 = vmatprep.subr.mxu0 0.0
      %1338 = vmatpush1.msra.mxu0 0.0
      %1339 = vmatprep.subr.mxu0 0.0
      %1340 = vmatpush1.msra.mxu0 0.0
      %1341 = vmatprep.subr.mxu0 0.0
      %1342 = vmatpush1.msra.mxu0 0.0
      %1343 = vmatprep.subr.mxu0 0.0
      %1344 = vmatpush1.msra.mxu0 0.0
      %1345 = vmatprep.subr.mxu0 0.0
      %1346 = vmatpush1.msra.mxu0 0.0
      %1347 = vmatprep.subr.mxu0 0.0
      %v1348 = vand.u32 %v305, 4294901760
      %1349 = vmatpush1.msra.mxu0 %v1348
      %1350 = vmatprep.subr.mxu0 0.0
      %v1351 = vand.u32 %v304, 4294901760
      %1352 = vmatpush1.msra.mxu0 %v1351
      %1353 = vmatprep.subr.mxu0 0.0
      %v1354 = vand.u32 %v303, 4294901760
      %1355 = vmatpush1.msra.mxu0 %v1354
      %1356 = vmatprep.subr.mxu0 0.0
      %v1357 = vand.u32 %v302, 4294901760
      %1358 = vmatpush1.msra.mxu0 %v1357
      %1359 = vmatprep.subr.mxu0 0.0
      %1360 = vmatpush2.msra.mxu0 0.0
      %1361 = vmatprep.subr.mxu0 0.0
      %1362 = vmatpush2.msra.mxu0 0.0
      %1363 = vmatprep.subr.mxu0 0.0
      %1364 = vmatpush2.msra.mxu0 0.0
      %1365 = vmatprep.subr.mxu0 0.0
      %1366 = vmatpush2.msra.mxu0 0.0
      %1367 = vmatprep.subr.mxu0 0.0
      %1368 = vmatpush2.msra.mxu0 0.0
      %1369 = vmatprep.subr.mxu0 0.0
      %1370 = vmatpush2.msra.mxu0 0.0
      %1371 = vmatprep.subr.mxu0 0.0
      %1372 = vmatpush2.msra.mxu0 0.0
      %1373 = vmatprep.subr.mxu0 0.0
      %1374 = vmatpush2.msra.mxu0 0.0
      %1375 = vmatprep.subr.mxu0 0.0
      %1376 = vmatpush2.msra.mxu0 0.0
      %1377 = vmatprep.subr.mxu0 0.0
      %1378 = vmatpush2.msra.mxu0 0.0
      %1379 = vmatprep.subr.mxu0 0.0
      %1380 = vmatpush2.msra.mxu0 0.0
      %1381 = vmatprep.subr.mxu0 0.0
      %1382 = vmatpush2.msra.mxu0 0.0
      %1383 = vmatprep.subr.mxu0 0.0
      %1384 = vmatpush2.msra.mxu0 0.0
      %1385 = vmatprep.subr.mxu0 0.0
      %1386 = vmatpush2.msra.mxu0 0.0
      %1387 = vmatprep.subr.mxu0 0.0
      %1388 = vmatpush2.msra.mxu0 0.0
      %1389 = vmatprep.subr.mxu0 0.0
      %1390 = vmatpush2.msra.mxu0 0.0
      %1391 = vmatprep.mubr.f32.mxu0 0.0
      %v1392 = vand.u32 %v332, 4294901760
      %v1393 = vsub.f32 %v332, %v1392
      %v1394 = vand.u32 %v1393, 4294901760
      %v1395 = vsub.f32 %v1393, %v1394
      %v1396 = vand.u32 %v1395, 4294901760
      %1397 = vmatmul.mubr.f32.gmra.mxu0 %v1396
      %v1398 = vpop.f32.mrf.mxu0
      %v1399 = vadd.f32 %v321, %v1398
      %v1400 = vpop.f32.mrf.mxu0
      %1401 = vdwg.mxu0
      %1402 = vmatprep.subr.mxu0 0.0
      %1403 = vmatpush1.msra.mxu0 0.0
      %1404 = vmatprep.subr.mxu0 0.0
      %1405 = vmatpush1.msra.mxu0 0.0
      %1406 = vmatprep.subr.mxu0 0.0
      %1407 = vmatpush1.msra.mxu0 0.0
      %1408 = vmatprep.subr.mxu0 0.0
      %1409 = vmatpush1.msra.mxu0 0.0
      %1410 = vmatprep.subr.mxu0 0.0
      %1411 = vmatpush1.msra.mxu0 0.0
      %1412 = vmatprep.subr.mxu0 0.0
      %1413 = vmatpush1.msra.mxu0 0.0
      %1414 = vmatprep.subr.mxu0 0.0
      %1415 = vmatpush1.msra.mxu0 0.0
      %1416 = vmatprep.subr.mxu0 0.0
      %1417 = vmatpush1.msra.mxu0 0.0
      %1418 = vmatprep.subr.mxu0 0.0
      %1419 = vmatpush1.msra.mxu0 0.0
      %1420 = vmatprep.subr.mxu0 0.0
      %1421 = vmatpush1.msra.mxu0 0.0
      %1422 = vmatprep.subr.mxu0 0.0
      %1423 = vmatpush1.msra.mxu0 0.0
      %1424 = vmatprep.subr.mxu0 0.0
      %1425 = vmatpush1.msra.mxu0 0.0
      %1426 = vmatprep.subr.mxu0 0.0
      %v1427 = vand.u32 %v305, 4294901760
      %v1428 = vsub.f32 %v305, %v1427
      %v1429 = vand.u32 %v1428, 4294901760
      %v1430 = vsub.f32 %v1428, %v1429
      %v1431 = vand.u32 %v1430, 4294901760
      %1432 = vmatpush1.msra.mxu0 %v1431
      %1433 = vmatprep.subr.mxu0 0.0
      %v1434 = vand.u32 %v304, 4294901760
      %v1435 = vsub.f32 %v304, %v1434
      %v1436 = vand.u32 %v1435, 4294901760
      %v1437 = vsub.f32 %v1435, %v1436
      %v1438 = vand.u32 %v1437, 4294901760
      %1439 = vmatpush1.msra.mxu0 %v1438
      %1440 = vmatprep.subr.mxu0 0.0
      %v1441 = vand.u32 %v303, 4294901760
      %v1442 = vsub.f32 %v303, %v1441
      %v1443 = vand.u32 %v1442, 4294901760
      %v1444 = vsub.f32 %v1442, %v1443
      %v1445 = vand.u32 %v1444, 4294901760
      %1446 = vmatpush1.msra.mxu0 %v1445
      %1447 = vmatprep.subr.mxu0 0.0
      %v1448 = vand.u32 %v302, 4294901760
      %v1449 = vsub.f32 %v302, %v1448
      %v1450 = vand.u32 %v1449, 4294901760
      %v1451 = vsub.f32 %v1449, %v1450
      %v1452 = vand.u32 %v1451, 4294901760
      %1453 = vmatpush1.msra.mxu0 %v1452
      %1454 = vmatprep.subr.mxu0 0.0
      %1455 = vmatpush2.msra.mxu0 0.0
      %1456 = vmatprep.subr.mxu0 0.0
      %1457 = vmatpush2.msra.mxu0 0.0
      %1458 = vmatprep.subr.mxu0 0.0
      %1459 = vmatpush2.msra.mxu0 0.0
      %1460 = vmatprep.subr.mxu0 0.0
      %1461 = vmatpush2.msra.mxu0 0.0
      %1462 = vmatprep.subr.mxu0 0.0
      %1463 = vmatpush2.msra.mxu0 0.0
      %1464 = vmatprep.subr.mxu0 0.0
      %1465 = vmatpush2.msra.mxu0 0.0
      %1466 = vmatprep.subr.mxu0 0.0
      %1467 = vmatpush2.msra.mxu0 0.0
      %1468 = vmatprep.subr.mxu0 0.0
      %1469 = vmatpush2.msra.mxu0 0.0
      %1470 = vmatprep.subr.mxu0 0.0
      %1471 = vmatpush2.msra.mxu0 0.0
      %1472 = vmatprep.subr.mxu0 0.0
      %1473 = vmatpush2.msra.mxu0 0.0
      %1474 = vmatprep.subr.mxu0 0.0
      %1475 = vmatpush2.msra.mxu0 0.0
      %1476 = vmatprep.subr.mxu0 0.0
      %1477 = vmatpush2.msra.mxu0 0.0
      %1478 = vmatprep.subr.mxu0 0.0
      %1479 = vmatpush2.msra.mxu0 0.0
      %1480 = vmatprep.subr.mxu0 0.0
      %1481 = vmatpush2.msra.mxu0 0.0
      %1482 = vmatprep.subr.mxu0 0.0
      %1483 = vmatpush2.msra.mxu0 0.0
      %1484 = vmatprep.subr.mxu0 0.0
      %1485 = vmatpush2.msra.mxu0 0.0
      %1486 = vmatprep.mubr.f32.mxu0 0.0
      %v1487 = vand.u32 %v332, 4294901760
      %1488 = vmatmul.mubr.f32.gmra.mxu0 %v1487
      %v1489 = vpop.f32.mrf.mxu0
      %v1490 = vadd.f32 %v1399, %v1489
      %v1491 = vpop.f32.mrf.mxu0
      %1492 = vdwg.mxu0
      %1493 = vmatprep.subr.mxu0 0.0
      %1494 = vmatpush1.msra.mxu0 0.0
      %1495 = vmatprep.subr.mxu0 0.0
      %1496 = vmatpush1.msra.mxu0 0.0
      %1497 = vmatprep.subr.mxu0 0.0
      %1498 = vmatpush1.msra.mxu0 0.0
      %1499 = vmatprep.subr.mxu0 0.0
      %1500 = vmatpush1.msra.mxu0 0.0
      %1501 = vmatprep.subr.mxu0 0.0
      %1502 = vmatpush1.msra.mxu0 0.0
      %1503 = vmatprep.subr.mxu0 0.0
      %1504 = vmatpush1.msra.mxu0 0.0
      %1505 = vmatprep.subr.mxu0 0.0
      %1506 = vmatpush1.msra.mxu0 0.0
      %1507 = vmatprep.subr.mxu0 0.0
      %1508 = vmatpush1.msra.mxu0 0.0
      %1509 = vmatprep.subr.mxu0 0.0
      %1510 = vmatpush1.msra.mxu0 0.0
      %1511 = vmatprep.subr.mxu0 0.0
      %1512 = vmatpush1.msra.mxu0 0.0
      %1513 = vmatprep.subr.mxu0 0.0
      %1514 = vmatpush1.msra.mxu0 0.0
      %1515 = vmatprep.subr.mxu0 0.0
      %1516 = vmatpush1.msra.mxu0 0.0
      %1517 = vmatprep.subr.mxu0 0.0
      %v1518 = vand.u32 %v305, 4294901760
      %v1519 = vsub.f32 %v305, %v1518
      %1520 = vmatpush1.msra.mxu0 %v1519
      %1521 = vmatprep.subr.mxu0 0.0
      %v1522 = vand.u32 %v304, 4294901760
      %v1523 = vsub.f32 %v304, %v1522
      %1524 = vmatpush1.msra.mxu0 %v1523
      %1525 = vmatprep.subr.mxu0 0.0
      %v1526 = vand.u32 %v303, 4294901760
      %v1527 = vsub.f32 %v303, %v1526
      %1528 = vmatpush1.msra.mxu0 %v1527
      %1529 = vmatprep.subr.mxu0 0.0
      %v1530 = vand.u32 %v302, 4294901760
      %v1531 = vsub.f32 %v302, %v1530
      %1532 = vmatpush1.msra.mxu0 %v1531
      %1533 = vmatprep.subr.mxu0 0.0
      %1534 = vmatpush2.msra.mxu0 0.0
      %1535 = vmatprep.subr.mxu0 0.0
      %1536 = vmatpush2.msra.mxu0 0.0
      %1537 = vmatprep.subr.mxu0 0.0
      %1538 = vmatpush2.msra.mxu0 0.0
      %1539 = vmatprep.subr.mxu0 0.0
      %1540 = vmatpush2.msra.mxu0 0.0
      %1541 = vmatprep.subr.mxu0 0.0
      %1542 = vmatpush2.msra.mxu0 0.0
      %1543 = vmatprep.subr.mxu0 0.0
      %1544 = vmatpush2.msra.mxu0 0.0
      %1545 = vmatprep.subr.mxu0 0.0
      %1546 = vmatpush2.msra.mxu0 0.0
      %1547 = vmatprep.subr.mxu0 0.0
      %1548 = vmatpush2.msra.mxu0 0.0
      %1549 = vmatprep.subr.mxu0 0.0
      %1550 = vmatpush2.msra.mxu0 0.0
      %1551 = vmatprep.subr.mxu0 0.0
      %1552 = vmatpush2.msra.mxu0 0.0
      %1553 = vmatprep.subr.mxu0 0.0
      %1554 = vmatpush2.msra.mxu0 0.0
      %1555 = vmatprep.subr.mxu0 0.0
      %1556 = vmatpush2.msra.mxu0 0.0
      %1557 = vmatprep.subr.mxu0 0.0
      %1558 = vmatpush2.msra.mxu0 0.0
      %1559 = vmatprep.subr.mxu0 0.0
      %1560 = vmatpush2.msra.mxu0 0.0
      %1561 = vmatprep.subr.mxu0 0.0
      %1562 = vmatpush2.msra.mxu0 0.0
      %1563 = vmatprep.subr.mxu0 0.0
      %1564 = vmatpush2.msra.mxu0 0.0
      %1565 = vmatprep.mubr.f32.mxu0 0.0
      %v1566 = vand.u32 %v332, 4294901760
      %v1567 = vsub.f32 %v332, %v1566
      %1568 = vmatmul.mubr.f32.gmra.mxu0 %v1567
      %v1569 = vpop.f32.mrf.mxu0
      %v1570 = vadd.f32 %v1490, %v1569
      %v1571 = vpop.f32.mrf.mxu0
      %1572 = vdwg.mxu0
      %1573 = vmatprep.subr.mxu0 0.0
      %1574 = vmatpush1.msra.mxu0 0.0
      %1575 = vmatprep.subr.mxu0 0.0
      %1576 = vmatpush1.msra.mxu0 0.0
      %1577 = vmatprep.subr.mxu0 0.0
      %1578 = vmatpush1.msra.mxu0 0.0
      %1579 = vmatprep.subr.mxu0 0.0
      %1580 = vmatpush1.msra.mxu0 0.0
      %1581 = vmatprep.subr.mxu0 0.0
      %1582 = vmatpush1.msra.mxu0 0.0
      %1583 = vmatprep.subr.mxu0 0.0
      %1584 = vmatpush1.msra.mxu0 0.0
      %1585 = vmatprep.subr.mxu0 0.0
      %1586 = vmatpush1.msra.mxu0 0.0
      %1587 = vmatprep.subr.mxu0 0.0
      %1588 = vmatpush1.msra.mxu0 0.0
      %1589 = vmatprep.subr.mxu0 0.0
      %1590 = vmatpush1.msra.mxu0 0.0
      %1591 = vmatprep.subr.mxu0 0.0
      %1592 = vmatpush1.msra.mxu0 0.0
      %1593 = vmatprep.subr.mxu0 0.0
      %1594 = vmatpush1.msra.mxu0 0.0
      %1595 = vmatprep.subr.mxu0 0.0
      %1596 = vmatpush1.msra.mxu0 0.0
      %1597 = vmatprep.subr.mxu0 0.0
      %v1598 = vand.u32 %v305, 4294901760
      %1599 = vmatpush1.msra.mxu0 %v1598
      %1600 = vmatprep.subr.mxu0 0.0
      %v1601 = vand.u32 %v304, 4294901760
      %1602 = vmatpush1.msra.mxu0 %v1601
      %1603 = vmatprep.subr.mxu0 0.0
      %v1604 = vand.u32 %v303, 4294901760
      %1605 = vmatpush1.msra.mxu0 %v1604
      %1606 = vmatprep.subr.mxu0 0.0
      %v1607 = vand.u32 %v302, 4294901760
      %1608 = vmatpush1.msra.mxu0 %v1607
      %1609 = vmatprep.subr.mxu0 0.0
      %1610 = vmatpush2.msra.mxu0 0.0
      %1611 = vmatprep.subr.mxu0 0.0
      %1612 = vmatpush2.msra.mxu0 0.0
      %1613 = vmatprep.subr.mxu0 0.0
      %1614 = vmatpush2.msra.mxu0 0.0
      %1615 = vmatprep.subr.mxu0 0.0
      %1616 = vmatpush2.msra.mxu0 0.0
      %1617 = vmatprep.subr.mxu0 0.0
      %1618 = vmatpush2.msra.mxu0 0.0
      %1619 = vmatprep.subr.mxu0 0.0
      %1620 = vmatpush2.msra.mxu0 0.0
      %1621 = vmatprep.subr.mxu0 0.0
      %1622 = vmatpush2.msra.mxu0 0.0
      %1623 = vmatprep.subr.mxu0 0.0
      %1624 = vmatpush2.msra.mxu0 0.0
      %1625 = vmatprep.subr.mxu0 0.0
      %1626 = vmatpush2.msra.mxu0 0.0
      %1627 = vmatprep.subr.mxu0 0.0
      %1628 = vmatpush2.msra.mxu0 0.0
      %1629 = vmatprep.subr.mxu0 0.0
      %1630 = vmatpush2.msra.mxu0 0.0
      %1631 = vmatprep.subr.mxu0 0.0
      %1632 = vmatpush2.msra.mxu0 0.0
      %1633 = vmatprep.subr.mxu0 0.0
      %1634 = vmatpush2.msra.mxu0 0.0
      %1635 = vmatprep.subr.mxu0 0.0
      %1636 = vmatpush2.msra.mxu0 0.0
      %1637 = vmatprep.subr.mxu0 0.0
      %1638 = vmatpush2.msra.mxu0 0.0
      %1639 = vmatprep.subr.mxu0 0.0
      %1640 = vmatpush2.msra.mxu0 0.0
      %1641 = vmatprep.mubr.f32.mxu0 0.0
      %v1642 = vand.u32 %v332, 4294901760
      %v1643 = vsub.f32 %v332, %v1642
      %v1644 = vand.u32 %v1643, 4294901760
      %1645 = vmatmul.mubr.f32.gmra.mxu0 %v1644
      %v1646 = vpop.f32.mrf.mxu0
      %v1647 = vadd.f32 %v1570, %v1646
      %v1648 = vpop.f32.mrf.mxu0
      %1649 = vdwg.mxu0
      %1650 = vmatprep.subr.mxu0 0.0
      %1651 = vmatpush1.msra.mxu0 0.0
      %1652 = vmatprep.subr.mxu0 0.0
      %1653 = vmatpush1.msra.mxu0 0.0
      %1654 = vmatprep.subr.mxu0 0.0
      %1655 = vmatpush1.msra.mxu0 0.0
      %1656 = vmatprep.subr.mxu0 0.0
      %1657 = vmatpush1.msra.mxu0 0.0
      %1658 = vmatprep.subr.mxu0 0.0
      %1659 = vmatpush1.msra.mxu0 0.0
      %1660 = vmatprep.subr.mxu0 0.0
      %1661 = vmatpush1.msra.mxu0 0.0
      %1662 = vmatprep.subr.mxu0 0.0
      %1663 = vmatpush1.msra.mxu0 0.0
      %1664 = vmatprep.subr.mxu0 0.0
      %1665 = vmatpush1.msra.mxu0 0.0
      %1666 = vmatprep.subr.mxu0 0.0
      %1667 = vmatpush1.msra.mxu0 0.0
      %1668 = vmatprep.subr.mxu0 0.0
      %1669 = vmatpush1.msra.mxu0 0.0
      %1670 = vmatprep.subr.mxu0 0.0
      %1671 = vmatpush1.msra.mxu0 0.0
      %1672 = vmatprep.subr.mxu0 0.0
      %1673 = vmatpush1.msra.mxu0 0.0
      %1674 = vmatprep.subr.mxu0 0.0
      %v1675 = vand.u32 %v305, 4294901760
      %v1676 = vsub.f32 %v305, %v1675
      %v1677 = vand.u32 %v1676, 4294901760
      %1678 = vmatpush1.msra.mxu0 %v1677
      %1679 = vmatprep.subr.mxu0 0.0
      %v1680 = vand.u32 %v304, 4294901760
      %v1681 = vsub.f32 %v304, %v1680
      %v1682 = vand.u32 %v1681, 4294901760
      %1683 = vmatpush1.msra.mxu0 %v1682
      %1684 = vmatprep.subr.mxu0 0.0
      %v1685 = vand.u32 %v303, 4294901760
      %v1686 = vsub.f32 %v303, %v1685
      %v1687 = vand.u32 %v1686, 4294901760
      %1688 = vmatpush1.msra.mxu0 %v1687
      %1689 = vmatprep.subr.mxu0 0.0
      %v1690 = vand.u32 %v302, 4294901760
      %v1691 = vsub.f32 %v302, %v1690
      %v1692 = vand.u32 %v1691, 4294901760
      %1693 = vmatpush1.msra.mxu0 %v1692
      %1694 = vmatprep.subr.mxu0 0.0
      %1695 = vmatpush2.msra.mxu0 0.0
      %1696 = vmatprep.subr.mxu0 0.0
      %1697 = vmatpush2.msra.mxu0 0.0
      %1698 = vmatprep.subr.mxu0 0.0
      %1699 = vmatpush2.msra.mxu0 0.0
      %1700 = vmatprep.subr.mxu0 0.0
      %1701 = vmatpush2.msra.mxu0 0.0
      %1702 = vmatprep.subr.mxu0 0.0
      %1703 = vmatpush2.msra.mxu0 0.0
      %1704 = vmatprep.subr.mxu0 0.0
      %1705 = vmatpush2.msra.mxu0 0.0
      %1706 = vmatprep.subr.mxu0 0.0
      %1707 = vmatpush2.msra.mxu0 0.0
      %1708 = vmatprep.subr.mxu0 0.0
      %1709 = vmatpush2.msra.mxu0 0.0
      %1710 = vmatprep.subr.mxu0 0.0
      %1711 = vmatpush2.msra.mxu0 0.0
      %1712 = vmatprep.subr.mxu0 0.0
      %1713 = vmatpush2.msra.mxu0 0.0
      %1714 = vmatprep.subr.mxu0 0.0
      %1715 = vmatpush2.msra.mxu0 0.0
      %1716 = vmatprep.subr.mxu0 0.0
      %1717 = vmatpush2.msra.mxu0 0.0
      %1718 = vmatprep.subr.mxu0 0.0
      %1719 = vmatpush2.msra.mxu0 0.0
      %1720 = vmatprep.subr.mxu0 0.0
      %1721 = vmatpush2.msra.mxu0 0.0
      %1722 = vmatprep.subr.mxu0 0.0
      %1723 = vmatpush2.msra.mxu0 0.0
      %1724 = vmatprep.subr.mxu0 0.0
      %1725 = vmatpush2.msra.mxu0 0.0
      %1726 = vmatprep.mubr.f32.mxu0 0.0
      %v1727 = vand.u32 %v332, 4294901760
      %1728 = vmatmul.mubr.f32.gmra.mxu0 %v1727
      %v1729 = vpop.f32.mrf.mxu0
      %v1730 = vadd.f32 %v1647, %v1729
      %v1731 = vpop.f32.mrf.mxu0
      %1732 = vdwg.mxu0
      %1733 = vmatprep.subr.mxu0 0.0
      %1734 = vmatpush1.msra.mxu0 0.0
      %1735 = vmatprep.subr.mxu0 0.0
      %1736 = vmatpush1.msra.mxu0 0.0
      %1737 = vmatprep.subr.mxu0 0.0
      %1738 = vmatpush1.msra.mxu0 0.0
      %1739 = vmatprep.subr.mxu0 0.0
      %1740 = vmatpush1.msra.mxu0 0.0
      %1741 = vmatprep.subr.mxu0 0.0
      %1742 = vmatpush1.msra.mxu0 0.0
      %1743 = vmatprep.subr.mxu0 0.0
      %1744 = vmatpush1.msra.mxu0 0.0
      %1745 = vmatprep.subr.mxu0 0.0
      %1746 = vmatpush1.msra.mxu0 0.0
      %1747 = vmatprep.subr.mxu0 0.0
      %1748 = vmatpush1.msra.mxu0 0.0
      %1749 = vmatprep.subr.mxu0 0.0
      %1750 = vmatpush1.msra.mxu0 0.0
      %1751 = vmatprep.subr.mxu0 0.0
      %1752 = vmatpush1.msra.mxu0 0.0
      %1753 = vmatprep.subr.mxu0 0.0
      %1754 = vmatpush1.msra.mxu0 0.0
      %1755 = vmatprep.subr.mxu0 0.0
      %1756 = vmatpush1.msra.mxu0 0.0
      %1757 = vmatprep.subr.mxu0 0.0
      %v1758 = vand.u32 %v305, 4294901760
      %1759 = vmatpush1.msra.mxu0 %v1758
      %1760 = vmatprep.subr.mxu0 0.0
      %v1761 = vand.u32 %v304, 4294901760
      %1762 = vmatpush1.msra.mxu0 %v1761
      %1763 = vmatprep.subr.mxu0 0.0
      %v1764 = vand.u32 %v303, 4294901760
      %1765 = vmatpush1.msra.mxu0 %v1764
      %1766 = vmatprep.subr.mxu0 0.0
      %v1767 = vand.u32 %v302, 4294901760
      %1768 = vmatpush1.msra.mxu0 %v1767
      %1769 = vmatprep.subr.mxu0 0.0
      %1770 = vmatpush2.msra.mxu0 0.0
      %1771 = vmatprep.subr.mxu0 0.0
      %1772 = vmatpush2.msra.mxu0 0.0
      %1773 = vmatprep.subr.mxu0 0.0
      %1774 = vmatpush2.msra.mxu0 0.0
      %1775 = vmatprep.subr.mxu0 0.0
      %1776 = vmatpush2.msra.mxu0 0.0
      %1777 = vmatprep.subr.mxu0 0.0
      %1778 = vmatpush2.msra.mxu0 0.0
      %1779 = vmatprep.subr.mxu0 0.0
      %1780 = vmatpush2.msra.mxu0 0.0
      %1781 = vmatprep.subr.mxu0 0.0
      %1782 = vmatpush2.msra.mxu0 0.0
      %1783 = vmatprep.subr.mxu0 0.0
      %1784 = vmatpush2.msra.mxu0 0.0
      %1785 = vmatprep.subr.mxu0 0.0
      %1786 = vmatpush2.msra.mxu0 0.0
      %1787 = vmatprep.subr.mxu0 0.0
      %1788 = vmatpush2.msra.mxu0 0.0
      %1789 = vmatprep.subr.mxu0 0.0
      %1790 = vmatpush2.msra.mxu0 0.0
      %1791 = vmatprep.subr.mxu0 0.0
      %1792 = vmatpush2.msra.mxu0 0.0
      %1793 = vmatprep.subr.mxu0 0.0
      %1794 = vmatpush2.msra.mxu0 0.0
      %1795 = vmatprep.subr.mxu0 0.0
      %1796 = vmatpush2.msra.mxu0 0.0
      %1797 = vmatprep.subr.mxu0 0.0
      %1798 = vmatpush2.msra.mxu0 0.0
      %1799 = vmatprep.subr.mxu0 0.0
      %1800 = vmatpush2.msra.mxu0 0.0
      %1801 = vmatprep.mubr.f32.mxu0 0.0
      %v1802 = vand.u32 %v332, 4294901760
      %1803 = vmatmul.mubr.f32.gmra.mxu0 %v1802
      %v1804 = vpop.f32.mrf.mxu0
      %v1805 = vadd.f32 %v1730, %v1804
      %v1806 = vpop.f32.mrf.mxu0
      %1807 = vdwg.mxu0
      %v1808 = vmul.f32 %v1311, %v1805
      %v1809 = vadd.f32 %v1322, %v1808
      %v1810 = vtanh.pop %v1809
      %v1811 = vsub.f32 1.0, %v1320
      %v1812 = vmul.f32 %v1811, %v1810
      %v1813 = vmul.f32 %v1320, %v324
      %v1814 = vadd.f32 %v1812, %v1813
      %vm1815 = vcmask 254976
      %1816 = vst.msk [vmem:[%s275] sm:$0x3] %vm1815, %v1814
      %v1818 = vsel %vm330, %v326, 0
      %1820 = vmatprep.subr.mxu0 0.0
      %1821 = vmatpush1.msra.mxu0 0.0
      %1822 = vmatprep.subr.mxu0 0.0
      %1823 = vmatpush1.msra.mxu0 0.0
      %1824 = vmatprep.subr.mxu0 0.0
      %1825 = vmatpush1.msra.mxu0 0.0
      %1826 = vmatprep.subr.mxu0 0.0
      %1827 = vmatpush1.msra.mxu0 0.0
      %1828 = vmatprep.subr.mxu0 0.0
      %1829 = vmatpush1.msra.mxu0 0.0
      %1830 = vmatprep.subr.mxu0 0.0
      %1831 = vmatpush1.msra.mxu0 0.0
      %1832 = vmatprep.subr.mxu0 0.0
      %1833 = vmatpush1.msra.mxu0 0.0
      %1834 = vmatprep.subr.mxu0 0.0
      %1835 = vmatpush1.msra.mxu0 0.0
      %1836 = vmatprep.subr.mxu0 0.0
      %1837 = vmatpush1.msra.mxu0 0.0
      %1838 = vmatprep.subr.mxu0 0.0
      %1839 = vmatpush1.msra.mxu0 0.0
      %1840 = vmatprep.subr.mxu0 0.0
      %1841 = vmatpush1.msra.mxu0 0.0
      %1842 = vmatprep.subr.mxu0 0.0
      %1843 = vmatpush1.msra.mxu0 0.0
      %1844 = vmatprep.subr.mxu0 0.0
      %v1845 = vand.u32 %v310, 4294901760
      %1846 = vmatpush1.msra.mxu0 %v1845
      %1847 = vmatprep.subr.mxu0 0.0
      %v1848 = vand.u32 %v309, 4294901760
      %1849 = vmatpush1.msra.mxu0 %v1848
      %1850 = vmatprep.subr.mxu0 0.0
      %v1851 = vand.u32 %v308, 4294901760
      %1852 = vmatpush1.msra.mxu0 %v1851
      %1853 = vmatprep.subr.mxu0 0.0
      %v1854 = vand.u32 %v307, 4294901760
      %1855 = vmatpush1.msra.mxu0 %v1854
      %1856 = vmatprep.subr.mxu0 0.0
      %1857 = vmatpush2.msra.mxu0 0.0
      %1858 = vmatprep.subr.mxu0 0.0
      %1859 = vmatpush2.msra.mxu0 0.0
      %1860 = vmatprep.subr.mxu0 0.0
      %1861 = vmatpush2.msra.mxu0 0.0
      %1862 = vmatprep.subr.mxu0 0.0
      %1863 = vmatpush2.msra.mxu0 0.0
      %1864 = vmatprep.subr.mxu0 0.0
      %1865 = vmatpush2.msra.mxu0 0.0
      %1866 = vmatprep.subr.mxu0 0.0
      %1867 = vmatpush2.msra.mxu0 0.0
      %1868 = vmatprep.subr.mxu0 0.0
      %1869 = vmatpush2.msra.mxu0 0.0
      %1870 = vmatprep.subr.mxu0 0.0
      %1871 = vmatpush2.msra.mxu0 0.0
      %1872 = vmatprep.subr.mxu0 0.0
      %1873 = vmatpush2.msra.mxu0 0.0
      %1874 = vmatprep.subr.mxu0 0.0
      %1875 = vmatpush2.msra.mxu0 0.0
      %1876 = vmatprep.subr.mxu0 0.0
      %1877 = vmatpush2.msra.mxu0 0.0
      %1878 = vmatprep.subr.mxu0 0.0
      %1879 = vmatpush2.msra.mxu0 0.0
      %1880 = vmatprep.subr.mxu0 0.0
      %1881 = vmatpush2.msra.mxu0 0.0
      %1882 = vmatprep.subr.mxu0 0.0
      %1883 = vmatpush2.msra.mxu0 0.0
      %1884 = vmatprep.subr.mxu0 0.0
      %1885 = vmatpush2.msra.mxu0 0.0
      %1886 = vmatprep.subr.mxu0 0.0
      %1887 = vmatpush2.msra.mxu0 0.0
      %1888 = vmatprep.mubr.f32.mxu0 0.0
      %v1889 = vand.u32 %v1818, 4294901760
      %v1890 = vsub.f32 %v1818, %v1889
      %v1891 = vand.u32 %v1890, 4294901760
      %v1892 = vsub.f32 %v1890, %v1891
      %v1893 = vand.u32 %v1892, 4294901760
      %1894 = vmatmul.mubr.f32.gmra.mxu0 %v1893
      %v1895 = vpop.f32.mrf.mxu0
      %v1896 = vadd.f32 0.0, %v1895
      %v1897 = vpop.f32.mrf.mxu0
      %1898 = vdwg.mxu0
      %1899 = vmatprep.subr.mxu0 0.0
      %1900 = vmatpush1.msra.mxu0 0.0
      %1901 = vmatprep.subr.mxu0 0.0
      %1902 = vmatpush1.msra.mxu0 0.0
      %1903 = vmatprep.subr.mxu0 0.0
      %1904 = vmatpush1.msra.mxu0 0.0
      %1905 = vmatprep.subr.mxu0 0.0
      %1906 = vmatpush1.msra.mxu0 0.0
      %1907 = vmatprep.subr.mxu0 0.0
      %1908 = vmatpush1.msra.mxu0 0.0
      %1909 = vmatprep.subr.mxu0 0.0
      %1910 = vmatpush1.msra.mxu0 0.0
      %1911 = vmatprep.subr.mxu0 0.0
      %1912 = vmatpush1.msra.mxu0 0.0
      %1913 = vmatprep.subr.mxu0 0.0
      %1914 = vmatpush1.msra.mxu0 0.0
      %1915 = vmatprep.subr.mxu0 0.0
      %1916 = vmatpush1.msra.mxu0 0.0
      %1917 = vmatprep.subr.mxu0 0.0
      %1918 = vmatpush1.msra.mxu0 0.0
      %1919 = vmatprep.subr.mxu0 0.0
      %1920 = vmatpush1.msra.mxu0 0.0
      %1921 = vmatprep.subr.mxu0 0.0
      %1922 = vmatpush1.msra.mxu0 0.0
      %1923 = vmatprep.subr.mxu0 0.0
      %v1924 = vand.u32 %v310, 4294901760
      %v1925 = vsub.f32 %v310, %v1924
      %v1926 = vand.u32 %v1925, 4294901760
      %v1927 = vsub.f32 %v1925, %v1926
      %v1928 = vand.u32 %v1927, 4294901760
      %1929 = vmatpush1.msra.mxu0 %v1928
      %1930 = vmatprep.subr.mxu0 0.0
      %v1931 = vand.u32 %v309, 4294901760
      %v1932 = vsub.f32 %v309, %v1931
      %v1933 = vand.u32 %v1932, 4294901760
      %v1934 = vsub.f32 %v1932, %v1933
      %v1935 = vand.u32 %v1934, 4294901760
      %1936 = vmatpush1.msra.mxu0 %v1935
      %1937 = vmatprep.subr.mxu0 0.0
      %v1938 = vand.u32 %v308, 4294901760
      %v1939 = vsub.f32 %v308, %v1938
      %v1940 = vand.u32 %v1939, 4294901760
      %v1941 = vsub.f32 %v1939, %v1940
      %v1942 = vand.u32 %v1941, 4294901760
      %1943 = vmatpush1.msra.mxu0 %v1942
      %1944 = vmatprep.subr.mxu0 0.0
      %v1945 = vand.u32 %v307, 4294901760
      %v1946 = vsub.f32 %v307, %v1945
      %v1947 = vand.u32 %v1946, 4294901760
      %v1948 = vsub.f32 %v1946, %v1947
      %v1949 = vand.u32 %v1948, 4294901760
      %1950 = vmatpush1.msra.mxu0 %v1949
      %1951 = vmatprep.subr.mxu0 0.0
      %1952 = vmatpush2.msra.mxu0 0.0
      %1953 = vmatprep.subr.mxu0 0.0
      %1954 = vmatpush2.msra.mxu0 0.0
      %1955 = vmatprep.subr.mxu0 0.0
      %1956 = vmatpush2.msra.mxu0 0.0
      %1957 = vmatprep.subr.mxu0 0.0
      %1958 = vmatpush2.msra.mxu0 0.0
      %1959 = vmatprep.subr.mxu0 0.0
      %1960 = vmatpush2.msra.mxu0 0.0
      %1961 = vmatprep.subr.mxu0 0.0
      %1962 = vmatpush2.msra.mxu0 0.0
      %1963 = vmatprep.subr.mxu0 0.0
      %1964 = vmatpush2.msra.mxu0 0.0
      %1965 = vmatprep.subr.mxu0 0.0
      %1966 = vmatpush2.msra.mxu0 0.0
      %1967 = vmatprep.subr.mxu0 0.0
      %1968 = vmatpush2.msra.mxu0 0.0
      %1969 = vmatprep.subr.mxu0 0.0
      %1970 = vmatpush2.msra.mxu0 0.0
      %1971 = vmatprep.subr.mxu0 0.0
      %1972 = vmatpush2.msra.mxu0 0.0
      %1973 = vmatprep.subr.mxu0 0.0
      %1974 = vmatpush2.msra.mxu0 0.0
      %1975 = vmatprep.subr.mxu0 0.0
      %1976 = vmatpush2.msra.mxu0 0.0
      %1977 = vmatprep.subr.mxu0 0.0
      %1978 = vmatpush2.msra.mxu0 0.0
      %1979 = vmatprep.subr.mxu0 0.0
      %1980 = vmatpush2.msra.mxu0 0.0
      %1981 = vmatprep.subr.mxu0 0.0
      %1982 = vmatpush2.msra.mxu0 0.0
      %1983 = vmatprep.mubr.f32.mxu0 0.0
      %v1984 = vand.u32 %v1818, 4294901760
      %1985 = vmatmul.mubr.f32.gmra.mxu0 %v1984
      %v1986 = vpop.f32.mrf.mxu0
      %v1987 = vadd.f32 %v1896, %v1986
      %v1988 = vpop.f32.mrf.mxu0
      %1989 = vdwg.mxu0
      %1990 = vmatprep.subr.mxu0 0.0
      %1991 = vmatpush1.msra.mxu0 0.0
      %1992 = vmatprep.subr.mxu0 0.0
      %1993 = vmatpush1.msra.mxu0 0.0
      %1994 = vmatprep.subr.mxu0 0.0
      %1995 = vmatpush1.msra.mxu0 0.0
      %1996 = vmatprep.subr.mxu0 0.0
      %1997 = vmatpush1.msra.mxu0 0.0
      %1998 = vmatprep.subr.mxu0 0.0
      %1999 = vmatpush1.msra.mxu0 0.0
      %2000 = vmatprep.subr.mxu0 0.0
      %2001 = vmatpush1.msra.mxu0 0.0
      %2002 = vmatprep.subr.mxu0 0.0
      %2003 = vmatpush1.msra.mxu0 0.0
      %2004 = vmatprep.subr.mxu0 0.0
      %2005 = vmatpush1.msra.mxu0 0.0
      %2006 = vmatprep.subr.mxu0 0.0
      %2007 = vmatpush1.msra.mxu0 0.0
      %2008 = vmatprep.subr.mxu0 0.0
      %2009 = vmatpush1.msra.mxu0 0.0
      %2010 = vmatprep.subr.mxu0 0.0
      %2011 = vmatpush1.msra.mxu0 0.0
      %2012 = vmatprep.subr.mxu0 0.0
      %2013 = vmatpush1.msra.mxu0 0.0
      %2014 = vmatprep.subr.mxu0 0.0
      %v2015 = vand.u32 %v310, 4294901760
      %v2016 = vsub.f32 %v310, %v2015
      %2017 = vmatpush1.msra.mxu0 %v2016
      %2018 = vmatprep.subr.mxu0 0.0
      %v2019 = vand.u32 %v309, 4294901760
      %v2020 = vsub.f32 %v309, %v2019
      %2021 = vmatpush1.msra.mxu0 %v2020
      %2022 = vmatprep.subr.mxu0 0.0
      %v2023 = vand.u32 %v308, 4294901760
      %v2024 = vsub.f32 %v308, %v2023
      %2025 = vmatpush1.msra.mxu0 %v2024
      %2026 = vmatprep.subr.mxu0 0.0
      %v2027 = vand.u32 %v307, 4294901760
      %v2028 = vsub.f32 %v307, %v2027
      %2029 = vmatpush1.msra.mxu0 %v2028
      %2030 = vmatprep.subr.mxu0 0.0
      %2031 = vmatpush2.msra.mxu0 0.0
      %2032 = vmatprep.subr.mxu0 0.0
      %2033 = vmatpush2.msra.mxu0 0.0
      %2034 = vmatprep.subr.mxu0 0.0
      %2035 = vmatpush2.msra.mxu0 0.0
      %2036 = vmatprep.subr.mxu0 0.0
      %2037 = vmatpush2.msra.mxu0 0.0
      %2038 = vmatprep.subr.mxu0 0.0
      %2039 = vmatpush2.msra.mxu0 0.0
      %2040 = vmatprep.subr.mxu0 0.0
      %2041 = vmatpush2.msra.mxu0 0.0
      %2042 = vmatprep.subr.mxu0 0.0
      %2043 = vmatpush2.msra.mxu0 0.0
      %2044 = vmatprep.subr.mxu0 0.0
      %2045 = vmatpush2.msra.mxu0 0.0
      %2046 = vmatprep.subr.mxu0 0.0
      %2047 = vmatpush2.msra.mxu0 0.0
      %2048 = vmatprep.subr.mxu0 0.0
      %2049 = vmatpush2.msra.mxu0 0.0
      %2050 = vmatprep.subr.mxu0 0.0
      %2051 = vmatpush2.msra.mxu0 0.0
      %2052 = vmatprep.subr.mxu0 0.0
      %2053 = vmatpush2.msra.mxu0 0.0
      %2054 = vmatprep.subr.mxu0 0.0
      %2055 = vmatpush2.msra.mxu0 0.0
      %2056 = vmatprep.subr.mxu0 0.0
      %2057 = vmatpush2.msra.mxu0 0.0
      %2058 = vmatprep.subr.mxu0 0.0
      %2059 = vmatpush2.msra.mxu0 0.0
      %2060 = vmatprep.subr.mxu0 0.0
      %2061 = vmatpush2.msra.mxu0 0.0
      %2062 = vmatprep.mubr.f32.mxu0 0.0
      %v2063 = vand.u32 %v1818, 4294901760
      %v2064 = vsub.f32 %v1818, %v2063
      %2065 = vmatmul.mubr.f32.gmra.mxu0 %v2064
      %v2066 = vpop.f32.mrf.mxu0
      %v2067 = vadd.f32 %v1987, %v2066
      %v2068 = vpop.f32.mrf.mxu0
      %2069 = vdwg.mxu0
      %2070 = vmatprep.subr.mxu0 0.0
      %2071 = vmatpush1.msra.mxu0 0.0
      %2072 = vmatprep.subr.mxu0 0.0
      %2073 = vmatpush1.msra.mxu0 0.0
      %2074 = vmatprep.subr.mxu0 0.0
      %2075 = vmatpush1.msra.mxu0 0.0
      %2076 = vmatprep.subr.mxu0 0.0
      %2077 = vmatpush1.msra.mxu0 0.0
      %2078 = vmatprep.subr.mxu0 0.0
      %2079 = vmatpush1.msra.mxu0 0.0
      %2080 = vmatprep.subr.mxu0 0.0
      %2081 = vmatpush1.msra.mxu0 0.0
      %2082 = vmatprep.subr.mxu0 0.0
      %2083 = vmatpush1.msra.mxu0 0.0
      %2084 = vmatprep.subr.mxu0 0.0
      %2085 = vmatpush1.msra.mxu0 0.0
      %2086 = vmatprep.subr.mxu0 0.0
      %2087 = vmatpush1.msra.mxu0 0.0
      %2088 = vmatprep.subr.mxu0 0.0
      %2089 = vmatpush1.msra.mxu0 0.0
      %2090 = vmatprep.subr.mxu0 0.0
      %2091 = vmatpush1.msra.mxu0 0.0
      %2092 = vmatprep.subr.mxu0 0.0
      %2093 = vmatpush1.msra.mxu0 0.0
      %2094 = vmatprep.subr.mxu0 0.0
      %v2095 = vand.u32 %v310, 4294901760
      %2096 = vmatpush1.msra.mxu0 %v2095
      %2097 = vmatprep.subr.mxu0 0.0
      %v2098 = vand.u32 %v309, 4294901760
      %2099 = vmatpush1.msra.mxu0 %v2098
      %2100 = vmatprep.subr.mxu0 0.0
      %v2101 = vand.u32 %v308, 4294901760
      %2102 = vmatpush1.msra.mxu0 %v2101
      %2103 = vmatprep.subr.mxu0 0.0
      %v2104 = vand.u32 %v307, 4294901760
      %2105 = vmatpush1.msra.mxu0 %v2104
      %2106 = vmatprep.subr.mxu0 0.0
      %2107 = vmatpush2.msra.mxu0 0.0
      %2108 = vmatprep.subr.mxu0 0.0
      %2109 = vmatpush2.msra.mxu0 0.0
      %2110 = vmatprep.subr.mxu0 0.0
      %2111 = vmatpush2.msra.mxu0 0.0
      %2112 = vmatprep.subr.mxu0 0.0
      %2113 = vmatpush2.msra.mxu0 0.0
      %2114 = vmatprep.subr.mxu0 0.0
      %2115 = vmatpush2.msra.mxu0 0.0
      %2116 = vmatprep.subr.mxu0 0.0
      %2117 = vmatpush2.msra.mxu0 0.0
      %2118 = vmatprep.subr.mxu0 0.0
      %2119 = vmatpush2.msra.mxu0 0.0
      %2120 = vmatprep.subr.mxu0 0.0
      %2121 = vmatpush2.msra.mxu0 0.0
      %2122 = vmatprep.subr.mxu0 0.0
      %2123 = vmatpush2.msra.mxu0 0.0
      %2124 = vmatprep.subr.mxu0 0.0
      %2125 = vmatpush2.msra.mxu0 0.0
      %2126 = vmatprep.subr.mxu0 0.0
      %2127 = vmatpush2.msra.mxu0 0.0
      %2128 = vmatprep.subr.mxu0 0.0
      %2129 = vmatpush2.msra.mxu0 0.0
      %2130 = vmatprep.subr.mxu0 0.0
      %2131 = vmatpush2.msra.mxu0 0.0
      %2132 = vmatprep.subr.mxu0 0.0
      %2133 = vmatpush2.msra.mxu0 0.0
      %2134 = vmatprep.subr.mxu0 0.0
      %2135 = vmatpush2.msra.mxu0 0.0
      %2136 = vmatprep.subr.mxu0 0.0
      %2137 = vmatpush2.msra.mxu0 0.0
      %2138 = vmatprep.mubr.f32.mxu0 0.0
      %v2139 = vand.u32 %v1818, 4294901760
      %v2140 = vsub.f32 %v1818, %v2139
      %v2141 = vand.u32 %v2140, 4294901760
      %2142 = vmatmul.mubr.f32.gmra.mxu0 %v2141
      %v2143 = vpop.f32.mrf.mxu0
      %v2144 = vadd.f32 %v2067, %v2143
      %v2145 = vpop.f32.mrf.mxu0
      %2146 = vdwg.mxu0
      %2147 = vmatprep.subr.mxu0 0.0
      %2148 = vmatpush1.msra.mxu0 0.0
      %2149 = vmatprep.subr.mxu0 0.0
      %2150 = vmatpush1.msra.mxu0 0.0
      %2151 = vmatprep.subr.mxu0 0.0
      %2152 = vmatpush1.msra.mxu0 0.0
      %2153 = vmatprep.subr.mxu0 0.0
      %2154 = vmatpush1.msra.mxu0 0.0
      %2155 = vmatprep.subr.mxu0 0.0
      %2156 = vmatpush1.msra.mxu0 0.0
      %2157 = vmatprep.subr.mxu0 0.0
      %2158 = vmatpush1.msra.mxu0 0.0
      %2159 = vmatprep.subr.mxu0 0.0
      %2160 = vmatpush1.msra.mxu0 0.0
      %2161 = vmatprep.subr.mxu0 0.0
      %2162 = vmatpush1.msra.mxu0 0.0
      %2163 = vmatprep.subr.mxu0 0.0
      %2164 = vmatpush1.msra.mxu0 0.0
      %2165 = vmatprep.subr.mxu0 0.0
      %2166 = vmatpush1.msra.mxu0 0.0
      %2167 = vmatprep.subr.mxu0 0.0
      %2168 = vmatpush1.msra.mxu0 0.0
      %2169 = vmatprep.subr.mxu0 0.0
      %2170 = vmatpush1.msra.mxu0 0.0
      %2171 = vmatprep.subr.mxu0 0.0
      %v2172 = vand.u32 %v310, 4294901760
      %v2173 = vsub.f32 %v310, %v2172
      %v2174 = vand.u32 %v2173, 4294901760
      %2175 = vmatpush1.msra.mxu0 %v2174
      %2176 = vmatprep.subr.mxu0 0.0
      %v2177 = vand.u32 %v309, 4294901760
      %v2178 = vsub.f32 %v309, %v2177
      %v2179 = vand.u32 %v2178, 4294901760
      %2180 = vmatpush1.msra.mxu0 %v2179
      %2181 = vmatprep.subr.mxu0 0.0
      %v2182 = vand.u32 %v308, 4294901760
      %v2183 = vsub.f32 %v308, %v2182
      %v2184 = vand.u32 %v2183, 4294901760
      %2185 = vmatpush1.msra.mxu0 %v2184
      %2186 = vmatprep.subr.mxu0 0.0
      %v2187 = vand.u32 %v307, 4294901760
      %v2188 = vsub.f32 %v307, %v2187
      %v2189 = vand.u32 %v2188, 4294901760
      %2190 = vmatpush1.msra.mxu0 %v2189
      %2191 = vmatprep.subr.mxu0 0.0
      %2192 = vmatpush2.msra.mxu0 0.0
      %2193 = vmatprep.subr.mxu0 0.0
      %2194 = vmatpush2.msra.mxu0 0.0
      %2195 = vmatprep.subr.mxu0 0.0
      %2196 = vmatpush2.msra.mxu0 0.0
      %2197 = vmatprep.subr.mxu0 0.0
      %2198 = vmatpush2.msra.mxu0 0.0
      %2199 = vmatprep.subr.mxu0 0.0
      %2200 = vmatpush2.msra.mxu0 0.0
      %2201 = vmatprep.subr.mxu0 0.0
      %2202 = vmatpush2.msra.mxu0 0.0
      %2203 = vmatprep.subr.mxu0 0.0
      %2204 = vmatpush2.msra.mxu0 0.0
      %2205 = vmatprep.subr.mxu0 0.0
      %2206 = vmatpush2.msra.mxu0 0.0
      %2207 = vmatprep.subr.mxu0 0.0
      %2208 = vmatpush2.msra.mxu0 0.0
      %2209 = vmatprep.subr.mxu0 0.0
      %2210 = vmatpush2.msra.mxu0 0.0
      %2211 = vmatprep.subr.mxu0 0.0
      %2212 = vmatpush2.msra.mxu0 0.0
      %2213 = vmatprep.subr.mxu0 0.0
      %2214 = vmatpush2.msra.mxu0 0.0
      %2215 = vmatprep.subr.mxu0 0.0
      %2216 = vmatpush2.msra.mxu0 0.0
      %2217 = vmatprep.subr.mxu0 0.0
      %2218 = vmatpush2.msra.mxu0 0.0
      %2219 = vmatprep.subr.mxu0 0.0
      %2220 = vmatpush2.msra.mxu0 0.0
      %2221 = vmatprep.subr.mxu0 0.0
      %2222 = vmatpush2.msra.mxu0 0.0
      %2223 = vmatprep.mubr.f32.mxu0 0.0
      %v2224 = vand.u32 %v1818, 4294901760
      %2225 = vmatmul.mubr.f32.gmra.mxu0 %v2224
      %v2226 = vpop.f32.mrf.mxu0
      %v2227 = vadd.f32 %v2144, %v2226
      %v2228 = vpop.f32.mrf.mxu0
      %2229 = vdwg.mxu0
      %2230 = vmatprep.subr.mxu0 0.0
      %2231 = vmatpush1.msra.mxu0 0.0
      %2232 = vmatprep.subr.mxu0 0.0
      %2233 = vmatpush1.msra.mxu0 0.0
      %2234 = vmatprep.subr.mxu0 0.0
      %2235 = vmatpush1.msra.mxu0 0.0
      %2236 = vmatprep.subr.mxu0 0.0
      %2237 = vmatpush1.msra.mxu0 0.0
      %2238 = vmatprep.subr.mxu0 0.0
      %2239 = vmatpush1.msra.mxu0 0.0
      %2240 = vmatprep.subr.mxu0 0.0
      %2241 = vmatpush1.msra.mxu0 0.0
      %2242 = vmatprep.subr.mxu0 0.0
      %2243 = vmatpush1.msra.mxu0 0.0
      %2244 = vmatprep.subr.mxu0 0.0
      %2245 = vmatpush1.msra.mxu0 0.0
      %2246 = vmatprep.subr.mxu0 0.0
      %2247 = vmatpush1.msra.mxu0 0.0
      %2248 = vmatprep.subr.mxu0 0.0
      %2249 = vmatpush1.msra.mxu0 0.0
      %2250 = vmatprep.subr.mxu0 0.0
      %2251 = vmatpush1.msra.mxu0 0.0
      %2252 = vmatprep.subr.mxu0 0.0
      %2253 = vmatpush1.msra.mxu0 0.0
      %2254 = vmatprep.subr.mxu0 0.0
      %v2255 = vand.u32 %v310, 4294901760
      %2256 = vmatpush1.msra.mxu0 %v2255
      %2257 = vmatprep.subr.mxu0 0.0
      %v2258 = vand.u32 %v309, 4294901760
      %2259 = vmatpush1.msra.mxu0 %v2258
      %2260 = vmatprep.subr.mxu0 0.0
      %v2261 = vand.u32 %v308, 4294901760
      %2262 = vmatpush1.msra.mxu0 %v2261
      %2263 = vmatprep.subr.mxu0 0.0
      %v2264 = vand.u32 %v307, 4294901760
      %2265 = vmatpush1.msra.mxu0 %v2264
      %2266 = vmatprep.subr.mxu0 0.0
      %2267 = vmatpush2.msra.mxu0 0.0
      %2268 = vmatprep.subr.mxu0 0.0
      %2269 = vmatpush2.msra.mxu0 0.0
      %2270 = vmatprep.subr.mxu0 0.0
      %2271 = vmatpush2.msra.mxu0 0.0
      %2272 = vmatprep.subr.mxu0 0.0
      %2273 = vmatpush2.msra.mxu0 0.0
      %2274 = vmatprep.subr.mxu0 0.0
      %2275 = vmatpush2.msra.mxu0 0.0
      %2276 = vmatprep.subr.mxu0 0.0
      %2277 = vmatpush2.msra.mxu0 0.0
      %2278 = vmatprep.subr.mxu0 0.0
      %2279 = vmatpush2.msra.mxu0 0.0
      %2280 = vmatprep.subr.mxu0 0.0
      %2281 = vmatpush2.msra.mxu0 0.0
      %2282 = vmatprep.subr.mxu0 0.0
      %2283 = vmatpush2.msra.mxu0 0.0
      %2284 = vmatprep.subr.mxu0 0.0
      %2285 = vmatpush2.msra.mxu0 0.0
      %2286 = vmatprep.subr.mxu0 0.0
      %2287 = vmatpush2.msra.mxu0 0.0
      %2288 = vmatprep.subr.mxu0 0.0
      %2289 = vmatpush2.msra.mxu0 0.0
      %2290 = vmatprep.subr.mxu0 0.0
      %2291 = vmatpush2.msra.mxu0 0.0
      %2292 = vmatprep.subr.mxu0 0.0
      %2293 = vmatpush2.msra.mxu0 0.0
      %2294 = vmatprep.subr.mxu0 0.0
      %2295 = vmatpush2.msra.mxu0 0.0
      %2296 = vmatprep.subr.mxu0 0.0
      %2297 = vmatpush2.msra.mxu0 0.0
      %2298 = vmatprep.mubr.f32.mxu0 0.0
      %v2299 = vand.u32 %v1818, 4294901760
      %2300 = vmatmul.mubr.f32.gmra.mxu0 %v2299
      %v2301 = vpop.f32.mrf.mxu0
      %v2302 = vadd.f32 %v2227, %v2301
      %v2303 = vpop.f32.mrf.mxu0
      %2304 = vdwg.mxu0
      %2305 = vmatprep.subr.mxu0 0.0
      %2306 = vmatpush1.msra.mxu0 0.0
      %2307 = vmatprep.subr.mxu0 0.0
      %2308 = vmatpush1.msra.mxu0 0.0
      %2309 = vmatprep.subr.mxu0 0.0
      %2310 = vmatpush1.msra.mxu0 0.0
      %2311 = vmatprep.subr.mxu0 0.0
      %2312 = vmatpush1.msra.mxu0 0.0
      %2313 = vmatprep.subr.mxu0 0.0
      %2314 = vmatpush1.msra.mxu0 0.0
      %2315 = vmatprep.subr.mxu0 0.0
      %2316 = vmatpush1.msra.mxu0 0.0
      %2317 = vmatprep.subr.mxu0 0.0
      %2318 = vmatpush1.msra.mxu0 0.0
      %2319 = vmatprep.subr.mxu0 0.0
      %2320 = vmatpush1.msra.mxu0 0.0
      %2321 = vmatprep.subr.mxu0 0.0
      %2322 = vmatpush1.msra.mxu0 0.0
      %2323 = vmatprep.subr.mxu0 0.0
      %2324 = vmatpush1.msra.mxu0 0.0
      %2325 = vmatprep.subr.mxu0 0.0
      %2326 = vmatpush1.msra.mxu0 0.0
      %2327 = vmatprep.subr.mxu0 0.0
      %2328 = vmatpush1.msra.mxu0 0.0
      %2329 = vmatprep.subr.mxu0 0.0
      %v2330 = vand.u32 %v315, 4294901760
      %2331 = vmatpush1.msra.mxu0 %v2330
      %2332 = vmatprep.subr.mxu0 0.0
      %v2333 = vand.u32 %v314, 4294901760
      %2334 = vmatpush1.msra.mxu0 %v2333
      %2335 = vmatprep.subr.mxu0 0.0
      %v2336 = vand.u32 %v313, 4294901760
      %2337 = vmatpush1.msra.mxu0 %v2336
      %2338 = vmatprep.subr.mxu0 0.0
      %v2339 = vand.u32 %v312, 4294901760
      %2340 = vmatpush1.msra.mxu0 %v2339
      %2341 = vmatprep.subr.mxu0 0.0
      %2342 = vmatpush2.msra.mxu0 0.0
      %2343 = vmatprep.subr.mxu0 0.0
      %2344 = vmatpush2.msra.mxu0 0.0
      %2345 = vmatprep.subr.mxu0 0.0
      %2346 = vmatpush2.msra.mxu0 0.0
      %2347 = vmatprep.subr.mxu0 0.0
      %2348 = vmatpush2.msra.mxu0 0.0
      %2349 = vmatprep.subr.mxu0 0.0
      %2350 = vmatpush2.msra.mxu0 0.0
      %2351 = vmatprep.subr.mxu0 0.0
      %2352 = vmatpush2.msra.mxu0 0.0
      %2353 = vmatprep.subr.mxu0 0.0
      %2354 = vmatpush2.msra.mxu0 0.0
      %2355 = vmatprep.subr.mxu0 0.0
      %2356 = vmatpush2.msra.mxu0 0.0
      %2357 = vmatprep.subr.mxu0 0.0
      %2358 = vmatpush2.msra.mxu0 0.0
      %2359 = vmatprep.subr.mxu0 0.0
      %2360 = vmatpush2.msra.mxu0 0.0
      %2361 = vmatprep.subr.mxu0 0.0
      %2362 = vmatpush2.msra.mxu0 0.0
      %2363 = vmatprep.subr.mxu0 0.0
      %2364 = vmatpush2.msra.mxu0 0.0
      %2365 = vmatprep.subr.mxu0 0.0
      %2366 = vmatpush2.msra.mxu0 0.0
      %2367 = vmatprep.subr.mxu0 0.0
      %2368 = vmatpush2.msra.mxu0 0.0
      %2369 = vmatprep.subr.mxu0 0.0
      %2370 = vmatpush2.msra.mxu0 0.0
      %2371 = vmatprep.subr.mxu0 0.0
      %2372 = vmatpush2.msra.mxu0 0.0
      %2373 = vmatprep.mubr.f32.mxu0 0.0
      %v2374 = vand.u32 %v1818, 4294901760
      %v2375 = vsub.f32 %v1818, %v2374
      %v2376 = vand.u32 %v2375, 4294901760
      %v2377 = vsub.f32 %v2375, %v2376
      %v2378 = vand.u32 %v2377, 4294901760
      %2379 = vmatmul.mubr.f32.gmra.mxu0 %v2378
      %v2380 = vpop.f32.mrf.mxu0
      %v2381 = vadd.f32 0.0, %v2380
      %v2382 = vpop.f32.mrf.mxu0
      %2383 = vdwg.mxu0
      %2384 = vmatprep.subr.mxu0 0.0
      %2385 = vmatpush1.msra.mxu0 0.0
      %2386 = vmatprep.subr.mxu0 0.0
      %2387 = vmatpush1.msra.mxu0 0.0
      %2388 = vmatprep.subr.mxu0 0.0
      %2389 = vmatpush1.msra.mxu0 0.0
      %2390 = vmatprep.subr.mxu0 0.0
      %2391 = vmatpush1.msra.mxu0 0.0
      %2392 = vmatprep.subr.mxu0 0.0
      %2393 = vmatpush1.msra.mxu0 0.0
      %2394 = vmatprep.subr.mxu0 0.0
      %2395 = vmatpush1.msra.mxu0 0.0
      %2396 = vmatprep.subr.mxu0 0.0
      %2397 = vmatpush1.msra.mxu0 0.0
      %2398 = vmatprep.subr.mxu0 0.0
      %2399 = vmatpush1.msra.mxu0 0.0
      %2400 = vmatprep.subr.mxu0 0.0
      %2401 = vmatpush1.msra.mxu0 0.0
      %2402 = vmatprep.subr.mxu0 0.0
      %2403 = vmatpush1.msra.mxu0 0.0
      %2404 = vmatprep.subr.mxu0 0.0
      %2405 = vmatpush1.msra.mxu0 0.0
      %2406 = vmatprep.subr.mxu0 0.0
      %2407 = vmatpush1.msra.mxu0 0.0
      %2408 = vmatprep.subr.mxu0 0.0
      %v2409 = vand.u32 %v315, 4294901760
      %v2410 = vsub.f32 %v315, %v2409
      %v2411 = vand.u32 %v2410, 4294901760
      %v2412 = vsub.f32 %v2410, %v2411
      %v2413 = vand.u32 %v2412, 4294901760
      %2414 = vmatpush1.msra.mxu0 %v2413
      %2415 = vmatprep.subr.mxu0 0.0
      %v2416 = vand.u32 %v314, 4294901760
      %v2417 = vsub.f32 %v314, %v2416
      %v2418 = vand.u32 %v2417, 4294901760
      %v2419 = vsub.f32 %v2417, %v2418
      %v2420 = vand.u32 %v2419, 4294901760
      %2421 = vmatpush1.msra.mxu0 %v2420
      %2422 = vmatprep.subr.mxu0 0.0
      %v2423 = vand.u32 %v313, 4294901760
      %v2424 = vsub.f32 %v313, %v2423
      %v2425 = vand.u32 %v2424, 4294901760
      %v2426 = vsub.f32 %v2424, %v2425
      %v2427 = vand.u32 %v2426, 4294901760
      %2428 = vmatpush1.msra.mxu0 %v2427
      %2429 = vmatprep.subr.mxu0 0.0
      %v2430 = vand.u32 %v312, 4294901760
      %v2431 = vsub.f32 %v312, %v2430
      %v2432 = vand.u32 %v2431, 4294901760
      %v2433 = vsub.f32 %v2431, %v2432
      %v2434 = vand.u32 %v2433, 4294901760
      %2435 = vmatpush1.msra.mxu0 %v2434
      %2436 = vmatprep.subr.mxu0 0.0
      %2437 = vmatpush2.msra.mxu0 0.0
      %2438 = vmatprep.subr.mxu0 0.0
      %2439 = vmatpush2.msra.mxu0 0.0
      %2440 = vmatprep.subr.mxu0 0.0
      %2441 = vmatpush2.msra.mxu0 0.0
      %2442 = vmatprep.subr.mxu0 0.0
      %2443 = vmatpush2.msra.mxu0 0.0
      %2444 = vmatprep.subr.mxu0 0.0
      %2445 = vmatpush2.msra.mxu0 0.0
      %2446 = vmatprep.subr.mxu0 0.0
      %2447 = vmatpush2.msra.mxu0 0.0
      %2448 = vmatprep.subr.mxu0 0.0
      %2449 = vmatpush2.msra.mxu0 0.0
      %2450 = vmatprep.subr.mxu0 0.0
      %2451 = vmatpush2.msra.mxu0 0.0
      %2452 = vmatprep.subr.mxu0 0.0
      %2453 = vmatpush2.msra.mxu0 0.0
      %2454 = vmatprep.subr.mxu0 0.0
      %2455 = vmatpush2.msra.mxu0 0.0
      %2456 = vmatprep.subr.mxu0 0.0
      %2457 = vmatpush2.msra.mxu0 0.0
      %2458 = vmatprep.subr.mxu0 0.0
      %2459 = vmatpush2.msra.mxu0 0.0
      %2460 = vmatprep.subr.mxu0 0.0
      %2461 = vmatpush2.msra.mxu0 0.0
      %2462 = vmatprep.subr.mxu0 0.0
      %2463 = vmatpush2.msra.mxu0 0.0
      %2464 = vmatprep.subr.mxu0 0.0
      %2465 = vmatpush2.msra.mxu0 0.0
      %2466 = vmatprep.subr.mxu0 0.0
      %2467 = vmatpush2.msra.mxu0 0.0
      %2468 = vmatprep.mubr.f32.mxu0 0.0
      %v2469 = vand.u32 %v1818, 4294901760
      %2470 = vmatmul.mubr.f32.gmra.mxu0 %v2469
      %v2471 = vpop.f32.mrf.mxu0
      %v2472 = vadd.f32 %v2381, %v2471
      %v2473 = vpop.f32.mrf.mxu0
      %2474 = vdwg.mxu0
      %2475 = vmatprep.subr.mxu0 0.0
      %2476 = vmatpush1.msra.mxu0 0.0
      %2477 = vmatprep.subr.mxu0 0.0
      %2478 = vmatpush1.msra.mxu0 0.0
      %2479 = vmatprep.subr.mxu0 0.0
      %2480 = vmatpush1.msra.mxu0 0.0
      %2481 = vmatprep.subr.mxu0 0.0
      %2482 = vmatpush1.msra.mxu0 0.0
      %2483 = vmatprep.subr.mxu0 0.0
      %2484 = vmatpush1.msra.mxu0 0.0
      %2485 = vmatprep.subr.mxu0 0.0
      %2486 = vmatpush1.msra.mxu0 0.0
      %2487 = vmatprep.subr.mxu0 0.0
      %2488 = vmatpush1.msra.mxu0 0.0
      %2489 = vmatprep.subr.mxu0 0.0
      %2490 = vmatpush1.msra.mxu0 0.0
      %2491 = vmatprep.subr.mxu0 0.0
      %2492 = vmatpush1.msra.mxu0 0.0
      %2493 = vmatprep.subr.mxu0 0.0
      %2494 = vmatpush1.msra.mxu0 0.0
      %2495 = vmatprep.subr.mxu0 0.0
      %2496 = vmatpush1.msra.mxu0 0.0
      %2497 = vmatprep.subr.mxu0 0.0
      %2498 = vmatpush1.msra.mxu0 0.0
      %2499 = vmatprep.subr.mxu0 0.0
      %v2500 = vand.u32 %v315, 4294901760
      %v2501 = vsub.f32 %v315, %v2500
      %2502 = vmatpush1.msra.mxu0 %v2501
      %2503 = vmatprep.subr.mxu0 0.0
      %v2504 = vand.u32 %v314, 4294901760
      %v2505 = vsub.f32 %v314, %v2504
      %2506 = vmatpush1.msra.mxu0 %v2505
      %2507 = vmatprep.subr.mxu0 0.0
      %v2508 = vand.u32 %v313, 4294901760
      %v2509 = vsub.f32 %v313, %v2508
      %2510 = vmatpush1.msra.mxu0 %v2509
      %2511 = vmatprep.subr.mxu0 0.0
      %v2512 = vand.u32 %v312, 4294901760
      %v2513 = vsub.f32 %v312, %v2512
      %2514 = vmatpush1.msra.mxu0 %v2513
      %2515 = vmatprep.subr.mxu0 0.0
      %2516 = vmatpush2.msra.mxu0 0.0
      %2517 = vmatprep.subr.mxu0 0.0
      %2518 = vmatpush2.msra.mxu0 0.0
      %2519 = vmatprep.subr.mxu0 0.0
      %2520 = vmatpush2.msra.mxu0 0.0
      %2521 = vmatprep.subr.mxu0 0.0
      %2522 = vmatpush2.msra.mxu0 0.0
      %2523 = vmatprep.subr.mxu0 0.0
      %2524 = vmatpush2.msra.mxu0 0.0
      %2525 = vmatprep.subr.mxu0 0.0
      %2526 = vmatpush2.msra.mxu0 0.0
      %2527 = vmatprep.subr.mxu0 0.0
      %2528 = vmatpush2.msra.mxu0 0.0
      %2529 = vmatprep.subr.mxu0 0.0
      %2530 = vmatpush2.msra.mxu0 0.0
      %2531 = vmatprep.subr.mxu0 0.0
      %2532 = vmatpush2.msra.mxu0 0.0
      %2533 = vmatprep.subr.mxu0 0.0
      %2534 = vmatpush2.msra.mxu0 0.0
      %2535 = vmatprep.subr.mxu0 0.0
      %2536 = vmatpush2.msra.mxu0 0.0
      %2537 = vmatprep.subr.mxu0 0.0
      %2538 = vmatpush2.msra.mxu0 0.0
      %2539 = vmatprep.subr.mxu0 0.0
      %2540 = vmatpush2.msra.mxu0 0.0
      %2541 = vmatprep.subr.mxu0 0.0
      %2542 = vmatpush2.msra.mxu0 0.0
      %2543 = vmatprep.subr.mxu0 0.0
      %2544 = vmatpush2.msra.mxu0 0.0
      %2545 = vmatprep.subr.mxu0 0.0
      %2546 = vmatpush2.msra.mxu0 0.0
      %2547 = vmatprep.mubr.f32.mxu0 0.0
      %v2548 = vand.u32 %v1818, 4294901760
      %v2549 = vsub.f32 %v1818, %v2548
      %2550 = vmatmul.mubr.f32.gmra.mxu0 %v2549
      %v2551 = vpop.f32.mrf.mxu0
      %v2552 = vadd.f32 %v2472, %v2551
      %v2553 = vpop.f32.mrf.mxu0
      %2554 = vdwg.mxu0
      %2555 = vmatprep.subr.mxu0 0.0
      %2556 = vmatpush1.msra.mxu0 0.0
      %2557 = vmatprep.subr.mxu0 0.0
      %2558 = vmatpush1.msra.mxu0 0.0
      %2559 = vmatprep.subr.mxu0 0.0
      %2560 = vmatpush1.msra.mxu0 0.0
      %2561 = vmatprep.subr.mxu0 0.0
      %2562 = vmatpush1.msra.mxu0 0.0
      %2563 = vmatprep.subr.mxu0 0.0
      %2564 = vmatpush1.msra.mxu0 0.0
      %2565 = vmatprep.subr.mxu0 0.0
      %2566 = vmatpush1.msra.mxu0 0.0
      %2567 = vmatprep.subr.mxu0 0.0
      %2568 = vmatpush1.msra.mxu0 0.0
      %2569 = vmatprep.subr.mxu0 0.0
      %2570 = vmatpush1.msra.mxu0 0.0
      %2571 = vmatprep.subr.mxu0 0.0
      %2572 = vmatpush1.msra.mxu0 0.0
      %2573 = vmatprep.subr.mxu0 0.0
      %2574 = vmatpush1.msra.mxu0 0.0
      %2575 = vmatprep.subr.mxu0 0.0
      %2576 = vmatpush1.msra.mxu0 0.0
      %2577 = vmatprep.subr.mxu0 0.0
      %2578 = vmatpush1.msra.mxu0 0.0
      %2579 = vmatprep.subr.mxu0 0.0
      %v2580 = vand.u32 %v315, 4294901760
      %2581 = vmatpush1.msra.mxu0 %v2580
      %2582 = vmatprep.subr.mxu0 0.0
      %v2583 = vand.u32 %v314, 4294901760
      %2584 = vmatpush1.msra.mxu0 %v2583
      %2585 = vmatprep.subr.mxu0 0.0
      %v2586 = vand.u32 %v313, 4294901760
      %2587 = vmatpush1.msra.mxu0 %v2586
      %2588 = vmatprep.subr.mxu0 0.0
      %v2589 = vand.u32 %v312, 4294901760
      %2590 = vmatpush1.msra.mxu0 %v2589
      %2591 = vmatprep.subr.mxu0 0.0
      %2592 = vmatpush2.msra.mxu0 0.0
      %2593 = vmatprep.subr.mxu0 0.0
      %2594 = vmatpush2.msra.mxu0 0.0
      %2595 = vmatprep.subr.mxu0 0.0
      %2596 = vmatpush2.msra.mxu0 0.0
      %2597 = vmatprep.subr.mxu0 0.0
      %2598 = vmatpush2.msra.mxu0 0.0
      %2599 = vmatprep.subr.mxu0 0.0
      %2600 = vmatpush2.msra.mxu0 0.0
      %2601 = vmatprep.subr.mxu0 0.0
      %2602 = vmatpush2.msra.mxu0 0.0
      %2603 = vmatprep.subr.mxu0 0.0
      %2604 = vmatpush2.msra.mxu0 0.0
      %2605 = vmatprep.subr.mxu0 0.0
      %2606 = vmatpush2.msra.mxu0 0.0
      %2607 = vmatprep.subr.mxu0 0.0
      %2608 = vmatpush2.msra.mxu0 0.0
      %2609 = vmatprep.subr.mxu0 0.0
      %2610 = vmatpush2.msra.mxu0 0.0
      %2611 = vmatprep.subr.mxu0 0.0
      %2612 = vmatpush2.msra.mxu0 0.0
      %2613 = vmatprep.subr.mxu0 0.0
      %2614 = vmatpush2.msra.mxu0 0.0
      %2615 = vmatprep.subr.mxu0 0.0
      %2616 = vmatpush2.msra.mxu0 0.0
      %2617 = vmatprep.subr.mxu0 0.0
      %2618 = vmatpush2.msra.mxu0 0.0
      %2619 = vmatprep.subr.mxu0 0.0
      %2620 = vmatpush2.msra.mxu0 0.0
      %2621 = vmatprep.subr.mxu0 0.0
      %2622 = vmatpush2.msra.mxu0 0.0
      %2623 = vmatprep.mubr.f32.mxu0 0.0
      %v2624 = vand.u32 %v1818, 4294901760
      %v2625 = vsub.f32 %v1818, %v2624
      %v2626 = vand.u32 %v2625, 4294901760
      %2627 = vmatmul.mubr.f32.gmra.mxu0 %v2626
      %v2628 = vpop.f32.mrf.mxu0
      %v2629 = vadd.f32 %v2552, %v2628
      %v2630 = vpop.f32.mrf.mxu0
      %2631 = vdwg.mxu0
      %2632 = vmatprep.subr.mxu0 0.0
      %2633 = vmatpush1.msra.mxu0 0.0
      %2634 = vmatprep.subr.mxu0 0.0
      %2635 = vmatpush1.msra.mxu0 0.0
      %2636 = vmatprep.subr.mxu0 0.0
      %2637 = vmatpush1.msra.mxu0 0.0
      %2638 = vmatprep.subr.mxu0 0.0
      %2639 = vmatpush1.msra.mxu0 0.0
      %2640 = vmatprep.subr.mxu0 0.0
      %2641 = vmatpush1.msra.mxu0 0.0
      %2642 = vmatprep.subr.mxu0 0.0
      %2643 = vmatpush1.msra.mxu0 0.0
      %2644 = vmatprep.subr.mxu0 0.0
      %2645 = vmatpush1.msra.mxu0 0.0
      %2646 = vmatprep.subr.mxu0 0.0
      %2647 = vmatpush1.msra.mxu0 0.0
      %2648 = vmatprep.subr.mxu0 0.0
      %2649 = vmatpush1.msra.mxu0 0.0
      %2650 = vmatprep.subr.mxu0 0.0
      %2651 = vmatpush1.msra.mxu0 0.0
      %2652 = vmatprep.subr.mxu0 0.0
      %2653 = vmatpush1.msra.mxu0 0.0
      %2654 = vmatprep.subr.mxu0 0.0
      %2655 = vmatpush1.msra.mxu0 0.0
      %2656 = vmatprep.subr.mxu0 0.0
      %v2657 = vand.u32 %v315, 4294901760
      %v2658 = vsub.f32 %v315, %v2657
      %v2659 = vand.u32 %v2658, 4294901760
      %2660 = vmatpush1.msra.mxu0 %v2659
      %2661 = vmatprep.subr.mxu0 0.0
      %v2662 = vand.u32 %v314, 4294901760
      %v2663 = vsub.f32 %v314, %v2662
      %v2664 = vand.u32 %v2663, 4294901760
      %2665 = vmatpush1.msra.mxu0 %v2664
      %2666 = vmatprep.subr.mxu0 0.0
      %v2667 = vand.u32 %v313, 4294901760
      %v2668 = vsub.f32 %v313, %v2667
      %v2669 = vand.u32 %v2668, 4294901760
      %2670 = vmatpush1.msra.mxu0 %v2669
      %2671 = vmatprep.subr.mxu0 0.0
      %v2672 = vand.u32 %v312, 4294901760
      %v2673 = vsub.f32 %v312, %v2672
      %v2674 = vand.u32 %v2673, 4294901760
      %2675 = vmatpush1.msra.mxu0 %v2674
      %2676 = vmatprep.subr.mxu0 0.0
      %2677 = vmatpush2.msra.mxu0 0.0
      %2678 = vmatprep.subr.mxu0 0.0
      %2679 = vmatpush2.msra.mxu0 0.0
      %2680 = vmatprep.subr.mxu0 0.0
      %2681 = vmatpush2.msra.mxu0 0.0
      %2682 = vmatprep.subr.mxu0 0.0
      %2683 = vmatpush2.msra.mxu0 0.0
      %2684 = vmatprep.subr.mxu0 0.0
      %2685 = vmatpush2.msra.mxu0 0.0
      %2686 = vmatprep.subr.mxu0 0.0
      %2687 = vmatpush2.msra.mxu0 0.0
      %2688 = vmatprep.subr.mxu0 0.0
      %2689 = vmatpush2.msra.mxu0 0.0
      %2690 = vmatprep.subr.mxu0 0.0
      %2691 = vmatpush2.msra.mxu0 0.0
      %2692 = vmatprep.subr.mxu0 0.0
      %2693 = vmatpush2.msra.mxu0 0.0
      %2694 = vmatprep.subr.mxu0 0.0
      %2695 = vmatpush2.msra.mxu0 0.0
      %2696 = vmatprep.subr.mxu0 0.0
      %2697 = vmatpush2.msra.mxu0 0.0
      %2698 = vmatprep.subr.mxu0 0.0
      %2699 = vmatpush2.msra.mxu0 0.0
      %2700 = vmatprep.subr.mxu0 0.0
      %2701 = vmatpush2.msra.mxu0 0.0
      %2702 = vmatprep.subr.mxu0 0.0
      %2703 = vmatpush2.msra.mxu0 0.0
      %2704 = vmatprep.subr.mxu0 0.0
      %2705 = vmatpush2.msra.mxu0 0.0
      %2706 = vmatprep.subr.mxu0 0.0
      %2707 = vmatpush2.msra.mxu0 0.0
      %2708 = vmatprep.mubr.f32.mxu0 0.0
      %v2709 = vand.u32 %v1818, 4294901760
      %2710 = vmatmul.mubr.f32.gmra.mxu0 %v2709
      %v2711 = vpop.f32.mrf.mxu0
      %v2712 = vadd.f32 %v2629, %v2711
      %v2713 = vpop.f32.mrf.mxu0
      %2714 = vdwg.mxu0
      %2715 = vmatprep.subr.mxu0 0.0
      %2716 = vmatpush1.msra.mxu0 0.0
      %2717 = vmatprep.subr.mxu0 0.0
      %2718 = vmatpush1.msra.mxu0 0.0
      %2719 = vmatprep.subr.mxu0 0.0
      %2720 = vmatpush1.msra.mxu0 0.0
      %2721 = vmatprep.subr.mxu0 0.0
      %2722 = vmatpush1.msra.mxu0 0.0
      %2723 = vmatprep.subr.mxu0 0.0
      %2724 = vmatpush1.msra.mxu0 0.0
      %2725 = vmatprep.subr.mxu0 0.0
      %2726 = vmatpush1.msra.mxu0 0.0
      %2727 = vmatprep.subr.mxu0 0.0
      %2728 = vmatpush1.msra.mxu0 0.0
      %2729 = vmatprep.subr.mxu0 0.0
      %2730 = vmatpush1.msra.mxu0 0.0
      %2731 = vmatprep.subr.mxu0 0.0
      %2732 = vmatpush1.msra.mxu0 0.0
      %2733 = vmatprep.subr.mxu0 0.0
      %2734 = vmatpush1.msra.mxu0 0.0
      %2735 = vmatprep.subr.mxu0 0.0
      %2736 = vmatpush1.msra.mxu0 0.0
      %2737 = vmatprep.subr.mxu0 0.0
      %2738 = vmatpush1.msra.mxu0 0.0
      %2739 = vmatprep.subr.mxu0 0.0
      %v2740 = vand.u32 %v315, 4294901760
      %2741 = vmatpush1.msra.mxu0 %v2740
      %2742 = vmatprep.subr.mxu0 0.0
      %v2743 = vand.u32 %v314, 4294901760
      %2744 = vmatpush1.msra.mxu0 %v2743
      %2745 = vmatprep.subr.mxu0 0.0
      %v2746 = vand.u32 %v313, 4294901760
      %2747 = vmatpush1.msra.mxu0 %v2746
      %2748 = vmatprep.subr.mxu0 0.0
      %v2749 = vand.u32 %v312, 4294901760
      %2750 = vmatpush1.msra.mxu0 %v2749
      %2751 = vmatprep.subr.mxu0 0.0
      %2752 = vmatpush2.msra.mxu0 0.0
      %2753 = vmatprep.subr.mxu0 0.0
      %2754 = vmatpush2.msra.mxu0 0.0
      %2755 = vmatprep.subr.mxu0 0.0
      %2756 = vmatpush2.msra.mxu0 0.0
      %2757 = vmatprep.subr.mxu0 0.0
      %2758 = vmatpush2.msra.mxu0 0.0
      %2759 = vmatprep.subr.mxu0 0.0
      %2760 = vmatpush2.msra.mxu0 0.0
      %2761 = vmatprep.subr.mxu0 0.0
      %2762 = vmatpush2.msra.mxu0 0.0
      %2763 = vmatprep.subr.mxu0 0.0
      %2764 = vmatpush2.msra.mxu0 0.0
      %2765 = vmatprep.subr.mxu0 0.0
      %2766 = vmatpush2.msra.mxu0 0.0
      %2767 = vmatprep.subr.mxu0 0.0
      %2768 = vmatpush2.msra.mxu0 0.0
      %2769 = vmatprep.subr.mxu0 0.0
      %2770 = vmatpush2.msra.mxu0 0.0
      %2771 = vmatprep.subr.mxu0 0.0
      %2772 = vmatpush2.msra.mxu0 0.0
      %2773 = vmatprep.subr.mxu0 0.0
      %2774 = vmatpush2.msra.mxu0 0.0
      %2775 = vmatprep.subr.mxu0 0.0
      %2776 = vmatpush2.msra.mxu0 0.0
      %2777 = vmatprep.subr.mxu0 0.0
      %2778 = vmatpush2.msra.mxu0 0.0
      %2779 = vmatprep.subr.mxu0 0.0
      %2780 = vmatpush2.msra.mxu0 0.0
      %2781 = vmatprep.subr.mxu0 0.0
      %2782 = vmatpush2.msra.mxu0 0.0
      %2783 = vmatprep.mubr.f32.mxu0 0.0
      %v2784 = vand.u32 %v1818, 4294901760
      %2785 = vmatmul.mubr.f32.gmra.mxu0 %v2784
      %v2786 = vpop.f32.mrf.mxu0
      %v2787 = vadd.f32 %v2712, %v2786
      %v2788 = vpop.f32.mrf.mxu0
      %2789 = vdwg.mxu0
      %s2790 = scalar_lea.vmem %s268, 12
      %v2791 = vld [vmem:[%s2790] sm:$0x3]
      %v2792 = vadd.f32 %v2791, %v2302
      %v2793 = vxor.u32 %v2792, 2147483648
      %v2794 = vmul.f32 %v2793, 1.442695
      %v2795 = vpow.pop %v2794
      %v2796 = vadd.f32 %v2795, 1.0
      %v2797 = vrcp.pop %v2796
      %v2798 = vmul.f32 1.0, %v2797
      %s2799 = scalar_lea.vmem %s268, 14
      %v2800 = vld [vmem:[%s2799] sm:$0x3]
      %v2801 = vadd.f32 %v2800, %v2787
      %v2802 = vxor.u32 %v2801, 2147483648
      %v2803 = vmul.f32 %v2802, 1.442695
      %v2804 = vpow.pop %v2803
      %v2805 = vadd.f32 %v2804, 1.0
      %v2806 = vrcp.pop %v2805
      %v2807 = vmul.f32 1.0, %v2806
      %s2808 = scalar_lea.vmem %s268, 16
      %v2809 = vld [vmem:[%s2808] sm:$0x3]
      %2810 = vmatprep.subr.mxu0 0.0
      %2811 = vmatpush1.msra.mxu0 0.0
      %2812 = vmatprep.subr.mxu0 0.0
      %2813 = vmatpush1.msra.mxu0 0.0
      %2814 = vmatprep.subr.mxu0 0.0
      %2815 = vmatpush1.msra.mxu0 0.0
      %2816 = vmatprep.subr.mxu0 0.0
      %2817 = vmatpush1.msra.mxu0 0.0
      %2818 = vmatprep.subr.mxu0 0.0
      %2819 = vmatpush1.msra.mxu0 0.0
      %2820 = vmatprep.subr.mxu0 0.0
      %2821 = vmatpush1.msra.mxu0 0.0
      %2822 = vmatprep.subr.mxu0 0.0
      %2823 = vmatpush1.msra.mxu0 0.0
      %2824 = vmatprep.subr.mxu0 0.0
      %2825 = vmatpush1.msra.mxu0 0.0
      %2826 = vmatprep.subr.mxu0 0.0
      %2827 = vmatpush1.msra.mxu0 0.0
      %2828 = vmatprep.subr.mxu0 0.0
      %2829 = vmatpush1.msra.mxu0 0.0
      %2830 = vmatprep.subr.mxu0 0.0
      %2831 = vmatpush1.msra.mxu0 0.0
      %2832 = vmatprep.subr.mxu0 0.0
      %2833 = vmatpush1.msra.mxu0 0.0
      %2834 = vmatprep.subr.mxu0 0.0
      %v2835 = vand.u32 %v320, 4294901760
      %2836 = vmatpush1.msra.mxu0 %v2835
      %2837 = vmatprep.subr.mxu0 0.0
      %v2838 = vand.u32 %v319, 4294901760
      %2839 = vmatpush1.msra.mxu0 %v2838
      %2840 = vmatprep.subr.mxu0 0.0
      %v2841 = vand.u32 %v318, 4294901760
      %2842 = vmatpush1.msra.mxu0 %v2841
      %2843 = vmatprep.subr.mxu0 0.0
      %v2844 = vand.u32 %v317, 4294901760
      %2845 = vmatpush1.msra.mxu0 %v2844
      %2846 = vmatprep.subr.mxu0 0.0
      %2847 = vmatpush2.msra.mxu0 0.0
      %2848 = vmatprep.subr.mxu0 0.0
      %2849 = vmatpush2.msra.mxu0 0.0
      %2850 = vmatprep.subr.mxu0 0.0
      %2851 = vmatpush2.msra.mxu0 0.0
      %2852 = vmatprep.subr.mxu0 0.0
      %2853 = vmatpush2.msra.mxu0 0.0
      %2854 = vmatprep.subr.mxu0 0.0
      %2855 = vmatpush2.msra.mxu0 0.0
      %2856 = vmatprep.subr.mxu0 0.0
      %2857 = vmatpush2.msra.mxu0 0.0
      %2858 = vmatprep.subr.mxu0 0.0
      %2859 = vmatpush2.msra.mxu0 0.0
      %2860 = vmatprep.subr.mxu0 0.0
      %2861 = vmatpush2.msra.mxu0 0.0
      %2862 = vmatprep.subr.mxu0 0.0
      %2863 = vmatpush2.msra.mxu0 0.0
      %2864 = vmatprep.subr.mxu0 0.0
      %2865 = vmatpush2.msra.mxu0 0.0
      %2866 = vmatprep.subr.mxu0 0.0
      %2867 = vmatpush2.msra.mxu0 0.0
      %2868 = vmatprep.subr.mxu0 0.0
      %2869 = vmatpush2.msra.mxu0 0.0
      %2870 = vmatprep.subr.mxu0 0.0
      %2871 = vmatpush2.msra.mxu0 0.0
      %2872 = vmatprep.subr.mxu0 0.0
      %2873 = vmatpush2.msra.mxu0 0.0
      %2874 = vmatprep.subr.mxu0 0.0
      %2875 = vmatpush2.msra.mxu0 0.0
      %2876 = vmatprep.subr.mxu0 0.0
      %2877 = vmatpush2.msra.mxu0 0.0
      %2878 = vmatprep.mubr.f32.mxu0 0.0
      %v2879 = vand.u32 %v1818, 4294901760
      %v2880 = vsub.f32 %v1818, %v2879
      %v2881 = vand.u32 %v2880, 4294901760
      %v2882 = vsub.f32 %v2880, %v2881
      %v2883 = vand.u32 %v2882, 4294901760
      %2884 = vmatmul.mubr.f32.gmra.mxu0 %v2883
      %v2885 = vpop.f32.mrf.mxu0
      %v2886 = vadd.f32 %v323, %v2885
      %v2887 = vpop.f32.mrf.mxu0
      %2888 = vdwg.mxu0
      %2889 = vmatprep.subr.mxu0 0.0
      %2890 = vmatpush1.msra.mxu0 0.0
      %2891 = vmatprep.subr.mxu0 0.0
      %2892 = vmatpush1.msra.mxu0 0.0
      %2893 = vmatprep.subr.mxu0 0.0
      %2894 = vmatpush1.msra.mxu0 0.0
      %2895 = vmatprep.subr.mxu0 0.0
      %2896 = vmatpush1.msra.mxu0 0.0
      %2897 = vmatprep.subr.mxu0 0.0
      %2898 = vmatpush1.msra.mxu0 0.0
      %2899 = vmatprep.subr.mxu0 0.0
      %2900 = vmatpush1.msra.mxu0 0.0
      %2901 = vmatprep.subr.mxu0 0.0
      %2902 = vmatpush1.msra.mxu0 0.0
      %2903 = vmatprep.subr.mxu0 0.0
      %2904 = vmatpush1.msra.mxu0 0.0
      %2905 = vmatprep.subr.mxu0 0.0
      %2906 = vmatpush1.msra.mxu0 0.0
      %2907 = vmatprep.subr.mxu0 0.0
      %2908 = vmatpush1.msra.mxu0 0.0
      %2909 = vmatprep.subr.mxu0 0.0
      %2910 = vmatpush1.msra.mxu0 0.0
      %2911 = vmatprep.subr.mxu0 0.0
      %2912 = vmatpush1.msra.mxu0 0.0
      %2913 = vmatprep.subr.mxu0 0.0
      %v2914 = vand.u32 %v320, 4294901760
      %v2915 = vsub.f32 %v320, %v2914
      %v2916 = vand.u32 %v2915, 4294901760
      %v2917 = vsub.f32 %v2915, %v2916
      %v2918 = vand.u32 %v2917, 4294901760
      %2919 = vmatpush1.msra.mxu0 %v2918
      %2920 = vmatprep.subr.mxu0 0.0
      %v2921 = vand.u32 %v319, 4294901760
      %v2922 = vsub.f32 %v319, %v2921
      %v2923 = vand.u32 %v2922, 4294901760
      %v2924 = vsub.f32 %v2922, %v2923
      %v2925 = vand.u32 %v2924, 4294901760
      %2926 = vmatpush1.msra.mxu0 %v2925
      %2927 = vmatprep.subr.mxu0 0.0
      %v2928 = vand.u32 %v318, 4294901760
      %v2929 = vsub.f32 %v318, %v2928
      %v2930 = vand.u32 %v2929, 4294901760
      %v2931 = vsub.f32 %v2929, %v2930
      %v2932 = vand.u32 %v2931, 4294901760
      %2933 = vmatpush1.msra.mxu0 %v2932
      %2934 = vmatprep.subr.mxu0 0.0
      %v2935 = vand.u32 %v317, 4294901760
      %v2936 = vsub.f32 %v317, %v2935
      %v2937 = vand.u32 %v2936, 4294901760
      %v2938 = vsub.f32 %v2936, %v2937
      %v2939 = vand.u32 %v2938, 4294901760
      %2940 = vmatpush1.msra.mxu0 %v2939
      %2941 = vmatprep.subr.mxu0 0.0
      %2942 = vmatpush2.msra.mxu0 0.0
      %2943 = vmatprep.subr.mxu0 0.0
      %2944 = vmatpush2.msra.mxu0 0.0
      %2945 = vmatprep.subr.mxu0 0.0
      %2946 = vmatpush2.msra.mxu0 0.0
      %2947 = vmatprep.subr.mxu0 0.0
      %2948 = vmatpush2.msra.mxu0 0.0
      %2949 = vmatprep.subr.mxu0 0.0
      %2950 = vmatpush2.msra.mxu0 0.0
      %2951 = vmatprep.subr.mxu0 0.0
      %2952 = vmatpush2.msra.mxu0 0.0
      %2953 = vmatprep.subr.mxu0 0.0
      %2954 = vmatpush2.msra.mxu0 0.0
      %2955 = vmatprep.subr.mxu0 0.0
      %2956 = vmatpush2.msra.mxu0 0.0
      %2957 = vmatprep.subr.mxu0 0.0
      %2958 = vmatpush2.msra.mxu0 0.0
      %2959 = vmatprep.subr.mxu0 0.0
      %2960 = vmatpush2.msra.mxu0 0.0
      %2961 = vmatprep.subr.mxu0 0.0
      %2962 = vmatpush2.msra.mxu0 0.0
      %2963 = vmatprep.subr.mxu0 0.0
      %2964 = vmatpush2.msra.mxu0 0.0
      %2965 = vmatprep.subr.mxu0 0.0
      %2966 = vmatpush2.msra.mxu0 0.0
      %2967 = vmatprep.subr.mxu0 0.0
      %2968 = vmatpush2.msra.mxu0 0.0
      %2969 = vmatprep.subr.mxu0 0.0
      %2970 = vmatpush2.msra.mxu0 0.0
      %2971 = vmatprep.subr.mxu0 0.0
      %2972 = vmatpush2.msra.mxu0 0.0
      %2973 = vmatprep.mubr.f32.mxu0 0.0
      %v2974 = vand.u32 %v1818, 4294901760
      %2975 = vmatmul.mubr.f32.gmra.mxu0 %v2974
      %v2976 = vpop.f32.mrf.mxu0
      %v2977 = vadd.f32 %v2886, %v2976
      %v2978 = vpop.f32.mrf.mxu0
      %2979 = vdwg.mxu0
      %2980 = vmatprep.subr.mxu0 0.0
      %2981 = vmatpush1.msra.mxu0 0.0
      %2982 = vmatprep.subr.mxu0 0.0
      %2983 = vmatpush1.msra.mxu0 0.0
      %2984 = vmatprep.subr.mxu0 0.0
      %2985 = vmatpush1.msra.mxu0 0.0
      %2986 = vmatprep.subr.mxu0 0.0
      %2987 = vmatpush1.msra.mxu0 0.0
      %2988 = vmatprep.subr.mxu0 0.0
      %2989 = vmatpush1.msra.mxu0 0.0
      %2990 = vmatprep.subr.mxu0 0.0
      %2991 = vmatpush1.msra.mxu0 0.0
      %2992 = vmatprep.subr.mxu0 0.0
      %2993 = vmatpush1.msra.mxu0 0.0
      %2994 = vmatprep.subr.mxu0 0.0
      %2995 = vmatpush1.msra.mxu0 0.0
      %2996 = vmatprep.subr.mxu0 0.0
      %2997 = vmatpush1.msra.mxu0 0.0
      %2998 = vmatprep.subr.mxu0 0.0
      %2999 = vmatpush1.msra.mxu0 0.0
      %3000 = vmatprep.subr.mxu0 0.0
      %3001 = vmatpush1.msra.mxu0 0.0
      %3002 = vmatprep.subr.mxu0 0.0
      %3003 = vmatpush1.msra.mxu0 0.0
      %3004 = vmatprep.subr.mxu0 0.0
      %v3005 = vand.u32 %v320, 4294901760
      %v3006 = vsub.f32 %v320, %v3005
      %3007 = vmatpush1.msra.mxu0 %v3006
      %3008 = vmatprep.subr.mxu0 0.0
      %v3009 = vand.u32 %v319, 4294901760
      %v3010 = vsub.f32 %v319, %v3009
      %3011 = vmatpush1.msra.mxu0 %v3010
      %3012 = vmatprep.subr.mxu0 0.0
      %v3013 = vand.u32 %v318, 4294901760
      %v3014 = vsub.f32 %v318, %v3013
      %3015 = vmatpush1.msra.mxu0 %v3014
      %3016 = vmatprep.subr.mxu0 0.0
      %v3017 = vand.u32 %v317, 4294901760
      %v3018 = vsub.f32 %v317, %v3017
      %3019 = vmatpush1.msra.mxu0 %v3018
      %3020 = vmatprep.subr.mxu0 0.0
      %3021 = vmatpush2.msra.mxu0 0.0
      %3022 = vmatprep.subr.mxu0 0.0
      %3023 = vmatpush2.msra.mxu0 0.0
      %3024 = vmatprep.subr.mxu0 0.0
      %3025 = vmatpush2.msra.mxu0 0.0
      %3026 = vmatprep.subr.mxu0 0.0
      %3027 = vmatpush2.msra.mxu0 0.0
      %3028 = vmatprep.subr.mxu0 0.0
      %3029 = vmatpush2.msra.mxu0 0.0
      %3030 = vmatprep.subr.mxu0 0.0
      %3031 = vmatpush2.msra.mxu0 0.0
      %3032 = vmatprep.subr.mxu0 0.0
      %3033 = vmatpush2.msra.mxu0 0.0
      %3034 = vmatprep.subr.mxu0 0.0
      %3035 = vmatpush2.msra.mxu0 0.0
      %3036 = vmatprep.subr.mxu0 0.0
      %3037 = vmatpush2.msra.mxu0 0.0
      %3038 = vmatprep.subr.mxu0 0.0
      %3039 = vmatpush2.msra.mxu0 0.0
      %3040 = vmatprep.subr.mxu0 0.0
      %3041 = vmatpush2.msra.mxu0 0.0
      %3042 = vmatprep.subr.mxu0 0.0
      %3043 = vmatpush2.msra.mxu0 0.0
      %3044 = vmatprep.subr.mxu0 0.0
      %3045 = vmatpush2.msra.mxu0 0.0
      %3046 = vmatprep.subr.mxu0 0.0
      %3047 = vmatpush2.msra.mxu0 0.0
      %3048 = vmatprep.subr.mxu0 0.0
      %3049 = vmatpush2.msra.mxu0 0.0
      %3050 = vmatprep.subr.mxu0 0.0
      %3051 = vmatpush2.msra.mxu0 0.0
      %3052 = vmatprep.mubr.f32.mxu0 0.0
      %v3053 = vand.u32 %v1818, 4294901760
      %v3054 = vsub.f32 %v1818, %v3053
      %3055 = vmatmul.mubr.f32.gmra.mxu0 %v3054
      %v3056 = vpop.f32.mrf.mxu0
      %v3057 = vadd.f32 %v2977, %v3056
      %v3058 = vpop.f32.mrf.mxu0
      %3059 = vdwg.mxu0
      %3060 = vmatprep.subr.mxu0 0.0
      %3061 = vmatpush1.msra.mxu0 0.0
      %3062 = vmatprep.subr.mxu0 0.0
      %3063 = vmatpush1.msra.mxu0 0.0
      %3064 = vmatprep.subr.mxu0 0.0
      %3065 = vmatpush1.msra.mxu0 0.0
      %3066 = vmatprep.subr.mxu0 0.0
      %3067 = vmatpush1.msra.mxu0 0.0
      %3068 = vmatprep.subr.mxu0 0.0
      %3069 = vmatpush1.msra.mxu0 0.0
      %3070 = vmatprep.subr.mxu0 0.0
      %3071 = vmatpush1.msra.mxu0 0.0
      %3072 = vmatprep.subr.mxu0 0.0
      %3073 = vmatpush1.msra.mxu0 0.0
      %3074 = vmatprep.subr.mxu0 0.0
      %3075 = vmatpush1.msra.mxu0 0.0
      %3076 = vmatprep.subr.mxu0 0.0
      %3077 = vmatpush1.msra.mxu0 0.0
      %3078 = vmatprep.subr.mxu0 0.0
      %3079 = vmatpush1.msra.mxu0 0.0
      %3080 = vmatprep.subr.mxu0 0.0
      %3081 = vmatpush1.msra.mxu0 0.0
      %3082 = vmatprep.subr.mxu0 0.0
      %3083 = vmatpush1.msra.mxu0 0.0
      %3084 = vmatprep.subr.mxu0 0.0
      %v3085 = vand.u32 %v320, 4294901760
      %3086 = vmatpush1.msra.mxu0 %v3085
      %3087 = vmatprep.subr.mxu0 0.0
      %v3088 = vand.u32 %v319, 4294901760
      %3089 = vmatpush1.msra.mxu0 %v3088
      %3090 = vmatprep.subr.mxu0 0.0
      %v3091 = vand.u32 %v318, 4294901760
      %3092 = vmatpush1.msra.mxu0 %v3091
      %3093 = vmatprep.subr.mxu0 0.0
      %v3094 = vand.u32 %v317, 4294901760
      %3095 = vmatpush1.msra.mxu0 %v3094
      %3096 = vmatprep.subr.mxu0 0.0
      %3097 = vmatpush2.msra.mxu0 0.0
      %3098 = vmatprep.subr.mxu0 0.0
      %3099 = vmatpush2.msra.mxu0 0.0
      %3100 = vmatprep.subr.mxu0 0.0
      %3101 = vmatpush2.msra.mxu0 0.0
      %3102 = vmatprep.subr.mxu0 0.0
      %3103 = vmatpush2.msra.mxu0 0.0
      %3104 = vmatprep.subr.mxu0 0.0
      %3105 = vmatpush2.msra.mxu0 0.0
      %3106 = vmatprep.subr.mxu0 0.0
      %3107 = vmatpush2.msra.mxu0 0.0
      %3108 = vmatprep.subr.mxu0 0.0
      %3109 = vmatpush2.msra.mxu0 0.0
      %3110 = vmatprep.subr.mxu0 0.0
      %3111 = vmatpush2.msra.mxu0 0.0
      %3112 = vmatprep.subr.mxu0 0.0
      %3113 = vmatpush2.msra.mxu0 0.0
      %3114 = vmatprep.subr.mxu0 0.0
      %3115 = vmatpush2.msra.mxu0 0.0
      %3116 = vmatprep.subr.mxu0 0.0
      %3117 = vmatpush2.msra.mxu0 0.0
      %3118 = vmatprep.subr.mxu0 0.0
      %3119 = vmatpush2.msra.mxu0 0.0
      %3120 = vmatprep.subr.mxu0 0.0
      %3121 = vmatpush2.msra.mxu0 0.0
      %3122 = vmatprep.subr.mxu0 0.0
      %3123 = vmatpush2.msra.mxu0 0.0
      %3124 = vmatprep.subr.mxu0 0.0
      %3125 = vmatpush2.msra.mxu0 0.0
      %3126 = vmatprep.subr.mxu0 0.0
      %3127 = vmatpush2.msra.mxu0 0.0
      %3128 = vmatprep.mubr.f32.mxu0 0.0
      %v3129 = vand.u32 %v1818, 4294901760
      %v3130 = vsub.f32 %v1818, %v3129
      %v3131 = vand.u32 %v3130, 4294901760
      %3132 = vmatmul.mubr.f32.gmra.mxu0 %v3131
      %v3133 = vpop.f32.mrf.mxu0
      %v3134 = vadd.f32 %v3057, %v3133
      %v3135 = vpop.f32.mrf.mxu0
      %3136 = vdwg.mxu0
      %3137 = vmatprep.subr.mxu0 0.0
      %3138 = vmatpush1.msra.mxu0 0.0
      %3139 = vmatprep.subr.mxu0 0.0
      %3140 = vmatpush1.msra.mxu0 0.0
      %3141 = vmatprep.subr.mxu0 0.0
      %3142 = vmatpush1.msra.mxu0 0.0
      %3143 = vmatprep.subr.mxu0 0.0
      %3144 = vmatpush1.msra.mxu0 0.0
      %3145 = vmatprep.subr.mxu0 0.0
      %3146 = vmatpush1.msra.mxu0 0.0
      %3147 = vmatprep.subr.mxu0 0.0
      %3148 = vmatpush1.msra.mxu0 0.0
      %3149 = vmatprep.subr.mxu0 0.0
      %3150 = vmatpush1.msra.mxu0 0.0
      %3151 = vmatprep.subr.mxu0 0.0
      %3152 = vmatpush1.msra.mxu0 0.0
      %3153 = vmatprep.subr.mxu0 0.0
      %3154 = vmatpush1.msra.mxu0 0.0
      %3155 = vmatprep.subr.mxu0 0.0
      %3156 = vmatpush1.msra.mxu0 0.0
      %3157 = vmatprep.subr.mxu0 0.0
      %3158 = vmatpush1.msra.mxu0 0.0
      %3159 = vmatprep.subr.mxu0 0.0
      %3160 = vmatpush1.msra.mxu0 0.0
      %3161 = vmatprep.subr.mxu0 0.0
      %v3162 = vand.u32 %v320, 4294901760
      %v3163 = vsub.f32 %v320, %v3162
      %v3164 = vand.u32 %v3163, 4294901760
      %3165 = vmatpush1.msra.mxu0 %v3164
      %3166 = vmatprep.subr.mxu0 0.0
      %v3167 = vand.u32 %v319, 4294901760
      %v3168 = vsub.f32 %v319, %v3167
      %v3169 = vand.u32 %v3168, 4294901760
      %3170 = vmatpush1.msra.mxu0 %v3169
      %3171 = vmatprep.subr.mxu0 0.0
      %v3172 = vand.u32 %v318, 4294901760
      %v3173 = vsub.f32 %v318, %v3172
      %v3174 = vand.u32 %v3173, 4294901760
      %3175 = vmatpush1.msra.mxu0 %v3174
      %3176 = vmatprep.subr.mxu0 0.0
      %v3177 = vand.u32 %v317, 4294901760
      %v3178 = vsub.f32 %v317, %v3177
      %v3179 = vand.u32 %v3178, 4294901760
      %3180 = vmatpush1.msra.mxu0 %v3179
      %3181 = vmatprep.subr.mxu0 0.0
      %3182 = vmatpush2.msra.mxu0 0.0
      %3183 = vmatprep.subr.mxu0 0.0
      %3184 = vmatpush2.msra.mxu0 0.0
      %3185 = vmatprep.subr.mxu0 0.0
      %3186 = vmatpush2.msra.mxu0 0.0
      %3187 = vmatprep.subr.mxu0 0.0
      %3188 = vmatpush2.msra.mxu0 0.0
      %3189 = vmatprep.subr.mxu0 0.0
      %3190 = vmatpush2.msra.mxu0 0.0
      %3191 = vmatprep.subr.mxu0 0.0
      %3192 = vmatpush2.msra.mxu0 0.0
      %3193 = vmatprep.subr.mxu0 0.0
      %3194 = vmatpush2.msra.mxu0 0.0
      %3195 = vmatprep.subr.mxu0 0.0
      %3196 = vmatpush2.msra.mxu0 0.0
      %3197 = vmatprep.subr.mxu0 0.0
      %3198 = vmatpush2.msra.mxu0 0.0
      %3199 = vmatprep.subr.mxu0 0.0
      %3200 = vmatpush2.msra.mxu0 0.0
      %3201 = vmatprep.subr.mxu0 0.0
      %3202 = vmatpush2.msra.mxu0 0.0
      %3203 = vmatprep.subr.mxu0 0.0
      %3204 = vmatpush2.msra.mxu0 0.0
      %3205 = vmatprep.subr.mxu0 0.0
      %3206 = vmatpush2.msra.mxu0 0.0
      %3207 = vmatprep.subr.mxu0 0.0
      %3208 = vmatpush2.msra.mxu0 0.0
      %3209 = vmatprep.subr.mxu0 0.0
      %3210 = vmatpush2.msra.mxu0 0.0
      %3211 = vmatprep.subr.mxu0 0.0
      %3212 = vmatpush2.msra.mxu0 0.0
      %3213 = vmatprep.mubr.f32.mxu0 0.0
      %v3214 = vand.u32 %v1818, 4294901760
      %3215 = vmatmul.mubr.f32.gmra.mxu0 %v3214
      %v3216 = vpop.f32.mrf.mxu0
      %v3217 = vadd.f32 %v3134, %v3216
      %v3218 = vpop.f32.mrf.mxu0
      %3219 = vdwg.mxu0
      %3220 = vmatprep.subr.mxu0 0.0
      %3221 = vmatpush1.msra.mxu0 0.0
      %3222 = vmatprep.subr.mxu0 0.0
      %3223 = vmatpush1.msra.mxu0 0.0
      %3224 = vmatprep.subr.mxu0 0.0
      %3225 = vmatpush1.msra.mxu0 0.0
      %3226 = vmatprep.subr.mxu0 0.0
      %3227 = vmatpush1.msra.mxu0 0.0
      %3228 = vmatprep.subr.mxu0 0.0
      %3229 = vmatpush1.msra.mxu0 0.0
      %3230 = vmatprep.subr.mxu0 0.0
      %3231 = vmatpush1.msra.mxu0 0.0
      %3232 = vmatprep.subr.mxu0 0.0
      %3233 = vmatpush1.msra.mxu0 0.0
      %3234 = vmatprep.subr.mxu0 0.0
      %3235 = vmatpush1.msra.mxu0 0.0
      %3236 = vmatprep.subr.mxu0 0.0
      %3237 = vmatpush1.msra.mxu0 0.0
      %3238 = vmatprep.subr.mxu0 0.0
      %3239 = vmatpush1.msra.mxu0 0.0
      %3240 = vmatprep.subr.mxu0 0.0
      %3241 = vmatpush1.msra.mxu0 0.0
      %3242 = vmatprep.subr.mxu0 0.0
      %3243 = vmatpush1.msra.mxu0 0.0
      %3244 = vmatprep.subr.mxu0 0.0
      %v3245 = vand.u32 %v320, 4294901760
      %3246 = vmatpush1.msra.mxu0 %v3245
      %3247 = vmatprep.subr.mxu0 0.0
      %v3248 = vand.u32 %v319, 4294901760
      %3249 = vmatpush1.msra.mxu0 %v3248
      %3250 = vmatprep.subr.mxu0 0.0
      %v3251 = vand.u32 %v318, 4294901760
      %3252 = vmatpush1.msra.mxu0 %v3251
      %3253 = vmatprep.subr.mxu0 0.0
      %v3254 = vand.u32 %v317, 4294901760
      %3255 = vmatpush1.msra.mxu0 %v3254
      %3256 = vmatprep.subr.mxu0 0.0
      %3257 = vmatpush2.msra.mxu0 0.0
      %3258 = vmatprep.subr.mxu0 0.0
      %3259 = vmatpush2.msra.mxu0 0.0
      %3260 = vmatprep.subr.mxu0 0.0
      %3261 = vmatpush2.msra.mxu0 0.0
      %3262 = vmatprep.subr.mxu0 0.0
      %3263 = vmatpush2.msra.mxu0 0.0
      %3264 = vmatprep.subr.mxu0 0.0
      %3265 = vmatpush2.msra.mxu0 0.0
      %3266 = vmatprep.subr.mxu0 0.0
      %3267 = vmatpush2.msra.mxu0 0.0
      %3268 = vmatprep.subr.mxu0 0.0
      %3269 = vmatpush2.msra.mxu0 0.0
      %3270 = vmatprep.subr.mxu0 0.0
      %3271 = vmatpush2.msra.mxu0 0.0
      %3272 = vmatprep.subr.mxu0 0.0
      %3273 = vmatpush2.msra.mxu0 0.0
      %3274 = vmatprep.subr.mxu0 0.0
      %3275 = vmatpush2.msra.mxu0 0.0
      %3276 = vmatprep.subr.mxu0 0.0
      %3277 = vmatpush2.msra.mxu0 0.0
      %3278 = vmatprep.subr.mxu0 0.0
      %3279 = vmatpush2.msra.mxu0 0.0
      %3280 = vmatprep.subr.mxu0 0.0
      %3281 = vmatpush2.msra.mxu0 0.0
      %3282 = vmatprep.subr.mxu0 0.0
      %3283 = vmatpush2.msra.mxu0 0.0
      %3284 = vmatprep.subr.mxu0 0.0
      %3285 = vmatpush2.msra.mxu0 0.0
      %3286 = vmatprep.subr.mxu0 0.0
      %3287 = vmatpush2.msra.mxu0 0.0
      %3288 = vmatprep.mubr.f32.mxu0 0.0
      %v3289 = vand.u32 %v1818, 4294901760
      %3290 = vmatmul.mubr.f32.gmra.mxu0 %v3289
      %v3291 = vpop.f32.mrf.mxu0
      %v3292 = vadd.f32 %v3217, %v3291
      %v3293 = vpop.f32.mrf.mxu0
      %3294 = vdwg.mxu0
      %v3295 = vmul.f32 %v2798, %v3292
      %v3296 = vadd.f32 %v2809, %v3295
      %v3297 = vtanh.pop %v3296
      %v3298 = vsub.f32 1.0, %v2807
      %v3299 = vmul.f32 %v3298, %v3297
      %v3300 = vmul.f32 %v2807, %v326
      %v3301 = vadd.f32 %v3299, %v3300
      %v3302 = vstv %s329
      %v3303 = vmul.f32 %v3302, %v3301
      %s3304 = ssub.f32 1.0, %s329
      %v3305 = vstv %s3304
      %v3306 = vmul.f32 %v3305, %v326
      %v3307 = vadd.f32 %v3303, %v3306
      %s3308 = scalar_lea.vmem %s282, 4
      %3309 = vst.msk [vmem:[%s3308] sm:$0x3] %vm1815, %v3307
      %v3311 = vsel %vm330, %v1814, 0
      %3313 = vmatprep.subr.mxu0 0.0
      %3314 = vmatpush1.msra.mxu0 0.0
      %3315 = vmatprep.subr.mxu0 0.0
      %3316 = vmatpush1.msra.mxu0 0.0
      %3317 = vmatprep.subr.mxu0 0.0
      %3318 = vmatpush1.msra.mxu0 0.0
      %3319 = vmatprep.subr.mxu0 0.0
      %3320 = vmatpush1.msra.mxu0 0.0
      %3321 = vmatprep.subr.mxu0 0.0
      %3322 = vmatpush1.msra.mxu0 0.0
      %3323 = vmatprep.subr.mxu0 0.0
      %3324 = vmatpush1.msra.mxu0 0.0
      %3325 = vmatprep.subr.mxu0 0.0
      %3326 = vmatpush1.msra.mxu0 0.0
      %3327 = vmatprep.subr.mxu0 0.0
      %3328 = vmatpush1.msra.mxu0 0.0
      %3329 = vmatprep.subr.mxu0 0.0
      %3330 = vmatpush1.msra.mxu0 0.0
      %3331 = vmatprep.subr.mxu0 0.0
      %3332 = vmatpush1.msra.mxu0 0.0
      %3333 = vmatprep.subr.mxu0 0.0
      %3334 = vmatpush1.msra.mxu0 0.0
      %3335 = vmatprep.subr.mxu0 0.0
      %3336 = vmatpush1.msra.mxu0 0.0
      %3337 = vmatprep.subr.mxu0 0.0
      %v3338 = vand.u32 %v295, 4294901760
      %3339 = vmatpush1.msra.mxu0 %v3338
      %3340 = vmatprep.subr.mxu0 0.0
      %v3341 = vand.u32 %v294, 4294901760
      %3342 = vmatpush1.msra.mxu0 %v3341
      %3343 = vmatprep.subr.mxu0 0.0
      %v3344 = vand.u32 %v293, 4294901760
      %3345 = vmatpush1.msra.mxu0 %v3344
      %3346 = vmatprep.subr.mxu0 0.0
      %v3347 = vand.u32 %v292, 4294901760
      %3348 = vmatpush1.msra.mxu0 %v3347
      %3349 = vmatprep.subr.mxu0 0.0
      %3350 = vmatpush2.msra.mxu0 0.0
      %3351 = vmatprep.subr.mxu0 0.0
      %3352 = vmatpush2.msra.mxu0 0.0
      %3353 = vmatprep.subr.mxu0 0.0
      %3354 = vmatpush2.msra.mxu0 0.0
      %3355 = vmatprep.subr.mxu0 0.0
      %3356 = vmatpush2.msra.mxu0 0.0
      %3357 = vmatprep.subr.mxu0 0.0
      %3358 = vmatpush2.msra.mxu0 0.0
      %3359 = vmatprep.subr.mxu0 0.0
      %3360 = vmatpush2.msra.mxu0 0.0
      %3361 = vmatprep.subr.mxu0 0.0
      %3362 = vmatpush2.msra.mxu0 0.0
      %3363 = vmatprep.subr.mxu0 0.0
      %3364 = vmatpush2.msra.mxu0 0.0
      %3365 = vmatprep.subr.mxu0 0.0
      %3366 = vmatpush2.msra.mxu0 0.0
      %3367 = vmatprep.subr.mxu0 0.0
      %3368 = vmatpush2.msra.mxu0 0.0
      %3369 = vmatprep.subr.mxu0 0.0
      %3370 = vmatpush2.msra.mxu0 0.0
      %3371 = vmatprep.subr.mxu0 0.0
      %3372 = vmatpush2.msra.mxu0 0.0
      %3373 = vmatprep.subr.mxu0 0.0
      %3374 = vmatpush2.msra.mxu0 0.0
      %3375 = vmatprep.subr.mxu0 0.0
      %3376 = vmatpush2.msra.mxu0 0.0
      %3377 = vmatprep.subr.mxu0 0.0
      %3378 = vmatpush2.msra.mxu0 0.0
      %3379 = vmatprep.subr.mxu0 0.0
      %3380 = vmatpush2.msra.mxu0 0.0
      %3381 = vmatprep.mubr.f32.mxu0 0.0
      %v3382 = vand.u32 %v3311, 4294901760
      %v3383 = vsub.f32 %v3311, %v3382
      %v3384 = vand.u32 %v3383, 4294901760
      %v3385 = vsub.f32 %v3383, %v3384
      %v3386 = vand.u32 %v3385, 4294901760
      %3387 = vmatmul.mubr.f32.gmra.mxu0 %v3386
      %v3388 = vpop.f32.mrf.mxu0
      %v3389 = vadd.f32 0.0, %v3388
      %v3390 = vpop.f32.mrf.mxu0
      %3391 = vdwg.mxu0
      %3392 = vmatprep.subr.mxu0 0.0
      %3393 = vmatpush1.msra.mxu0 0.0
      %3394 = vmatprep.subr.mxu0 0.0
      %3395 = vmatpush1.msra.mxu0 0.0
      %3396 = vmatprep.subr.mxu0 0.0
      %3397 = vmatpush1.msra.mxu0 0.0
      %3398 = vmatprep.subr.mxu0 0.0
      %3399 = vmatpush1.msra.mxu0 0.0
      %3400 = vmatprep.subr.mxu0 0.0
      %3401 = vmatpush1.msra.mxu0 0.0
      %3402 = vmatprep.subr.mxu0 0.0
      %3403 = vmatpush1.msra.mxu0 0.0
      %3404 = vmatprep.subr.mxu0 0.0
      %3405 = vmatpush1.msra.mxu0 0.0
      %3406 = vmatprep.subr.mxu0 0.0
      %3407 = vmatpush1.msra.mxu0 0.0
      %3408 = vmatprep.subr.mxu0 0.0
      %3409 = vmatpush1.msra.mxu0 0.0
      %3410 = vmatprep.subr.mxu0 0.0
      %3411 = vmatpush1.msra.mxu0 0.0
      %3412 = vmatprep.subr.mxu0 0.0
      %3413 = vmatpush1.msra.mxu0 0.0
      %3414 = vmatprep.subr.mxu0 0.0
      %3415 = vmatpush1.msra.mxu0 0.0
      %3416 = vmatprep.subr.mxu0 0.0
      %v3417 = vand.u32 %v295, 4294901760
      %v3418 = vsub.f32 %v295, %v3417
      %v3419 = vand.u32 %v3418, 4294901760
      %v3420 = vsub.f32 %v3418, %v3419
      %v3421 = vand.u32 %v3420, 4294901760
      %3422 = vmatpush1.msra.mxu0 %v3421
      %3423 = vmatprep.subr.mxu0 0.0
      %v3424 = vand.u32 %v294, 4294901760
      %v3425 = vsub.f32 %v294, %v3424
      %v3426 = vand.u32 %v3425, 4294901760
      %v3427 = vsub.f32 %v3425, %v3426
      %v3428 = vand.u32 %v3427, 4294901760
      %3429 = vmatpush1.msra.mxu0 %v3428
      %3430 = vmatprep.subr.mxu0 0.0
      %v3431 = vand.u32 %v293, 4294901760
      %v3432 = vsub.f32 %v293, %v3431
      %v3433 = vand.u32 %v3432, 4294901760
      %v3434 = vsub.f32 %v3432, %v3433
      %v3435 = vand.u32 %v3434, 4294901760
      %3436 = vmatpush1.msra.mxu0 %v3435
      %3437 = vmatprep.subr.mxu0 0.0
      %v3438 = vand.u32 %v292, 4294901760
      %v3439 = vsub.f32 %v292, %v3438
      %v3440 = vand.u32 %v3439, 4294901760
      %v3441 = vsub.f32 %v3439, %v3440
      %v3442 = vand.u32 %v3441, 4294901760
      %3443 = vmatpush1.msra.mxu0 %v3442
      %3444 = vmatprep.subr.mxu0 0.0
      %3445 = vmatpush2.msra.mxu0 0.0
      %3446 = vmatprep.subr.mxu0 0.0
      %3447 = vmatpush2.msra.mxu0 0.0
      %3448 = vmatprep.subr.mxu0 0.0
      %3449 = vmatpush2.msra.mxu0 0.0
      %3450 = vmatprep.subr.mxu0 0.0
      %3451 = vmatpush2.msra.mxu0 0.0
      %3452 = vmatprep.subr.mxu0 0.0
      %3453 = vmatpush2.msra.mxu0 0.0
      %3454 = vmatprep.subr.mxu0 0.0
      %3455 = vmatpush2.msra.mxu0 0.0
      %3456 = vmatprep.subr.mxu0 0.0
      %3457 = vmatpush2.msra.mxu0 0.0
      %3458 = vmatprep.subr.mxu0 0.0
      %3459 = vmatpush2.msra.mxu0 0.0
      %3460 = vmatprep.subr.mxu0 0.0
      %3461 = vmatpush2.msra.mxu0 0.0
      %3462 = vmatprep.subr.mxu0 0.0
      %3463 = vmatpush2.msra.mxu0 0.0
      %3464 = vmatprep.subr.mxu0 0.0
      %3465 = vmatpush2.msra.mxu0 0.0
      %3466 = vmatprep.subr.mxu0 0.0
      %3467 = vmatpush2.msra.mxu0 0.0
      %3468 = vmatprep.subr.mxu0 0.0
      %3469 = vmatpush2.msra.mxu0 0.0
      %3470 = vmatprep.subr.mxu0 0.0
      %3471 = vmatpush2.msra.mxu0 0.0
      %3472 = vmatprep.subr.mxu0 0.0
      %3473 = vmatpush2.msra.mxu0 0.0
      %3474 = vmatprep.subr.mxu0 0.0
      %3475 = vmatpush2.msra.mxu0 0.0
      %3476 = vmatprep.mubr.f32.mxu0 0.0
      %v3477 = vand.u32 %v3311, 4294901760
      %3478 = vmatmul.mubr.f32.gmra.mxu0 %v3477
      %v3479 = vpop.f32.mrf.mxu0
      %v3480 = vadd.f32 %v3389, %v3479
      %v3481 = vpop.f32.mrf.mxu0
      %3482 = vdwg.mxu0
      %3483 = vmatprep.subr.mxu0 0.0
      %3484 = vmatpush1.msra.mxu0 0.0
      %3485 = vmatprep.subr.mxu0 0.0
      %3486 = vmatpush1.msra.mxu0 0.0
      %3487 = vmatprep.subr.mxu0 0.0
      %3488 = vmatpush1.msra.mxu0 0.0
      %3489 = vmatprep.subr.mxu0 0.0
      %3490 = vmatpush1.msra.mxu0 0.0
      %3491 = vmatprep.subr.mxu0 0.0
      %3492 = vmatpush1.msra.mxu0 0.0
      %3493 = vmatprep.subr.mxu0 0.0
      %3494 = vmatpush1.msra.mxu0 0.0
      %3495 = vmatprep.subr.mxu0 0.0
      %3496 = vmatpush1.msra.mxu0 0.0
      %3497 = vmatprep.subr.mxu0 0.0
      %3498 = vmatpush1.msra.mxu0 0.0
      %3499 = vmatprep.subr.mxu0 0.0
      %3500 = vmatpush1.msra.mxu0 0.0
      %3501 = vmatprep.subr.mxu0 0.0
      %3502 = vmatpush1.msra.mxu0 0.0
      %3503 = vmatprep.subr.mxu0 0.0
      %3504 = vmatpush1.msra.mxu0 0.0
      %3505 = vmatprep.subr.mxu0 0.0
      %3506 = vmatpush1.msra.mxu0 0.0
      %3507 = vmatprep.subr.mxu0 0.0
      %v3508 = vand.u32 %v295, 4294901760
      %v3509 = vsub.f32 %v295, %v3508
      %3510 = vmatpush1.msra.mxu0 %v3509
      %3511 = vmatprep.subr.mxu0 0.0
      %v3512 = vand.u32 %v294, 4294901760
      %v3513 = vsub.f32 %v294, %v3512
      %3514 = vmatpush1.msra.mxu0 %v3513
      %3515 = vmatprep.subr.mxu0 0.0
      %v3516 = vand.u32 %v293, 4294901760
      %v3517 = vsub.f32 %v293, %v3516
      %3518 = vmatpush1.msra.mxu0 %v3517
      %3519 = vmatprep.subr.mxu0 0.0
      %v3520 = vand.u32 %v292, 4294901760
      %v3521 = vsub.f32 %v292, %v3520
      %3522 = vmatpush1.msra.mxu0 %v3521
      %3523 = vmatprep.subr.mxu0 0.0
      %3524 = vmatpush2.msra.mxu0 0.0
      %3525 = vmatprep.subr.mxu0 0.0
      %3526 = vmatpush2.msra.mxu0 0.0
      %3527 = vmatprep.subr.mxu0 0.0
      %3528 = vmatpush2.msra.mxu0 0.0
      %3529 = vmatprep.subr.mxu0 0.0
      %3530 = vmatpush2.msra.mxu0 0.0
      %3531 = vmatprep.subr.mxu0 0.0
      %3532 = vmatpush2.msra.mxu0 0.0
      %3533 = vmatprep.subr.mxu0 0.0
      %3534 = vmatpush2.msra.mxu0 0.0
      %3535 = vmatprep.subr.mxu0 0.0
      %3536 = vmatpush2.msra.mxu0 0.0
      %3537 = vmatprep.subr.mxu0 0.0
      %3538 = vmatpush2.msra.mxu0 0.0
      %3539 = vmatprep.subr.mxu0 0.0
      %3540 = vmatpush2.msra.mxu0 0.0
      %3541 = vmatprep.subr.mxu0 0.0
      %3542 = vmatpush2.msra.mxu0 0.0
      %3543 = vmatprep.subr.mxu0 0.0
      %3544 = vmatpush2.msra.mxu0 0.0
      %3545 = vmatprep.subr.mxu0 0.0
      %3546 = vmatpush2.msra.mxu0 0.0
      %3547 = vmatprep.subr.mxu0 0.0
      %3548 = vmatpush2.msra.mxu0 0.0
      %3549 = vmatprep.subr.mxu0 0.0
      %3550 = vmatpush2.msra.mxu0 0.0
      %3551 = vmatprep.subr.mxu0 0.0
      %3552 = vmatpush2.msra.mxu0 0.0
      %3553 = vmatprep.subr.mxu0 0.0
      %3554 = vmatpush2.msra.mxu0 0.0
      %3555 = vmatprep.mubr.f32.mxu0 0.0
      %v3556 = vand.u32 %v3311, 4294901760
      %v3557 = vsub.f32 %v3311, %v3556
      %3558 = vmatmul.mubr.f32.gmra.mxu0 %v3557
      %v3559 = vpop.f32.mrf.mxu0
      %v3560 = vadd.f32 %v3480, %v3559
      %v3561 = vpop.f32.mrf.mxu0
      %3562 = vdwg.mxu0
      %3563 = vmatprep.subr.mxu0 0.0
      %3564 = vmatpush1.msra.mxu0 0.0
      %3565 = vmatprep.subr.mxu0 0.0
      %3566 = vmatpush1.msra.mxu0 0.0
      %3567 = vmatprep.subr.mxu0 0.0
      %3568 = vmatpush1.msra.mxu0 0.0
      %3569 = vmatprep.subr.mxu0 0.0
      %3570 = vmatpush1.msra.mxu0 0.0
      %3571 = vmatprep.subr.mxu0 0.0
      %3572 = vmatpush1.msra.mxu0 0.0
      %3573 = vmatprep.subr.mxu0 0.0
      %3574 = vmatpush1.msra.mxu0 0.0
      %3575 = vmatprep.subr.mxu0 0.0
      %3576 = vmatpush1.msra.mxu0 0.0
      %3577 = vmatprep.subr.mxu0 0.0
      %3578 = vmatpush1.msra.mxu0 0.0
      %3579 = vmatprep.subr.mxu0 0.0
      %3580 = vmatpush1.msra.mxu0 0.0
      %3581 = vmatprep.subr.mxu0 0.0
      %3582 = vmatpush1.msra.mxu0 0.0
      %3583 = vmatprep.subr.mxu0 0.0
      %3584 = vmatpush1.msra.mxu0 0.0
      %3585 = vmatprep.subr.mxu0 0.0
      %3586 = vmatpush1.msra.mxu0 0.0
      %3587 = vmatprep.subr.mxu0 0.0
      %v3588 = vand.u32 %v295, 4294901760
      %3589 = vmatpush1.msra.mxu0 %v3588
      %3590 = vmatprep.subr.mxu0 0.0
      %v3591 = vand.u32 %v294, 4294901760
      %3592 = vmatpush1.msra.mxu0 %v3591
      %3593 = vmatprep.subr.mxu0 0.0
      %v3594 = vand.u32 %v293, 4294901760
      %3595 = vmatpush1.msra.mxu0 %v3594
      %3596 = vmatprep.subr.mxu0 0.0
      %v3597 = vand.u32 %v292, 4294901760
      %3598 = vmatpush1.msra.mxu0 %v3597
      %3599 = vmatprep.subr.mxu0 0.0
      %3600 = vmatpush2.msra.mxu0 0.0
      %3601 = vmatprep.subr.mxu0 0.0
      %3602 = vmatpush2.msra.mxu0 0.0
      %3603 = vmatprep.subr.mxu0 0.0
      %3604 = vmatpush2.msra.mxu0 0.0
      %3605 = vmatprep.subr.mxu0 0.0
      %3606 = vmatpush2.msra.mxu0 0.0
      %3607 = vmatprep.subr.mxu0 0.0
      %3608 = vmatpush2.msra.mxu0 0.0
      %3609 = vmatprep.subr.mxu0 0.0
      %3610 = vmatpush2.msra.mxu0 0.0
      %3611 = vmatprep.subr.mxu0 0.0
      %3612 = vmatpush2.msra.mxu0 0.0
      %3613 = vmatprep.subr.mxu0 0.0
      %3614 = vmatpush2.msra.mxu0 0.0
      %3615 = vmatprep.subr.mxu0 0.0
      %3616 = vmatpush2.msra.mxu0 0.0
      %3617 = vmatprep.subr.mxu0 0.0
      %3618 = vmatpush2.msra.mxu0 0.0
      %3619 = vmatprep.subr.mxu0 0.0
      %3620 = vmatpush2.msra.mxu0 0.0
      %3621 = vmatprep.subr.mxu0 0.0
      %3622 = vmatpush2.msra.mxu0 0.0
      %3623 = vmatprep.subr.mxu0 0.0
      %3624 = vmatpush2.msra.mxu0 0.0
      %3625 = vmatprep.subr.mxu0 0.0
      %3626 = vmatpush2.msra.mxu0 0.0
      %3627 = vmatprep.subr.mxu0 0.0
      %3628 = vmatpush2.msra.mxu0 0.0
      %3629 = vmatprep.subr.mxu0 0.0
      %3630 = vmatpush2.msra.mxu0 0.0
      %3631 = vmatprep.mubr.f32.mxu0 0.0
      %v3632 = vand.u32 %v3311, 4294901760
      %v3633 = vsub.f32 %v3311, %v3632
      %v3634 = vand.u32 %v3633, 4294901760
      %3635 = vmatmul.mubr.f32.gmra.mxu0 %v3634
      %v3636 = vpop.f32.mrf.mxu0
      %v3637 = vadd.f32 %v3560, %v3636
      %v3638 = vpop.f32.mrf.mxu0
      %3639 = vdwg.mxu0
      %3640 = vmatprep.subr.mxu0 0.0
      %3641 = vmatpush1.msra.mxu0 0.0
      %3642 = vmatprep.subr.mxu0 0.0
      %3643 = vmatpush1.msra.mxu0 0.0
      %3644 = vmatprep.subr.mxu0 0.0
      %3645 = vmatpush1.msra.mxu0 0.0
      %3646 = vmatprep.subr.mxu0 0.0
      %3647 = vmatpush1.msra.mxu0 0.0
      %3648 = vmatprep.subr.mxu0 0.0
      %3649 = vmatpush1.msra.mxu0 0.0
      %3650 = vmatprep.subr.mxu0 0.0
      %3651 = vmatpush1.msra.mxu0 0.0
      %3652 = vmatprep.subr.mxu0 0.0
      %3653 = vmatpush1.msra.mxu0 0.0
      %3654 = vmatprep.subr.mxu0 0.0
      %3655 = vmatpush1.msra.mxu0 0.0
      %3656 = vmatprep.subr.mxu0 0.0
      %3657 = vmatpush1.msra.mxu0 0.0
      %3658 = vmatprep.subr.mxu0 0.0
      %3659 = vmatpush1.msra.mxu0 0.0
      %3660 = vmatprep.subr.mxu0 0.0
      %3661 = vmatpush1.msra.mxu0 0.0
      %3662 = vmatprep.subr.mxu0 0.0
      %3663 = vmatpush1.msra.mxu0 0.0
      %3664 = vmatprep.subr.mxu0 0.0
      %v3665 = vand.u32 %v295, 4294901760
      %v3666 = vsub.f32 %v295, %v3665
      %v3667 = vand.u32 %v3666, 4294901760
      %3668 = vmatpush1.msra.mxu0 %v3667
      %3669 = vmatprep.subr.mxu0 0.0
      %v3670 = vand.u32 %v294, 4294901760
      %v3671 = vsub.f32 %v294, %v3670
      %v3672 = vand.u32 %v3671, 4294901760
      %3673 = vmatpush1.msra.mxu0 %v3672
      %3674 = vmatprep.subr.mxu0 0.0
      %v3675 = vand.u32 %v293, 4294901760
      %v3676 = vsub.f32 %v293, %v3675
      %v3677 = vand.u32 %v3676, 4294901760
      %3678 = vmatpush1.msra.mxu0 %v3677
      %3679 = vmatprep.subr.mxu0 0.0
      %v3680 = vand.u32 %v292, 4294901760
      %v3681 = vsub.f32 %v292, %v3680
      %v3682 = vand.u32 %v3681, 4294901760
      %3683 = vmatpush1.msra.mxu0 %v3682
      %3684 = vmatprep.subr.mxu0 0.0
      %3685 = vmatpush2.msra.mxu0 0.0
      %3686 = vmatprep.subr.mxu0 0.0
      %3687 = vmatpush2.msra.mxu0 0.0
      %3688 = vmatprep.subr.mxu0 0.0
      %3689 = vmatpush2.msra.mxu0 0.0
      %3690 = vmatprep.subr.mxu0 0.0
      %3691 = vmatpush2.msra.mxu0 0.0
      %3692 = vmatprep.subr.mxu0 0.0
      %3693 = vmatpush2.msra.mxu0 0.0
      %3694 = vmatprep.subr.mxu0 0.0
      %3695 = vmatpush2.msra.mxu0 0.0
      %3696 = vmatprep.subr.mxu0 0.0
      %3697 = vmatpush2.msra.mxu0 0.0
      %3698 = vmatprep.subr.mxu0 0.0
      %3699 = vmatpush2.msra.mxu0 0.0
      %3700 = vmatprep.subr.mxu0 0.0
      %3701 = vmatpush2.msra.mxu0 0.0
      %3702 = vmatprep.subr.mxu0 0.0
      %3703 = vmatpush2.msra.mxu0 0.0
      %3704 = vmatprep.subr.mxu0 0.0
      %3705 = vmatpush2.msra.mxu0 0.0
      %3706 = vmatprep.subr.mxu0 0.0
      %3707 = vmatpush2.msra.mxu0 0.0
      %3708 = vmatprep.subr.mxu0 0.0
      %3709 = vmatpush2.msra.mxu0 0.0
      %3710 = vmatprep.subr.mxu0 0.0
      %3711 = vmatpush2.msra.mxu0 0.0
      %3712 = vmatprep.subr.mxu0 0.0
      %3713 = vmatpush2.msra.mxu0 0.0
      %3714 = vmatprep.subr.mxu0 0.0
      %3715 = vmatpush2.msra.mxu0 0.0
      %3716 = vmatprep.mubr.f32.mxu0 0.0
      %v3717 = vand.u32 %v3311, 4294901760
      %3718 = vmatmul.mubr.f32.gmra.mxu0 %v3717
      %v3719 = vpop.f32.mrf.mxu0
      %v3720 = vadd.f32 %v3637, %v3719
      %v3721 = vpop.f32.mrf.mxu0
      %3722 = vdwg.mxu0
      %3723 = vmatprep.subr.mxu0 0.0
      %3724 = vmatpush1.msra.mxu0 0.0
      %3725 = vmatprep.subr.mxu0 0.0
      %3726 = vmatpush1.msra.mxu0 0.0
      %3727 = vmatprep.subr.mxu0 0.0
      %3728 = vmatpush1.msra.mxu0 0.0
      %3729 = vmatprep.subr.mxu0 0.0
      %3730 = vmatpush1.msra.mxu0 0.0
      %3731 = vmatprep.subr.mxu0 0.0
      %3732 = vmatpush1.msra.mxu0 0.0
      %3733 = vmatprep.subr.mxu0 0.0
      %3734 = vmatpush1.msra.mxu0 0.0
      %3735 = vmatprep.subr.mxu0 0.0
      %3736 = vmatpush1.msra.mxu0 0.0
      %3737 = vmatprep.subr.mxu0 0.0
      %3738 = vmatpush1.msra.mxu0 0.0
      %3739 = vmatprep.subr.mxu0 0.0
      %3740 = vmatpush1.msra.mxu0 0.0
      %3741 = vmatprep.subr.mxu0 0.0
      %3742 = vmatpush1.msra.mxu0 0.0
      %3743 = vmatprep.subr.mxu0 0.0
      %3744 = vmatpush1.msra.mxu0 0.0
      %3745 = vmatprep.subr.mxu0 0.0
      %3746 = vmatpush1.msra.mxu0 0.0
      %3747 = vmatprep.subr.mxu0 0.0
      %v3748 = vand.u32 %v295, 4294901760
      %3749 = vmatpush1.msra.mxu0 %v3748
      %3750 = vmatprep.subr.mxu0 0.0
      %v3751 = vand.u32 %v294, 4294901760
      %3752 = vmatpush1.msra.mxu0 %v3751
      %3753 = vmatprep.subr.mxu0 0.0
      %v3754 = vand.u32 %v293, 4294901760
      %3755 = vmatpush1.msra.mxu0 %v3754
      %3756 = vmatprep.subr.mxu0 0.0
      %v3757 = vand.u32 %v292, 4294901760
      %3758 = vmatpush1.msra.mxu0 %v3757
      %3759 = vmatprep.subr.mxu0 0.0
      %3760 = vmatpush2.msra.mxu0 0.0
      %3761 = vmatprep.subr.mxu0 0.0
      %3762 = vmatpush2.msra.mxu0 0.0
      %3763 = vmatprep.subr.mxu0 0.0
      %3764 = vmatpush2.msra.mxu0 0.0
      %3765 = vmatprep.subr.mxu0 0.0
      %3766 = vmatpush2.msra.mxu0 0.0
      %3767 = vmatprep.subr.mxu0 0.0
      %3768 = vmatpush2.msra.mxu0 0.0
      %3769 = vmatprep.subr.mxu0 0.0
      %3770 = vmatpush2.msra.mxu0 0.0
      %3771 = vmatprep.subr.mxu0 0.0
      %3772 = vmatpush2.msra.mxu0 0.0
      %3773 = vmatprep.subr.mxu0 0.0
      %3774 = vmatpush2.msra.mxu0 0.0
      %3775 = vmatprep.subr.mxu0 0.0
      %3776 = vmatpush2.msra.mxu0 0.0
      %3777 = vmatprep.subr.mxu0 0.0
      %3778 = vmatpush2.msra.mxu0 0.0
      %3779 = vmatprep.subr.mxu0 0.0
      %3780 = vmatpush2.msra.mxu0 0.0
      %3781 = vmatprep.subr.mxu0 0.0
      %3782 = vmatpush2.msra.mxu0 0.0
      %3783 = vmatprep.subr.mxu0 0.0
      %3784 = vmatpush2.msra.mxu0 0.0
      %3785 = vmatprep.subr.mxu0 0.0
      %3786 = vmatpush2.msra.mxu0 0.0
      %3787 = vmatprep.subr.mxu0 0.0
      %3788 = vmatpush2.msra.mxu0 0.0
      %3789 = vmatprep.subr.mxu0 0.0
      %3790 = vmatpush2.msra.mxu0 0.0
      %3791 = vmatprep.mubr.f32.mxu0 0.0
      %v3792 = vand.u32 %v3311, 4294901760
      %3793 = vmatmul.mubr.f32.gmra.mxu0 %v3792
      %v3794 = vpop.f32.mrf.mxu0
      %v3795 = vadd.f32 %v3720, %v3794
      %v3796 = vpop.f32.mrf.mxu0
      %3797 = vdwg.mxu0
      %3798 = vmatprep.subr.mxu0 0.0
      %3799 = vmatpush1.msra.mxu0 0.0
      %3800 = vmatprep.subr.mxu0 0.0
      %3801 = vmatpush1.msra.mxu0 0.0
      %3802 = vmatprep.subr.mxu0 0.0
      %3803 = vmatpush1.msra.mxu0 0.0
      %3804 = vmatprep.subr.mxu0 0.0
      %3805 = vmatpush1.msra.mxu0 0.0
      %3806 = vmatprep.subr.mxu0 0.0
      %3807 = vmatpush1.msra.mxu0 0.0
      %3808 = vmatprep.subr.mxu0 0.0
      %3809 = vmatpush1.msra.mxu0 0.0
      %3810 = vmatprep.subr.mxu0 0.0
      %3811 = vmatpush1.msra.mxu0 0.0
      %3812 = vmatprep.subr.mxu0 0.0
      %3813 = vmatpush1.msra.mxu0 0.0
      %3814 = vmatprep.subr.mxu0 0.0
      %3815 = vmatpush1.msra.mxu0 0.0
      %3816 = vmatprep.subr.mxu0 0.0
      %3817 = vmatpush1.msra.mxu0 0.0
      %3818 = vmatprep.subr.mxu0 0.0
      %3819 = vmatpush1.msra.mxu0 0.0
      %3820 = vmatprep.subr.mxu0 0.0
      %3821 = vmatpush1.msra.mxu0 0.0
      %3822 = vmatprep.subr.mxu0 0.0
      %v3823 = vand.u32 %v300, 4294901760
      %3824 = vmatpush1.msra.mxu0 %v3823
      %3825 = vmatprep.subr.mxu0 0.0
      %v3826 = vand.u32 %v299, 4294901760
      %3827 = vmatpush1.msra.mxu0 %v3826
      %3828 = vmatprep.subr.mxu0 0.0
      %v3829 = vand.u32 %v298, 4294901760
      %3830 = vmatpush1.msra.mxu0 %v3829
      %3831 = vmatprep.subr.mxu0 0.0
      %v3832 = vand.u32 %v297, 4294901760
      %3833 = vmatpush1.msra.mxu0 %v3832
      %3834 = vmatprep.subr.mxu0 0.0
      %3835 = vmatpush2.msra.mxu0 0.0
      %3836 = vmatprep.subr.mxu0 0.0
      %3837 = vmatpush2.msra.mxu0 0.0
      %3838 = vmatprep.subr.mxu0 0.0
      %3839 = vmatpush2.msra.mxu0 0.0
      %3840 = vmatprep.subr.mxu0 0.0
      %3841 = vmatpush2.msra.mxu0 0.0
      %3842 = vmatprep.subr.mxu0 0.0
      %3843 = vmatpush2.msra.mxu0 0.0
      %3844 = vmatprep.subr.mxu0 0.0
      %3845 = vmatpush2.msra.mxu0 0.0
      %3846 = vmatprep.subr.mxu0 0.0
      %3847 = vmatpush2.msra.mxu0 0.0
      %3848 = vmatprep.subr.mxu0 0.0
      %3849 = vmatpush2.msra.mxu0 0.0
      %3850 = vmatprep.subr.mxu0 0.0
      %3851 = vmatpush2.msra.mxu0 0.0
      %3852 = vmatprep.subr.mxu0 0.0
      %3853 = vmatpush2.msra.mxu0 0.0
      %3854 = vmatprep.subr.mxu0 0.0
      %3855 = vmatpush2.msra.mxu0 0.0
      %3856 = vmatprep.subr.mxu0 0.0
      %3857 = vmatpush2.msra.mxu0 0.0
      %3858 = vmatprep.subr.mxu0 0.0
      %3859 = vmatpush2.msra.mxu0 0.0
      %3860 = vmatprep.subr.mxu0 0.0
      %3861 = vmatpush2.msra.mxu0 0.0
      %3862 = vmatprep.subr.mxu0 0.0
      %3863 = vmatpush2.msra.mxu0 0.0
      %3864 = vmatprep.subr.mxu0 0.0
      %3865 = vmatpush2.msra.mxu0 0.0
      %3866 = vmatprep.mubr.f32.mxu0 0.0
      %v3867 = vand.u32 %v3311, 4294901760
      %v3868 = vsub.f32 %v3311, %v3867
      %v3869 = vand.u32 %v3868, 4294901760
      %v3870 = vsub.f32 %v3868, %v3869
      %v3871 = vand.u32 %v3870, 4294901760
      %3872 = vmatmul.mubr.f32.gmra.mxu0 %v3871
      %v3873 = vpop.f32.mrf.mxu0
      %v3874 = vadd.f32 0.0, %v3873
      %v3875 = vpop.f32.mrf.mxu0
      %3876 = vdwg.mxu0
      %3877 = vmatprep.subr.mxu0 0.0
      %3878 = vmatpush1.msra.mxu0 0.0
      %3879 = vmatprep.subr.mxu0 0.0
      %3880 = vmatpush1.msra.mxu0 0.0
      %3881 = vmatprep.subr.mxu0 0.0
      %3882 = vmatpush1.msra.mxu0 0.0
      %3883 = vmatprep.subr.mxu0 0.0
      %3884 = vmatpush1.msra.mxu0 0.0
      %3885 = vmatprep.subr.mxu0 0.0
      %3886 = vmatpush1.msra.mxu0 0.0
      %3887 = vmatprep.subr.mxu0 0.0
      %3888 = vmatpush1.msra.mxu0 0.0
      %3889 = vmatprep.subr.mxu0 0.0
      %3890 = vmatpush1.msra.mxu0 0.0
      %3891 = vmatprep.subr.mxu0 0.0
      %3892 = vmatpush1.msra.mxu0 0.0
      %3893 = vmatprep.subr.mxu0 0.0
      %3894 = vmatpush1.msra.mxu0 0.0
      %3895 = vmatprep.subr.mxu0 0.0
      %3896 = vmatpush1.msra.mxu0 0.0
      %3897 = vmatprep.subr.mxu0 0.0
      %3898 = vmatpush1.msra.mxu0 0.0
      %3899 = vmatprep.subr.mxu0 0.0
      %3900 = vmatpush1.msra.mxu0 0.0
      %3901 = vmatprep.subr.mxu0 0.0
      %v3902 = vand.u32 %v300, 4294901760
      %v3903 = vsub.f32 %v300, %v3902
      %v3904 = vand.u32 %v3903, 4294901760
      %v3905 = vsub.f32 %v3903, %v3904
      %v3906 = vand.u32 %v3905, 4294901760
      %3907 = vmatpush1.msra.mxu0 %v3906
      %3908 = vmatprep.subr.mxu0 0.0
      %v3909 = vand.u32 %v299, 4294901760
      %v3910 = vsub.f32 %v299, %v3909
      %v3911 = vand.u32 %v3910, 4294901760
      %v3912 = vsub.f32 %v3910, %v3911
      %v3913 = vand.u32 %v3912, 4294901760
      %3914 = vmatpush1.msra.mxu0 %v3913
      %3915 = vmatprep.subr.mxu0 0.0
      %v3916 = vand.u32 %v298, 4294901760
      %v3917 = vsub.f32 %v298, %v3916
      %v3918 = vand.u32 %v3917, 4294901760
      %v3919 = vsub.f32 %v3917, %v3918
      %v3920 = vand.u32 %v3919, 4294901760
      %3921 = vmatpush1.msra.mxu0 %v3920
      %3922 = vmatprep.subr.mxu0 0.0
      %v3923 = vand.u32 %v297, 4294901760
      %v3924 = vsub.f32 %v297, %v3923
      %v3925 = vand.u32 %v3924, 4294901760
      %v3926 = vsub.f32 %v3924, %v3925
      %v3927 = vand.u32 %v3926, 4294901760
      %3928 = vmatpush1.msra.mxu0 %v3927
      %3929 = vmatprep.subr.mxu0 0.0
      %3930 = vmatpush2.msra.mxu0 0.0
      %3931 = vmatprep.subr.mxu0 0.0
      %3932 = vmatpush2.msra.mxu0 0.0
      %3933 = vmatprep.subr.mxu0 0.0
      %3934 = vmatpush2.msra.mxu0 0.0
      %3935 = vmatprep.subr.mxu0 0.0
      %3936 = vmatpush2.msra.mxu0 0.0
      %3937 = vmatprep.subr.mxu0 0.0
      %3938 = vmatpush2.msra.mxu0 0.0
      %3939 = vmatprep.subr.mxu0 0.0
      %3940 = vmatpush2.msra.mxu0 0.0
      %3941 = vmatprep.subr.mxu0 0.0
      %3942 = vmatpush2.msra.mxu0 0.0
      %3943 = vmatprep.subr.mxu0 0.0
      %3944 = vmatpush2.msra.mxu0 0.0
      %3945 = vmatprep.subr.mxu0 0.0
      %3946 = vmatpush2.msra.mxu0 0.0
      %3947 = vmatprep.subr.mxu0 0.0
      %3948 = vmatpush2.msra.mxu0 0.0
      %3949 = vmatprep.subr.mxu0 0.0
      %3950 = vmatpush2.msra.mxu0 0.0
      %3951 = vmatprep.subr.mxu0 0.0
      %3952 = vmatpush2.msra.mxu0 0.0
      %3953 = vmatprep.subr.mxu0 0.0
      %3954 = vmatpush2.msra.mxu0 0.0
      %3955 = vmatprep.subr.mxu0 0.0
      %3956 = vmatpush2.msra.mxu0 0.0
      %3957 = vmatprep.subr.mxu0 0.0
      %3958 = vmatpush2.msra.mxu0 0.0
      %3959 = vmatprep.subr.mxu0 0.0
      %3960 = vmatpush2.msra.mxu0 0.0
      %3961 = vmatprep.mubr.f32.mxu0 0.0
      %v3962 = vand.u32 %v3311, 4294901760
      %3963 = vmatmul.mubr.f32.gmra.mxu0 %v3962
      %v3964 = vpop.f32.mrf.mxu0
      %v3965 = vadd.f32 %v3874, %v3964
      %v3966 = vpop.f32.mrf.mxu0
      %3967 = vdwg.mxu0
      %3968 = vmatprep.subr.mxu0 0.0
      %3969 = vmatpush1.msra.mxu0 0.0
      %3970 = vmatprep.subr.mxu0 0.0
      %3971 = vmatpush1.msra.mxu0 0.0
      %3972 = vmatprep.subr.mxu0 0.0
      %3973 = vmatpush1.msra.mxu0 0.0
      %3974 = vmatprep.subr.mxu0 0.0
      %3975 = vmatpush1.msra.mxu0 0.0
      %3976 = vmatprep.subr.mxu0 0.0
      %3977 = vmatpush1.msra.mxu0 0.0
      %3978 = vmatprep.subr.mxu0 0.0
      %3979 = vmatpush1.msra.mxu0 0.0
      %3980 = vmatprep.subr.mxu0 0.0
      %3981 = vmatpush1.msra.mxu0 0.0
      %3982 = vmatprep.subr.mxu0 0.0
      %3983 = vmatpush1.msra.mxu0 0.0
      %3984 = vmatprep.subr.mxu0 0.0
      %3985 = vmatpush1.msra.mxu0 0.0
      %3986 = vmatprep.subr.mxu0 0.0
      %3987 = vmatpush1.msra.mxu0 0.0
      %3988 = vmatprep.subr.mxu0 0.0
      %3989 = vmatpush1.msra.mxu0 0.0
      %3990 = vmatprep.subr.mxu0 0.0
      %3991 = vmatpush1.msra.mxu0 0.0
      %3992 = vmatprep.subr.mxu0 0.0
      %v3993 = vand.u32 %v300, 4294901760
      %v3994 = vsub.f32 %v300, %v3993
      %3995 = vmatpush1.msra.mxu0 %v3994
      %3996 = vmatprep.subr.mxu0 0.0
      %v3997 = vand.u32 %v299, 4294901760
      %v3998 = vsub.f32 %v299, %v3997
      %3999 = vmatpush1.msra.mxu0 %v3998
      %4000 = vmatprep.subr.mxu0 0.0
      %v4001 = vand.u32 %v298, 4294901760
      %v4002 = vsub.f32 %v298, %v4001
      %4003 = vmatpush1.msra.mxu0 %v4002
      %4004 = vmatprep.subr.mxu0 0.0
      %v4005 = vand.u32 %v297, 4294901760
      %v4006 = vsub.f32 %v297, %v4005
      %4007 = vmatpush1.msra.mxu0 %v4006
      %4008 = vmatprep.subr.mxu0 0.0
      %4009 = vmatpush2.msra.mxu0 0.0
      %4010 = vmatprep.subr.mxu0 0.0
      %4011 = vmatpush2.msra.mxu0 0.0
      %4012 = vmatprep.subr.mxu0 0.0
      %4013 = vmatpush2.msra.mxu0 0.0
      %4014 = vmatprep.subr.mxu0 0.0
      %4015 = vmatpush2.msra.mxu0 0.0
      %4016 = vmatprep.subr.mxu0 0.0
      %4017 = vmatpush2.msra.mxu0 0.0
      %4018 = vmatprep.subr.mxu0 0.0
      %4019 = vmatpush2.msra.mxu0 0.0
      %4020 = vmatprep.subr.mxu0 0.0
      %4021 = vmatpush2.msra.mxu0 0.0
      %4022 = vmatprep.subr.mxu0 0.0
      %4023 = vmatpush2.msra.mxu0 0.0
      %4024 = vmatprep.subr.mxu0 0.0
      %4025 = vmatpush2.msra.mxu0 0.0
      %4026 = vmatprep.subr.mxu0 0.0
      %4027 = vmatpush2.msra.mxu0 0.0
      %4028 = vmatprep.subr.mxu0 0.0
      %4029 = vmatpush2.msra.mxu0 0.0
      %4030 = vmatprep.subr.mxu0 0.0
      %4031 = vmatpush2.msra.mxu0 0.0
      %4032 = vmatprep.subr.mxu0 0.0
      %4033 = vmatpush2.msra.mxu0 0.0
      %4034 = vmatprep.subr.mxu0 0.0
      %4035 = vmatpush2.msra.mxu0 0.0
      %4036 = vmatprep.subr.mxu0 0.0
      %4037 = vmatpush2.msra.mxu0 0.0
      %4038 = vmatprep.subr.mxu0 0.0
      %4039 = vmatpush2.msra.mxu0 0.0
      %4040 = vmatprep.mubr.f32.mxu0 0.0
      %v4041 = vand.u32 %v3311, 4294901760
      %v4042 = vsub.f32 %v3311, %v4041
      %4043 = vmatmul.mubr.f32.gmra.mxu0 %v4042
      %v4044 = vpop.f32.mrf.mxu0
      %v4045 = vadd.f32 %v3965, %v4044
      %v4046 = vpop.f32.mrf.mxu0
      %4047 = vdwg.mxu0
      %4048 = vmatprep.subr.mxu0 0.0
      %4049 = vmatpush1.msra.mxu0 0.0
      %4050 = vmatprep.subr.mxu0 0.0
      %4051 = vmatpush1.msra.mxu0 0.0
      %4052 = vmatprep.subr.mxu0 0.0
      %4053 = vmatpush1.msra.mxu0 0.0
      %4054 = vmatprep.subr.mxu0 0.0
      %4055 = vmatpush1.msra.mxu0 0.0
      %4056 = vmatprep.subr.mxu0 0.0
      %4057 = vmatpush1.msra.mxu0 0.0
      %4058 = vmatprep.subr.mxu0 0.0
      %4059 = vmatpush1.msra.mxu0 0.0
      %4060 = vmatprep.subr.mxu0 0.0
      %4061 = vmatpush1.msra.mxu0 0.0
      %4062 = vmatprep.subr.mxu0 0.0
      %4063 = vmatpush1.msra.mxu0 0.0
      %4064 = vmatprep.subr.mxu0 0.0
      %4065 = vmatpush1.msra.mxu0 0.0
      %4066 = vmatprep.subr.mxu0 0.0
      %4067 = vmatpush1.msra.mxu0 0.0
      %4068 = vmatprep.subr.mxu0 0.0
      %4069 = vmatpush1.msra.mxu0 0.0
      %4070 = vmatprep.subr.mxu0 0.0
      %4071 = vmatpush1.msra.mxu0 0.0
      %4072 = vmatprep.subr.mxu0 0.0
      %v4073 = vand.u32 %v300, 4294901760
      %4074 = vmatpush1.msra.mxu0 %v4073
      %4075 = vmatprep.subr.mxu0 0.0
      %v4076 = vand.u32 %v299, 4294901760
      %4077 = vmatpush1.msra.mxu0 %v4076
      %4078 = vmatprep.subr.mxu0 0.0
      %v4079 = vand.u32 %v298, 4294901760
      %4080 = vmatpush1.msra.mxu0 %v4079
      %4081 = vmatprep.subr.mxu0 0.0
      %v4082 = vand.u32 %v297, 4294901760
      %4083 = vmatpush1.msra.mxu0 %v4082
      %4084 = vmatprep.subr.mxu0 0.0
      %4085 = vmatpush2.msra.mxu0 0.0
      %4086 = vmatprep.subr.mxu0 0.0
      %4087 = vmatpush2.msra.mxu0 0.0
      %4088 = vmatprep.subr.mxu0 0.0
      %4089 = vmatpush2.msra.mxu0 0.0
      %4090 = vmatprep.subr.mxu0 0.0
      %4091 = vmatpush2.msra.mxu0 0.0
      %4092 = vmatprep.subr.mxu0 0.0
      %4093 = vmatpush2.msra.mxu0 0.0
      %4094 = vmatprep.subr.mxu0 0.0
      %4095 = vmatpush2.msra.mxu0 0.0
      %4096 = vmatprep.subr.mxu0 0.0
      %4097 = vmatpush2.msra.mxu0 0.0
      %4098 = vmatprep.subr.mxu0 0.0
      %4099 = vmatpush2.msra.mxu0 0.0
      %4100 = vmatprep.subr.mxu0 0.0
      %4101 = vmatpush2.msra.mxu0 0.0
      %4102 = vmatprep.subr.mxu0 0.0
      %4103 = vmatpush2.msra.mxu0 0.0
      %4104 = vmatprep.subr.mxu0 0.0
      %4105 = vmatpush2.msra.mxu0 0.0
      %4106 = vmatprep.subr.mxu0 0.0
      %4107 = vmatpush2.msra.mxu0 0.0
      %4108 = vmatprep.subr.mxu0 0.0
      %4109 = vmatpush2.msra.mxu0 0.0
      %4110 = vmatprep.subr.mxu0 0.0
      %4111 = vmatpush2.msra.mxu0 0.0
      %4112 = vmatprep.subr.mxu0 0.0
      %4113 = vmatpush2.msra.mxu0 0.0
      %4114 = vmatprep.subr.mxu0 0.0
      %4115 = vmatpush2.msra.mxu0 0.0
      %4116 = vmatprep.mubr.f32.mxu0 0.0
      %v4117 = vand.u32 %v3311, 4294901760
      %v4118 = vsub.f32 %v3311, %v4117
      %v4119 = vand.u32 %v4118, 4294901760
      %4120 = vmatmul.mubr.f32.gmra.mxu0 %v4119
      %v4121 = vpop.f32.mrf.mxu0
      %v4122 = vadd.f32 %v4045, %v4121
      %v4123 = vpop.f32.mrf.mxu0
      %4124 = vdwg.mxu0
      %4125 = vmatprep.subr.mxu0 0.0
      %4126 = vmatpush1.msra.mxu0 0.0
      %4127 = vmatprep.subr.mxu0 0.0
      %4128 = vmatpush1.msra.mxu0 0.0
      %4129 = vmatprep.subr.mxu0 0.0
      %4130 = vmatpush1.msra.mxu0 0.0
      %4131 = vmatprep.subr.mxu0 0.0
      %4132 = vmatpush1.msra.mxu0 0.0
      %4133 = vmatprep.subr.mxu0 0.0
      %4134 = vmatpush1.msra.mxu0 0.0
      %4135 = vmatprep.subr.mxu0 0.0
      %4136 = vmatpush1.msra.mxu0 0.0
      %4137 = vmatprep.subr.mxu0 0.0
      %4138 = vmatpush1.msra.mxu0 0.0
      %4139 = vmatprep.subr.mxu0 0.0
      %4140 = vmatpush1.msra.mxu0 0.0
      %4141 = vmatprep.subr.mxu0 0.0
      %4142 = vmatpush1.msra.mxu0 0.0
      %4143 = vmatprep.subr.mxu0 0.0
      %4144 = vmatpush1.msra.mxu0 0.0
      %4145 = vmatprep.subr.mxu0 0.0
      %4146 = vmatpush1.msra.mxu0 0.0
      %4147 = vmatprep.subr.mxu0 0.0
      %4148 = vmatpush1.msra.mxu0 0.0
      %4149 = vmatprep.subr.mxu0 0.0
      %v4150 = vand.u32 %v300, 4294901760
      %v4151 = vsub.f32 %v300, %v4150
      %v4152 = vand.u32 %v4151, 4294901760
      %4153 = vmatpush1.msra.mxu0 %v4152
      %4154 = vmatprep.subr.mxu0 0.0
      %v4155 = vand.u32 %v299, 4294901760
      %v4156 = vsub.f32 %v299, %v4155
      %v4157 = vand.u32 %v4156, 4294901760
      %4158 = vmatpush1.msra.mxu0 %v4157
      %4159 = vmatprep.subr.mxu0 0.0
      %v4160 = vand.u32 %v298, 4294901760
      %v4161 = vsub.f32 %v298, %v4160
      %v4162 = vand.u32 %v4161, 4294901760
      %4163 = vmatpush1.msra.mxu0 %v4162
      %4164 = vmatprep.subr.mxu0 0.0
      %v4165 = vand.u32 %v297, 4294901760
      %v4166 = vsub.f32 %v297, %v4165
      %v4167 = vand.u32 %v4166, 4294901760
      %4168 = vmatpush1.msra.mxu0 %v4167
      %4169 = vmatprep.subr.mxu0 0.0
      %4170 = vmatpush2.msra.mxu0 0.0
      %4171 = vmatprep.subr.mxu0 0.0
      %4172 = vmatpush2.msra.mxu0 0.0
      %4173 = vmatprep.subr.mxu0 0.0
      %4174 = vmatpush2.msra.mxu0 0.0
      %4175 = vmatprep.subr.mxu0 0.0
      %4176 = vmatpush2.msra.mxu0 0.0
      %4177 = vmatprep.subr.mxu0 0.0
      %4178 = vmatpush2.msra.mxu0 0.0
      %4179 = vmatprep.subr.mxu0 0.0
      %4180 = vmatpush2.msra.mxu0 0.0
      %4181 = vmatprep.subr.mxu0 0.0
      %4182 = vmatpush2.msra.mxu0 0.0
      %4183 = vmatprep.subr.mxu0 0.0
      %4184 = vmatpush2.msra.mxu0 0.0
      %4185 = vmatprep.subr.mxu0 0.0
      %4186 = vmatpush2.msra.mxu0 0.0
      %4187 = vmatprep.subr.mxu0 0.0
      %4188 = vmatpush2.msra.mxu0 0.0
      %4189 = vmatprep.subr.mxu0 0.0
      %4190 = vmatpush2.msra.mxu0 0.0
      %4191 = vmatprep.subr.mxu0 0.0
      %4192 = vmatpush2.msra.mxu0 0.0
      %4193 = vmatprep.subr.mxu0 0.0
      %4194 = vmatpush2.msra.mxu0 0.0
      %4195 = vmatprep.subr.mxu0 0.0
      %4196 = vmatpush2.msra.mxu0 0.0
      %4197 = vmatprep.subr.mxu0 0.0
      %4198 = vmatpush2.msra.mxu0 0.0
      %4199 = vmatprep.subr.mxu0 0.0
      %4200 = vmatpush2.msra.mxu0 0.0
      %4201 = vmatprep.mubr.f32.mxu0 0.0
      %v4202 = vand.u32 %v3311, 4294901760
      %4203 = vmatmul.mubr.f32.gmra.mxu0 %v4202
      %v4204 = vpop.f32.mrf.mxu0
      %v4205 = vadd.f32 %v4122, %v4204
      %v4206 = vpop.f32.mrf.mxu0
      %4207 = vdwg.mxu0
      %4208 = vmatprep.subr.mxu0 0.0
      %4209 = vmatpush1.msra.mxu0 0.0
      %4210 = vmatprep.subr.mxu0 0.0
      %4211 = vmatpush1.msra.mxu0 0.0
      %4212 = vmatprep.subr.mxu0 0.0
      %4213 = vmatpush1.msra.mxu0 0.0
      %4214 = vmatprep.subr.mxu0 0.0
      %4215 = vmatpush1.msra.mxu0 0.0
      %4216 = vmatprep.subr.mxu0 0.0
      %4217 = vmatpush1.msra.mxu0 0.0
      %4218 = vmatprep.subr.mxu0 0.0
      %4219 = vmatpush1.msra.mxu0 0.0
      %4220 = vmatprep.subr.mxu0 0.0
      %4221 = vmatpush1.msra.mxu0 0.0
      %4222 = vmatprep.subr.mxu0 0.0
      %4223 = vmatpush1.msra.mxu0 0.0
      %4224 = vmatprep.subr.mxu0 0.0
      %4225 = vmatpush1.msra.mxu0 0.0
      %4226 = vmatprep.subr.mxu0 0.0
      %4227 = vmatpush1.msra.mxu0 0.0
      %4228 = vmatprep.subr.mxu0 0.0
      %4229 = vmatpush1.msra.mxu0 0.0
      %4230 = vmatprep.subr.mxu0 0.0
      %4231 = vmatpush1.msra.mxu0 0.0
      %4232 = vmatprep.subr.mxu0 0.0
      %v4233 = vand.u32 %v300, 4294901760
      %4234 = vmatpush1.msra.mxu0 %v4233
      %4235 = vmatprep.subr.mxu0 0.0
      %v4236 = vand.u32 %v299, 4294901760
      %4237 = vmatpush1.msra.mxu0 %v4236
      %4238 = vmatprep.subr.mxu0 0.0
      %v4239 = vand.u32 %v298, 4294901760
      %4240 = vmatpush1.msra.mxu0 %v4239
      %4241 = vmatprep.subr.mxu0 0.0
      %v4242 = vand.u32 %v297, 4294901760
      %4243 = vmatpush1.msra.mxu0 %v4242
      %4244 = vmatprep.subr.mxu0 0.0
      %4245 = vmatpush2.msra.mxu0 0.0
      %4246 = vmatprep.subr.mxu0 0.0
      %4247 = vmatpush2.msra.mxu0 0.0
      %4248 = vmatprep.subr.mxu0 0.0
      %4249 = vmatpush2.msra.mxu0 0.0
      %4250 = vmatprep.subr.mxu0 0.0
      %4251 = vmatpush2.msra.mxu0 0.0
      %4252 = vmatprep.subr.mxu0 0.0
      %4253 = vmatpush2.msra.mxu0 0.0
      %4254 = vmatprep.subr.mxu0 0.0
      %4255 = vmatpush2.msra.mxu0 0.0
      %4256 = vmatprep.subr.mxu0 0.0
      %4257 = vmatpush2.msra.mxu0 0.0
      %4258 = vmatprep.subr.mxu0 0.0
      %4259 = vmatpush2.msra.mxu0 0.0
      %4260 = vmatprep.subr.mxu0 0.0
      %4261 = vmatpush2.msra.mxu0 0.0
      %4262 = vmatprep.subr.mxu0 0.0
      %4263 = vmatpush2.msra.mxu0 0.0
      %4264 = vmatprep.subr.mxu0 0.0
      %4265 = vmatpush2.msra.mxu0 0.0
      %4266 = vmatprep.subr.mxu0 0.0
      %4267 = vmatpush2.msra.mxu0 0.0
      %4268 = vmatprep.subr.mxu0 0.0
      %4269 = vmatpush2.msra.mxu0 0.0
      %4270 = vmatprep.subr.mxu0 0.0
      %4271 = vmatpush2.msra.mxu0 0.0
      %4272 = vmatprep.subr.mxu0 0.0
      %4273 = vmatpush2.msra.mxu0 0.0
      %4274 = vmatprep.subr.mxu0 0.0
      %4275 = vmatpush2.msra.mxu0 0.0
      %4276 = vmatprep.mubr.f32.mxu0 0.0
      %v4277 = vand.u32 %v3311, 4294901760
      %4278 = vmatmul.mubr.f32.gmra.mxu0 %v4277
      %v4279 = vpop.f32.mrf.mxu0
      %v4280 = vadd.f32 %v4205, %v4279
      %v4281 = vpop.f32.mrf.mxu0
      %4282 = vdwg.mxu0
      %s4283 = scalar_lea.vmem %s259, 6
      %v4284 = vld [vmem:[%s4283] sm:$0x3]
      %v4285 = vadd.f32 %v4284, %v3795
      %v4286 = vxor.u32 %v4285, 2147483648
      %v4287 = vmul.f32 %v4286, 1.442695
      %v4288 = vpow.pop %v4287
      %v4289 = vadd.f32 %v4288, 1.0
      %v4290 = vrcp.pop %v4289
      %v4291 = vmul.f32 1.0, %v4290
      %s4292 = scalar_lea.vmem %s259, 8
      %v4293 = vld [vmem:[%s4292] sm:$0x3]
      %v4294 = vadd.f32 %v4293, %v4280
      %v4295 = vxor.u32 %v4294, 2147483648
      %v4296 = vmul.f32 %v4295, 1.442695
      %v4297 = vpow.pop %v4296
      %v4298 = vadd.f32 %v4297, 1.0
      %v4299 = vrcp.pop %v4298
      %v4300 = vmul.f32 1.0, %v4299
      %s4301 = scalar_lea.vmem %s259, 10
      %v4302 = vld [vmem:[%s4301] sm:$0x3]
      %4303 = vmatprep.subr.mxu0 0.0
      %4304 = vmatpush1.msra.mxu0 0.0
      %4305 = vmatprep.subr.mxu0 0.0
      %4306 = vmatpush1.msra.mxu0 0.0
      %4307 = vmatprep.subr.mxu0 0.0
      %4308 = vmatpush1.msra.mxu0 0.0
      %4309 = vmatprep.subr.mxu0 0.0
      %4310 = vmatpush1.msra.mxu0 0.0
      %4311 = vmatprep.subr.mxu0 0.0
      %4312 = vmatpush1.msra.mxu0 0.0
      %4313 = vmatprep.subr.mxu0 0.0
      %4314 = vmatpush1.msra.mxu0 0.0
      %4315 = vmatprep.subr.mxu0 0.0
      %4316 = vmatpush1.msra.mxu0 0.0
      %4317 = vmatprep.subr.mxu0 0.0
      %4318 = vmatpush1.msra.mxu0 0.0
      %4319 = vmatprep.subr.mxu0 0.0
      %4320 = vmatpush1.msra.mxu0 0.0
      %4321 = vmatprep.subr.mxu0 0.0
      %4322 = vmatpush1.msra.mxu0 0.0
      %4323 = vmatprep.subr.mxu0 0.0
      %4324 = vmatpush1.msra.mxu0 0.0
      %4325 = vmatprep.subr.mxu0 0.0
      %4326 = vmatpush1.msra.mxu0 0.0
      %4327 = vmatprep.subr.mxu0 0.0
      %v4328 = vand.u32 %v305, 4294901760
      %4329 = vmatpush1.msra.mxu0 %v4328
      %4330 = vmatprep.subr.mxu0 0.0
      %v4331 = vand.u32 %v304, 4294901760
      %4332 = vmatpush1.msra.mxu0 %v4331
      %4333 = vmatprep.subr.mxu0 0.0
      %v4334 = vand.u32 %v303, 4294901760
      %4335 = vmatpush1.msra.mxu0 %v4334
      %4336 = vmatprep.subr.mxu0 0.0
      %v4337 = vand.u32 %v302, 4294901760
      %4338 = vmatpush1.msra.mxu0 %v4337
      %4339 = vmatprep.subr.mxu0 0.0
      %4340 = vmatpush2.msra.mxu0 0.0
      %4341 = vmatprep.subr.mxu0 0.0
      %4342 = vmatpush2.msra.mxu0 0.0
      %4343 = vmatprep.subr.mxu0 0.0
      %4344 = vmatpush2.msra.mxu0 0.0
      %4345 = vmatprep.subr.mxu0 0.0
      %4346 = vmatpush2.msra.mxu0 0.0
      %4347 = vmatprep.subr.mxu0 0.0
      %4348 = vmatpush2.msra.mxu0 0.0
      %4349 = vmatprep.subr.mxu0 0.0
      %4350 = vmatpush2.msra.mxu0 0.0
      %4351 = vmatprep.subr.mxu0 0.0
      %4352 = vmatpush2.msra.mxu0 0.0
      %4353 = vmatprep.subr.mxu0 0.0
      %4354 = vmatpush2.msra.mxu0 0.0
      %4355 = vmatprep.subr.mxu0 0.0
      %4356 = vmatpush2.msra.mxu0 0.0
      %4357 = vmatprep.subr.mxu0 0.0
      %4358 = vmatpush2.msra.mxu0 0.0
      %4359 = vmatprep.subr.mxu0 0.0
      %4360 = vmatpush2.msra.mxu0 0.0
      %4361 = vmatprep.subr.mxu0 0.0
      %4362 = vmatpush2.msra.mxu0 0.0
      %4363 = vmatprep.subr.mxu0 0.0
      %4364 = vmatpush2.msra.mxu0 0.0
      %4365 = vmatprep.subr.mxu0 0.0
      %4366 = vmatpush2.msra.mxu0 0.0
      %4367 = vmatprep.subr.mxu0 0.0
      %4368 = vmatpush2.msra.mxu0 0.0
      %4369 = vmatprep.subr.mxu0 0.0
      %4370 = vmatpush2.msra.mxu0 0.0
      %4371 = vmatprep.mubr.f32.mxu0 0.0
      %v4372 = vand.u32 %v3311, 4294901760
      %v4373 = vsub.f32 %v3311, %v4372
      %v4374 = vand.u32 %v4373, 4294901760
      %v4375 = vsub.f32 %v4373, %v4374
      %v4376 = vand.u32 %v4375, 4294901760
      %4377 = vmatmul.mubr.f32.gmra.mxu0 %v4376
      %v4378 = vpop.f32.mrf.mxu0
      %v4379 = vadd.f32 %v321, %v4378
      %v4380 = vpop.f32.mrf.mxu0
      %4381 = vdwg.mxu0
      %4382 = vmatprep.subr.mxu0 0.0
      %4383 = vmatpush1.msra.mxu0 0.0
      %4384 = vmatprep.subr.mxu0 0.0
      %4385 = vmatpush1.msra.mxu0 0.0
      %4386 = vmatprep.subr.mxu0 0.0
      %4387 = vmatpush1.msra.mxu0 0.0
      %4388 = vmatprep.subr.mxu0 0.0
      %4389 = vmatpush1.msra.mxu0 0.0
      %4390 = vmatprep.subr.mxu0 0.0
      %4391 = vmatpush1.msra.mxu0 0.0
      %4392 = vmatprep.subr.mxu0 0.0
      %4393 = vmatpush1.msra.mxu0 0.0
      %4394 = vmatprep.subr.mxu0 0.0
      %4395 = vmatpush1.msra.mxu0 0.0
      %4396 = vmatprep.subr.mxu0 0.0
      %4397 = vmatpush1.msra.mxu0 0.0
      %4398 = vmatprep.subr.mxu0 0.0
      %4399 = vmatpush1.msra.mxu0 0.0
      %4400 = vmatprep.subr.mxu0 0.0
      %4401 = vmatpush1.msra.mxu0 0.0
      %4402 = vmatprep.subr.mxu0 0.0
      %4403 = vmatpush1.msra.mxu0 0.0
      %4404 = vmatprep.subr.mxu0 0.0
      %4405 = vmatpush1.msra.mxu0 0.0
      %4406 = vmatprep.subr.mxu0 0.0
      %v4407 = vand.u32 %v305, 4294901760
      %v4408 = vsub.f32 %v305, %v4407
      %v4409 = vand.u32 %v4408, 4294901760
      %v4410 = vsub.f32 %v4408, %v4409
      %v4411 = vand.u32 %v4410, 4294901760
      %4412 = vmatpush1.msra.mxu0 %v4411
      %4413 = vmatprep.subr.mxu0 0.0
      %v4414 = vand.u32 %v304, 4294901760
      %v4415 = vsub.f32 %v304, %v4414
      %v4416 = vand.u32 %v4415, 4294901760
      %v4417 = vsub.f32 %v4415, %v4416
      %v4418 = vand.u32 %v4417, 4294901760
      %4419 = vmatpush1.msra.mxu0 %v4418
      %4420 = vmatprep.subr.mxu0 0.0
      %v4421 = vand.u32 %v303, 4294901760
      %v4422 = vsub.f32 %v303, %v4421
      %v4423 = vand.u32 %v4422, 4294901760
      %v4424 = vsub.f32 %v4422, %v4423
      %v4425 = vand.u32 %v4424, 4294901760
      %4426 = vmatpush1.msra.mxu0 %v4425
      %4427 = vmatprep.subr.mxu0 0.0
      %v4428 = vand.u32 %v302, 4294901760
      %v4429 = vsub.f32 %v302, %v4428
      %v4430 = vand.u32 %v4429, 4294901760
      %v4431 = vsub.f32 %v4429, %v4430
      %v4432 = vand.u32 %v4431, 4294901760
      %4433 = vmatpush1.msra.mxu0 %v4432
      %4434 = vmatprep.subr.mxu0 0.0
      %4435 = vmatpush2.msra.mxu0 0.0
      %4436 = vmatprep.subr.mxu0 0.0
      %4437 = vmatpush2.msra.mxu0 0.0
      %4438 = vmatprep.subr.mxu0 0.0
      %4439 = vmatpush2.msra.mxu0 0.0
      %4440 = vmatprep.subr.mxu0 0.0
      %4441 = vmatpush2.msra.mxu0 0.0
      %4442 = vmatprep.subr.mxu0 0.0
      %4443 = vmatpush2.msra.mxu0 0.0
      %4444 = vmatprep.subr.mxu0 0.0
      %4445 = vmatpush2.msra.mxu0 0.0
      %4446 = vmatprep.subr.mxu0 0.0
      %4447 = vmatpush2.msra.mxu0 0.0
      %4448 = vmatprep.subr.mxu0 0.0
      %4449 = vmatpush2.msra.mxu0 0.0
      %4450 = vmatprep.subr.mxu0 0.0
      %4451 = vmatpush2.msra.mxu0 0.0
      %4452 = vmatprep.subr.mxu0 0.0
      %4453 = vmatpush2.msra.mxu0 0.0
      %4454 = vmatprep.subr.mxu0 0.0
      %4455 = vmatpush2.msra.mxu0 0.0
      %4456 = vmatprep.subr.mxu0 0.0
      %4457 = vmatpush2.msra.mxu0 0.0
      %4458 = vmatprep.subr.mxu0 0.0
      %4459 = vmatpush2.msra.mxu0 0.0
      %4460 = vmatprep.subr.mxu0 0.0
      %4461 = vmatpush2.msra.mxu0 0.0
      %4462 = vmatprep.subr.mxu0 0.0
      %4463 = vmatpush2.msra.mxu0 0.0
      %4464 = vmatprep.subr.mxu0 0.0
      %4465 = vmatpush2.msra.mxu0 0.0
      %4466 = vmatprep.mubr.f32.mxu0 0.0
      %v4467 = vand.u32 %v3311, 4294901760
      %4468 = vmatmul.mubr.f32.gmra.mxu0 %v4467
      %v4469 = vpop.f32.mrf.mxu0
      %v4470 = vadd.f32 %v4379, %v4469
      %v4471 = vpop.f32.mrf.mxu0
      %4472 = vdwg.mxu0
      %4473 = vmatprep.subr.mxu0 0.0
      %4474 = vmatpush1.msra.mxu0 0.0
      %4475 = vmatprep.subr.mxu0 0.0
      %4476 = vmatpush1.msra.mxu0 0.0
      %4477 = vmatprep.subr.mxu0 0.0
      %4478 = vmatpush1.msra.mxu0 0.0
      %4479 = vmatprep.subr.mxu0 0.0
      %4480 = vmatpush1.msra.mxu0 0.0
      %4481 = vmatprep.subr.mxu0 0.0
      %4482 = vmatpush1.msra.mxu0 0.0
      %4483 = vmatprep.subr.mxu0 0.0
      %4484 = vmatpush1.msra.mxu0 0.0
      %4485 = vmatprep.subr.mxu0 0.0
      %4486 = vmatpush1.msra.mxu0 0.0
      %4487 = vmatprep.subr.mxu0 0.0
      %4488 = vmatpush1.msra.mxu0 0.0
      %4489 = vmatprep.subr.mxu0 0.0
      %4490 = vmatpush1.msra.mxu0 0.0
      %4491 = vmatprep.subr.mxu0 0.0
      %4492 = vmatpush1.msra.mxu0 0.0
      %4493 = vmatprep.subr.mxu0 0.0
      %4494 = vmatpush1.msra.mxu0 0.0
      %4495 = vmatprep.subr.mxu0 0.0
      %4496 = vmatpush1.msra.mxu0 0.0
      %4497 = vmatprep.subr.mxu0 0.0
      %v4498 = vand.u32 %v305, 4294901760
      %v4499 = vsub.f32 %v305, %v4498
      %4500 = vmatpush1.msra.mxu0 %v4499
      %4501 = vmatprep.subr.mxu0 0.0
      %v4502 = vand.u32 %v304, 4294901760
      %v4503 = vsub.f32 %v304, %v4502
      %4504 = vmatpush1.msra.mxu0 %v4503
      %4505 = vmatprep.subr.mxu0 0.0
      %v4506 = vand.u32 %v303, 4294901760
      %v4507 = vsub.f32 %v303, %v4506
      %4508 = vmatpush1.msra.mxu0 %v4507
      %4509 = vmatprep.subr.mxu0 0.0
      %v4510 = vand.u32 %v302, 4294901760
      %v4511 = vsub.f32 %v302, %v4510
      %4512 = vmatpush1.msra.mxu0 %v4511
      %4513 = vmatprep.subr.mxu0 0.0
      %4514 = vmatpush2.msra.mxu0 0.0
      %4515 = vmatprep.subr.mxu0 0.0
      %4516 = vmatpush2.msra.mxu0 0.0
      %4517 = vmatprep.subr.mxu0 0.0
      %4518 = vmatpush2.msra.mxu0 0.0
      %4519 = vmatprep.subr.mxu0 0.0
      %4520 = vmatpush2.msra.mxu0 0.0
      %4521 = vmatprep.subr.mxu0 0.0
      %4522 = vmatpush2.msra.mxu0 0.0
      %4523 = vmatprep.subr.mxu0 0.0
      %4524 = vmatpush2.msra.mxu0 0.0
      %4525 = vmatprep.subr.mxu0 0.0
      %4526 = vmatpush2.msra.mxu0 0.0
      %4527 = vmatprep.subr.mxu0 0.0
      %4528 = vmatpush2.msra.mxu0 0.0
      %4529 = vmatprep.subr.mxu0 0.0
      %4530 = vmatpush2.msra.mxu0 0.0
      %4531 = vmatprep.subr.mxu0 0.0
      %4532 = vmatpush2.msra.mxu0 0.0
      %4533 = vmatprep.subr.mxu0 0.0
      %4534 = vmatpush2.msra.mxu0 0.0
      %4535 = vmatprep.subr.mxu0 0.0
      %4536 = vmatpush2.msra.mxu0 0.0
      %4537 = vmatprep.subr.mxu0 0.0
      %4538 = vmatpush2.msra.mxu0 0.0
      %4539 = vmatprep.subr.mxu0 0.0
      %4540 = vmatpush2.msra.mxu0 0.0
      %4541 = vmatprep.subr.mxu0 0.0
      %4542 = vmatpush2.msra.mxu0 0.0
      %4543 = vmatprep.subr.mxu0 0.0
      %4544 = vmatpush2.msra.mxu0 0.0
      %4545 = vmatprep.mubr.f32.mxu0 0.0
      %v4546 = vand.u32 %v3311, 4294901760
      %v4547 = vsub.f32 %v3311, %v4546
      %4548 = vmatmul.mubr.f32.gmra.mxu0 %v4547
      %v4549 = vpop.f32.mrf.mxu0
      %v4550 = vadd.f32 %v4470, %v4549
      %v4551 = vpop.f32.mrf.mxu0
      %4552 = vdwg.mxu0
      %4553 = vmatprep.subr.mxu0 0.0
      %4554 = vmatpush1.msra.mxu0 0.0
      %4555 = vmatprep.subr.mxu0 0.0
      %4556 = vmatpush1.msra.mxu0 0.0
      %4557 = vmatprep.subr.mxu0 0.0
      %4558 = vmatpush1.msra.mxu0 0.0
      %4559 = vmatprep.subr.mxu0 0.0
      %4560 = vmatpush1.msra.mxu0 0.0
      %4561 = vmatprep.subr.mxu0 0.0
      %4562 = vmatpush1.msra.mxu0 0.0
      %4563 = vmatprep.subr.mxu0 0.0
      %4564 = vmatpush1.msra.mxu0 0.0
      %4565 = vmatprep.subr.mxu0 0.0
      %4566 = vmatpush1.msra.mxu0 0.0
      %4567 = vmatprep.subr.mxu0 0.0
      %4568 = vmatpush1.msra.mxu0 0.0
      %4569 = vmatprep.subr.mxu0 0.0
      %4570 = vmatpush1.msra.mxu0 0.0
      %4571 = vmatprep.subr.mxu0 0.0
      %4572 = vmatpush1.msra.mxu0 0.0
      %4573 = vmatprep.subr.mxu0 0.0
      %4574 = vmatpush1.msra.mxu0 0.0
      %4575 = vmatprep.subr.mxu0 0.0
      %4576 = vmatpush1.msra.mxu0 0.0
      %4577 = vmatprep.subr.mxu0 0.0
      %v4578 = vand.u32 %v305, 4294901760
      %4579 = vmatpush1.msra.mxu0 %v4578
      %4580 = vmatprep.subr.mxu0 0.0
      %v4581 = vand.u32 %v304, 4294901760
      %4582 = vmatpush1.msra.mxu0 %v4581
      %4583 = vmatprep.subr.mxu0 0.0
      %v4584 = vand.u32 %v303, 4294901760
      %4585 = vmatpush1.msra.mxu0 %v4584
      %4586 = vmatprep.subr.mxu0 0.0
      %v4587 = vand.u32 %v302, 4294901760
      %4588 = vmatpush1.msra.mxu0 %v4587
      %4589 = vmatprep.subr.mxu0 0.0
      %4590 = vmatpush2.msra.mxu0 0.0
      %4591 = vmatprep.subr.mxu0 0.0
      %4592 = vmatpush2.msra.mxu0 0.0
      %4593 = vmatprep.subr.mxu0 0.0
      %4594 = vmatpush2.msra.mxu0 0.0
      %4595 = vmatprep.subr.mxu0 0.0
      %4596 = vmatpush2.msra.mxu0 0.0
      %4597 = vmatprep.subr.mxu0 0.0
      %4598 = vmatpush2.msra.mxu0 0.0
      %4599 = vmatprep.subr.mxu0 0.0
      %4600 = vmatpush2.msra.mxu0 0.0
      %4601 = vmatprep.subr.mxu0 0.0
      %4602 = vmatpush2.msra.mxu0 0.0
      %4603 = vmatprep.subr.mxu0 0.0
      %4604 = vmatpush2.msra.mxu0 0.0
      %4605 = vmatprep.subr.mxu0 0.0
      %4606 = vmatpush2.msra.mxu0 0.0
      %4607 = vmatprep.subr.mxu0 0.0
      %4608 = vmatpush2.msra.mxu0 0.0
      %4609 = vmatprep.subr.mxu0 0.0
      %4610 = vmatpush2.msra.mxu0 0.0
      %4611 = vmatprep.subr.mxu0 0.0
      %4612 = vmatpush2.msra.mxu0 0.0
      %4613 = vmatprep.subr.mxu0 0.0
      %4614 = vmatpush2.msra.mxu0 0.0
      %4615 = vmatprep.subr.mxu0 0.0
      %4616 = vmatpush2.msra.mxu0 0.0
      %4617 = vmatprep.subr.mxu0 0.0
      %4618 = vmatpush2.msra.mxu0 0.0
      %4619 = vmatprep.subr.mxu0 0.0
      %4620 = vmatpush2.msra.mxu0 0.0
      %4621 = vmatprep.mubr.f32.mxu0 0.0
      %v4622 = vand.u32 %v3311, 4294901760
      %v4623 = vsub.f32 %v3311, %v4622
      %v4624 = vand.u32 %v4623, 4294901760
      %4625 = vmatmul.mubr.f32.gmra.mxu0 %v4624
      %v4626 = vpop.f32.mrf.mxu0
      %v4627 = vadd.f32 %v4550, %v4626
      %v4628 = vpop.f32.mrf.mxu0
      %4629 = vdwg.mxu0
      %4630 = vmatprep.subr.mxu0 0.0
      %4631 = vmatpush1.msra.mxu0 0.0
      %4632 = vmatprep.subr.mxu0 0.0
      %4633 = vmatpush1.msra.mxu0 0.0
      %4634 = vmatprep.subr.mxu0 0.0
      %4635 = vmatpush1.msra.mxu0 0.0
      %4636 = vmatprep.subr.mxu0 0.0
      %4637 = vmatpush1.msra.mxu0 0.0
      %4638 = vmatprep.subr.mxu0 0.0
      %4639 = vmatpush1.msra.mxu0 0.0
      %4640 = vmatprep.subr.mxu0 0.0
      %4641 = vmatpush1.msra.mxu0 0.0
      %4642 = vmatprep.subr.mxu0 0.0
      %4643 = vmatpush1.msra.mxu0 0.0
      %4644 = vmatprep.subr.mxu0 0.0
      %4645 = vmatpush1.msra.mxu0 0.0
      %4646 = vmatprep.subr.mxu0 0.0
      %4647 = vmatpush1.msra.mxu0 0.0
      %4648 = vmatprep.subr.mxu0 0.0
      %4649 = vmatpush1.msra.mxu0 0.0
      %4650 = vmatprep.subr.mxu0 0.0
      %4651 = vmatpush1.msra.mxu0 0.0
      %4652 = vmatprep.subr.mxu0 0.0
      %4653 = vmatpush1.msra.mxu0 0.0
      %4654 = vmatprep.subr.mxu0 0.0
      %v4655 = vand.u32 %v305, 4294901760
      %v4656 = vsub.f32 %v305, %v4655
      %v4657 = vand.u32 %v4656, 4294901760
      %4658 = vmatpush1.msra.mxu0 %v4657
      %4659 = vmatprep.subr.mxu0 0.0
      %v4660 = vand.u32 %v304, 4294901760
      %v4661 = vsub.f32 %v304, %v4660
      %v4662 = vand.u32 %v4661, 4294901760
      %4663 = vmatpush1.msra.mxu0 %v4662
      %4664 = vmatprep.subr.mxu0 0.0
      %v4665 = vand.u32 %v303, 4294901760
      %v4666 = vsub.f32 %v303, %v4665
      %v4667 = vand.u32 %v4666, 4294901760
      %4668 = vmatpush1.msra.mxu0 %v4667
      %4669 = vmatprep.subr.mxu0 0.0
      %v4670 = vand.u32 %v302, 4294901760
      %v4671 = vsub.f32 %v302, %v4670
      %v4672 = vand.u32 %v4671, 4294901760
      %4673 = vmatpush1.msra.mxu0 %v4672
      %4674 = vmatprep.subr.mxu0 0.0
      %4675 = vmatpush2.msra.mxu0 0.0
      %4676 = vmatprep.subr.mxu0 0.0
      %4677 = vmatpush2.msra.mxu0 0.0
      %4678 = vmatprep.subr.mxu0 0.0
      %4679 = vmatpush2.msra.mxu0 0.0
      %4680 = vmatprep.subr.mxu0 0.0
      %4681 = vmatpush2.msra.mxu0 0.0
      %4682 = vmatprep.subr.mxu0 0.0
      %4683 = vmatpush2.msra.mxu0 0.0
      %4684 = vmatprep.subr.mxu0 0.0
      %4685 = vmatpush2.msra.mxu0 0.0
      %4686 = vmatprep.subr.mxu0 0.0
      %4687 = vmatpush2.msra.mxu0 0.0
      %4688 = vmatprep.subr.mxu0 0.0
      %4689 = vmatpush2.msra.mxu0 0.0
      %4690 = vmatprep.subr.mxu0 0.0
      %4691 = vmatpush2.msra.mxu0 0.0
      %4692 = vmatprep.subr.mxu0 0.0
      %4693 = vmatpush2.msra.mxu0 0.0
      %4694 = vmatprep.subr.mxu0 0.0
      %4695 = vmatpush2.msra.mxu0 0.0
      %4696 = vmatprep.subr.mxu0 0.0
      %4697 = vmatpush2.msra.mxu0 0.0
      %4698 = vmatprep.subr.mxu0 0.0
      %4699 = vmatpush2.msra.mxu0 0.0
      %4700 = vmatprep.subr.mxu0 0.0
      %4701 = vmatpush2.msra.mxu0 0.0
      %4702 = vmatprep.subr.mxu0 0.0
      %4703 = vmatpush2.msra.mxu0 0.0
      %4704 = vmatprep.subr.mxu0 0.0
      %4705 = vmatpush2.msra.mxu0 0.0
      %4706 = vmatprep.mubr.f32.mxu0 0.0
      %v4707 = vand.u32 %v3311, 4294901760
      %4708 = vmatmul.mubr.f32.gmra.mxu0 %v4707
      %v4709 = vpop.f32.mrf.mxu0
      %v4710 = vadd.f32 %v4627, %v4709
      %v4711 = vpop.f32.mrf.mxu0
      %4712 = vdwg.mxu0
      %4713 = vmatprep.subr.mxu0 0.0
      %4714 = vmatpush1.msra.mxu0 0.0
      %4715 = vmatprep.subr.mxu0 0.0
      %4716 = vmatpush1.msra.mxu0 0.0
      %4717 = vmatprep.subr.mxu0 0.0
      %4718 = vmatpush1.msra.mxu0 0.0
      %4719 = vmatprep.subr.mxu0 0.0
      %4720 = vmatpush1.msra.mxu0 0.0
      %4721 = vmatprep.subr.mxu0 0.0
      %4722 = vmatpush1.msra.mxu0 0.0
      %4723 = vmatprep.subr.mxu0 0.0
      %4724 = vmatpush1.msra.mxu0 0.0
      %4725 = vmatprep.subr.mxu0 0.0
      %4726 = vmatpush1.msra.mxu0 0.0
      %4727 = vmatprep.subr.mxu0 0.0
      %4728 = vmatpush1.msra.mxu0 0.0
      %4729 = vmatprep.subr.mxu0 0.0
      %4730 = vmatpush1.msra.mxu0 0.0
      %4731 = vmatprep.subr.mxu0 0.0
      %4732 = vmatpush1.msra.mxu0 0.0
      %4733 = vmatprep.subr.mxu0 0.0
      %4734 = vmatpush1.msra.mxu0 0.0
      %4735 = vmatprep.subr.mxu0 0.0
      %4736 = vmatpush1.msra.mxu0 0.0
      %4737 = vmatprep.subr.mxu0 0.0
      %v4738 = vand.u32 %v305, 4294901760
      %4739 = vmatpush1.msra.mxu0 %v4738
      %4740 = vmatprep.subr.mxu0 0.0
      %v4741 = vand.u32 %v304, 4294901760
      %4742 = vmatpush1.msra.mxu0 %v4741
      %4743 = vmatprep.subr.mxu0 0.0
      %v4744 = vand.u32 %v303, 4294901760
      %4745 = vmatpush1.msra.mxu0 %v4744
      %4746 = vmatprep.subr.mxu0 0.0
      %v4747 = vand.u32 %v302, 4294901760
      %4748 = vmatpush1.msra.mxu0 %v4747
      %4749 = vmatprep.subr.mxu0 0.0
      %4750 = vmatpush2.msra.mxu0 0.0
      %4751 = vmatprep.subr.mxu0 0.0
      %4752 = vmatpush2.msra.mxu0 0.0
      %4753 = vmatprep.subr.mxu0 0.0
      %4754 = vmatpush2.msra.mxu0 0.0
      %4755 = vmatprep.subr.mxu0 0.0
      %4756 = vmatpush2.msra.mxu0 0.0
      %4757 = vmatprep.subr.mxu0 0.0
      %4758 = vmatpush2.msra.mxu0 0.0
      %4759 = vmatprep.subr.mxu0 0.0
      %4760 = vmatpush2.msra.mxu0 0.0
      %4761 = vmatprep.subr.mxu0 0.0
      %4762 = vmatpush2.msra.mxu0 0.0
      %4763 = vmatprep.subr.mxu0 0.0
      %4764 = vmatpush2.msra.mxu0 0.0
      %4765 = vmatprep.subr.mxu0 0.0
      %4766 = vmatpush2.msra.mxu0 0.0
      %4767 = vmatprep.subr.mxu0 0.0
      %4768 = vmatpush2.msra.mxu0 0.0
      %4769 = vmatprep.subr.mxu0 0.0
      %4770 = vmatpush2.msra.mxu0 0.0
      %4771 = vmatprep.subr.mxu0 0.0
      %4772 = vmatpush2.msra.mxu0 0.0
      %4773 = vmatprep.subr.mxu0 0.0
      %4774 = vmatpush2.msra.mxu0 0.0
      %4775 = vmatprep.subr.mxu0 0.0
      %4776 = vmatpush2.msra.mxu0 0.0
      %4777 = vmatprep.subr.mxu0 0.0
      %4778 = vmatpush2.msra.mxu0 0.0
      %4779 = vmatprep.subr.mxu0 0.0
      %4780 = vmatpush2.msra.mxu0 0.0
      %4781 = vmatprep.mubr.f32.mxu0 0.0
      %v4782 = vand.u32 %v3311, 4294901760
      %4783 = vmatmul.mubr.f32.gmra.mxu0 %v4782
      %v4784 = vpop.f32.mrf.mxu0
      %v4785 = vadd.f32 %v4710, %v4784
      %v4786 = vpop.f32.mrf.mxu0
      %4787 = vdwg.mxu0
      %v4788 = vmul.f32 %v4291, %v4785
      %v4789 = vadd.f32 %v4302, %v4788
      %v4790 = vtanh.pop %v4789
      %v4791 = vsub.f32 1.0, %v4300
      %v4792 = vmul.f32 %v4791, %v4790
      %v4793 = vmul.f32 %v4300, %v1814
      %v4794 = vadd.f32 %v4792, %v4793
      %s4795 = scalar_lea.vmem %s275, 2
      %4796 = vst.msk [vmem:[%s4795] sm:$0x3] %vm1815, %v4794
      %v4798 = vsel %vm330, %v3307, 0
      %4800 = vmatprep.subr.mxu0 0.0
      %4801 = vmatpush1.msra.mxu0 0.0
      %4802 = vmatprep.subr.mxu0 0.0
      %4803 = vmatpush1.msra.mxu0 0.0
      %4804 = vmatprep.subr.mxu0 0.0
      %4805 = vmatpush1.msra.mxu0 0.0
      %4806 = vmatprep.subr.mxu0 0.0
      %4807 = vmatpush1.msra.mxu0 0.0
      %4808 = vmatprep.subr.mxu0 0.0
      %4809 = vmatpush1.msra.mxu0 0.0
      %4810 = vmatprep.subr.mxu0 0.0
      %4811 = vmatpush1.msra.mxu0 0.0
      %4812 = vmatprep.subr.mxu0 0.0
      %4813 = vmatpush1.msra.mxu0 0.0
      %4814 = vmatprep.subr.mxu0 0.0
      %4815 = vmatpush1.msra.mxu0 0.0
      %4816 = vmatprep.subr.mxu0 0.0
      %4817 = vmatpush1.msra.mxu0 0.0
      %4818 = vmatprep.subr.mxu0 0.0
      %4819 = vmatpush1.msra.mxu0 0.0
      %4820 = vmatprep.subr.mxu0 0.0
      %4821 = vmatpush1.msra.mxu0 0.0
      %4822 = vmatprep.subr.mxu0 0.0
      %4823 = vmatpush1.msra.mxu0 0.0
      %4824 = vmatprep.subr.mxu0 0.0
      %v4825 = vand.u32 %v310, 4294901760
      %4826 = vmatpush1.msra.mxu0 %v4825
      %4827 = vmatprep.subr.mxu0 0.0
      %v4828 = vand.u32 %v309, 4294901760
      %4829 = vmatpush1.msra.mxu0 %v4828
      %4830 = vmatprep.subr.mxu0 0.0
      %v4831 = vand.u32 %v308, 4294901760
      %4832 = vmatpush1.msra.mxu0 %v4831
      %4833 = vmatprep.subr.mxu0 0.0
      %v4834 = vand.u32 %v307, 4294901760
      %4835 = vmatpush1.msra.mxu0 %v4834
      %4836 = vmatprep.subr.mxu0 0.0
      %4837 = vmatpush2.msra.mxu0 0.0
      %4838 = vmatprep.subr.mxu0 0.0
      %4839 = vmatpush2.msra.mxu0 0.0
      %4840 = vmatprep.subr.mxu0 0.0
      %4841 = vmatpush2.msra.mxu0 0.0
      %4842 = vmatprep.subr.mxu0 0.0
      %4843 = vmatpush2.msra.mxu0 0.0
      %4844 = vmatprep.subr.mxu0 0.0
      %4845 = vmatpush2.msra.mxu0 0.0
      %4846 = vmatprep.subr.mxu0 0.0
      %4847 = vmatpush2.msra.mxu0 0.0
      %4848 = vmatprep.subr.mxu0 0.0
      %4849 = vmatpush2.msra.mxu0 0.0
      %4850 = vmatprep.subr.mxu0 0.0
      %4851 = vmatpush2.msra.mxu0 0.0
      %4852 = vmatprep.subr.mxu0 0.0
      %4853 = vmatpush2.msra.mxu0 0.0
      %4854 = vmatprep.subr.mxu0 0.0
      %4855 = vmatpush2.msra.mxu0 0.0
      %4856 = vmatprep.subr.mxu0 0.0
      %4857 = vmatpush2.msra.mxu0 0.0
      %4858 = vmatprep.subr.mxu0 0.0
      %4859 = vmatpush2.msra.mxu0 0.0
      %4860 = vmatprep.subr.mxu0 0.0
      %4861 = vmatpush2.msra.mxu0 0.0
      %4862 = vmatprep.subr.mxu0 0.0
      %4863 = vmatpush2.msra.mxu0 0.0
      %4864 = vmatprep.subr.mxu0 0.0
      %4865 = vmatpush2.msra.mxu0 0.0
      %4866 = vmatprep.subr.mxu0 0.0
      %4867 = vmatpush2.msra.mxu0 0.0
      %4868 = vmatprep.mubr.f32.mxu0 0.0
      %v4869 = vand.u32 %v4798, 4294901760
      %v4870 = vsub.f32 %v4798, %v4869
      %v4871 = vand.u32 %v4870, 4294901760
      %v4872 = vsub.f32 %v4870, %v4871
      %v4873 = vand.u32 %v4872, 4294901760
      %4874 = vmatmul.mubr.f32.gmra.mxu0 %v4873
      %v4875 = vpop.f32.mrf.mxu0
      %v4876 = vadd.f32 0.0, %v4875
      %v4877 = vpop.f32.mrf.mxu0
      %4878 = vdwg.mxu0
      %4879 = vmatprep.subr.mxu0 0.0
      %4880 = vmatpush1.msra.mxu0 0.0
      %4881 = vmatprep.subr.mxu0 0.0
      %4882 = vmatpush1.msra.mxu0 0.0
      %4883 = vmatprep.subr.mxu0 0.0
      %4884 = vmatpush1.msra.mxu0 0.0
      %4885 = vmatprep.subr.mxu0 0.0
      %4886 = vmatpush1.msra.mxu0 0.0
      %4887 = vmatprep.subr.mxu0 0.0
      %4888 = vmatpush1.msra.mxu0 0.0
      %4889 = vmatprep.subr.mxu0 0.0
      %4890 = vmatpush1.msra.mxu0 0.0
      %4891 = vmatprep.subr.mxu0 0.0
      %4892 = vmatpush1.msra.mxu0 0.0
      %4893 = vmatprep.subr.mxu0 0.0
      %4894 = vmatpush1.msra.mxu0 0.0
      %4895 = vmatprep.subr.mxu0 0.0
      %4896 = vmatpush1.msra.mxu0 0.0
      %4897 = vmatprep.subr.mxu0 0.0
      %4898 = vmatpush1.msra.mxu0 0.0
      %4899 = vmatprep.subr.mxu0 0.0
      %4900 = vmatpush1.msra.mxu0 0.0
      %4901 = vmatprep.subr.mxu0 0.0
      %4902 = vmatpush1.msra.mxu0 0.0
      %4903 = vmatprep.subr.mxu0 0.0
      %v4904 = vand.u32 %v310, 4294901760
      %v4905 = vsub.f32 %v310, %v4904
      %v4906 = vand.u32 %v4905, 4294901760
      %v4907 = vsub.f32 %v4905, %v4906
      %v4908 = vand.u32 %v4907, 4294901760
      %4909 = vmatpush1.msra.mxu0 %v4908
      %4910 = vmatprep.subr.mxu0 0.0
      %v4911 = vand.u32 %v309, 4294901760
      %v4912 = vsub.f32 %v309, %v4911
      %v4913 = vand.u32 %v4912, 4294901760
      %v4914 = vsub.f32 %v4912, %v4913
      %v4915 = vand.u32 %v4914, 4294901760
      %4916 = vmatpush1.msra.mxu0 %v4915
      %4917 = vmatprep.subr.mxu0 0.0
      %v4918 = vand.u32 %v308, 4294901760
      %v4919 = vsub.f32 %v308, %v4918
      %v4920 = vand.u32 %v4919, 4294901760
      %v4921 = vsub.f32 %v4919, %v4920
      %v4922 = vand.u32 %v4921, 4294901760
      %4923 = vmatpush1.msra.mxu0 %v4922
      %4924 = vmatprep.subr.mxu0 0.0
      %v4925 = vand.u32 %v307, 4294901760
      %v4926 = vsub.f32 %v307, %v4925
      %v4927 = vand.u32 %v4926, 4294901760
      %v4928 = vsub.f32 %v4926, %v4927
      %v4929 = vand.u32 %v4928, 4294901760
      %4930 = vmatpush1.msra.mxu0 %v4929
      %4931 = vmatprep.subr.mxu0 0.0
      %4932 = vmatpush2.msra.mxu0 0.0
      %4933 = vmatprep.subr.mxu0 0.0
      %4934 = vmatpush2.msra.mxu0 0.0
      %4935 = vmatprep.subr.mxu0 0.0
      %4936 = vmatpush2.msra.mxu0 0.0
      %4937 = vmatprep.subr.mxu0 0.0
      %4938 = vmatpush2.msra.mxu0 0.0
      %4939 = vmatprep.subr.mxu0 0.0
      %4940 = vmatpush2.msra.mxu0 0.0
      %4941 = vmatprep.subr.mxu0 0.0
      %4942 = vmatpush2.msra.mxu0 0.0
      %4943 = vmatprep.subr.mxu0 0.0
      %4944 = vmatpush2.msra.mxu0 0.0
      %4945 = vmatprep.subr.mxu0 0.0
      %4946 = vmatpush2.msra.mxu0 0.0
      %4947 = vmatprep.subr.mxu0 0.0
      %4948 = vmatpush2.msra.mxu0 0.0
      %4949 = vmatprep.subr.mxu0 0.0
      %4950 = vmatpush2.msra.mxu0 0.0
      %4951 = vmatprep.subr.mxu0 0.0
      %4952 = vmatpush2.msra.mxu0 0.0
      %4953 = vmatprep.subr.mxu0 0.0
      %4954 = vmatpush2.msra.mxu0 0.0
      %4955 = vmatprep.subr.mxu0 0.0
      %4956 = vmatpush2.msra.mxu0 0.0
      %4957 = vmatprep.subr.mxu0 0.0
      %4958 = vmatpush2.msra.mxu0 0.0
      %4959 = vmatprep.subr.mxu0 0.0
      %4960 = vmatpush2.msra.mxu0 0.0
      %4961 = vmatprep.subr.mxu0 0.0
      %4962 = vmatpush2.msra.mxu0 0.0
      %4963 = vmatprep.mubr.f32.mxu0 0.0
      %v4964 = vand.u32 %v4798, 4294901760
      %4965 = vmatmul.mubr.f32.gmra.mxu0 %v4964
      %v4966 = vpop.f32.mrf.mxu0
      %v4967 = vadd.f32 %v4876, %v4966
      %v4968 = vpop.f32.mrf.mxu0
      %4969 = vdwg.mxu0
      %4970 = vmatprep.subr.mxu0 0.0
      %4971 = vmatpush1.msra.mxu0 0.0
      %4972 = vmatprep.subr.mxu0 0.0
      %4973 = vmatpush1.msra.mxu0 0.0
      %4974 = vmatprep.subr.mxu0 0.0
      %4975 = vmatpush1.msra.mxu0 0.0
      %4976 = vmatprep.subr.mxu0 0.0
      %4977 = vmatpush1.msra.mxu0 0.0
      %4978 = vmatprep.subr.mxu0 0.0
      %4979 = vmatpush1.msra.mxu0 0.0
      %4980 = vmatprep.subr.mxu0 0.0
      %4981 = vmatpush1.msra.mxu0 0.0
      %4982 = vmatprep.subr.mxu0 0.0
      %4983 = vmatpush1.msra.mxu0 0.0
      %4984 = vmatprep.subr.mxu0 0.0
      %4985 = vmatpush1.msra.mxu0 0.0
      %4986 = vmatprep.subr.mxu0 0.0
      %4987 = vmatpush1.msra.mxu0 0.0
      %4988 = vmatprep.subr.mxu0 0.0
      %4989 = vmatpush1.msra.mxu0 0.0
      %4990 = vmatprep.subr.mxu0 0.0
      %4991 = vmatpush1.msra.mxu0 0.0
      %4992 = vmatprep.subr.mxu0 0.0
      %4993 = vmatpush1.msra.mxu0 0.0
      %4994 = vmatprep.subr.mxu0 0.0
      %v4995 = vand.u32 %v310, 4294901760
      %v4996 = vsub.f32 %v310, %v4995
      %4997 = vmatpush1.msra.mxu0 %v4996
      %4998 = vmatprep.subr.mxu0 0.0
      %v4999 = vand.u32 %v309, 4294901760
      %v5000 = vsub.f32 %v309, %v4999
      %5001 = vmatpush1.msra.mxu0 %v5000
      %5002 = vmatprep.subr.mxu0 0.0
      %v5003 = vand.u32 %v308, 4294901760
      %v5004 = vsub.f32 %v308, %v5003
      %5005 = vmatpush1.msra.mxu0 %v5004
      %5006 = vmatprep.subr.mxu0 0.0
      %v5007 = vand.u32 %v307, 4294901760
      %v5008 = vsub.f32 %v307, %v5007
      %5009 = vmatpush1.msra.mxu0 %v5008
      %5010 = vmatprep.subr.mxu0 0.0
      %5011 = vmatpush2.msra.mxu0 0.0
      %5012 = vmatprep.subr.mxu0 0.0
      %5013 = vmatpush2.msra.mxu0 0.0
      %5014 = vmatprep.subr.mxu0 0.0
      %5015 = vmatpush2.msra.mxu0 0.0
      %5016 = vmatprep.subr.mxu0 0.0
      %5017 = vmatpush2.msra.mxu0 0.0
      %5018 = vmatprep.subr.mxu0 0.0
      %5019 = vmatpush2.msra.mxu0 0.0
      %5020 = vmatprep.subr.mxu0 0.0
      %5021 = vmatpush2.msra.mxu0 0.0
      %5022 = vmatprep.subr.mxu0 0.0
      %5023 = vmatpush2.msra.mxu0 0.0
      %5024 = vmatprep.subr.mxu0 0.0
      %5025 = vmatpush2.msra.mxu0 0.0
      %5026 = vmatprep.subr.mxu0 0.0
      %5027 = vmatpush2.msra.mxu0 0.0
      %5028 = vmatprep.subr.mxu0 0.0
      %5029 = vmatpush2.msra.mxu0 0.0
      %5030 = vmatprep.subr.mxu0 0.0
      %5031 = vmatpush2.msra.mxu0 0.0
      %5032 = vmatprep.subr.mxu0 0.0
      %5033 = vmatpush2.msra.mxu0 0.0
      %5034 = vmatprep.subr.mxu0 0.0
      %5035 = vmatpush2.msra.mxu0 0.0
      %5036 = vmatprep.subr.mxu0 0.0
      %5037 = vmatpush2.msra.mxu0 0.0
      %5038 = vmatprep.subr.mxu0 0.0
      %5039 = vmatpush2.msra.mxu0 0.0
      %5040 = vmatprep.subr.mxu0 0.0
      %5041 = vmatpush2.msra.mxu0 0.0
      %5042 = vmatprep.mubr.f32.mxu0 0.0
      %v5043 = vand.u32 %v4798, 4294901760
      %v5044 = vsub.f32 %v4798, %v5043
      %5045 = vmatmul.mubr.f32.gmra.mxu0 %v5044
      %v5046 = vpop.f32.mrf.mxu0
      %v5047 = vadd.f32 %v4967, %v5046
      %v5048 = vpop.f32.mrf.mxu0
      %5049 = vdwg.mxu0
      %5050 = vmatprep.subr.mxu0 0.0
      %5051 = vmatpush1.msra.mxu0 0.0
      %5052 = vmatprep.subr.mxu0 0.0
      %5053 = vmatpush1.msra.mxu0 0.0
      %5054 = vmatprep.subr.mxu0 0.0
      %5055 = vmatpush1.msra.mxu0 0.0
      %5056 = vmatprep.subr.mxu0 0.0
      %5057 = vmatpush1.msra.mxu0 0.0
      %5058 = vmatprep.subr.mxu0 0.0
      %5059 = vmatpush1.msra.mxu0 0.0
      %5060 = vmatprep.subr.mxu0 0.0
      %5061 = vmatpush1.msra.mxu0 0.0
      %5062 = vmatprep.subr.mxu0 0.0
      %5063 = vmatpush1.msra.mxu0 0.0
      %5064 = vmatprep.subr.mxu0 0.0
      %5065 = vmatpush1.msra.mxu0 0.0
      %5066 = vmatprep.subr.mxu0 0.0
      %5067 = vmatpush1.msra.mxu0 0.0
      %5068 = vmatprep.subr.mxu0 0.0
      %5069 = vmatpush1.msra.mxu0 0.0
      %5070 = vmatprep.subr.mxu0 0.0
      %5071 = vmatpush1.msra.mxu0 0.0
      %5072 = vmatprep.subr.mxu0 0.0
      %5073 = vmatpush1.msra.mxu0 0.0
      %5074 = vmatprep.subr.mxu0 0.0
      %v5075 = vand.u32 %v310, 4294901760
      %5076 = vmatpush1.msra.mxu0 %v5075
      %5077 = vmatprep.subr.mxu0 0.0
      %v5078 = vand.u32 %v309, 4294901760
      %5079 = vmatpush1.msra.mxu0 %v5078
      %5080 = vmatprep.subr.mxu0 0.0
      %v5081 = vand.u32 %v308, 4294901760
      %5082 = vmatpush1.msra.mxu0 %v5081
      %5083 = vmatprep.subr.mxu0 0.0
      %v5084 = vand.u32 %v307, 4294901760
      %5085 = vmatpush1.msra.mxu0 %v5084
      %5086 = vmatprep.subr.mxu0 0.0
      %5087 = vmatpush2.msra.mxu0 0.0
      %5088 = vmatprep.subr.mxu0 0.0
      %5089 = vmatpush2.msra.mxu0 0.0
      %5090 = vmatprep.subr.mxu0 0.0
      %5091 = vmatpush2.msra.mxu0 0.0
      %5092 = vmatprep.subr.mxu0 0.0
      %5093 = vmatpush2.msra.mxu0 0.0
      %5094 = vmatprep.subr.mxu0 0.0
      %5095 = vmatpush2.msra.mxu0 0.0
      %5096 = vmatprep.subr.mxu0 0.0
      %5097 = vmatpush2.msra.mxu0 0.0
      %5098 = vmatprep.subr.mxu0 0.0
      %5099 = vmatpush2.msra.mxu0 0.0
      %5100 = vmatprep.subr.mxu0 0.0
      %5101 = vmatpush2.msra.mxu0 0.0
      %5102 = vmatprep.subr.mxu0 0.0
      %5103 = vmatpush2.msra.mxu0 0.0
      %5104 = vmatprep.subr.mxu0 0.0
      %5105 = vmatpush2.msra.mxu0 0.0
      %5106 = vmatprep.subr.mxu0 0.0
      %5107 = vmatpush2.msra.mxu0 0.0
      %5108 = vmatprep.subr.mxu0 0.0
      %5109 = vmatpush2.msra.mxu0 0.0
      %5110 = vmatprep.subr.mxu0 0.0
      %5111 = vmatpush2.msra.mxu0 0.0
      %5112 = vmatprep.subr.mxu0 0.0
      %5113 = vmatpush2.msra.mxu0 0.0
      %5114 = vmatprep.subr.mxu0 0.0
      %5115 = vmatpush2.msra.mxu0 0.0
      %5116 = vmatprep.subr.mxu0 0.0
      %5117 = vmatpush2.msra.mxu0 0.0
      %5118 = vmatprep.mubr.f32.mxu0 0.0
      %v5119 = vand.u32 %v4798, 4294901760
      %v5120 = vsub.f32 %v4798, %v5119
      %v5121 = vand.u32 %v5120, 4294901760
      %5122 = vmatmul.mubr.f32.gmra.mxu0 %v5121
      %v5123 = vpop.f32.mrf.mxu0
      %v5124 = vadd.f32 %v5047, %v5123
      %v5125 = vpop.f32.mrf.mxu0
      %5126 = vdwg.mxu0
      %5127 = vmatprep.subr.mxu0 0.0
      %5128 = vmatpush1.msra.mxu0 0.0
      %5129 = vmatprep.subr.mxu0 0.0
      %5130 = vmatpush1.msra.mxu0 0.0
      %5131 = vmatprep.subr.mxu0 0.0
      %5132 = vmatpush1.msra.mxu0 0.0
      %5133 = vmatprep.subr.mxu0 0.0
      %5134 = vmatpush1.msra.mxu0 0.0
      %5135 = vmatprep.subr.mxu0 0.0
      %5136 = vmatpush1.msra.mxu0 0.0
      %5137 = vmatprep.subr.mxu0 0.0
      %5138 = vmatpush1.msra.mxu0 0.0
      %5139 = vmatprep.subr.mxu0 0.0
      %5140 = vmatpush1.msra.mxu0 0.0
      %5141 = vmatprep.subr.mxu0 0.0
      %5142 = vmatpush1.msra.mxu0 0.0
      %5143 = vmatprep.subr.mxu0 0.0
      %5144 = vmatpush1.msra.mxu0 0.0
      %5145 = vmatprep.subr.mxu0 0.0
      %5146 = vmatpush1.msra.mxu0 0.0
      %5147 = vmatprep.subr.mxu0 0.0
      %5148 = vmatpush1.msra.mxu0 0.0
      %5149 = vmatprep.subr.mxu0 0.0
      %5150 = vmatpush1.msra.mxu0 0.0
      %5151 = vmatprep.subr.mxu0 0.0
      %v5152 = vand.u32 %v310, 4294901760
      %v5153 = vsub.f32 %v310, %v5152
      %v5154 = vand.u32 %v5153, 4294901760
      %5155 = vmatpush1.msra.mxu0 %v5154
      %5156 = vmatprep.subr.mxu0 0.0
      %v5157 = vand.u32 %v309, 4294901760
      %v5158 = vsub.f32 %v309, %v5157
      %v5159 = vand.u32 %v5158, 4294901760
      %5160 = vmatpush1.msra.mxu0 %v5159
      %5161 = vmatprep.subr.mxu0 0.0
      %v5162 = vand.u32 %v308, 4294901760
      %v5163 = vsub.f32 %v308, %v5162
      %v5164 = vand.u32 %v5163, 4294901760
      %5165 = vmatpush1.msra.mxu0 %v5164
      %5166 = vmatprep.subr.mxu0 0.0
      %v5167 = vand.u32 %v307, 4294901760
      %v5168 = vsub.f32 %v307, %v5167
      %v5169 = vand.u32 %v5168, 4294901760
      %5170 = vmatpush1.msra.mxu0 %v5169
      %5171 = vmatprep.subr.mxu0 0.0
      %5172 = vmatpush2.msra.mxu0 0.0
      %5173 = vmatprep.subr.mxu0 0.0
      %5174 = vmatpush2.msra.mxu0 0.0
      %5175 = vmatprep.subr.mxu0 0.0
      %5176 = vmatpush2.msra.mxu0 0.0
      %5177 = vmatprep.subr.mxu0 0.0
      %5178 = vmatpush2.msra.mxu0 0.0
      %5179 = vmatprep.subr.mxu0 0.0
      %5180 = vmatpush2.msra.mxu0 0.0
      %5181 = vmatprep.subr.mxu0 0.0
      %5182 = vmatpush2.msra.mxu0 0.0
      %5183 = vmatprep.subr.mxu0 0.0
      %5184 = vmatpush2.msra.mxu0 0.0
      %5185 = vmatprep.subr.mxu0 0.0
      %5186 = vmatpush2.msra.mxu0 0.0
      %5187 = vmatprep.subr.mxu0 0.0
      %5188 = vmatpush2.msra.mxu0 0.0
      %5189 = vmatprep.subr.mxu0 0.0
      %5190 = vmatpush2.msra.mxu0 0.0
      %5191 = vmatprep.subr.mxu0 0.0
      %5192 = vmatpush2.msra.mxu0 0.0
      %5193 = vmatprep.subr.mxu0 0.0
      %5194 = vmatpush2.msra.mxu0 0.0
      %5195 = vmatprep.subr.mxu0 0.0
      %5196 = vmatpush2.msra.mxu0 0.0
      %5197 = vmatprep.subr.mxu0 0.0
      %5198 = vmatpush2.msra.mxu0 0.0
      %5199 = vmatprep.subr.mxu0 0.0
      %5200 = vmatpush2.msra.mxu0 0.0
      %5201 = vmatprep.subr.mxu0 0.0
      %5202 = vmatpush2.msra.mxu0 0.0
      %5203 = vmatprep.mubr.f32.mxu0 0.0
      %v5204 = vand.u32 %v4798, 4294901760
      %5205 = vmatmul.mubr.f32.gmra.mxu0 %v5204
      %v5206 = vpop.f32.mrf.mxu0
      %v5207 = vadd.f32 %v5124, %v5206
      %v5208 = vpop.f32.mrf.mxu0
      %5209 = vdwg.mxu0
      %5210 = vmatprep.subr.mxu0 0.0
      %5211 = vmatpush1.msra.mxu0 0.0
      %5212 = vmatprep.subr.mxu0 0.0
      %5213 = vmatpush1.msra.mxu0 0.0
      %5214 = vmatprep.subr.mxu0 0.0
      %5215 = vmatpush1.msra.mxu0 0.0
      %5216 = vmatprep.subr.mxu0 0.0
      %5217 = vmatpush1.msra.mxu0 0.0
      %5218 = vmatprep.subr.mxu0 0.0
      %5219 = vmatpush1.msra.mxu0 0.0
      %5220 = vmatprep.subr.mxu0 0.0
      %5221 = vmatpush1.msra.mxu0 0.0
      %5222 = vmatprep.subr.mxu0 0.0
      %5223 = vmatpush1.msra.mxu0 0.0
      %5224 = vmatprep.subr.mxu0 0.0
      %5225 = vmatpush1.msra.mxu0 0.0
      %5226 = vmatprep.subr.mxu0 0.0
      %5227 = vmatpush1.msra.mxu0 0.0
      %5228 = vmatprep.subr.mxu0 0.0
      %5229 = vmatpush1.msra.mxu0 0.0
      %5230 = vmatprep.subr.mxu0 0.0
      %5231 = vmatpush1.msra.mxu0 0.0
      %5232 = vmatprep.subr.mxu0 0.0
      %5233 = vmatpush1.msra.mxu0 0.0
      %5234 = vmatprep.subr.mxu0 0.0
      %v5235 = vand.u32 %v310, 4294901760
      %5236 = vmatpush1.msra.mxu0 %v5235
      %5237 = vmatprep.subr.mxu0 0.0
      %v5238 = vand.u32 %v309, 4294901760
      %5239 = vmatpush1.msra.mxu0 %v5238
      %5240 = vmatprep.subr.mxu0 0.0
      %v5241 = vand.u32 %v308, 4294901760
      %5242 = vmatpush1.msra.mxu0 %v5241
      %5243 = vmatprep.subr.mxu0 0.0
      %v5244 = vand.u32 %v307, 4294901760
      %5245 = vmatpush1.msra.mxu0 %v5244
      %5246 = vmatprep.subr.mxu0 0.0
      %5247 = vmatpush2.msra.mxu0 0.0
      %5248 = vmatprep.subr.mxu0 0.0
      %5249 = vmatpush2.msra.mxu0 0.0
      %5250 = vmatprep.subr.mxu0 0.0
      %5251 = vmatpush2.msra.mxu0 0.0
      %5252 = vmatprep.subr.mxu0 0.0
      %5253 = vmatpush2.msra.mxu0 0.0
      %5254 = vmatprep.subr.mxu0 0.0
      %5255 = vmatpush2.msra.mxu0 0.0
      %5256 = vmatprep.subr.mxu0 0.0
      %5257 = vmatpush2.msra.mxu0 0.0
      %5258 = vmatprep.subr.mxu0 0.0
      %5259 = vmatpush2.msra.mxu0 0.0
      %5260 = vmatprep.subr.mxu0 0.0
      %5261 = vmatpush2.msra.mxu0 0.0
      %5262 = vmatprep.subr.mxu0 0.0
      %5263 = vmatpush2.msra.mxu0 0.0
      %5264 = vmatprep.subr.mxu0 0.0
      %5265 = vmatpush2.msra.mxu0 0.0
      %5266 = vmatprep.subr.mxu0 0.0
      %5267 = vmatpush2.msra.mxu0 0.0
      %5268 = vmatprep.subr.mxu0 0.0
      %5269 = vmatpush2.msra.mxu0 0.0
      %5270 = vmatprep.subr.mxu0 0.0
      %5271 = vmatpush2.msra.mxu0 0.0
      %5272 = vmatprep.subr.mxu0 0.0
      %5273 = vmatpush2.msra.mxu0 0.0
      %5274 = vmatprep.subr.mxu0 0.0
      %5275 = vmatpush2.msra.mxu0 0.0
      %5276 = vmatprep.subr.mxu0 0.0
      %5277 = vmatpush2.msra.mxu0 0.0
      %5278 = vmatprep.mubr.f32.mxu0 0.0
      %v5279 = vand.u32 %v4798, 4294901760
      %5280 = vmatmul.mubr.f32.gmra.mxu0 %v5279
      %v5281 = vpop.f32.mrf.mxu0
      %v5282 = vadd.f32 %v5207, %v5281
      %v5283 = vpop.f32.mrf.mxu0
      %5284 = vdwg.mxu0
      %5285 = vmatprep.subr.mxu0 0.0
      %5286 = vmatpush1.msra.mxu0 0.0
      %5287 = vmatprep.subr.mxu0 0.0
      %5288 = vmatpush1.msra.mxu0 0.0
      %5289 = vmatprep.subr.mxu0 0.0
      %5290 = vmatpush1.msra.mxu0 0.0
      %5291 = vmatprep.subr.mxu0 0.0
      %5292 = vmatpush1.msra.mxu0 0.0
      %5293 = vmatprep.subr.mxu0 0.0
      %5294 = vmatpush1.msra.mxu0 0.0
      %5295 = vmatprep.subr.mxu0 0.0
      %5296 = vmatpush1.msra.mxu0 0.0
      %5297 = vmatprep.subr.mxu0 0.0
      %5298 = vmatpush1.msra.mxu0 0.0
      %5299 = vmatprep.subr.mxu0 0.0
      %5300 = vmatpush1.msra.mxu0 0.0
      %5301 = vmatprep.subr.mxu0 0.0
      %5302 = vmatpush1.msra.mxu0 0.0
      %5303 = vmatprep.subr.mxu0 0.0
      %5304 = vmatpush1.msra.mxu0 0.0
      %5305 = vmatprep.subr.mxu0 0.0
      %5306 = vmatpush1.msra.mxu0 0.0
      %5307 = vmatprep.subr.mxu0 0.0
      %5308 = vmatpush1.msra.mxu0 0.0
      %5309 = vmatprep.subr.mxu0 0.0
      %v5310 = vand.u32 %v315, 4294901760
      %5311 = vmatpush1.msra.mxu0 %v5310
      %5312 = vmatprep.subr.mxu0 0.0
      %v5313 = vand.u32 %v314, 4294901760
      %5314 = vmatpush1.msra.mxu0 %v5313
      %5315 = vmatprep.subr.mxu0 0.0
      %v5316 = vand.u32 %v313, 4294901760
      %5317 = vmatpush1.msra.mxu0 %v5316
      %5318 = vmatprep.subr.mxu0 0.0
      %v5319 = vand.u32 %v312, 4294901760
      %5320 = vmatpush1.msra.mxu0 %v5319
      %5321 = vmatprep.subr.mxu0 0.0
      %5322 = vmatpush2.msra.mxu0 0.0
      %5323 = vmatprep.subr.mxu0 0.0
      %5324 = vmatpush2.msra.mxu0 0.0
      %5325 = vmatprep.subr.mxu0 0.0
      %5326 = vmatpush2.msra.mxu0 0.0
      %5327 = vmatprep.subr.mxu0 0.0
      %5328 = vmatpush2.msra.mxu0 0.0
      %5329 = vmatprep.subr.mxu0 0.0
      %5330 = vmatpush2.msra.mxu0 0.0
      %5331 = vmatprep.subr.mxu0 0.0
      %5332 = vmatpush2.msra.mxu0 0.0
      %5333 = vmatprep.subr.mxu0 0.0
      %5334 = vmatpush2.msra.mxu0 0.0
      %5335 = vmatprep.subr.mxu0 0.0
      %5336 = vmatpush2.msra.mxu0 0.0
      %5337 = vmatprep.subr.mxu0 0.0
      %5338 = vmatpush2.msra.mxu0 0.0
      %5339 = vmatprep.subr.mxu0 0.0
      %5340 = vmatpush2.msra.mxu0 0.0
      %5341 = vmatprep.subr.mxu0 0.0
      %5342 = vmatpush2.msra.mxu0 0.0
      %5343 = vmatprep.subr.mxu0 0.0
      %5344 = vmatpush2.msra.mxu0 0.0
      %5345 = vmatprep.subr.mxu0 0.0
      %5346 = vmatpush2.msra.mxu0 0.0
      %5347 = vmatprep.subr.mxu0 0.0
      %5348 = vmatpush2.msra.mxu0 0.0
      %5349 = vmatprep.subr.mxu0 0.0
      %5350 = vmatpush2.msra.mxu0 0.0
      %5351 = vmatprep.subr.mxu0 0.0
      %5352 = vmatpush2.msra.mxu0 0.0
      %5353 = vmatprep.mubr.f32.mxu0 0.0
      %v5354 = vand.u32 %v4798, 4294901760
      %v5355 = vsub.f32 %v4798, %v5354
      %v5356 = vand.u32 %v5355, 4294901760
      %v5357 = vsub.f32 %v5355, %v5356
      %v5358 = vand.u32 %v5357, 4294901760
      %5359 = vmatmul.mubr.f32.gmra.mxu0 %v5358
      %v5360 = vpop.f32.mrf.mxu0
      %v5361 = vadd.f32 0.0, %v5360
      %v5362 = vpop.f32.mrf.mxu0
      %5363 = vdwg.mxu0
      %5364 = vmatprep.subr.mxu0 0.0
      %5365 = vmatpush1.msra.mxu0 0.0
      %5366 = vmatprep.subr.mxu0 0.0
      %5367 = vmatpush1.msra.mxu0 0.0
      %5368 = vmatprep.subr.mxu0 0.0
      %5369 = vmatpush1.msra.mxu0 0.0
      %5370 = vmatprep.subr.mxu0 0.0
      %5371 = vmatpush1.msra.mxu0 0.0
      %5372 = vmatprep.subr.mxu0 0.0
      %5373 = vmatpush1.msra.mxu0 0.0
      %5374 = vmatprep.subr.mxu0 0.0
      %5375 = vmatpush1.msra.mxu0 0.0
      %5376 = vmatprep.subr.mxu0 0.0
      %5377 = vmatpush1.msra.mxu0 0.0
      %5378 = vmatprep.subr.mxu0 0.0
      %5379 = vmatpush1.msra.mxu0 0.0
      %5380 = vmatprep.subr.mxu0 0.0
      %5381 = vmatpush1.msra.mxu0 0.0
      %5382 = vmatprep.subr.mxu0 0.0
      %5383 = vmatpush1.msra.mxu0 0.0
      %5384 = vmatprep.subr.mxu0 0.0
      %5385 = vmatpush1.msra.mxu0 0.0
      %5386 = vmatprep.subr.mxu0 0.0
      %5387 = vmatpush1.msra.mxu0 0.0
      %5388 = vmatprep.subr.mxu0 0.0
      %v5389 = vand.u32 %v315, 4294901760
      %v5390 = vsub.f32 %v315, %v5389
      %v5391 = vand.u32 %v5390, 4294901760
      %v5392 = vsub.f32 %v5390, %v5391
      %v5393 = vand.u32 %v5392, 4294901760
      %5394 = vmatpush1.msra.mxu0 %v5393
      %5395 = vmatprep.subr.mxu0 0.0
      %v5396 = vand.u32 %v314, 4294901760
      %v5397 = vsub.f32 %v314, %v5396
      %v5398 = vand.u32 %v5397, 4294901760
      %v5399 = vsub.f32 %v5397, %v5398
      %v5400 = vand.u32 %v5399, 4294901760
      %5401 = vmatpush1.msra.mxu0 %v5400
      %5402 = vmatprep.subr.mxu0 0.0
      %v5403 = vand.u32 %v313, 4294901760
      %v5404 = vsub.f32 %v313, %v5403
      %v5405 = vand.u32 %v5404, 4294901760
      %v5406 = vsub.f32 %v5404, %v5405
      %v5407 = vand.u32 %v5406, 4294901760
      %5408 = vmatpush1.msra.mxu0 %v5407
      %5409 = vmatprep.subr.mxu0 0.0
      %v5410 = vand.u32 %v312, 4294901760
      %v5411 = vsub.f32 %v312, %v5410
      %v5412 = vand.u32 %v5411, 4294901760
      %v5413 = vsub.f32 %v5411, %v5412
      %v5414 = vand.u32 %v5413, 4294901760
      %5415 = vmatpush1.msra.mxu0 %v5414
      %5416 = vmatprep.subr.mxu0 0.0
      %5417 = vmatpush2.msra.mxu0 0.0
      %5418 = vmatprep.subr.mxu0 0.0
      %5419 = vmatpush2.msra.mxu0 0.0
      %5420 = vmatprep.subr.mxu0 0.0
      %5421 = vmatpush2.msra.mxu0 0.0
      %5422 = vmatprep.subr.mxu0 0.0
      %5423 = vmatpush2.msra.mxu0 0.0
      %5424 = vmatprep.subr.mxu0 0.0
      %5425 = vmatpush2.msra.mxu0 0.0
      %5426 = vmatprep.subr.mxu0 0.0
      %5427 = vmatpush2.msra.mxu0 0.0
      %5428 = vmatprep.subr.mxu0 0.0
      %5429 = vmatpush2.msra.mxu0 0.0
      %5430 = vmatprep.subr.mxu0 0.0
      %5431 = vmatpush2.msra.mxu0 0.0
      %5432 = vmatprep.subr.mxu0 0.0
      %5433 = vmatpush2.msra.mxu0 0.0
      %5434 = vmatprep.subr.mxu0 0.0
      %5435 = vmatpush2.msra.mxu0 0.0
      %5436 = vmatprep.subr.mxu0 0.0
      %5437 = vmatpush2.msra.mxu0 0.0
      %5438 = vmatprep.subr.mxu0 0.0
      %5439 = vmatpush2.msra.mxu0 0.0
      %5440 = vmatprep.subr.mxu0 0.0
      %5441 = vmatpush2.msra.mxu0 0.0
      %5442 = vmatprep.subr.mxu0 0.0
      %5443 = vmatpush2.msra.mxu0 0.0
      %5444 = vmatprep.subr.mxu0 0.0
      %5445 = vmatpush2.msra.mxu0 0.0
      %5446 = vmatprep.subr.mxu0 0.0
      %5447 = vmatpush2.msra.mxu0 0.0
      %5448 = vmatprep.mubr.f32.mxu0 0.0
      %v5449 = vand.u32 %v4798, 4294901760
      %5450 = vmatmul.mubr.f32.gmra.mxu0 %v5449
      %v5451 = vpop.f32.mrf.mxu0
      %v5452 = vadd.f32 %v5361, %v5451
      %v5453 = vpop.f32.mrf.mxu0
      %5454 = vdwg.mxu0
      %5455 = vmatprep.subr.mxu0 0.0
      %5456 = vmatpush1.msra.mxu0 0.0
      %5457 = vmatprep.subr.mxu0 0.0
      %5458 = vmatpush1.msra.mxu0 0.0
      %5459 = vmatprep.subr.mxu0 0.0
      %5460 = vmatpush1.msra.mxu0 0.0
      %5461 = vmatprep.subr.mxu0 0.0
      %5462 = vmatpush1.msra.mxu0 0.0
      %5463 = vmatprep.subr.mxu0 0.0
      %5464 = vmatpush1.msra.mxu0 0.0
      %5465 = vmatprep.subr.mxu0 0.0
      %5466 = vmatpush1.msra.mxu0 0.0
      %5467 = vmatprep.subr.mxu0 0.0
      %5468 = vmatpush1.msra.mxu0 0.0
      %5469 = vmatprep.subr.mxu0 0.0
      %5470 = vmatpush1.msra.mxu0 0.0
      %5471 = vmatprep.subr.mxu0 0.0
      %5472 = vmatpush1.msra.mxu0 0.0
      %5473 = vmatprep.subr.mxu0 0.0
      %5474 = vmatpush1.msra.mxu0 0.0
      %5475 = vmatprep.subr.mxu0 0.0
      %5476 = vmatpush1.msra.mxu0 0.0
      %5477 = vmatprep.subr.mxu0 0.0
      %5478 = vmatpush1.msra.mxu0 0.0
      %5479 = vmatprep.subr.mxu0 0.0
      %v5480 = vand.u32 %v315, 4294901760
      %v5481 = vsub.f32 %v315, %v5480
      %5482 = vmatpush1.msra.mxu0 %v5481
      %5483 = vmatprep.subr.mxu0 0.0
      %v5484 = vand.u32 %v314, 4294901760
      %v5485 = vsub.f32 %v314, %v5484
      %5486 = vmatpush1.msra.mxu0 %v5485
      %5487 = vmatprep.subr.mxu0 0.0
      %v5488 = vand.u32 %v313, 4294901760
      %v5489 = vsub.f32 %v313, %v5488
      %5490 = vmatpush1.msra.mxu0 %v5489
      %5491 = vmatprep.subr.mxu0 0.0
      %v5492 = vand.u32 %v312, 4294901760
      %v5493 = vsub.f32 %v312, %v5492
      %5494 = vmatpush1.msra.mxu0 %v5493
      %5495 = vmatprep.subr.mxu0 0.0
      %5496 = vmatpush2.msra.mxu0 0.0
      %5497 = vmatprep.subr.mxu0 0.0
      %5498 = vmatpush2.msra.mxu0 0.0
      %5499 = vmatprep.subr.mxu0 0.0
      %5500 = vmatpush2.msra.mxu0 0.0
      %5501 = vmatprep.subr.mxu0 0.0
      %5502 = vmatpush2.msra.mxu0 0.0
      %5503 = vmatprep.subr.mxu0 0.0
      %5504 = vmatpush2.msra.mxu0 0.0
      %5505 = vmatprep.subr.mxu0 0.0
      %5506 = vmatpush2.msra.mxu0 0.0
      %5507 = vmatprep.subr.mxu0 0.0
      %5508 = vmatpush2.msra.mxu0 0.0
      %5509 = vmatprep.subr.mxu0 0.0
      %5510 = vmatpush2.msra.mxu0 0.0
      %5511 = vmatprep.subr.mxu0 0.0
      %5512 = vmatpush2.msra.mxu0 0.0
      %5513 = vmatprep.subr.mxu0 0.0
      %5514 = vmatpush2.msra.mxu0 0.0
      %5515 = vmatprep.subr.mxu0 0.0
      %5516 = vmatpush2.msra.mxu0 0.0
      %5517 = vmatprep.subr.mxu0 0.0
      %5518 = vmatpush2.msra.mxu0 0.0
      %5519 = vmatprep.subr.mxu0 0.0
      %5520 = vmatpush2.msra.mxu0 0.0
      %5521 = vmatprep.subr.mxu0 0.0
      %5522 = vmatpush2.msra.mxu0 0.0
      %5523 = vmatprep.subr.mxu0 0.0
      %5524 = vmatpush2.msra.mxu0 0.0
      %5525 = vmatprep.subr.mxu0 0.0
      %5526 = vmatpush2.msra.mxu0 0.0
      %5527 = vmatprep.mubr.f32.mxu0 0.0
      %v5528 = vand.u32 %v4798, 4294901760
      %v5529 = vsub.f32 %v4798, %v5528
      %5530 = vmatmul.mubr.f32.gmra.mxu0 %v5529
      %v5531 = vpop.f32.mrf.mxu0
      %v5532 = vadd.f32 %v5452, %v5531
      %v5533 = vpop.f32.mrf.mxu0
      %5534 = vdwg.mxu0
      %5535 = vmatprep.subr.mxu0 0.0
      %5536 = vmatpush1.msra.mxu0 0.0
      %5537 = vmatprep.subr.mxu0 0.0
      %5538 = vmatpush1.msra.mxu0 0.0
      %5539 = vmatprep.subr.mxu0 0.0
      %5540 = vmatpush1.msra.mxu0 0.0
      %5541 = vmatprep.subr.mxu0 0.0
      %5542 = vmatpush1.msra.mxu0 0.0
      %5543 = vmatprep.subr.mxu0 0.0
      %5544 = vmatpush1.msra.mxu0 0.0
      %5545 = vmatprep.subr.mxu0 0.0
      %5546 = vmatpush1.msra.mxu0 0.0
      %5547 = vmatprep.subr.mxu0 0.0
      %5548 = vmatpush1.msra.mxu0 0.0
      %5549 = vmatprep.subr.mxu0 0.0
      %5550 = vmatpush1.msra.mxu0 0.0
      %5551 = vmatprep.subr.mxu0 0.0
      %5552 = vmatpush1.msra.mxu0 0.0
      %5553 = vmatprep.subr.mxu0 0.0
      %5554 = vmatpush1.msra.mxu0 0.0
      %5555 = vmatprep.subr.mxu0 0.0
      %5556 = vmatpush1.msra.mxu0 0.0
      %5557 = vmatprep.subr.mxu0 0.0
      %5558 = vmatpush1.msra.mxu0 0.0
      %5559 = vmatprep.subr.mxu0 0.0
      %v5560 = vand.u32 %v315, 4294901760
      %5561 = vmatpush1.msra.mxu0 %v5560
      %5562 = vmatprep.subr.mxu0 0.0
      %v5563 = vand.u32 %v314, 4294901760
      %5564 = vmatpush1.msra.mxu0 %v5563
      %5565 = vmatprep.subr.mxu0 0.0
      %v5566 = vand.u32 %v313, 4294901760
      %5567 = vmatpush1.msra.mxu0 %v5566
      %5568 = vmatprep.subr.mxu0 0.0
      %v5569 = vand.u32 %v312, 4294901760
      %5570 = vmatpush1.msra.mxu0 %v5569
      %5571 = vmatprep.subr.mxu0 0.0
      %5572 = vmatpush2.msra.mxu0 0.0
      %5573 = vmatprep.subr.mxu0 0.0
      %5574 = vmatpush2.msra.mxu0 0.0
      %5575 = vmatprep.subr.mxu0 0.0
      %5576 = vmatpush2.msra.mxu0 0.0
      %5577 = vmatprep.subr.mxu0 0.0
      %5578 = vmatpush2.msra.mxu0 0.0
      %5579 = vmatprep.subr.mxu0 0.0
      %5580 = vmatpush2.msra.mxu0 0.0
      %5581 = vmatprep.subr.mxu0 0.0
      %5582 = vmatpush2.msra.mxu0 0.0
      %5583 = vmatprep.subr.mxu0 0.0
      %5584 = vmatpush2.msra.mxu0 0.0
      %5585 = vmatprep.subr.mxu0 0.0
      %5586 = vmatpush2.msra.mxu0 0.0
      %5587 = vmatprep.subr.mxu0 0.0
      %5588 = vmatpush2.msra.mxu0 0.0
      %5589 = vmatprep.subr.mxu0 0.0
      %5590 = vmatpush2.msra.mxu0 0.0
      %5591 = vmatprep.subr.mxu0 0.0
      %5592 = vmatpush2.msra.mxu0 0.0
      %5593 = vmatprep.subr.mxu0 0.0
      %5594 = vmatpush2.msra.mxu0 0.0
      %5595 = vmatprep.subr.mxu0 0.0
      %5596 = vmatpush2.msra.mxu0 0.0
      %5597 = vmatprep.subr.mxu0 0.0
      %5598 = vmatpush2.msra.mxu0 0.0
      %5599 = vmatprep.subr.mxu0 0.0
      %5600 = vmatpush2.msra.mxu0 0.0
      %5601 = vmatprep.subr.mxu0 0.0
      %5602 = vmatpush2.msra.mxu0 0.0
      %5603 = vmatprep.mubr.f32.mxu0 0.0
      %v5604 = vand.u32 %v4798, 4294901760
      %v5605 = vsub.f32 %v4798, %v5604
      %v5606 = vand.u32 %v5605, 4294901760
      %5607 = vmatmul.mubr.f32.gmra.mxu0 %v5606
      %v5608 = vpop.f32.mrf.mxu0
      %v5609 = vadd.f32 %v5532, %v5608
      %v5610 = vpop.f32.mrf.mxu0
      %5611 = vdwg.mxu0
      %5612 = vmatprep.subr.mxu0 0.0
      %5613 = vmatpush1.msra.mxu0 0.0
      %5614 = vmatprep.subr.mxu0 0.0
      %5615 = vmatpush1.msra.mxu0 0.0
      %5616 = vmatprep.subr.mxu0 0.0
      %5617 = vmatpush1.msra.mxu0 0.0
      %5618 = vmatprep.subr.mxu0 0.0
      %5619 = vmatpush1.msra.mxu0 0.0
      %5620 = vmatprep.subr.mxu0 0.0
      %5621 = vmatpush1.msra.mxu0 0.0
      %5622 = vmatprep.subr.mxu0 0.0
      %5623 = vmatpush1.msra.mxu0 0.0
      %5624 = vmatprep.subr.mxu0 0.0
      %5625 = vmatpush1.msra.mxu0 0.0
      %5626 = vmatprep.subr.mxu0 0.0
      %5627 = vmatpush1.msra.mxu0 0.0
      %5628 = vmatprep.subr.mxu0 0.0
      %5629 = vmatpush1.msra.mxu0 0.0
      %5630 = vmatprep.subr.mxu0 0.0
      %5631 = vmatpush1.msra.mxu0 0.0
      %5632 = vmatprep.subr.mxu0 0.0
      %5633 = vmatpush1.msra.mxu0 0.0
      %5634 = vmatprep.subr.mxu0 0.0
      %5635 = vmatpush1.msra.mxu0 0.0
      %5636 = vmatprep.subr.mxu0 0.0
      %v5637 = vand.u32 %v315, 4294901760
      %v5638 = vsub.f32 %v315, %v5637
      %v5639 = vand.u32 %v5638, 4294901760
      %5640 = vmatpush1.msra.mxu0 %v5639
      %5641 = vmatprep.subr.mxu0 0.0
      %v5642 = vand.u32 %v314, 4294901760
      %v5643 = vsub.f32 %v314, %v5642
      %v5644 = vand.u32 %v5643, 4294901760
      %5645 = vmatpush1.msra.mxu0 %v5644
      %5646 = vmatprep.subr.mxu0 0.0
      %v5647 = vand.u32 %v313, 4294901760
      %v5648 = vsub.f32 %v313, %v5647
      %v5649 = vand.u32 %v5648, 4294901760
      %5650 = vmatpush1.msra.mxu0 %v5649
      %5651 = vmatprep.subr.mxu0 0.0
      %v5652 = vand.u32 %v312, 4294901760
      %v5653 = vsub.f32 %v312, %v5652
      %v5654 = vand.u32 %v5653, 4294901760
      %5655 = vmatpush1.msra.mxu0 %v5654
      %5656 = vmatprep.subr.mxu0 0.0
      %5657 = vmatpush2.msra.mxu0 0.0
      %5658 = vmatprep.subr.mxu0 0.0
      %5659 = vmatpush2.msra.mxu0 0.0
      %5660 = vmatprep.subr.mxu0 0.0
      %5661 = vmatpush2.msra.mxu0 0.0
      %5662 = vmatprep.subr.mxu0 0.0
      %5663 = vmatpush2.msra.mxu0 0.0
      %5664 = vmatprep.subr.mxu0 0.0
      %5665 = vmatpush2.msra.mxu0 0.0
      %5666 = vmatprep.subr.mxu0 0.0
      %5667 = vmatpush2.msra.mxu0 0.0
      %5668 = vmatprep.subr.mxu0 0.0
      %5669 = vmatpush2.msra.mxu0 0.0
      %5670 = vmatprep.subr.mxu0 0.0
      %5671 = vmatpush2.msra.mxu0 0.0
      %5672 = vmatprep.subr.mxu0 0.0
      %5673 = vmatpush2.msra.mxu0 0.0
      %5674 = vmatprep.subr.mxu0 0.0
      %5675 = vmatpush2.msra.mxu0 0.0
      %5676 = vmatprep.subr.mxu0 0.0
      %5677 = vmatpush2.msra.mxu0 0.0
      %5678 = vmatprep.subr.mxu0 0.0
      %5679 = vmatpush2.msra.mxu0 0.0
      %5680 = vmatprep.subr.mxu0 0.0
      %5681 = vmatpush2.msra.mxu0 0.0
      %5682 = vmatprep.subr.mxu0 0.0
      %5683 = vmatpush2.msra.mxu0 0.0
      %5684 = vmatprep.subr.mxu0 0.0
      %5685 = vmatpush2.msra.mxu0 0.0
      %5686 = vmatprep.subr.mxu0 0.0
      %5687 = vmatpush2.msra.mxu0 0.0
      %5688 = vmatprep.mubr.f32.mxu0 0.0
      %v5689 = vand.u32 %v4798, 4294901760
      %5690 = vmatmul.mubr.f32.gmra.mxu0 %v5689
      %v5691 = vpop.f32.mrf.mxu0
      %v5692 = vadd.f32 %v5609, %v5691
      %v5693 = vpop.f32.mrf.mxu0
      %5694 = vdwg.mxu0
      %5695 = vmatprep.subr.mxu0 0.0
      %5696 = vmatpush1.msra.mxu0 0.0
      %5697 = vmatprep.subr.mxu0 0.0
      %5698 = vmatpush1.msra.mxu0 0.0
      %5699 = vmatprep.subr.mxu0 0.0
      %5700 = vmatpush1.msra.mxu0 0.0
      %5701 = vmatprep.subr.mxu0 0.0
      %5702 = vmatpush1.msra.mxu0 0.0
      %5703 = vmatprep.subr.mxu0 0.0
      %5704 = vmatpush1.msra.mxu0 0.0
      %5705 = vmatprep.subr.mxu0 0.0
      %5706 = vmatpush1.msra.mxu0 0.0
      %5707 = vmatprep.subr.mxu0 0.0
      %5708 = vmatpush1.msra.mxu0 0.0
      %5709 = vmatprep.subr.mxu0 0.0
      %5710 = vmatpush1.msra.mxu0 0.0
      %5711 = vmatprep.subr.mxu0 0.0
      %5712 = vmatpush1.msra.mxu0 0.0
      %5713 = vmatprep.subr.mxu0 0.0
      %5714 = vmatpush1.msra.mxu0 0.0
      %5715 = vmatprep.subr.mxu0 0.0
      %5716 = vmatpush1.msra.mxu0 0.0
      %5717 = vmatprep.subr.mxu0 0.0
      %5718 = vmatpush1.msra.mxu0 0.0
      %5719 = vmatprep.subr.mxu0 0.0
      %v5720 = vand.u32 %v315, 4294901760
      %5721 = vmatpush1.msra.mxu0 %v5720
      %5722 = vmatprep.subr.mxu0 0.0
      %v5723 = vand.u32 %v314, 4294901760
      %5724 = vmatpush1.msra.mxu0 %v5723
      %5725 = vmatprep.subr.mxu0 0.0
      %v5726 = vand.u32 %v313, 4294901760
      %5727 = vmatpush1.msra.mxu0 %v5726
      %5728 = vmatprep.subr.mxu0 0.0
      %v5729 = vand.u32 %v312, 4294901760
      %5730 = vmatpush1.msra.mxu0 %v5729
      %5731 = vmatprep.subr.mxu0 0.0
      %5732 = vmatpush2.msra.mxu0 0.0
      %5733 = vmatprep.subr.mxu0 0.0
      %5734 = vmatpush2.msra.mxu0 0.0
      %5735 = vmatprep.subr.mxu0 0.0
      %5736 = vmatpush2.msra.mxu0 0.0
      %5737 = vmatprep.subr.mxu0 0.0
      %5738 = vmatpush2.msra.mxu0 0.0
      %5739 = vmatprep.subr.mxu0 0.0
      %5740 = vmatpush2.msra.mxu0 0.0
      %5741 = vmatprep.subr.mxu0 0.0
      %5742 = vmatpush2.msra.mxu0 0.0
      %5743 = vmatprep.subr.mxu0 0.0
      %5744 = vmatpush2.msra.mxu0 0.0
      %5745 = vmatprep.subr.mxu0 0.0
      %5746 = vmatpush2.msra.mxu0 0.0
      %5747 = vmatprep.subr.mxu0 0.0
      %5748 = vmatpush2.msra.mxu0 0.0
      %5749 = vmatprep.subr.mxu0 0.0
      %5750 = vmatpush2.msra.mxu0 0.0
      %5751 = vmatprep.subr.mxu0 0.0
      %5752 = vmatpush2.msra.mxu0 0.0
      %5753 = vmatprep.subr.mxu0 0.0
      %5754 = vmatpush2.msra.mxu0 0.0
      %5755 = vmatprep.subr.mxu0 0.0
      %5756 = vmatpush2.msra.mxu0 0.0
      %5757 = vmatprep.subr.mxu0 0.0
      %5758 = vmatpush2.msra.mxu0 0.0
      %5759 = vmatprep.subr.mxu0 0.0
      %5760 = vmatpush2.msra.mxu0 0.0
      %5761 = vmatprep.subr.mxu0 0.0
      %5762 = vmatpush2.msra.mxu0 0.0
      %5763 = vmatprep.mubr.f32.mxu0 0.0
      %v5764 = vand.u32 %v4798, 4294901760
      %5765 = vmatmul.mubr.f32.gmra.mxu0 %v5764
      %v5766 = vpop.f32.mrf.mxu0
      %v5767 = vadd.f32 %v5692, %v5766
      %v5768 = vpop.f32.mrf.mxu0
      %5769 = vdwg.mxu0
      %s5770 = scalar_lea.vmem %s268, 6
      %v5771 = vld [vmem:[%s5770] sm:$0x3]
      %v5772 = vadd.f32 %v5771, %v5282
      %v5773 = vxor.u32 %v5772, 2147483648
      %v5774 = vmul.f32 %v5773, 1.442695
      %v5775 = vpow.pop %v5774
      %v5776 = vadd.f32 %v5775, 1.0
      %v5777 = vrcp.pop %v5776
      %v5778 = vmul.f32 1.0, %v5777
      %s5779 = scalar_lea.vmem %s268, 8
      %v5780 = vld [vmem:[%s5779] sm:$0x3]
      %v5781 = vadd.f32 %v5780, %v5767
      %v5782 = vxor.u32 %v5781, 2147483648
      %v5783 = vmul.f32 %v5782, 1.442695
      %v5784 = vpow.pop %v5783
      %v5785 = vadd.f32 %v5784, 1.0
      %v5786 = vrcp.pop %v5785
      %v5787 = vmul.f32 1.0, %v5786
      %s5788 = scalar_lea.vmem %s268, 10
      %v5789 = vld [vmem:[%s5788] sm:$0x3]
      %5790 = vmatprep.subr.mxu0 0.0
      %5791 = vmatpush1.msra.mxu0 0.0
      %5792 = vmatprep.subr.mxu0 0.0
      %5793 = vmatpush1.msra.mxu0 0.0
      %5794 = vmatprep.subr.mxu0 0.0
      %5795 = vmatpush1.msra.mxu0 0.0
      %5796 = vmatprep.subr.mxu0 0.0
      %5797 = vmatpush1.msra.mxu0 0.0
      %5798 = vmatprep.subr.mxu0 0.0
      %5799 = vmatpush1.msra.mxu0 0.0
      %5800 = vmatprep.subr.mxu0 0.0
      %5801 = vmatpush1.msra.mxu0 0.0
      %5802 = vmatprep.subr.mxu0 0.0
      %5803 = vmatpush1.msra.mxu0 0.0
      %5804 = vmatprep.subr.mxu0 0.0
      %5805 = vmatpush1.msra.mxu0 0.0
      %5806 = vmatprep.subr.mxu0 0.0
      %5807 = vmatpush1.msra.mxu0 0.0
      %5808 = vmatprep.subr.mxu0 0.0
      %5809 = vmatpush1.msra.mxu0 0.0
      %5810 = vmatprep.subr.mxu0 0.0
      %5811 = vmatpush1.msra.mxu0 0.0
      %5812 = vmatprep.subr.mxu0 0.0
      %5813 = vmatpush1.msra.mxu0 0.0
      %5814 = vmatprep.subr.mxu0 0.0
      %v5815 = vand.u32 %v320, 4294901760
      %5816 = vmatpush1.msra.mxu0 %v5815
      %5817 = vmatprep.subr.mxu0 0.0
      %v5818 = vand.u32 %v319, 4294901760
      %5819 = vmatpush1.msra.mxu0 %v5818
      %5820 = vmatprep.subr.mxu0 0.0
      %v5821 = vand.u32 %v318, 4294901760
      %5822 = vmatpush1.msra.mxu0 %v5821
      %5823 = vmatprep.subr.mxu0 0.0
      %v5824 = vand.u32 %v317, 4294901760
      %5825 = vmatpush1.msra.mxu0 %v5824
      %5826 = vmatprep.subr.mxu0 0.0
      %5827 = vmatpush2.msra.mxu0 0.0
      %5828 = vmatprep.subr.mxu0 0.0
      %5829 = vmatpush2.msra.mxu0 0.0
      %5830 = vmatprep.subr.mxu0 0.0
      %5831 = vmatpush2.msra.mxu0 0.0
      %5832 = vmatprep.subr.mxu0 0.0
      %5833 = vmatpush2.msra.mxu0 0.0
      %5834 = vmatprep.subr.mxu0 0.0
      %5835 = vmatpush2.msra.mxu0 0.0
      %5836 = vmatprep.subr.mxu0 0.0
      %5837 = vmatpush2.msra.mxu0 0.0
      %5838 = vmatprep.subr.mxu0 0.0
      %5839 = vmatpush2.msra.mxu0 0.0
      %5840 = vmatprep.subr.mxu0 0.0
      %5841 = vmatpush2.msra.mxu0 0.0
      %5842 = vmatprep.subr.mxu0 0.0
      %5843 = vmatpush2.msra.mxu0 0.0
      %5844 = vmatprep.subr.mxu0 0.0
      %5845 = vmatpush2.msra.mxu0 0.0
      %5846 = vmatprep.subr.mxu0 0.0
      %5847 = vmatpush2.msra.mxu0 0.0
      %5848 = vmatprep.subr.mxu0 0.0
      %5849 = vmatpush2.msra.mxu0 0.0
      %5850 = vmatprep.subr.mxu0 0.0
      %5851 = vmatpush2.msra.mxu0 0.0
      %5852 = vmatprep.subr.mxu0 0.0
      %5853 = vmatpush2.msra.mxu0 0.0
      %5854 = vmatprep.subr.mxu0 0.0
      %5855 = vmatpush2.msra.mxu0 0.0
      %5856 = vmatprep.subr.mxu0 0.0
      %5857 = vmatpush2.msra.mxu0 0.0
      %5858 = vmatprep.mubr.f32.mxu0 0.0
      %v5859 = vand.u32 %v4798, 4294901760
      %v5860 = vsub.f32 %v4798, %v5859
      %v5861 = vand.u32 %v5860, 4294901760
      %v5862 = vsub.f32 %v5860, %v5861
      %v5863 = vand.u32 %v5862, 4294901760
      %5864 = vmatmul.mubr.f32.gmra.mxu0 %v5863
      %v5865 = vpop.f32.mrf.mxu0
      %v5866 = vadd.f32 %v323, %v5865
      %v5867 = vpop.f32.mrf.mxu0
      %5868 = vdwg.mxu0
      %5869 = vmatprep.subr.mxu0 0.0
      %5870 = vmatpush1.msra.mxu0 0.0
      %5871 = vmatprep.subr.mxu0 0.0
      %5872 = vmatpush1.msra.mxu0 0.0
      %5873 = vmatprep.subr.mxu0 0.0
      %5874 = vmatpush1.msra.mxu0 0.0
      %5875 = vmatprep.subr.mxu0 0.0
      %5876 = vmatpush1.msra.mxu0 0.0
      %5877 = vmatprep.subr.mxu0 0.0
      %5878 = vmatpush1.msra.mxu0 0.0
      %5879 = vmatprep.subr.mxu0 0.0
      %5880 = vmatpush1.msra.mxu0 0.0
      %5881 = vmatprep.subr.mxu0 0.0
      %5882 = vmatpush1.msra.mxu0 0.0
      %5883 = vmatprep.subr.mxu0 0.0
      %5884 = vmatpush1.msra.mxu0 0.0
      %5885 = vmatprep.subr.mxu0 0.0
      %5886 = vmatpush1.msra.mxu0 0.0
      %5887 = vmatprep.subr.mxu0 0.0
      %5888 = vmatpush1.msra.mxu0 0.0
      %5889 = vmatprep.subr.mxu0 0.0
      %5890 = vmatpush1.msra.mxu0 0.0
      %5891 = vmatprep.subr.mxu0 0.0
      %5892 = vmatpush1.msra.mxu0 0.0
      %5893 = vmatprep.subr.mxu0 0.0
      %v5894 = vand.u32 %v320, 4294901760
      %v5895 = vsub.f32 %v320, %v5894
      %v5896 = vand.u32 %v5895, 4294901760
      %v5897 = vsub.f32 %v5895, %v5896
      %v5898 = vand.u32 %v5897, 4294901760
      %5899 = vmatpush1.msra.mxu0 %v5898
      %5900 = vmatprep.subr.mxu0 0.0
      %v5901 = vand.u32 %v319, 4294901760
      %v5902 = vsub.f32 %v319, %v5901
      %v5903 = vand.u32 %v5902, 4294901760
      %v5904 = vsub.f32 %v5902, %v5903
      %v5905 = vand.u32 %v5904, 4294901760
      %5906 = vmatpush1.msra.mxu0 %v5905
      %5907 = vmatprep.subr.mxu0 0.0
      %v5908 = vand.u32 %v318, 4294901760
      %v5909 = vsub.f32 %v318, %v5908
      %v5910 = vand.u32 %v5909, 4294901760
      %v5911 = vsub.f32 %v5909, %v5910
      %v5912 = vand.u32 %v5911, 4294901760
      %5913 = vmatpush1.msra.mxu0 %v5912
      %5914 = vmatprep.subr.mxu0 0.0
      %v5915 = vand.u32 %v317, 4294901760
      %v5916 = vsub.f32 %v317, %v5915
      %v5917 = vand.u32 %v5916, 4294901760
      %v5918 = vsub.f32 %v5916, %v5917
      %v5919 = vand.u32 %v5918, 4294901760
      %5920 = vmatpush1.msra.mxu0 %v5919
      %5921 = vmatprep.subr.mxu0 0.0
      %5922 = vmatpush2.msra.mxu0 0.0
      %5923 = vmatprep.subr.mxu0 0.0
      %5924 = vmatpush2.msra.mxu0 0.0
      %5925 = vmatprep.subr.mxu0 0.0
      %5926 = vmatpush2.msra.mxu0 0.0
      %5927 = vmatprep.subr.mxu0 0.0
      %5928 = vmatpush2.msra.mxu0 0.0
      %5929 = vmatprep.subr.mxu0 0.0
      %5930 = vmatpush2.msra.mxu0 0.0
      %5931 = vmatprep.subr.mxu0 0.0
      %5932 = vmatpush2.msra.mxu0 0.0
      %5933 = vmatprep.subr.mxu0 0.0
      %5934 = vmatpush2.msra.mxu0 0.0
      %5935 = vmatprep.subr.mxu0 0.0
      %5936 = vmatpush2.msra.mxu0 0.0
      %5937 = vmatprep.subr.mxu0 0.0
      %5938 = vmatpush2.msra.mxu0 0.0
      %5939 = vmatprep.subr.mxu0 0.0
      %5940 = vmatpush2.msra.mxu0 0.0
      %5941 = vmatprep.subr.mxu0 0.0
      %5942 = vmatpush2.msra.mxu0 0.0
      %5943 = vmatprep.subr.mxu0 0.0
      %5944 = vmatpush2.msra.mxu0 0.0
      %5945 = vmatprep.subr.mxu0 0.0
      %5946 = vmatpush2.msra.mxu0 0.0
      %5947 = vmatprep.subr.mxu0 0.0
      %5948 = vmatpush2.msra.mxu0 0.0
      %5949 = vmatprep.subr.mxu0 0.0
      %5950 = vmatpush2.msra.mxu0 0.0
      %5951 = vmatprep.subr.mxu0 0.0
      %5952 = vmatpush2.msra.mxu0 0.0
      %5953 = vmatprep.mubr.f32.mxu0 0.0
      %v5954 = vand.u32 %v4798, 4294901760
      %5955 = vmatmul.mubr.f32.gmra.mxu0 %v5954
      %v5956 = vpop.f32.mrf.mxu0
      %v5957 = vadd.f32 %v5866, %v5956
      %v5958 = vpop.f32.mrf.mxu0
      %5959 = vdwg.mxu0
      %5960 = vmatprep.subr.mxu0 0.0
      %5961 = vmatpush1.msra.mxu0 0.0
      %5962 = vmatprep.subr.mxu0 0.0
      %5963 = vmatpush1.msra.mxu0 0.0
      %5964 = vmatprep.subr.mxu0 0.0
      %5965 = vmatpush1.msra.mxu0 0.0
      %5966 = vmatprep.subr.mxu0 0.0
      %5967 = vmatpush1.msra.mxu0 0.0
      %5968 = vmatprep.subr.mxu0 0.0
      %5969 = vmatpush1.msra.mxu0 0.0
      %5970 = vmatprep.subr.mxu0 0.0
      %5971 = vmatpush1.msra.mxu0 0.0
      %5972 = vmatprep.subr.mxu0 0.0
      %5973 = vmatpush1.msra.mxu0 0.0
      %5974 = vmatprep.subr.mxu0 0.0
      %5975 = vmatpush1.msra.mxu0 0.0
      %5976 = vmatprep.subr.mxu0 0.0
      %5977 = vmatpush1.msra.mxu0 0.0
      %5978 = vmatprep.subr.mxu0 0.0
      %5979 = vmatpush1.msra.mxu0 0.0
      %5980 = vmatprep.subr.mxu0 0.0
      %5981 = vmatpush1.msra.mxu0 0.0
      %5982 = vmatprep.subr.mxu0 0.0
      %5983 = vmatpush1.msra.mxu0 0.0
      %5984 = vmatprep.subr.mxu0 0.0
      %v5985 = vand.u32 %v320, 4294901760
      %v5986 = vsub.f32 %v320, %v5985
      %5987 = vmatpush1.msra.mxu0 %v5986
      %5988 = vmatprep.subr.mxu0 0.0
      %v5989 = vand.u32 %v319, 4294901760
      %v5990 = vsub.f32 %v319, %v5989
      %5991 = vmatpush1.msra.mxu0 %v5990
      %5992 = vmatprep.subr.mxu0 0.0
      %v5993 = vand.u32 %v318, 4294901760
      %v5994 = vsub.f32 %v318, %v5993
      %5995 = vmatpush1.msra.mxu0 %v5994
      %5996 = vmatprep.subr.mxu0 0.0
      %v5997 = vand.u32 %v317, 4294901760
      %v5998 = vsub.f32 %v317, %v5997
      %5999 = vmatpush1.msra.mxu0 %v5998
      %6000 = vmatprep.subr.mxu0 0.0
      %6001 = vmatpush2.msra.mxu0 0.0
      %6002 = vmatprep.subr.mxu0 0.0
      %6003 = vmatpush2.msra.mxu0 0.0
      %6004 = vmatprep.subr.mxu0 0.0
      %6005 = vmatpush2.msra.mxu0 0.0
      %6006 = vmatprep.subr.mxu0 0.0
      %6007 = vmatpush2.msra.mxu0 0.0
      %6008 = vmatprep.subr.mxu0 0.0
      %6009 = vmatpush2.msra.mxu0 0.0
      %6010 = vmatprep.subr.mxu0 0.0
      %6011 = vmatpush2.msra.mxu0 0.0
      %6012 = vmatprep.subr.mxu0 0.0
      %6013 = vmatpush2.msra.mxu0 0.0
      %6014 = vmatprep.subr.mxu0 0.0
      %6015 = vmatpush2.msra.mxu0 0.0
      %6016 = vmatprep.subr.mxu0 0.0
      %6017 = vmatpush2.msra.mxu0 0.0
      %6018 = vmatprep.subr.mxu0 0.0
      %6019 = vmatpush2.msra.mxu0 0.0
      %6020 = vmatprep.subr.mxu0 0.0
      %6021 = vmatpush2.msra.mxu0 0.0
      %6022 = vmatprep.subr.mxu0 0.0
      %6023 = vmatpush2.msra.mxu0 0.0
      %6024 = vmatprep.subr.mxu0 0.0
      %6025 = vmatpush2.msra.mxu0 0.0
      %6026 = vmatprep.subr.mxu0 0.0
      %6027 = vmatpush2.msra.mxu0 0.0
      %6028 = vmatprep.subr.mxu0 0.0
      %6029 = vmatpush2.msra.mxu0 0.0
      %6030 = vmatprep.subr.mxu0 0.0
      %6031 = vmatpush2.msra.mxu0 0.0
      %6032 = vmatprep.mubr.f32.mxu0 0.0
      %v6033 = vand.u32 %v4798, 4294901760
      %v6034 = vsub.f32 %v4798, %v6033
      %6035 = vmatmul.mubr.f32.gmra.mxu0 %v6034
      %v6036 = vpop.f32.mrf.mxu0
      %v6037 = vadd.f32 %v5957, %v6036
      %v6038 = vpop.f32.mrf.mxu0
      %6039 = vdwg.mxu0
      %6040 = vmatprep.subr.mxu0 0.0
      %6041 = vmatpush1.msra.mxu0 0.0
      %6042 = vmatprep.subr.mxu0 0.0
      %6043 = vmatpush1.msra.mxu0 0.0
      %6044 = vmatprep.subr.mxu0 0.0
      %6045 = vmatpush1.msra.mxu0 0.0
      %6046 = vmatprep.subr.mxu0 0.0
      %6047 = vmatpush1.msra.mxu0 0.0
      %6048 = vmatprep.subr.mxu0 0.0
      %6049 = vmatpush1.msra.mxu0 0.0
      %6050 = vmatprep.subr.mxu0 0.0
      %6051 = vmatpush1.msra.mxu0 0.0
      %6052 = vmatprep.subr.mxu0 0.0
      %6053 = vmatpush1.msra.mxu0 0.0
      %6054 = vmatprep.subr.mxu0 0.0
      %6055 = vmatpush1.msra.mxu0 0.0
      %6056 = vmatprep.subr.mxu0 0.0
      %6057 = vmatpush1.msra.mxu0 0.0
      %6058 = vmatprep.subr.mxu0 0.0
      %6059 = vmatpush1.msra.mxu0 0.0
      %6060 = vmatprep.subr.mxu0 0.0
      %6061 = vmatpush1.msra.mxu0 0.0
      %6062 = vmatprep.subr.mxu0 0.0
      %6063 = vmatpush1.msra.mxu0 0.0
      %6064 = vmatprep.subr.mxu0 0.0
      %v6065 = vand.u32 %v320, 4294901760
      %6066 = vmatpush1.msra.mxu0 %v6065
      %6067 = vmatprep.subr.mxu0 0.0
      %v6068 = vand.u32 %v319, 4294901760
      %6069 = vmatpush1.msra.mxu0 %v6068
      %6070 = vmatprep.subr.mxu0 0.0
      %v6071 = vand.u32 %v318, 4294901760
      %6072 = vmatpush1.msra.mxu0 %v6071
      %6073 = vmatprep.subr.mxu0 0.0
      %v6074 = vand.u32 %v317, 4294901760
      %6075 = vmatpush1.msra.mxu0 %v6074
      %6076 = vmatprep.subr.mxu0 0.0
      %6077 = vmatpush2.msra.mxu0 0.0
      %6078 = vmatprep.subr.mxu0 0.0
      %6079 = vmatpush2.msra.mxu0 0.0
      %6080 = vmatprep.subr.mxu0 0.0
      %6081 = vmatpush2.msra.mxu0 0.0
      %6082 = vmatprep.subr.mxu0 0.0
      %6083 = vmatpush2.msra.mxu0 0.0
      %6084 = vmatprep.subr.mxu0 0.0
      %6085 = vmatpush2.msra.mxu0 0.0
      %6086 = vmatprep.subr.mxu0 0.0
      %6087 = vmatpush2.msra.mxu0 0.0
      %6088 = vmatprep.subr.mxu0 0.0
      %6089 = vmatpush2.msra.mxu0 0.0
      %6090 = vmatprep.subr.mxu0 0.0
      %6091 = vmatpush2.msra.mxu0 0.0
      %6092 = vmatprep.subr.mxu0 0.0
      %6093 = vmatpush2.msra.mxu0 0.0
      %6094 = vmatprep.subr.mxu0 0.0
      %6095 = vmatpush2.msra.mxu0 0.0
      %6096 = vmatprep.subr.mxu0 0.0
      %6097 = vmatpush2.msra.mxu0 0.0
      %6098 = vmatprep.subr.mxu0 0.0
      %6099 = vmatpush2.msra.mxu0 0.0
      %6100 = vmatprep.subr.mxu0 0.0
      %6101 = vmatpush2.msra.mxu0 0.0
      %6102 = vmatprep.subr.mxu0 0.0
      %6103 = vmatpush2.msra.mxu0 0.0
      %6104 = vmatprep.subr.mxu0 0.0
      %6105 = vmatpush2.msra.mxu0 0.0
      %6106 = vmatprep.subr.mxu0 0.0
      %6107 = vmatpush2.msra.mxu0 0.0
      %6108 = vmatprep.mubr.f32.mxu0 0.0
      %v6109 = vand.u32 %v4798, 4294901760
      %v6110 = vsub.f32 %v4798, %v6109
      %v6111 = vand.u32 %v6110, 4294901760
      %6112 = vmatmul.mubr.f32.gmra.mxu0 %v6111
      %v6113 = vpop.f32.mrf.mxu0
      %v6114 = vadd.f32 %v6037, %v6113
      %v6115 = vpop.f32.mrf.mxu0
      %6116 = vdwg.mxu0
      %6117 = vmatprep.subr.mxu0 0.0
      %6118 = vmatpush1.msra.mxu0 0.0
      %6119 = vmatprep.subr.mxu0 0.0
      %6120 = vmatpush1.msra.mxu0 0.0
      %6121 = vmatprep.subr.mxu0 0.0
      %6122 = vmatpush1.msra.mxu0 0.0
      %6123 = vmatprep.subr.mxu0 0.0
      %6124 = vmatpush1.msra.mxu0 0.0
      %6125 = vmatprep.subr.mxu0 0.0
      %6126 = vmatpush1.msra.mxu0 0.0
      %6127 = vmatprep.subr.mxu0 0.0
      %6128 = vmatpush1.msra.mxu0 0.0
      %6129 = vmatprep.subr.mxu0 0.0
      %6130 = vmatpush1.msra.mxu0 0.0
      %6131 = vmatprep.subr.mxu0 0.0
      %6132 = vmatpush1.msra.mxu0 0.0
      %6133 = vmatprep.subr.mxu0 0.0
      %6134 = vmatpush1.msra.mxu0 0.0
      %6135 = vmatprep.subr.mxu0 0.0
      %6136 = vmatpush1.msra.mxu0 0.0
      %6137 = vmatprep.subr.mxu0 0.0
      %6138 = vmatpush1.msra.mxu0 0.0
      %6139 = vmatprep.subr.mxu0 0.0
      %6140 = vmatpush1.msra.mxu0 0.0
      %6141 = vmatprep.subr.mxu0 0.0
      %v6142 = vand.u32 %v320, 4294901760
      %v6143 = vsub.f32 %v320, %v6142
      %v6144 = vand.u32 %v6143, 4294901760
      %6145 = vmatpush1.msra.mxu0 %v6144
      %6146 = vmatprep.subr.mxu0 0.0
      %v6147 = vand.u32 %v319, 4294901760
      %v6148 = vsub.f32 %v319, %v6147
      %v6149 = vand.u32 %v6148, 4294901760
      %6150 = vmatpush1.msra.mxu0 %v6149
      %6151 = vmatprep.subr.mxu0 0.0
      %v6152 = vand.u32 %v318, 4294901760
      %v6153 = vsub.f32 %v318, %v6152
      %v6154 = vand.u32 %v6153, 4294901760
      %6155 = vmatpush1.msra.mxu0 %v6154
      %6156 = vmatprep.subr.mxu0 0.0
      %v6157 = vand.u32 %v317, 4294901760
      %v6158 = vsub.f32 %v317, %v6157
      %v6159 = vand.u32 %v6158, 4294901760
      %6160 = vmatpush1.msra.mxu0 %v6159
      %6161 = vmatprep.subr.mxu0 0.0
      %6162 = vmatpush2.msra.mxu0 0.0
      %6163 = vmatprep.subr.mxu0 0.0
      %6164 = vmatpush2.msra.mxu0 0.0
      %6165 = vmatprep.subr.mxu0 0.0
      %6166 = vmatpush2.msra.mxu0 0.0
      %6167 = vmatprep.subr.mxu0 0.0
      %6168 = vmatpush2.msra.mxu0 0.0
      %6169 = vmatprep.subr.mxu0 0.0
      %6170 = vmatpush2.msra.mxu0 0.0
      %6171 = vmatprep.subr.mxu0 0.0
      %6172 = vmatpush2.msra.mxu0 0.0
      %6173 = vmatprep.subr.mxu0 0.0
      %6174 = vmatpush2.msra.mxu0 0.0
      %6175 = vmatprep.subr.mxu0 0.0
      %6176 = vmatpush2.msra.mxu0 0.0
      %6177 = vmatprep.subr.mxu0 0.0
      %6178 = vmatpush2.msra.mxu0 0.0
      %6179 = vmatprep.subr.mxu0 0.0
      %6180 = vmatpush2.msra.mxu0 0.0
      %6181 = vmatprep.subr.mxu0 0.0
      %6182 = vmatpush2.msra.mxu0 0.0
      %6183 = vmatprep.subr.mxu0 0.0
      %6184 = vmatpush2.msra.mxu0 0.0
      %6185 = vmatprep.subr.mxu0 0.0
      %6186 = vmatpush2.msra.mxu0 0.0
      %6187 = vmatprep.subr.mxu0 0.0
      %6188 = vmatpush2.msra.mxu0 0.0
      %6189 = vmatprep.subr.mxu0 0.0
      %6190 = vmatpush2.msra.mxu0 0.0
      %6191 = vmatprep.subr.mxu0 0.0
      %6192 = vmatpush2.msra.mxu0 0.0
      %6193 = vmatprep.mubr.f32.mxu0 0.0
      %v6194 = vand.u32 %v4798, 4294901760
      %6195 = vmatmul.mubr.f32.gmra.mxu0 %v6194
      %v6196 = vpop.f32.mrf.mxu0
      %v6197 = vadd.f32 %v6114, %v6196
      %v6198 = vpop.f32.mrf.mxu0
      %6199 = vdwg.mxu0
      %6200 = vmatprep.subr.mxu0 0.0
      %6201 = vmatpush1.msra.mxu0 0.0
      %6202 = vmatprep.subr.mxu0 0.0
      %6203 = vmatpush1.msra.mxu0 0.0
      %6204 = vmatprep.subr.mxu0 0.0
      %6205 = vmatpush1.msra.mxu0 0.0
      %6206 = vmatprep.subr.mxu0 0.0
      %6207 = vmatpush1.msra.mxu0 0.0
      %6208 = vmatprep.subr.mxu0 0.0
      %6209 = vmatpush1.msra.mxu0 0.0
      %6210 = vmatprep.subr.mxu0 0.0
      %6211 = vmatpush1.msra.mxu0 0.0
      %6212 = vmatprep.subr.mxu0 0.0
      %6213 = vmatpush1.msra.mxu0 0.0
      %6214 = vmatprep.subr.mxu0 0.0
      %6215 = vmatpush1.msra.mxu0 0.0
      %6216 = vmatprep.subr.mxu0 0.0
      %6217 = vmatpush1.msra.mxu0 0.0
      %6218 = vmatprep.subr.mxu0 0.0
      %6219 = vmatpush1.msra.mxu0 0.0
      %6220 = vmatprep.subr.mxu0 0.0
      %6221 = vmatpush1.msra.mxu0 0.0
      %6222 = vmatprep.subr.mxu0 0.0
      %6223 = vmatpush1.msra.mxu0 0.0
      %6224 = vmatprep.subr.mxu0 0.0
      %v6225 = vand.u32 %v320, 4294901760
      %6226 = vmatpush1.msra.mxu0 %v6225
      %6227 = vmatprep.subr.mxu0 0.0
      %v6228 = vand.u32 %v319, 4294901760
      %6229 = vmatpush1.msra.mxu0 %v6228
      %6230 = vmatprep.subr.mxu0 0.0
      %v6231 = vand.u32 %v318, 4294901760
      %6232 = vmatpush1.msra.mxu0 %v6231
      %6233 = vmatprep.subr.mxu0 0.0
      %v6234 = vand.u32 %v317, 4294901760
      %6235 = vmatpush1.msra.mxu0 %v6234
      %6236 = vmatprep.subr.mxu0 0.0
      %6237 = vmatpush2.msra.mxu0 0.0
      %6238 = vmatprep.subr.mxu0 0.0
      %6239 = vmatpush2.msra.mxu0 0.0
      %6240 = vmatprep.subr.mxu0 0.0
      %6241 = vmatpush2.msra.mxu0 0.0
      %6242 = vmatprep.subr.mxu0 0.0
      %6243 = vmatpush2.msra.mxu0 0.0
      %6244 = vmatprep.subr.mxu0 0.0
      %6245 = vmatpush2.msra.mxu0 0.0
      %6246 = vmatprep.subr.mxu0 0.0
      %6247 = vmatpush2.msra.mxu0 0.0
      %6248 = vmatprep.subr.mxu0 0.0
      %6249 = vmatpush2.msra.mxu0 0.0
      %6250 = vmatprep.subr.mxu0 0.0
      %6251 = vmatpush2.msra.mxu0 0.0
      %6252 = vmatprep.subr.mxu0 0.0
      %6253 = vmatpush2.msra.mxu0 0.0
      %6254 = vmatprep.subr.mxu0 0.0
      %6255 = vmatpush2.msra.mxu0 0.0
      %6256 = vmatprep.subr.mxu0 0.0
      %6257 = vmatpush2.msra.mxu0 0.0
      %6258 = vmatprep.subr.mxu0 0.0
      %6259 = vmatpush2.msra.mxu0 0.0
      %6260 = vmatprep.subr.mxu0 0.0
      %6261 = vmatpush2.msra.mxu0 0.0
      %6262 = vmatprep.subr.mxu0 0.0
      %6263 = vmatpush2.msra.mxu0 0.0
      %6264 = vmatprep.subr.mxu0 0.0
      %6265 = vmatpush2.msra.mxu0 0.0
      %6266 = vmatprep.subr.mxu0 0.0
      %6267 = vmatpush2.msra.mxu0 0.0
      %6268 = vmatprep.mubr.f32.mxu0 0.0
      %v6269 = vand.u32 %v4798, 4294901760
      %6270 = vmatmul.mubr.f32.gmra.mxu0 %v6269
      %v6271 = vpop.f32.mrf.mxu0
      %v6272 = vadd.f32 %v6197, %v6271
      %v6273 = vpop.f32.mrf.mxu0
      %6274 = vdwg.mxu0
      %v6275 = vmul.f32 %v5778, %v6272
      %v6276 = vadd.f32 %v5789, %v6275
      %v6277 = vtanh.pop %v6276
      %v6278 = vsub.f32 1.0, %v5787
      %v6279 = vmul.f32 %v6278, %v6277
      %v6280 = vmul.f32 %v5787, %v3307
      %v6281 = vadd.f32 %v6279, %v6280
      %s6282 = scalar_lea.vmem %s282, 2
      %6283 = vst.msk [vmem:[%s6282] sm:$0x3] %vm1815, %v6281
      %v6285 = vsel %vm330, %v4794, 0
      %6287 = vmatprep.subr.mxu0 0.0
      %6288 = vmatpush1.msra.mxu0 0.0
      %6289 = vmatprep.subr.mxu0 0.0
      %6290 = vmatpush1.msra.mxu0 0.0
      %6291 = vmatprep.subr.mxu0 0.0
      %6292 = vmatpush1.msra.mxu0 0.0
      %6293 = vmatprep.subr.mxu0 0.0
      %6294 = vmatpush1.msra.mxu0 0.0
      %6295 = vmatprep.subr.mxu0 0.0
      %6296 = vmatpush1.msra.mxu0 0.0
      %6297 = vmatprep.subr.mxu0 0.0
      %6298 = vmatpush1.msra.mxu0 0.0
      %6299 = vmatprep.subr.mxu0 0.0
      %6300 = vmatpush1.msra.mxu0 0.0
      %6301 = vmatprep.subr.mxu0 0.0
      %6302 = vmatpush1.msra.mxu0 0.0
      %6303 = vmatprep.subr.mxu0 0.0
      %6304 = vmatpush1.msra.mxu0 0.0
      %6305 = vmatprep.subr.mxu0 0.0
      %6306 = vmatpush1.msra.mxu0 0.0
      %6307 = vmatprep.subr.mxu0 0.0
      %6308 = vmatpush1.msra.mxu0 0.0
      %6309 = vmatprep.subr.mxu0 0.0
      %6310 = vmatpush1.msra.mxu0 0.0
      %6311 = vmatprep.subr.mxu0 0.0
      %v6312 = vand.u32 %v295, 4294901760
      %6313 = vmatpush1.msra.mxu0 %v6312
      %6314 = vmatprep.subr.mxu0 0.0
      %v6315 = vand.u32 %v294, 4294901760
      %6316 = vmatpush1.msra.mxu0 %v6315
      %6317 = vmatprep.subr.mxu0 0.0
      %v6318 = vand.u32 %v293, 4294901760
      %6319 = vmatpush1.msra.mxu0 %v6318
      %6320 = vmatprep.subr.mxu0 0.0
      %v6321 = vand.u32 %v292, 4294901760
      %6322 = vmatpush1.msra.mxu0 %v6321
      %6323 = vmatprep.subr.mxu0 0.0
      %6324 = vmatpush2.msra.mxu0 0.0
      %6325 = vmatprep.subr.mxu0 0.0
      %6326 = vmatpush2.msra.mxu0 0.0
      %6327 = vmatprep.subr.mxu0 0.0
      %6328 = vmatpush2.msra.mxu0 0.0
      %6329 = vmatprep.subr.mxu0 0.0
      %6330 = vmatpush2.msra.mxu0 0.0
      %6331 = vmatprep.subr.mxu0 0.0
      %6332 = vmatpush2.msra.mxu0 0.0
      %6333 = vmatprep.subr.mxu0 0.0
      %6334 = vmatpush2.msra.mxu0 0.0
      %6335 = vmatprep.subr.mxu0 0.0
      %6336 = vmatpush2.msra.mxu0 0.0
      %6337 = vmatprep.subr.mxu0 0.0
      %6338 = vmatpush2.msra.mxu0 0.0
      %6339 = vmatprep.subr.mxu0 0.0
      %6340 = vmatpush2.msra.mxu0 0.0
      %6341 = vmatprep.subr.mxu0 0.0
      %6342 = vmatpush2.msra.mxu0 0.0
      %6343 = vmatprep.subr.mxu0 0.0
      %6344 = vmatpush2.msra.mxu0 0.0
      %6345 = vmatprep.subr.mxu0 0.0
      %6346 = vmatpush2.msra.mxu0 0.0
      %6347 = vmatprep.subr.mxu0 0.0
      %6348 = vmatpush2.msra.mxu0 0.0
      %6349 = vmatprep.subr.mxu0 0.0
      %6350 = vmatpush2.msra.mxu0 0.0
      %6351 = vmatprep.subr.mxu0 0.0
      %6352 = vmatpush2.msra.mxu0 0.0
      %6353 = vmatprep.subr.mxu0 0.0
      %6354 = vmatpush2.msra.mxu0 0.0
      %6355 = vmatprep.mubr.f32.mxu0 0.0
      %v6356 = vand.u32 %v6285, 4294901760
      %v6357 = vsub.f32 %v6285, %v6356
      %v6358 = vand.u32 %v6357, 4294901760
      %v6359 = vsub.f32 %v6357, %v6358
      %v6360 = vand.u32 %v6359, 4294901760
      %6361 = vmatmul.mubr.f32.gmra.mxu0 %v6360
      %v6362 = vpop.f32.mrf.mxu0
      %v6363 = vadd.f32 0.0, %v6362
      %v6364 = vpop.f32.mrf.mxu0
      %6365 = vdwg.mxu0
      %6366 = vmatprep.subr.mxu0 0.0
      %6367 = vmatpush1.msra.mxu0 0.0
      %6368 = vmatprep.subr.mxu0 0.0
      %6369 = vmatpush1.msra.mxu0 0.0
      %6370 = vmatprep.subr.mxu0 0.0
      %6371 = vmatpush1.msra.mxu0 0.0
      %6372 = vmatprep.subr.mxu0 0.0
      %6373 = vmatpush1.msra.mxu0 0.0
      %6374 = vmatprep.subr.mxu0 0.0
      %6375 = vmatpush1.msra.mxu0 0.0
      %6376 = vmatprep.subr.mxu0 0.0
      %6377 = vmatpush1.msra.mxu0 0.0
      %6378 = vmatprep.subr.mxu0 0.0
      %6379 = vmatpush1.msra.mxu0 0.0
      %6380 = vmatprep.subr.mxu0 0.0
      %6381 = vmatpush1.msra.mxu0 0.0
      %6382 = vmatprep.subr.mxu0 0.0
      %6383 = vmatpush1.msra.mxu0 0.0
      %6384 = vmatprep.subr.mxu0 0.0
      %6385 = vmatpush1.msra.mxu0 0.0
      %6386 = vmatprep.subr.mxu0 0.0
      %6387 = vmatpush1.msra.mxu0 0.0
      %6388 = vmatprep.subr.mxu0 0.0
      %6389 = vmatpush1.msra.mxu0 0.0
      %6390 = vmatprep.subr.mxu0 0.0
      %v6391 = vand.u32 %v295, 4294901760
      %v6392 = vsub.f32 %v295, %v6391
      %v6393 = vand.u32 %v6392, 4294901760
      %v6394 = vsub.f32 %v6392, %v6393
      %v6395 = vand.u32 %v6394, 4294901760
      %6396 = vmatpush1.msra.mxu0 %v6395
      %6397 = vmatprep.subr.mxu0 0.0
      %v6398 = vand.u32 %v294, 4294901760
      %v6399 = vsub.f32 %v294, %v6398
      %v6400 = vand.u32 %v6399, 4294901760
      %v6401 = vsub.f32 %v6399, %v6400
      %v6402 = vand.u32 %v6401, 4294901760
      %6403 = vmatpush1.msra.mxu0 %v6402
      %6404 = vmatprep.subr.mxu0 0.0
      %v6405 = vand.u32 %v293, 4294901760
      %v6406 = vsub.f32 %v293, %v6405
      %v6407 = vand.u32 %v6406, 4294901760
      %v6408 = vsub.f32 %v6406, %v6407
      %v6409 = vand.u32 %v6408, 4294901760
      %6410 = vmatpush1.msra.mxu0 %v6409
      %6411 = vmatprep.subr.mxu0 0.0
      %v6412 = vand.u32 %v292, 4294901760
      %v6413 = vsub.f32 %v292, %v6412
      %v6414 = vand.u32 %v6413, 4294901760
      %v6415 = vsub.f32 %v6413, %v6414
      %v6416 = vand.u32 %v6415, 4294901760
      %6417 = vmatpush1.msra.mxu0 %v6416
      %6418 = vmatprep.subr.mxu0 0.0
      %6419 = vmatpush2.msra.mxu0 0.0
      %6420 = vmatprep.subr.mxu0 0.0
      %6421 = vmatpush2.msra.mxu0 0.0
      %6422 = vmatprep.subr.mxu0 0.0
      %6423 = vmatpush2.msra.mxu0 0.0
      %6424 = vmatprep.subr.mxu0 0.0
      %6425 = vmatpush2.msra.mxu0 0.0
      %6426 = vmatprep.subr.mxu0 0.0
      %6427 = vmatpush2.msra.mxu0 0.0
      %6428 = vmatprep.subr.mxu0 0.0
      %6429 = vmatpush2.msra.mxu0 0.0
      %6430 = vmatprep.subr.mxu0 0.0
      %6431 = vmatpush2.msra.mxu0 0.0
      %6432 = vmatprep.subr.mxu0 0.0
      %6433 = vmatpush2.msra.mxu0 0.0
      %6434 = vmatprep.subr.mxu0 0.0
      %6435 = vmatpush2.msra.mxu0 0.0
      %6436 = vmatprep.subr.mxu0 0.0
      %6437 = vmatpush2.msra.mxu0 0.0
      %6438 = vmatprep.subr.mxu0 0.0
      %6439 = vmatpush2.msra.mxu0 0.0
      %6440 = vmatprep.subr.mxu0 0.0
      %6441 = vmatpush2.msra.mxu0 0.0
      %6442 = vmatprep.subr.mxu0 0.0
      %6443 = vmatpush2.msra.mxu0 0.0
      %6444 = vmatprep.subr.mxu0 0.0
      %6445 = vmatpush2.msra.mxu0 0.0
      %6446 = vmatprep.subr.mxu0 0.0
      %6447 = vmatpush2.msra.mxu0 0.0
      %6448 = vmatprep.subr.mxu0 0.0
      %6449 = vmatpush2.msra.mxu0 0.0
      %6450 = vmatprep.mubr.f32.mxu0 0.0
      %v6451 = vand.u32 %v6285, 4294901760
      %6452 = vmatmul.mubr.f32.gmra.mxu0 %v6451
      %v6453 = vpop.f32.mrf.mxu0
      %v6454 = vadd.f32 %v6363, %v6453
      %v6455 = vpop.f32.mrf.mxu0
      %6456 = vdwg.mxu0
      %6457 = vmatprep.subr.mxu0 0.0
      %6458 = vmatpush1.msra.mxu0 0.0
      %6459 = vmatprep.subr.mxu0 0.0
      %6460 = vmatpush1.msra.mxu0 0.0
      %6461 = vmatprep.subr.mxu0 0.0
      %6462 = vmatpush1.msra.mxu0 0.0
      %6463 = vmatprep.subr.mxu0 0.0
      %6464 = vmatpush1.msra.mxu0 0.0
      %6465 = vmatprep.subr.mxu0 0.0
      %6466 = vmatpush1.msra.mxu0 0.0
      %6467 = vmatprep.subr.mxu0 0.0
      %6468 = vmatpush1.msra.mxu0 0.0
      %6469 = vmatprep.subr.mxu0 0.0
      %6470 = vmatpush1.msra.mxu0 0.0
      %6471 = vmatprep.subr.mxu0 0.0
      %6472 = vmatpush1.msra.mxu0 0.0
      %6473 = vmatprep.subr.mxu0 0.0
      %6474 = vmatpush1.msra.mxu0 0.0
      %6475 = vmatprep.subr.mxu0 0.0
      %6476 = vmatpush1.msra.mxu0 0.0
      %6477 = vmatprep.subr.mxu0 0.0
      %6478 = vmatpush1.msra.mxu0 0.0
      %6479 = vmatprep.subr.mxu0 0.0
      %6480 = vmatpush1.msra.mxu0 0.0
      %6481 = vmatprep.subr.mxu0 0.0
      %v6482 = vand.u32 %v295, 4294901760
      %v6483 = vsub.f32 %v295, %v6482
      %6484 = vmatpush1.msra.mxu0 %v6483
      %6485 = vmatprep.subr.mxu0 0.0
      %v6486 = vand.u32 %v294, 4294901760
      %v6487 = vsub.f32 %v294, %v6486
      %6488 = vmatpush1.msra.mxu0 %v6487
      %6489 = vmatprep.subr.mxu0 0.0
      %v6490 = vand.u32 %v293, 4294901760
      %v6491 = vsub.f32 %v293, %v6490
      %6492 = vmatpush1.msra.mxu0 %v6491
      %6493 = vmatprep.subr.mxu0 0.0
      %v6494 = vand.u32 %v292, 4294901760
      %v6495 = vsub.f32 %v292, %v6494
      %6496 = vmatpush1.msra.mxu0 %v6495
      %6497 = vmatprep.subr.mxu0 0.0
      %6498 = vmatpush2.msra.mxu0 0.0
      %6499 = vmatprep.subr.mxu0 0.0
      %6500 = vmatpush2.msra.mxu0 0.0
      %6501 = vmatprep.subr.mxu0 0.0
      %6502 = vmatpush2.msra.mxu0 0.0
      %6503 = vmatprep.subr.mxu0 0.0
      %6504 = vmatpush2.msra.mxu0 0.0
      %6505 = vmatprep.subr.mxu0 0.0
      %6506 = vmatpush2.msra.mxu0 0.0
      %6507 = vmatprep.subr.mxu0 0.0
      %6508 = vmatpush2.msra.mxu0 0.0
      %6509 = vmatprep.subr.mxu0 0.0
      %6510 = vmatpush2.msra.mxu0 0.0
      %6511 = vmatprep.subr.mxu0 0.0
      %6512 = vmatpush2.msra.mxu0 0.0
      %6513 = vmatprep.subr.mxu0 0.0
      %6514 = vmatpush2.msra.mxu0 0.0
      %6515 = vmatprep.subr.mxu0 0.0
      %6516 = vmatpush2.msra.mxu0 0.0
      %6517 = vmatprep.subr.mxu0 0.0
      %6518 = vmatpush2.msra.mxu0 0.0
      %6519 = vmatprep.subr.mxu0 0.0
      %6520 = vmatpush2.msra.mxu0 0.0
      %6521 = vmatprep.subr.mxu0 0.0
      %6522 = vmatpush2.msra.mxu0 0.0
      %6523 = vmatprep.subr.mxu0 0.0
      %6524 = vmatpush2.msra.mxu0 0.0
      %6525 = vmatprep.subr.mxu0 0.0
      %6526 = vmatpush2.msra.mxu0 0.0
      %6527 = vmatprep.subr.mxu0 0.0
      %6528 = vmatpush2.msra.mxu0 0.0
      %6529 = vmatprep.mubr.f32.mxu0 0.0
      %v6530 = vand.u32 %v6285, 4294901760
      %v6531 = vsub.f32 %v6285, %v6530
      %6532 = vmatmul.mubr.f32.gmra.mxu0 %v6531
      %v6533 = vpop.f32.mrf.mxu0
      %v6534 = vadd.f32 %v6454, %v6533
      %v6535 = vpop.f32.mrf.mxu0
      %6536 = vdwg.mxu0
      %6537 = vmatprep.subr.mxu0 0.0
      %6538 = vmatpush1.msra.mxu0 0.0
      %6539 = vmatprep.subr.mxu0 0.0
      %6540 = vmatpush1.msra.mxu0 0.0
      %6541 = vmatprep.subr.mxu0 0.0
      %6542 = vmatpush1.msra.mxu0 0.0
      %6543 = vmatprep.subr.mxu0 0.0
      %6544 = vmatpush1.msra.mxu0 0.0
      %6545 = vmatprep.subr.mxu0 0.0
      %6546 = vmatpush1.msra.mxu0 0.0
      %6547 = vmatprep.subr.mxu0 0.0
      %6548 = vmatpush1.msra.mxu0 0.0
      %6549 = vmatprep.subr.mxu0 0.0
      %6550 = vmatpush1.msra.mxu0 0.0
      %6551 = vmatprep.subr.mxu0 0.0
      %6552 = vmatpush1.msra.mxu0 0.0
      %6553 = vmatprep.subr.mxu0 0.0
      %6554 = vmatpush1.msra.mxu0 0.0
      %6555 = vmatprep.subr.mxu0 0.0
      %6556 = vmatpush1.msra.mxu0 0.0
      %6557 = vmatprep.subr.mxu0 0.0
      %6558 = vmatpush1.msra.mxu0 0.0
      %6559 = vmatprep.subr.mxu0 0.0
      %6560 = vmatpush1.msra.mxu0 0.0
      %6561 = vmatprep.subr.mxu0 0.0
      %v6562 = vand.u32 %v295, 4294901760
      %6563 = vmatpush1.msra.mxu0 %v6562
      %6564 = vmatprep.subr.mxu0 0.0
      %v6565 = vand.u32 %v294, 4294901760
      %6566 = vmatpush1.msra.mxu0 %v6565
      %6567 = vmatprep.subr.mxu0 0.0
      %v6568 = vand.u32 %v293, 4294901760
      %6569 = vmatpush1.msra.mxu0 %v6568
      %6570 = vmatprep.subr.mxu0 0.0
      %v6571 = vand.u32 %v292, 4294901760
      %6572 = vmatpush1.msra.mxu0 %v6571
      %6573 = vmatprep.subr.mxu0 0.0
      %6574 = vmatpush2.msra.mxu0 0.0
      %6575 = vmatprep.subr.mxu0 0.0
      %6576 = vmatpush2.msra.mxu0 0.0
      %6577 = vmatprep.subr.mxu0 0.0
      %6578 = vmatpush2.msra.mxu0 0.0
      %6579 = vmatprep.subr.mxu0 0.0
      %6580 = vmatpush2.msra.mxu0 0.0
      %6581 = vmatprep.subr.mxu0 0.0
      %6582 = vmatpush2.msra.mxu0 0.0
      %6583 = vmatprep.subr.mxu0 0.0
      %6584 = vmatpush2.msra.mxu0 0.0
      %6585 = vmatprep.subr.mxu0 0.0
      %6586 = vmatpush2.msra.mxu0 0.0
      %6587 = vmatprep.subr.mxu0 0.0
      %6588 = vmatpush2.msra.mxu0 0.0
      %6589 = vmatprep.subr.mxu0 0.0
      %6590 = vmatpush2.msra.mxu0 0.0
      %6591 = vmatprep.subr.mxu0 0.0
      %6592 = vmatpush2.msra.mxu0 0.0
      %6593 = vmatprep.subr.mxu0 0.0
      %6594 = vmatpush2.msra.mxu0 0.0
      %6595 = vmatprep.subr.mxu0 0.0
      %6596 = vmatpush2.msra.mxu0 0.0
      %6597 = vmatprep.subr.mxu0 0.0
      %6598 = vmatpush2.msra.mxu0 0.0
      %6599 = vmatprep.subr.mxu0 0.0
      %6600 = vmatpush2.msra.mxu0 0.0
      %6601 = vmatprep.subr.mxu0 0.0
      %6602 = vmatpush2.msra.mxu0 0.0
      %6603 = vmatprep.subr.mxu0 0.0
      %6604 = vmatpush2.msra.mxu0 0.0
      %6605 = vmatprep.mubr.f32.mxu0 0.0
      %v6606 = vand.u32 %v6285, 4294901760
      %v6607 = vsub.f32 %v6285, %v6606
      %v6608 = vand.u32 %v6607, 4294901760
      %6609 = vmatmul.mubr.f32.gmra.mxu0 %v6608
      %v6610 = vpop.f32.mrf.mxu0
      %v6611 = vadd.f32 %v6534, %v6610
      %v6612 = vpop.f32.mrf.mxu0
      %6613 = vdwg.mxu0
      %6614 = vmatprep.subr.mxu0 0.0
      %6615 = vmatpush1.msra.mxu0 0.0
      %6616 = vmatprep.subr.mxu0 0.0
      %6617 = vmatpush1.msra.mxu0 0.0
      %6618 = vmatprep.subr.mxu0 0.0
      %6619 = vmatpush1.msra.mxu0 0.0
      %6620 = vmatprep.subr.mxu0 0.0
      %6621 = vmatpush1.msra.mxu0 0.0
      %6622 = vmatprep.subr.mxu0 0.0
      %6623 = vmatpush1.msra.mxu0 0.0
      %6624 = vmatprep.subr.mxu0 0.0
      %6625 = vmatpush1.msra.mxu0 0.0
      %6626 = vmatprep.subr.mxu0 0.0
      %6627 = vmatpush1.msra.mxu0 0.0
      %6628 = vmatprep.subr.mxu0 0.0
      %6629 = vmatpush1.msra.mxu0 0.0
      %6630 = vmatprep.subr.mxu0 0.0
      %6631 = vmatpush1.msra.mxu0 0.0
      %6632 = vmatprep.subr.mxu0 0.0
      %6633 = vmatpush1.msra.mxu0 0.0
      %6634 = vmatprep.subr.mxu0 0.0
      %6635 = vmatpush1.msra.mxu0 0.0
      %6636 = vmatprep.subr.mxu0 0.0
      %6637 = vmatpush1.msra.mxu0 0.0
      %6638 = vmatprep.subr.mxu0 0.0
      %v6639 = vand.u32 %v295, 4294901760
      %v6640 = vsub.f32 %v295, %v6639
      %v6641 = vand.u32 %v6640, 4294901760
      %6642 = vmatpush1.msra.mxu0 %v6641
      %6643 = vmatprep.subr.mxu0 0.0
      %v6644 = vand.u32 %v294, 4294901760
      %v6645 = vsub.f32 %v294, %v6644
      %v6646 = vand.u32 %v6645, 4294901760
      %6647 = vmatpush1.msra.mxu0 %v6646
      %6648 = vmatprep.subr.mxu0 0.0
      %v6649 = vand.u32 %v293, 4294901760
      %v6650 = vsub.f32 %v293, %v6649
      %v6651 = vand.u32 %v6650, 4294901760
      %6652 = vmatpush1.msra.mxu0 %v6651
      %6653 = vmatprep.subr.mxu0 0.0
      %v6654 = vand.u32 %v292, 4294901760
      %v6655 = vsub.f32 %v292, %v6654
      %v6656 = vand.u32 %v6655, 4294901760
      %6657 = vmatpush1.msra.mxu0 %v6656
      %6658 = vmatprep.subr.mxu0 0.0
      %6659 = vmatpush2.msra.mxu0 0.0
      %6660 = vmatprep.subr.mxu0 0.0
      %6661 = vmatpush2.msra.mxu0 0.0
      %6662 = vmatprep.subr.mxu0 0.0
      %6663 = vmatpush2.msra.mxu0 0.0
      %6664 = vmatprep.subr.mxu0 0.0
      %6665 = vmatpush2.msra.mxu0 0.0
      %6666 = vmatprep.subr.mxu0 0.0
      %6667 = vmatpush2.msra.mxu0 0.0
      %6668 = vmatprep.subr.mxu0 0.0
      %6669 = vmatpush2.msra.mxu0 0.0
      %6670 = vmatprep.subr.mxu0 0.0
      %6671 = vmatpush2.msra.mxu0 0.0
      %6672 = vmatprep.subr.mxu0 0.0
      %6673 = vmatpush2.msra.mxu0 0.0
      %6674 = vmatprep.subr.mxu0 0.0
      %6675 = vmatpush2.msra.mxu0 0.0
      %6676 = vmatprep.subr.mxu0 0.0
      %6677 = vmatpush2.msra.mxu0 0.0
      %6678 = vmatprep.subr.mxu0 0.0
      %6679 = vmatpush2.msra.mxu0 0.0
      %6680 = vmatprep.subr.mxu0 0.0
      %6681 = vmatpush2.msra.mxu0 0.0
      %6682 = vmatprep.subr.mxu0 0.0
      %6683 = vmatpush2.msra.mxu0 0.0
      %6684 = vmatprep.subr.mxu0 0.0
      %6685 = vmatpush2.msra.mxu0 0.0
      %6686 = vmatprep.subr.mxu0 0.0
      %6687 = vmatpush2.msra.mxu0 0.0
      %6688 = vmatprep.subr.mxu0 0.0
      %6689 = vmatpush2.msra.mxu0 0.0
      %6690 = vmatprep.mubr.f32.mxu0 0.0
      %v6691 = vand.u32 %v6285, 4294901760
      %6692 = vmatmul.mubr.f32.gmra.mxu0 %v6691
      %v6693 = vpop.f32.mrf.mxu0
      %v6694 = vadd.f32 %v6611, %v6693
      %v6695 = vpop.f32.mrf.mxu0
      %6696 = vdwg.mxu0
      %6697 = vmatprep.subr.mxu0 0.0
      %6698 = vmatpush1.msra.mxu0 0.0
      %6699 = vmatprep.subr.mxu0 0.0
      %6700 = vmatpush1.msra.mxu0 0.0
      %6701 = vmatprep.subr.mxu0 0.0
      %6702 = vmatpush1.msra.mxu0 0.0
      %6703 = vmatprep.subr.mxu0 0.0
      %6704 = vmatpush1.msra.mxu0 0.0
      %6705 = vmatprep.subr.mxu0 0.0
      %6706 = vmatpush1.msra.mxu0 0.0
      %6707 = vmatprep.subr.mxu0 0.0
      %6708 = vmatpush1.msra.mxu0 0.0
      %6709 = vmatprep.subr.mxu0 0.0
      %6710 = vmatpush1.msra.mxu0 0.0
      %6711 = vmatprep.subr.mxu0 0.0
      %6712 = vmatpush1.msra.mxu0 0.0
      %6713 = vmatprep.subr.mxu0 0.0
      %6714 = vmatpush1.msra.mxu0 0.0
      %6715 = vmatprep.subr.mxu0 0.0
      %6716 = vmatpush1.msra.mxu0 0.0
      %6717 = vmatprep.subr.mxu0 0.0
      %6718 = vmatpush1.msra.mxu0 0.0
      %6719 = vmatprep.subr.mxu0 0.0
      %6720 = vmatpush1.msra.mxu0 0.0
      %6721 = vmatprep.subr.mxu0 0.0
      %v6722 = vand.u32 %v295, 4294901760
      %6723 = vmatpush1.msra.mxu0 %v6722
      %6724 = vmatprep.subr.mxu0 0.0
      %v6725 = vand.u32 %v294, 4294901760
      %6726 = vmatpush1.msra.mxu0 %v6725
      %6727 = vmatprep.subr.mxu0 0.0
      %v6728 = vand.u32 %v293, 4294901760
      %6729 = vmatpush1.msra.mxu0 %v6728
      %6730 = vmatprep.subr.mxu0 0.0
      %v6731 = vand.u32 %v292, 4294901760
      %6732 = vmatpush1.msra.mxu0 %v6731
      %6733 = vmatprep.subr.mxu0 0.0
      %6734 = vmatpush2.msra.mxu0 0.0
      %6735 = vmatprep.subr.mxu0 0.0
      %6736 = vmatpush2.msra.mxu0 0.0
      %6737 = vmatprep.subr.mxu0 0.0
      %6738 = vmatpush2.msra.mxu0 0.0
      %6739 = vmatprep.subr.mxu0 0.0
      %6740 = vmatpush2.msra.mxu0 0.0
      %6741 = vmatprep.subr.mxu0 0.0
      %6742 = vmatpush2.msra.mxu0 0.0
      %6743 = vmatprep.subr.mxu0 0.0
      %6744 = vmatpush2.msra.mxu0 0.0
      %6745 = vmatprep.subr.mxu0 0.0
      %6746 = vmatpush2.msra.mxu0 0.0
      %6747 = vmatprep.subr.mxu0 0.0
      %6748 = vmatpush2.msra.mxu0 0.0
      %6749 = vmatprep.subr.mxu0 0.0
      %6750 = vmatpush2.msra.mxu0 0.0
      %6751 = vmatprep.subr.mxu0 0.0
      %6752 = vmatpush2.msra.mxu0 0.0
      %6753 = vmatprep.subr.mxu0 0.0
      %6754 = vmatpush2.msra.mxu0 0.0
      %6755 = vmatprep.subr.mxu0 0.0
      %6756 = vmatpush2.msra.mxu0 0.0
      %6757 = vmatprep.subr.mxu0 0.0
      %6758 = vmatpush2.msra.mxu0 0.0
      %6759 = vmatprep.subr.mxu0 0.0
      %6760 = vmatpush2.msra.mxu0 0.0
      %6761 = vmatprep.subr.mxu0 0.0
      %6762 = vmatpush2.msra.mxu0 0.0
      %6763 = vmatprep.subr.mxu0 0.0
      %6764 = vmatpush2.msra.mxu0 0.0
      %6765 = vmatprep.mubr.f32.mxu0 0.0
      %v6766 = vand.u32 %v6285, 4294901760
      %6767 = vmatmul.mubr.f32.gmra.mxu0 %v6766
      %v6768 = vpop.f32.mrf.mxu0
      %v6769 = vadd.f32 %v6694, %v6768
      %v6770 = vpop.f32.mrf.mxu0
      %6771 = vdwg.mxu0
      %6772 = vmatprep.subr.mxu0 0.0
      %6773 = vmatpush1.msra.mxu0 0.0
      %6774 = vmatprep.subr.mxu0 0.0
      %6775 = vmatpush1.msra.mxu0 0.0
      %6776 = vmatprep.subr.mxu0 0.0
      %6777 = vmatpush1.msra.mxu0 0.0
      %6778 = vmatprep.subr.mxu0 0.0
      %6779 = vmatpush1.msra.mxu0 0.0
      %6780 = vmatprep.subr.mxu0 0.0
      %6781 = vmatpush1.msra.mxu0 0.0
      %6782 = vmatprep.subr.mxu0 0.0
      %6783 = vmatpush1.msra.mxu0 0.0
      %6784 = vmatprep.subr.mxu0 0.0
      %6785 = vmatpush1.msra.mxu0 0.0
      %6786 = vmatprep.subr.mxu0 0.0
      %6787 = vmatpush1.msra.mxu0 0.0
      %6788 = vmatprep.subr.mxu0 0.0
      %6789 = vmatpush1.msra.mxu0 0.0
      %6790 = vmatprep.subr.mxu0 0.0
      %6791 = vmatpush1.msra.mxu0 0.0
      %6792 = vmatprep.subr.mxu0 0.0
      %6793 = vmatpush1.msra.mxu0 0.0
      %6794 = vmatprep.subr.mxu0 0.0
      %6795 = vmatpush1.msra.mxu0 0.0
      %6796 = vmatprep.subr.mxu0 0.0
      %v6797 = vand.u32 %v300, 4294901760
      %6798 = vmatpush1.msra.mxu0 %v6797
      %6799 = vmatprep.subr.mxu0 0.0
      %v6800 = vand.u32 %v299, 4294901760
      %6801 = vmatpush1.msra.mxu0 %v6800
      %6802 = vmatprep.subr.mxu0 0.0
      %v6803 = vand.u32 %v298, 4294901760
      %6804 = vmatpush1.msra.mxu0 %v6803
      %6805 = vmatprep.subr.mxu0 0.0
      %v6806 = vand.u32 %v297, 4294901760
      %6807 = vmatpush1.msra.mxu0 %v6806
      %6808 = vmatprep.subr.mxu0 0.0
      %6809 = vmatpush2.msra.mxu0 0.0
      %6810 = vmatprep.subr.mxu0 0.0
      %6811 = vmatpush2.msra.mxu0 0.0
      %6812 = vmatprep.subr.mxu0 0.0
      %6813 = vmatpush2.msra.mxu0 0.0
      %6814 = vmatprep.subr.mxu0 0.0
      %6815 = vmatpush2.msra.mxu0 0.0
      %6816 = vmatprep.subr.mxu0 0.0
      %6817 = vmatpush2.msra.mxu0 0.0
      %6818 = vmatprep.subr.mxu0 0.0
      %6819 = vmatpush2.msra.mxu0 0.0
      %6820 = vmatprep.subr.mxu0 0.0
      %6821 = vmatpush2.msra.mxu0 0.0
      %6822 = vmatprep.subr.mxu0 0.0
      %6823 = vmatpush2.msra.mxu0 0.0
      %6824 = vmatprep.subr.mxu0 0.0
      %6825 = vmatpush2.msra.mxu0 0.0
      %6826 = vmatprep.subr.mxu0 0.0
      %6827 = vmatpush2.msra.mxu0 0.0
      %6828 = vmatprep.subr.mxu0 0.0
      %6829 = vmatpush2.msra.mxu0 0.0
      %6830 = vmatprep.subr.mxu0 0.0
      %6831 = vmatpush2.msra.mxu0 0.0
      %6832 = vmatprep.subr.mxu0 0.0
      %6833 = vmatpush2.msra.mxu0 0.0
      %6834 = vmatprep.subr.mxu0 0.0
      %6835 = vmatpush2.msra.mxu0 0.0
      %6836 = vmatprep.subr.mxu0 0.0
      %6837 = vmatpush2.msra.mxu0 0.0
      %6838 = vmatprep.subr.mxu0 0.0
      %6839 = vmatpush2.msra.mxu0 0.0
      %6840 = vmatprep.mubr.f32.mxu0 0.0
      %v6841 = vand.u32 %v6285, 4294901760
      %v6842 = vsub.f32 %v6285, %v6841
      %v6843 = vand.u32 %v6842, 4294901760
      %v6844 = vsub.f32 %v6842, %v6843
      %v6845 = vand.u32 %v6844, 4294901760
      %6846 = vmatmul.mubr.f32.gmra.mxu0 %v6845
      %v6847 = vpop.f32.mrf.mxu0
      %v6848 = vadd.f32 0.0, %v6847
      %v6849 = vpop.f32.mrf.mxu0
      %6850 = vdwg.mxu0
      %6851 = vmatprep.subr.mxu0 0.0
      %6852 = vmatpush1.msra.mxu0 0.0
      %6853 = vmatprep.subr.mxu0 0.0
      %6854 = vmatpush1.msra.mxu0 0.0
      %6855 = vmatprep.subr.mxu0 0.0
      %6856 = vmatpush1.msra.mxu0 0.0
      %6857 = vmatprep.subr.mxu0 0.0
      %6858 = vmatpush1.msra.mxu0 0.0
      %6859 = vmatprep.subr.mxu0 0.0
      %6860 = vmatpush1.msra.mxu0 0.0
      %6861 = vmatprep.subr.mxu0 0.0
      %6862 = vmatpush1.msra.mxu0 0.0
      %6863 = vmatprep.subr.mxu0 0.0
      %6864 = vmatpush1.msra.mxu0 0.0
      %6865 = vmatprep.subr.mxu0 0.0
      %6866 = vmatpush1.msra.mxu0 0.0
      %6867 = vmatprep.subr.mxu0 0.0
      %6868 = vmatpush1.msra.mxu0 0.0
      %6869 = vmatprep.subr.mxu0 0.0
      %6870 = vmatpush1.msra.mxu0 0.0
      %6871 = vmatprep.subr.mxu0 0.0
      %6872 = vmatpush1.msra.mxu0 0.0
      %6873 = vmatprep.subr.mxu0 0.0
      %6874 = vmatpush1.msra.mxu0 0.0
      %6875 = vmatprep.subr.mxu0 0.0
      %v6876 = vand.u32 %v300, 4294901760
      %v6877 = vsub.f32 %v300, %v6876
      %v6878 = vand.u32 %v6877, 4294901760
      %v6879 = vsub.f32 %v6877, %v6878
      %v6880 = vand.u32 %v6879, 4294901760
      %6881 = vmatpush1.msra.mxu0 %v6880
      %6882 = vmatprep.subr.mxu0 0.0
      %v6883 = vand.u32 %v299, 4294901760
      %v6884 = vsub.f32 %v299, %v6883
      %v6885 = vand.u32 %v6884, 4294901760
      %v6886 = vsub.f32 %v6884, %v6885
      %v6887 = vand.u32 %v6886, 4294901760
      %6888 = vmatpush1.msra.mxu0 %v6887
      %6889 = vmatprep.subr.mxu0 0.0
      %v6890 = vand.u32 %v298, 4294901760
      %v6891 = vsub.f32 %v298, %v6890
      %v6892 = vand.u32 %v6891, 4294901760
      %v6893 = vsub.f32 %v6891, %v6892
      %v6894 = vand.u32 %v6893, 4294901760
      %6895 = vmatpush1.msra.mxu0 %v6894
      %6896 = vmatprep.subr.mxu0 0.0
      %v6897 = vand.u32 %v297, 4294901760
      %v6898 = vsub.f32 %v297, %v6897
      %v6899 = vand.u32 %v6898, 4294901760
      %v6900 = vsub.f32 %v6898, %v6899
      %v6901 = vand.u32 %v6900, 4294901760
      %6902 = vmatpush1.msra.mxu0 %v6901
      %6903 = vmatprep.subr.mxu0 0.0
      %6904 = vmatpush2.msra.mxu0 0.0
      %6905 = vmatprep.subr.mxu0 0.0
      %6906 = vmatpush2.msra.mxu0 0.0
      %6907 = vmatprep.subr.mxu0 0.0
      %6908 = vmatpush2.msra.mxu0 0.0
      %6909 = vmatprep.subr.mxu0 0.0
      %6910 = vmatpush2.msra.mxu0 0.0
      %6911 = vmatprep.subr.mxu0 0.0
      %6912 = vmatpush2.msra.mxu0 0.0
      %6913 = vmatprep.subr.mxu0 0.0
      %6914 = vmatpush2.msra.mxu0 0.0
      %6915 = vmatprep.subr.mxu0 0.0
      %6916 = vmatpush2.msra.mxu0 0.0
      %6917 = vmatprep.subr.mxu0 0.0
      %6918 = vmatpush2.msra.mxu0 0.0
      %6919 = vmatprep.subr.mxu0 0.0
      %6920 = vmatpush2.msra.mxu0 0.0
      %6921 = vmatprep.subr.mxu0 0.0
      %6922 = vmatpush2.msra.mxu0 0.0
      %6923 = vmatprep.subr.mxu0 0.0
      %6924 = vmatpush2.msra.mxu0 0.0
      %6925 = vmatprep.subr.mxu0 0.0
      %6926 = vmatpush2.msra.mxu0 0.0
      %6927 = vmatprep.subr.mxu0 0.0
      %6928 = vmatpush2.msra.mxu0 0.0
      %6929 = vmatprep.subr.mxu0 0.0
      %6930 = vmatpush2.msra.mxu0 0.0
      %6931 = vmatprep.subr.mxu0 0.0
      %6932 = vmatpush2.msra.mxu0 0.0
      %6933 = vmatprep.subr.mxu0 0.0
      %6934 = vmatpush2.msra.mxu0 0.0
      %6935 = vmatprep.mubr.f32.mxu0 0.0
      %v6936 = vand.u32 %v6285, 4294901760
      %6937 = vmatmul.mubr.f32.gmra.mxu0 %v6936
      %v6938 = vpop.f32.mrf.mxu0
      %v6939 = vadd.f32 %v6848, %v6938
      %v6940 = vpop.f32.mrf.mxu0
      %6941 = vdwg.mxu0
      %6942 = vmatprep.subr.mxu0 0.0
      %6943 = vmatpush1.msra.mxu0 0.0
      %6944 = vmatprep.subr.mxu0 0.0
      %6945 = vmatpush1.msra.mxu0 0.0
      %6946 = vmatprep.subr.mxu0 0.0
      %6947 = vmatpush1.msra.mxu0 0.0
      %6948 = vmatprep.subr.mxu0 0.0
      %6949 = vmatpush1.msra.mxu0 0.0
      %6950 = vmatprep.subr.mxu0 0.0
      %6951 = vmatpush1.msra.mxu0 0.0
      %6952 = vmatprep.subr.mxu0 0.0
      %6953 = vmatpush1.msra.mxu0 0.0
      %6954 = vmatprep.subr.mxu0 0.0
      %6955 = vmatpush1.msra.mxu0 0.0
      %6956 = vmatprep.subr.mxu0 0.0
      %6957 = vmatpush1.msra.mxu0 0.0
      %6958 = vmatprep.subr.mxu0 0.0
      %6959 = vmatpush1.msra.mxu0 0.0
      %6960 = vmatprep.subr.mxu0 0.0
      %6961 = vmatpush1.msra.mxu0 0.0
      %6962 = vmatprep.subr.mxu0 0.0
      %6963 = vmatpush1.msra.mxu0 0.0
      %6964 = vmatprep.subr.mxu0 0.0
      %6965 = vmatpush1.msra.mxu0 0.0
      %6966 = vmatprep.subr.mxu0 0.0
      %v6967 = vand.u32 %v300, 4294901760
      %v6968 = vsub.f32 %v300, %v6967
      %6969 = vmatpush1.msra.mxu0 %v6968
      %6970 = vmatprep.subr.mxu0 0.0
      %v6971 = vand.u32 %v299, 4294901760
      %v6972 = vsub.f32 %v299, %v6971
      %6973 = vmatpush1.msra.mxu0 %v6972
      %6974 = vmatprep.subr.mxu0 0.0
      %v6975 = vand.u32 %v298, 4294901760
      %v6976 = vsub.f32 %v298, %v6975
      %6977 = vmatpush1.msra.mxu0 %v6976
      %6978 = vmatprep.subr.mxu0 0.0
      %v6979 = vand.u32 %v297, 4294901760
      %v6980 = vsub.f32 %v297, %v6979
      %6981 = vmatpush1.msra.mxu0 %v6980
      %6982 = vmatprep.subr.mxu0 0.0
      %6983 = vmatpush2.msra.mxu0 0.0
      %6984 = vmatprep.subr.mxu0 0.0
      %6985 = vmatpush2.msra.mxu0 0.0
      %6986 = vmatprep.subr.mxu0 0.0
      %6987 = vmatpush2.msra.mxu0 0.0
      %6988 = vmatprep.subr.mxu0 0.0
      %6989 = vmatpush2.msra.mxu0 0.0
      %6990 = vmatprep.subr.mxu0 0.0
      %6991 = vmatpush2.msra.mxu0 0.0
      %6992 = vmatprep.subr.mxu0 0.0
      %6993 = vmatpush2.msra.mxu0 0.0
      %6994 = vmatprep.subr.mxu0 0.0
      %6995 = vmatpush2.msra.mxu0 0.0
      %6996 = vmatprep.subr.mxu0 0.0
      %6997 = vmatpush2.msra.mxu0 0.0
      %6998 = vmatprep.subr.mxu0 0.0
      %6999 = vmatpush2.msra.mxu0 0.0
      %7000 = vmatprep.subr.mxu0 0.0
      %7001 = vmatpush2.msra.mxu0 0.0
      %7002 = vmatprep.subr.mxu0 0.0
      %7003 = vmatpush2.msra.mxu0 0.0
      %7004 = vmatprep.subr.mxu0 0.0
      %7005 = vmatpush2.msra.mxu0 0.0
      %7006 = vmatprep.subr.mxu0 0.0
      %7007 = vmatpush2.msra.mxu0 0.0
      %7008 = vmatprep.subr.mxu0 0.0
      %7009 = vmatpush2.msra.mxu0 0.0
      %7010 = vmatprep.subr.mxu0 0.0
      %7011 = vmatpush2.msra.mxu0 0.0
      %7012 = vmatprep.subr.mxu0 0.0
      %7013 = vmatpush2.msra.mxu0 0.0
      %7014 = vmatprep.mubr.f32.mxu0 0.0
      %v7015 = vand.u32 %v6285, 4294901760
      %v7016 = vsub.f32 %v6285, %v7015
      %7017 = vmatmul.mubr.f32.gmra.mxu0 %v7016
      %v7018 = vpop.f32.mrf.mxu0
      %v7019 = vadd.f32 %v6939, %v7018
      %v7020 = vpop.f32.mrf.mxu0
      %7021 = vdwg.mxu0
      %7022 = vmatprep.subr.mxu0 0.0
      %7023 = vmatpush1.msra.mxu0 0.0
      %7024 = vmatprep.subr.mxu0 0.0
      %7025 = vmatpush1.msra.mxu0 0.0
      %7026 = vmatprep.subr.mxu0 0.0
      %7027 = vmatpush1.msra.mxu0 0.0
      %7028 = vmatprep.subr.mxu0 0.0
      %7029 = vmatpush1.msra.mxu0 0.0
      %7030 = vmatprep.subr.mxu0 0.0
      %7031 = vmatpush1.msra.mxu0 0.0
      %7032 = vmatprep.subr.mxu0 0.0
      %7033 = vmatpush1.msra.mxu0 0.0
      %7034 = vmatprep.subr.mxu0 0.0
      %7035 = vmatpush1.msra.mxu0 0.0
      %7036 = vmatprep.subr.mxu0 0.0
      %7037 = vmatpush1.msra.mxu0 0.0
      %7038 = vmatprep.subr.mxu0 0.0
      %7039 = vmatpush1.msra.mxu0 0.0
      %7040 = vmatprep.subr.mxu0 0.0
      %7041 = vmatpush1.msra.mxu0 0.0
      %7042 = vmatprep.subr.mxu0 0.0
      %7043 = vmatpush1.msra.mxu0 0.0
      %7044 = vmatprep.subr.mxu0 0.0
      %7045 = vmatpush1.msra.mxu0 0.0
      %7046 = vmatprep.subr.mxu0 0.0
      %v7047 = vand.u32 %v300, 4294901760
      %7048 = vmatpush1.msra.mxu0 %v7047
      %7049 = vmatprep.subr.mxu0 0.0
      %v7050 = vand.u32 %v299, 4294901760
      %7051 = vmatpush1.msra.mxu0 %v7050
      %7052 = vmatprep.subr.mxu0 0.0
      %v7053 = vand.u32 %v298, 4294901760
      %7054 = vmatpush1.msra.mxu0 %v7053
      %7055 = vmatprep.subr.mxu0 0.0
      %v7056 = vand.u32 %v297, 4294901760
      %7057 = vmatpush1.msra.mxu0 %v7056
      %7058 = vmatprep.subr.mxu0 0.0
      %7059 = vmatpush2.msra.mxu0 0.0
      %7060 = vmatprep.subr.mxu0 0.0
      %7061 = vmatpush2.msra.mxu0 0.0
      %7062 = vmatprep.subr.mxu0 0.0
      %7063 = vmatpush2.msra.mxu0 0.0
      %7064 = vmatprep.subr.mxu0 0.0
      %7065 = vmatpush2.msra.mxu0 0.0
      %7066 = vmatprep.subr.mxu0 0.0
      %7067 = vmatpush2.msra.mxu0 0.0
      %7068 = vmatprep.subr.mxu0 0.0
      %7069 = vmatpush2.msra.mxu0 0.0
      %7070 = vmatprep.subr.mxu0 0.0
      %7071 = vmatpush2.msra.mxu0 0.0
      %7072 = vmatprep.subr.mxu0 0.0
      %7073 = vmatpush2.msra.mxu0 0.0
      %7074 = vmatprep.subr.mxu0 0.0
      %7075 = vmatpush2.msra.mxu0 0.0
      %7076 = vmatprep.subr.mxu0 0.0
      %7077 = vmatpush2.msra.mxu0 0.0
      %7078 = vmatprep.subr.mxu0 0.0
      %7079 = vmatpush2.msra.mxu0 0.0
      %7080 = vmatprep.subr.mxu0 0.0
      %7081 = vmatpush2.msra.mxu0 0.0
      %7082 = vmatprep.subr.mxu0 0.0
      %7083 = vmatpush2.msra.mxu0 0.0
      %7084 = vmatprep.subr.mxu0 0.0
      %7085 = vmatpush2.msra.mxu0 0.0
      %7086 = vmatprep.subr.mxu0 0.0
      %7087 = vmatpush2.msra.mxu0 0.0
      %7088 = vmatprep.subr.mxu0 0.0
      %7089 = vmatpush2.msra.mxu0 0.0
      %7090 = vmatprep.mubr.f32.mxu0 0.0
      %v7091 = vand.u32 %v6285, 4294901760
      %v7092 = vsub.f32 %v6285, %v7091
      %v7093 = vand.u32 %v7092, 4294901760
      %7094 = vmatmul.mubr.f32.gmra.mxu0 %v7093
      %v7095 = vpop.f32.mrf.mxu0
      %v7096 = vadd.f32 %v7019, %v7095
      %v7097 = vpop.f32.mrf.mxu0
      %7098 = vdwg.mxu0
      %7099 = vmatprep.subr.mxu0 0.0
      %7100 = vmatpush1.msra.mxu0 0.0
      %7101 = vmatprep.subr.mxu0 0.0
      %7102 = vmatpush1.msra.mxu0 0.0
      %7103 = vmatprep.subr.mxu0 0.0
      %7104 = vmatpush1.msra.mxu0 0.0
      %7105 = vmatprep.subr.mxu0 0.0
      %7106 = vmatpush1.msra.mxu0 0.0
      %7107 = vmatprep.subr.mxu0 0.0
      %7108 = vmatpush1.msra.mxu0 0.0
      %7109 = vmatprep.subr.mxu0 0.0
      %7110 = vmatpush1.msra.mxu0 0.0
      %7111 = vmatprep.subr.mxu0 0.0
      %7112 = vmatpush1.msra.mxu0 0.0
      %7113 = vmatprep.subr.mxu0 0.0
      %7114 = vmatpush1.msra.mxu0 0.0
      %7115 = vmatprep.subr.mxu0 0.0
      %7116 = vmatpush1.msra.mxu0 0.0
      %7117 = vmatprep.subr.mxu0 0.0
      %7118 = vmatpush1.msra.mxu0 0.0
      %7119 = vmatprep.subr.mxu0 0.0
      %7120 = vmatpush1.msra.mxu0 0.0
      %7121 = vmatprep.subr.mxu0 0.0
      %7122 = vmatpush1.msra.mxu0 0.0
      %7123 = vmatprep.subr.mxu0 0.0
      %v7124 = vand.u32 %v300, 4294901760
      %v7125 = vsub.f32 %v300, %v7124
      %v7126 = vand.u32 %v7125, 4294901760
      %7127 = vmatpush1.msra.mxu0 %v7126
      %7128 = vmatprep.subr.mxu0 0.0
      %v7129 = vand.u32 %v299, 4294901760
      %v7130 = vsub.f32 %v299, %v7129
      %v7131 = vand.u32 %v7130, 4294901760
      %7132 = vmatpush1.msra.mxu0 %v7131
      %7133 = vmatprep.subr.mxu0 0.0
      %v7134 = vand.u32 %v298, 4294901760
      %v7135 = vsub.f32 %v298, %v7134
      %v7136 = vand.u32 %v7135, 4294901760
      %7137 = vmatpush1.msra.mxu0 %v7136
      %7138 = vmatprep.subr.mxu0 0.0
      %v7139 = vand.u32 %v297, 4294901760
      %v7140 = vsub.f32 %v297, %v7139
      %v7141 = vand.u32 %v7140, 4294901760
      %7142 = vmatpush1.msra.mxu0 %v7141
      %7143 = vmatprep.subr.mxu0 0.0
      %7144 = vmatpush2.msra.mxu0 0.0
      %7145 = vmatprep.subr.mxu0 0.0
      %7146 = vmatpush2.msra.mxu0 0.0
      %7147 = vmatprep.subr.mxu0 0.0
      %7148 = vmatpush2.msra.mxu0 0.0
      %7149 = vmatprep.subr.mxu0 0.0
      %7150 = vmatpush2.msra.mxu0 0.0
      %7151 = vmatprep.subr.mxu0 0.0
      %7152 = vmatpush2.msra.mxu0 0.0
      %7153 = vmatprep.subr.mxu0 0.0
      %7154 = vmatpush2.msra.mxu0 0.0
      %7155 = vmatprep.subr.mxu0 0.0
      %7156 = vmatpush2.msra.mxu0 0.0
      %7157 = vmatprep.subr.mxu0 0.0
      %7158 = vmatpush2.msra.mxu0 0.0
      %7159 = vmatprep.subr.mxu0 0.0
      %7160 = vmatpush2.msra.mxu0 0.0
      %7161 = vmatprep.subr.mxu0 0.0
      %7162 = vmatpush2.msra.mxu0 0.0
      %7163 = vmatprep.subr.mxu0 0.0
      %7164 = vmatpush2.msra.mxu0 0.0
      %7165 = vmatprep.subr.mxu0 0.0
      %7166 = vmatpush2.msra.mxu0 0.0
      %7167 = vmatprep.subr.mxu0 0.0
      %7168 = vmatpush2.msra.mxu0 0.0
      %7169 = vmatprep.subr.mxu0 0.0
      %7170 = vmatpush2.msra.mxu0 0.0
      %7171 = vmatprep.subr.mxu0 0.0
      %7172 = vmatpush2.msra.mxu0 0.0
      %7173 = vmatprep.subr.mxu0 0.0
      %7174 = vmatpush2.msra.mxu0 0.0
      %7175 = vmatprep.mubr.f32.mxu0 0.0
      %v7176 = vand.u32 %v6285, 4294901760
      %7177 = vmatmul.mubr.f32.gmra.mxu0 %v7176
      %v7178 = vpop.f32.mrf.mxu0
      %v7179 = vadd.f32 %v7096, %v7178
      %v7180 = vpop.f32.mrf.mxu0
      %7181 = vdwg.mxu0
      %7182 = vmatprep.subr.mxu0 0.0
      %7183 = vmatpush1.msra.mxu0 0.0
      %7184 = vmatprep.subr.mxu0 0.0
      %7185 = vmatpush1.msra.mxu0 0.0
      %7186 = vmatprep.subr.mxu0 0.0
      %7187 = vmatpush1.msra.mxu0 0.0
      %7188 = vmatprep.subr.mxu0 0.0
      %7189 = vmatpush1.msra.mxu0 0.0
      %7190 = vmatprep.subr.mxu0 0.0
      %7191 = vmatpush1.msra.mxu0 0.0
      %7192 = vmatprep.subr.mxu0 0.0
      %7193 = vmatpush1.msra.mxu0 0.0
      %7194 = vmatprep.subr.mxu0 0.0
      %7195 = vmatpush1.msra.mxu0 0.0
      %7196 = vmatprep.subr.mxu0 0.0
      %7197 = vmatpush1.msra.mxu0 0.0
      %7198 = vmatprep.subr.mxu0 0.0
      %7199 = vmatpush1.msra.mxu0 0.0
      %7200 = vmatprep.subr.mxu0 0.0
      %7201 = vmatpush1.msra.mxu0 0.0
      %7202 = vmatprep.subr.mxu0 0.0
      %7203 = vmatpush1.msra.mxu0 0.0
      %7204 = vmatprep.subr.mxu0 0.0
      %7205 = vmatpush1.msra.mxu0 0.0
      %7206 = vmatprep.subr.mxu0 0.0
      %v7207 = vand.u32 %v300, 4294901760
      %7208 = vmatpush1.msra.mxu0 %v7207
      %7209 = vmatprep.subr.mxu0 0.0
      %v7210 = vand.u32 %v299, 4294901760
      %7211 = vmatpush1.msra.mxu0 %v7210
      %7212 = vmatprep.subr.mxu0 0.0
      %v7213 = vand.u32 %v298, 4294901760
      %7214 = vmatpush1.msra.mxu0 %v7213
      %7215 = vmatprep.subr.mxu0 0.0
      %v7216 = vand.u32 %v297, 4294901760
      %7217 = vmatpush1.msra.mxu0 %v7216
      %7218 = vmatprep.subr.mxu0 0.0
      %7219 = vmatpush2.msra.mxu0 0.0
      %7220 = vmatprep.subr.mxu0 0.0
      %7221 = vmatpush2.msra.mxu0 0.0
      %7222 = vmatprep.subr.mxu0 0.0
      %7223 = vmatpush2.msra.mxu0 0.0
      %7224 = vmatprep.subr.mxu0 0.0
      %7225 = vmatpush2.msra.mxu0 0.0
      %7226 = vmatprep.subr.mxu0 0.0
      %7227 = vmatpush2.msra.mxu0 0.0
      %7228 = vmatprep.subr.mxu0 0.0
      %7229 = vmatpush2.msra.mxu0 0.0
      %7230 = vmatprep.subr.mxu0 0.0
      %7231 = vmatpush2.msra.mxu0 0.0
      %7232 = vmatprep.subr.mxu0 0.0
      %7233 = vmatpush2.msra.mxu0 0.0
      %7234 = vmatprep.subr.mxu0 0.0
      %7235 = vmatpush2.msra.mxu0 0.0
      %7236 = vmatprep.subr.mxu0 0.0
      %7237 = vmatpush2.msra.mxu0 0.0
      %7238 = vmatprep.subr.mxu0 0.0
      %7239 = vmatpush2.msra.mxu0 0.0
      %7240 = vmatprep.subr.mxu0 0.0
      %7241 = vmatpush2.msra.mxu0 0.0
      %7242 = vmatprep.subr.mxu0 0.0
      %7243 = vmatpush2.msra.mxu0 0.0
      %7244 = vmatprep.subr.mxu0 0.0
      %7245 = vmatpush2.msra.mxu0 0.0
      %7246 = vmatprep.subr.mxu0 0.0
      %7247 = vmatpush2.msra.mxu0 0.0
      %7248 = vmatprep.subr.mxu0 0.0
      %7249 = vmatpush2.msra.mxu0 0.0
      %7250 = vmatprep.mubr.f32.mxu0 0.0
      %v7251 = vand.u32 %v6285, 4294901760
      %7252 = vmatmul.mubr.f32.gmra.mxu0 %v7251
      %v7253 = vpop.f32.mrf.mxu0
      %v7254 = vadd.f32 %v7179, %v7253
      %v7255 = vpop.f32.mrf.mxu0
      %7256 = vdwg.mxu0
      %s7257 = scalar_lea.vmem %s259, 12
      %v7258 = vld [vmem:[%s7257] sm:$0x3]
      %v7259 = vadd.f32 %v7258, %v6769
      %v7260 = vxor.u32 %v7259, 2147483648
      %v7261 = vmul.f32 %v7260, 1.442695
      %v7262 = vpow.pop %v7261
      %v7263 = vadd.f32 %v7262, 1.0
      %v7264 = vrcp.pop %v7263
      %v7265 = vmul.f32 1.0, %v7264
      %s7266 = scalar_lea.vmem %s259, 14
      %v7267 = vld [vmem:[%s7266] sm:$0x3]
      %v7268 = vadd.f32 %v7267, %v7254
      %v7269 = vxor.u32 %v7268, 2147483648
      %v7270 = vmul.f32 %v7269, 1.442695
      %v7271 = vpow.pop %v7270
      %v7272 = vadd.f32 %v7271, 1.0
      %v7273 = vrcp.pop %v7272
      %v7274 = vmul.f32 1.0, %v7273
      %s7275 = scalar_lea.vmem %s259, 16
      %v7276 = vld [vmem:[%s7275] sm:$0x3]
      %7277 = vmatprep.subr.mxu0 0.0
      %7278 = vmatpush1.msra.mxu0 0.0
      %7279 = vmatprep.subr.mxu0 0.0
      %7280 = vmatpush1.msra.mxu0 0.0
      %7281 = vmatprep.subr.mxu0 0.0
      %7282 = vmatpush1.msra.mxu0 0.0
      %7283 = vmatprep.subr.mxu0 0.0
      %7284 = vmatpush1.msra.mxu0 0.0
      %7285 = vmatprep.subr.mxu0 0.0
      %7286 = vmatpush1.msra.mxu0 0.0
      %7287 = vmatprep.subr.mxu0 0.0
      %7288 = vmatpush1.msra.mxu0 0.0
      %7289 = vmatprep.subr.mxu0 0.0
      %7290 = vmatpush1.msra.mxu0 0.0
      %7291 = vmatprep.subr.mxu0 0.0
      %7292 = vmatpush1.msra.mxu0 0.0
      %7293 = vmatprep.subr.mxu0 0.0
      %7294 = vmatpush1.msra.mxu0 0.0
      %7295 = vmatprep.subr.mxu0 0.0
      %7296 = vmatpush1.msra.mxu0 0.0
      %7297 = vmatprep.subr.mxu0 0.0
      %7298 = vmatpush1.msra.mxu0 0.0
      %7299 = vmatprep.subr.mxu0 0.0
      %7300 = vmatpush1.msra.mxu0 0.0
      %7301 = vmatprep.subr.mxu0 0.0
      %v7302 = vand.u32 %v305, 4294901760
      %7303 = vmatpush1.msra.mxu0 %v7302
      %7304 = vmatprep.subr.mxu0 0.0
      %v7305 = vand.u32 %v304, 4294901760
      %7306 = vmatpush1.msra.mxu0 %v7305
      %7307 = vmatprep.subr.mxu0 0.0
      %v7308 = vand.u32 %v303, 4294901760
      %7309 = vmatpush1.msra.mxu0 %v7308
      %7310 = vmatprep.subr.mxu0 0.0
      %v7311 = vand.u32 %v302, 4294901760
      %7312 = vmatpush1.msra.mxu0 %v7311
      %7313 = vmatprep.subr.mxu0 0.0
      %7314 = vmatpush2.msra.mxu0 0.0
      %7315 = vmatprep.subr.mxu0 0.0
      %7316 = vmatpush2.msra.mxu0 0.0
      %7317 = vmatprep.subr.mxu0 0.0
      %7318 = vmatpush2.msra.mxu0 0.0
      %7319 = vmatprep.subr.mxu0 0.0
      %7320 = vmatpush2.msra.mxu0 0.0
      %7321 = vmatprep.subr.mxu0 0.0
      %7322 = vmatpush2.msra.mxu0 0.0
      %7323 = vmatprep.subr.mxu0 0.0
      %7324 = vmatpush2.msra.mxu0 0.0
      %7325 = vmatprep.subr.mxu0 0.0
      %7326 = vmatpush2.msra.mxu0 0.0
      %7327 = vmatprep.subr.mxu0 0.0
      %7328 = vmatpush2.msra.mxu0 0.0
      %7329 = vmatprep.subr.mxu0 0.0
      %7330 = vmatpush2.msra.mxu0 0.0
      %7331 = vmatprep.subr.mxu0 0.0
      %7332 = vmatpush2.msra.mxu0 0.0
      %7333 = vmatprep.subr.mxu0 0.0
      %7334 = vmatpush2.msra.mxu0 0.0
      %7335 = vmatprep.subr.mxu0 0.0
      %7336 = vmatpush2.msra.mxu0 0.0
      %7337 = vmatprep.subr.mxu0 0.0
      %7338 = vmatpush2.msra.mxu0 0.0
      %7339 = vmatprep.subr.mxu0 0.0
      %7340 = vmatpush2.msra.mxu0 0.0
      %7341 = vmatprep.subr.mxu0 0.0
      %7342 = vmatpush2.msra.mxu0 0.0
      %7343 = vmatprep.subr.mxu0 0.0
      %7344 = vmatpush2.msra.mxu0 0.0
      %7345 = vmatprep.mubr.f32.mxu0 0.0
      %v7346 = vand.u32 %v6285, 4294901760
      %v7347 = vsub.f32 %v6285, %v7346
      %v7348 = vand.u32 %v7347, 4294901760
      %v7349 = vsub.f32 %v7347, %v7348
      %v7350 = vand.u32 %v7349, 4294901760
      %7351 = vmatmul.mubr.f32.gmra.mxu0 %v7350
      %v7352 = vpop.f32.mrf.mxu0
      %v7353 = vadd.f32 %v321, %v7352
      %v7354 = vpop.f32.mrf.mxu0
      %7355 = vdwg.mxu0
      %7356 = vmatprep.subr.mxu0 0.0
      %7357 = vmatpush1.msra.mxu0 0.0
      %7358 = vmatprep.subr.mxu0 0.0
      %7359 = vmatpush1.msra.mxu0 0.0
      %7360 = vmatprep.subr.mxu0 0.0
      %7361 = vmatpush1.msra.mxu0 0.0
      %7362 = vmatprep.subr.mxu0 0.0
      %7363 = vmatpush1.msra.mxu0 0.0
      %7364 = vmatprep.subr.mxu0 0.0
      %7365 = vmatpush1.msra.mxu0 0.0
      %7366 = vmatprep.subr.mxu0 0.0
      %7367 = vmatpush1.msra.mxu0 0.0
      %7368 = vmatprep.subr.mxu0 0.0
      %7369 = vmatpush1.msra.mxu0 0.0
      %7370 = vmatprep.subr.mxu0 0.0
      %7371 = vmatpush1.msra.mxu0 0.0
      %7372 = vmatprep.subr.mxu0 0.0
      %7373 = vmatpush1.msra.mxu0 0.0
      %7374 = vmatprep.subr.mxu0 0.0
      %7375 = vmatpush1.msra.mxu0 0.0
      %7376 = vmatprep.subr.mxu0 0.0
      %7377 = vmatpush1.msra.mxu0 0.0
      %7378 = vmatprep.subr.mxu0 0.0
      %7379 = vmatpush1.msra.mxu0 0.0
      %7380 = vmatprep.subr.mxu0 0.0
      %v7381 = vand.u32 %v305, 4294901760
      %v7382 = vsub.f32 %v305, %v7381
      %v7383 = vand.u32 %v7382, 4294901760
      %v7384 = vsub.f32 %v7382, %v7383
      %v7385 = vand.u32 %v7384, 4294901760
      %7386 = vmatpush1.msra.mxu0 %v7385
      %7387 = vmatprep.subr.mxu0 0.0
      %v7388 = vand.u32 %v304, 4294901760
      %v7389 = vsub.f32 %v304, %v7388
      %v7390 = vand.u32 %v7389, 4294901760
      %v7391 = vsub.f32 %v7389, %v7390
      %v7392 = vand.u32 %v7391, 4294901760
      %7393 = vmatpush1.msra.mxu0 %v7392
      %7394 = vmatprep.subr.mxu0 0.0
      %v7395 = vand.u32 %v303, 4294901760
      %v7396 = vsub.f32 %v303, %v7395
      %v7397 = vand.u32 %v7396, 4294901760
      %v7398 = vsub.f32 %v7396, %v7397
      %v7399 = vand.u32 %v7398, 4294901760
      %7400 = vmatpush1.msra.mxu0 %v7399
      %7401 = vmatprep.subr.mxu0 0.0
      %v7402 = vand.u32 %v302, 4294901760
      %v7403 = vsub.f32 %v302, %v7402
      %v7404 = vand.u32 %v7403, 4294901760
      %v7405 = vsub.f32 %v7403, %v7404
      %v7406 = vand.u32 %v7405, 4294901760
      %7407 = vmatpush1.msra.mxu0 %v7406
      %7408 = vmatprep.subr.mxu0 0.0
      %7409 = vmatpush2.msra.mxu0 0.0
      %7410 = vmatprep.subr.mxu0 0.0
      %7411 = vmatpush2.msra.mxu0 0.0
      %7412 = vmatprep.subr.mxu0 0.0
      %7413 = vmatpush2.msra.mxu0 0.0
      %7414 = vmatprep.subr.mxu0 0.0
      %7415 = vmatpush2.msra.mxu0 0.0
      %7416 = vmatprep.subr.mxu0 0.0
      %7417 = vmatpush2.msra.mxu0 0.0
      %7418 = vmatprep.subr.mxu0 0.0
      %7419 = vmatpush2.msra.mxu0 0.0
      %7420 = vmatprep.subr.mxu0 0.0
      %7421 = vmatpush2.msra.mxu0 0.0
      %7422 = vmatprep.subr.mxu0 0.0
      %7423 = vmatpush2.msra.mxu0 0.0
      %7424 = vmatprep.subr.mxu0 0.0
      %7425 = vmatpush2.msra.mxu0 0.0
      %7426 = vmatprep.subr.mxu0 0.0
      %7427 = vmatpush2.msra.mxu0 0.0
      %7428 = vmatprep.subr.mxu0 0.0
      %7429 = vmatpush2.msra.mxu0 0.0
      %7430 = vmatprep.subr.mxu0 0.0
      %7431 = vmatpush2.msra.mxu0 0.0
      %7432 = vmatprep.subr.mxu0 0.0
      %7433 = vmatpush2.msra.mxu0 0.0
      %7434 = vmatprep.subr.mxu0 0.0
      %7435 = vmatpush2.msra.mxu0 0.0
      %7436 = vmatprep.subr.mxu0 0.0
      %7437 = vmatpush2.msra.mxu0 0.0
      %7438 = vmatprep.subr.mxu0 0.0
      %7439 = vmatpush2.msra.mxu0 0.0
      %7440 = vmatprep.mubr.f32.mxu0 0.0
      %v7441 = vand.u32 %v6285, 4294901760
      %7442 = vmatmul.mubr.f32.gmra.mxu0 %v7441
      %v7443 = vpop.f32.mrf.mxu0
      %v7444 = vadd.f32 %v7353, %v7443
      %v7445 = vpop.f32.mrf.mxu0
      %7446 = vdwg.mxu0
      %7447 = vmatprep.subr.mxu0 0.0
      %7448 = vmatpush1.msra.mxu0 0.0
      %7449 = vmatprep.subr.mxu0 0.0
      %7450 = vmatpush1.msra.mxu0 0.0
      %7451 = vmatprep.subr.mxu0 0.0
      %7452 = vmatpush1.msra.mxu0 0.0
      %7453 = vmatprep.subr.mxu0 0.0
      %7454 = vmatpush1.msra.mxu0 0.0
      %7455 = vmatprep.subr.mxu0 0.0
      %7456 = vmatpush1.msra.mxu0 0.0
      %7457 = vmatprep.subr.mxu0 0.0
      %7458 = vmatpush1.msra.mxu0 0.0
      %7459 = vmatprep.subr.mxu0 0.0
      %7460 = vmatpush1.msra.mxu0 0.0
      %7461 = vmatprep.subr.mxu0 0.0
      %7462 = vmatpush1.msra.mxu0 0.0
      %7463 = vmatprep.subr.mxu0 0.0
      %7464 = vmatpush1.msra.mxu0 0.0
      %7465 = vmatprep.subr.mxu0 0.0
      %7466 = vmatpush1.msra.mxu0 0.0
      %7467 = vmatprep.subr.mxu0 0.0
      %7468 = vmatpush1.msra.mxu0 0.0
      %7469 = vmatprep.subr.mxu0 0.0
      %7470 = vmatpush1.msra.mxu0 0.0
      %7471 = vmatprep.subr.mxu0 0.0
      %v7472 = vand.u32 %v305, 4294901760
      %v7473 = vsub.f32 %v305, %v7472
      %7474 = vmatpush1.msra.mxu0 %v7473
      %7475 = vmatprep.subr.mxu0 0.0
      %v7476 = vand.u32 %v304, 4294901760
      %v7477 = vsub.f32 %v304, %v7476
      %7478 = vmatpush1.msra.mxu0 %v7477
      %7479 = vmatprep.subr.mxu0 0.0
      %v7480 = vand.u32 %v303, 4294901760
      %v7481 = vsub.f32 %v303, %v7480
      %7482 = vmatpush1.msra.mxu0 %v7481
      %7483 = vmatprep.subr.mxu0 0.0
      %v7484 = vand.u32 %v302, 4294901760
      %v7485 = vsub.f32 %v302, %v7484
      %7486 = vmatpush1.msra.mxu0 %v7485
      %7487 = vmatprep.subr.mxu0 0.0
      %7488 = vmatpush2.msra.mxu0 0.0
      %7489 = vmatprep.subr.mxu0 0.0
      %7490 = vmatpush2.msra.mxu0 0.0
      %7491 = vmatprep.subr.mxu0 0.0
      %7492 = vmatpush2.msra.mxu0 0.0
      %7493 = vmatprep.subr.mxu0 0.0
      %7494 = vmatpush2.msra.mxu0 0.0
      %7495 = vmatprep.subr.mxu0 0.0
      %7496 = vmatpush2.msra.mxu0 0.0
      %7497 = vmatprep.subr.mxu0 0.0
      %7498 = vmatpush2.msra.mxu0 0.0
      %7499 = vmatprep.subr.mxu0 0.0
      %7500 = vmatpush2.msra.mxu0 0.0
      %7501 = vmatprep.subr.mxu0 0.0
      %7502 = vmatpush2.msra.mxu0 0.0
      %7503 = vmatprep.subr.mxu0 0.0
      %7504 = vmatpush2.msra.mxu0 0.0
      %7505 = vmatprep.subr.mxu0 0.0
      %7506 = vmatpush2.msra.mxu0 0.0
      %7507 = vmatprep.subr.mxu0 0.0
      %7508 = vmatpush2.msra.mxu0 0.0
      %7509 = vmatprep.subr.mxu0 0.0
      %7510 = vmatpush2.msra.mxu0 0.0
      %7511 = vmatprep.subr.mxu0 0.0
      %7512 = vmatpush2.msra.mxu0 0.0
      %7513 = vmatprep.subr.mxu0 0.0
      %7514 = vmatpush2.msra.mxu0 0.0
      %7515 = vmatprep.subr.mxu0 0.0
      %7516 = vmatpush2.msra.mxu0 0.0
      %7517 = vmatprep.subr.mxu0 0.0
      %7518 = vmatpush2.msra.mxu0 0.0
      %7519 = vmatprep.mubr.f32.mxu0 0.0
      %v7520 = vand.u32 %v6285, 4294901760
      %v7521 = vsub.f32 %v6285, %v7520
      %7522 = vmatmul.mubr.f32.gmra.mxu0 %v7521
      %v7523 = vpop.f32.mrf.mxu0
      %v7524 = vadd.f32 %v7444, %v7523
      %v7525 = vpop.f32.mrf.mxu0
      %7526 = vdwg.mxu0
      %7527 = vmatprep.subr.mxu0 0.0
      %7528 = vmatpush1.msra.mxu0 0.0
      %7529 = vmatprep.subr.mxu0 0.0
      %7530 = vmatpush1.msra.mxu0 0.0
      %7531 = vmatprep.subr.mxu0 0.0
      %7532 = vmatpush1.msra.mxu0 0.0
      %7533 = vmatprep.subr.mxu0 0.0
      %7534 = vmatpush1.msra.mxu0 0.0
      %7535 = vmatprep.subr.mxu0 0.0
      %7536 = vmatpush1.msra.mxu0 0.0
      %7537 = vmatprep.subr.mxu0 0.0
      %7538 = vmatpush1.msra.mxu0 0.0
      %7539 = vmatprep.subr.mxu0 0.0
      %7540 = vmatpush1.msra.mxu0 0.0
      %7541 = vmatprep.subr.mxu0 0.0
      %7542 = vmatpush1.msra.mxu0 0.0
      %7543 = vmatprep.subr.mxu0 0.0
      %7544 = vmatpush1.msra.mxu0 0.0
      %7545 = vmatprep.subr.mxu0 0.0
      %7546 = vmatpush1.msra.mxu0 0.0
      %7547 = vmatprep.subr.mxu0 0.0
      %7548 = vmatpush1.msra.mxu0 0.0
      %7549 = vmatprep.subr.mxu0 0.0
      %7550 = vmatpush1.msra.mxu0 0.0
      %7551 = vmatprep.subr.mxu0 0.0
      %v7552 = vand.u32 %v305, 4294901760
      %7553 = vmatpush1.msra.mxu0 %v7552
      %7554 = vmatprep.subr.mxu0 0.0
      %v7555 = vand.u32 %v304, 4294901760
      %7556 = vmatpush1.msra.mxu0 %v7555
      %7557 = vmatprep.subr.mxu0 0.0
      %v7558 = vand.u32 %v303, 4294901760
      %7559 = vmatpush1.msra.mxu0 %v7558
      %7560 = vmatprep.subr.mxu0 0.0
      %v7561 = vand.u32 %v302, 4294901760
      %7562 = vmatpush1.msra.mxu0 %v7561
      %7563 = vmatprep.subr.mxu0 0.0
      %7564 = vmatpush2.msra.mxu0 0.0
      %7565 = vmatprep.subr.mxu0 0.0
      %7566 = vmatpush2.msra.mxu0 0.0
      %7567 = vmatprep.subr.mxu0 0.0
      %7568 = vmatpush2.msra.mxu0 0.0
      %7569 = vmatprep.subr.mxu0 0.0
      %7570 = vmatpush2.msra.mxu0 0.0
      %7571 = vmatprep.subr.mxu0 0.0
      %7572 = vmatpush2.msra.mxu0 0.0
      %7573 = vmatprep.subr.mxu0 0.0
      %7574 = vmatpush2.msra.mxu0 0.0
      %7575 = vmatprep.subr.mxu0 0.0
      %7576 = vmatpush2.msra.mxu0 0.0
      %7577 = vmatprep.subr.mxu0 0.0
      %7578 = vmatpush2.msra.mxu0 0.0
      %7579 = vmatprep.subr.mxu0 0.0
      %7580 = vmatpush2.msra.mxu0 0.0
      %7581 = vmatprep.subr.mxu0 0.0
      %7582 = vmatpush2.msra.mxu0 0.0
      %7583 = vmatprep.subr.mxu0 0.0
      %7584 = vmatpush2.msra.mxu0 0.0
      %7585 = vmatprep.subr.mxu0 0.0
      %7586 = vmatpush2.msra.mxu0 0.0
      %7587 = vmatprep.subr.mxu0 0.0
      %7588 = vmatpush2.msra.mxu0 0.0
      %7589 = vmatprep.subr.mxu0 0.0
      %7590 = vmatpush2.msra.mxu0 0.0
      %7591 = vmatprep.subr.mxu0 0.0
      %7592 = vmatpush2.msra.mxu0 0.0
      %7593 = vmatprep.subr.mxu0 0.0
      %7594 = vmatpush2.msra.mxu0 0.0
      %7595 = vmatprep.mubr.f32.mxu0 0.0
      %v7596 = vand.u32 %v6285, 4294901760
      %v7597 = vsub.f32 %v6285, %v7596
      %v7598 = vand.u32 %v7597, 4294901760
      %7599 = vmatmul.mubr.f32.gmra.mxu0 %v7598
      %v7600 = vpop.f32.mrf.mxu0
      %v7601 = vadd.f32 %v7524, %v7600
      %v7602 = vpop.f32.mrf.mxu0
      %7603 = vdwg.mxu0
      %7604 = vmatprep.subr.mxu0 0.0
      %7605 = vmatpush1.msra.mxu0 0.0
      %7606 = vmatprep.subr.mxu0 0.0
      %7607 = vmatpush1.msra.mxu0 0.0
      %7608 = vmatprep.subr.mxu0 0.0
      %7609 = vmatpush1.msra.mxu0 0.0
      %7610 = vmatprep.subr.mxu0 0.0
      %7611 = vmatpush1.msra.mxu0 0.0
      %7612 = vmatprep.subr.mxu0 0.0
      %7613 = vmatpush1.msra.mxu0 0.0
      %7614 = vmatprep.subr.mxu0 0.0
      %7615 = vmatpush1.msra.mxu0 0.0
      %7616 = vmatprep.subr.mxu0 0.0
      %7617 = vmatpush1.msra.mxu0 0.0
      %7618 = vmatprep.subr.mxu0 0.0
      %7619 = vmatpush1.msra.mxu0 0.0
      %7620 = vmatprep.subr.mxu0 0.0
      %7621 = vmatpush1.msra.mxu0 0.0
      %7622 = vmatprep.subr.mxu0 0.0
      %7623 = vmatpush1.msra.mxu0 0.0
      %7624 = vmatprep.subr.mxu0 0.0
      %7625 = vmatpush1.msra.mxu0 0.0
      %7626 = vmatprep.subr.mxu0 0.0
      %7627 = vmatpush1.msra.mxu0 0.0
      %7628 = vmatprep.subr.mxu0 0.0
      %v7629 = vand.u32 %v305, 4294901760
      %v7630 = vsub.f32 %v305, %v7629
      %v7631 = vand.u32 %v7630, 4294901760
      %7632 = vmatpush1.msra.mxu0 %v7631
      %7633 = vmatprep.subr.mxu0 0.0
      %v7634 = vand.u32 %v304, 4294901760
      %v7635 = vsub.f32 %v304, %v7634
      %v7636 = vand.u32 %v7635, 4294901760
      %7637 = vmatpush1.msra.mxu0 %v7636
      %7638 = vmatprep.subr.mxu0 0.0
      %v7639 = vand.u32 %v303, 4294901760
      %v7640 = vsub.f32 %v303, %v7639
      %v7641 = vand.u32 %v7640, 4294901760
      %7642 = vmatpush1.msra.mxu0 %v7641
      %7643 = vmatprep.subr.mxu0 0.0
      %v7644 = vand.u32 %v302, 4294901760
      %v7645 = vsub.f32 %v302, %v7644
      %v7646 = vand.u32 %v7645, 4294901760
      %7647 = vmatpush1.msra.mxu0 %v7646
      %7648 = vmatprep.subr.mxu0 0.0
      %7649 = vmatpush2.msra.mxu0 0.0
      %7650 = vmatprep.subr.mxu0 0.0
      %7651 = vmatpush2.msra.mxu0 0.0
      %7652 = vmatprep.subr.mxu0 0.0
      %7653 = vmatpush2.msra.mxu0 0.0
      %7654 = vmatprep.subr.mxu0 0.0
      %7655 = vmatpush2.msra.mxu0 0.0
      %7656 = vmatprep.subr.mxu0 0.0
      %7657 = vmatpush2.msra.mxu0 0.0
      %7658 = vmatprep.subr.mxu0 0.0
      %7659 = vmatpush2.msra.mxu0 0.0
      %7660 = vmatprep.subr.mxu0 0.0
      %7661 = vmatpush2.msra.mxu0 0.0
      %7662 = vmatprep.subr.mxu0 0.0
      %7663 = vmatpush2.msra.mxu0 0.0
      %7664 = vmatprep.subr.mxu0 0.0
      %7665 = vmatpush2.msra.mxu0 0.0
      %7666 = vmatprep.subr.mxu0 0.0
      %7667 = vmatpush2.msra.mxu0 0.0
      %7668 = vmatprep.subr.mxu0 0.0
      %7669 = vmatpush2.msra.mxu0 0.0
      %7670 = vmatprep.subr.mxu0 0.0
      %7671 = vmatpush2.msra.mxu0 0.0
      %7672 = vmatprep.subr.mxu0 0.0
      %7673 = vmatpush2.msra.mxu0 0.0
      %7674 = vmatprep.subr.mxu0 0.0
      %7675 = vmatpush2.msra.mxu0 0.0
      %7676 = vmatprep.subr.mxu0 0.0
      %7677 = vmatpush2.msra.mxu0 0.0
      %7678 = vmatprep.subr.mxu0 0.0
      %7679 = vmatpush2.msra.mxu0 0.0
      %7680 = vmatprep.mubr.f32.mxu0 0.0
      %v7681 = vand.u32 %v6285, 4294901760
      %7682 = vmatmul.mubr.f32.gmra.mxu0 %v7681
      %v7683 = vpop.f32.mrf.mxu0
      %v7684 = vadd.f32 %v7601, %v7683
      %v7685 = vpop.f32.mrf.mxu0
      %7686 = vdwg.mxu0
      %7687 = vmatprep.subr.mxu0 0.0
      %7688 = vmatpush1.msra.mxu0 0.0
      %7689 = vmatprep.subr.mxu0 0.0
      %7690 = vmatpush1.msra.mxu0 0.0
      %7691 = vmatprep.subr.mxu0 0.0
      %7692 = vmatpush1.msra.mxu0 0.0
      %7693 = vmatprep.subr.mxu0 0.0
      %7694 = vmatpush1.msra.mxu0 0.0
      %7695 = vmatprep.subr.mxu0 0.0
      %7696 = vmatpush1.msra.mxu0 0.0
      %7697 = vmatprep.subr.mxu0 0.0
      %7698 = vmatpush1.msra.mxu0 0.0
      %7699 = vmatprep.subr.mxu0 0.0
      %7700 = vmatpush1.msra.mxu0 0.0
      %7701 = vmatprep.subr.mxu0 0.0
      %7702 = vmatpush1.msra.mxu0 0.0
      %7703 = vmatprep.subr.mxu0 0.0
      %7704 = vmatpush1.msra.mxu0 0.0
      %7705 = vmatprep.subr.mxu0 0.0
      %7706 = vmatpush1.msra.mxu0 0.0
      %7707 = vmatprep.subr.mxu0 0.0
      %7708 = vmatpush1.msra.mxu0 0.0
      %7709 = vmatprep.subr.mxu0 0.0
      %7710 = vmatpush1.msra.mxu0 0.0
      %7711 = vmatprep.subr.mxu0 0.0
      %v7712 = vand.u32 %v305, 4294901760
      %7713 = vmatpush1.msra.mxu0 %v7712
      %7714 = vmatprep.subr.mxu0 0.0
      %v7715 = vand.u32 %v304, 4294901760
      %7716 = vmatpush1.msra.mxu0 %v7715
      %7717 = vmatprep.subr.mxu0 0.0
      %v7718 = vand.u32 %v303, 4294901760
      %7719 = vmatpush1.msra.mxu0 %v7718
      %7720 = vmatprep.subr.mxu0 0.0
      %v7721 = vand.u32 %v302, 4294901760
      %7722 = vmatpush1.msra.mxu0 %v7721
      %7723 = vmatprep.subr.mxu0 0.0
      %7724 = vmatpush2.msra.mxu0 0.0
      %7725 = vmatprep.subr.mxu0 0.0
      %7726 = vmatpush2.msra.mxu0 0.0
      %7727 = vmatprep.subr.mxu0 0.0
      %7728 = vmatpush2.msra.mxu0 0.0
      %7729 = vmatprep.subr.mxu0 0.0
      %7730 = vmatpush2.msra.mxu0 0.0
      %7731 = vmatprep.subr.mxu0 0.0
      %7732 = vmatpush2.msra.mxu0 0.0
      %7733 = vmatprep.subr.mxu0 0.0
      %7734 = vmatpush2.msra.mxu0 0.0
      %7735 = vmatprep.subr.mxu0 0.0
      %7736 = vmatpush2.msra.mxu0 0.0
      %7737 = vmatprep.subr.mxu0 0.0
      %7738 = vmatpush2.msra.mxu0 0.0
      %7739 = vmatprep.subr.mxu0 0.0
      %7740 = vmatpush2.msra.mxu0 0.0
      %7741 = vmatprep.subr.mxu0 0.0
      %7742 = vmatpush2.msra.mxu0 0.0
      %7743 = vmatprep.subr.mxu0 0.0
      %7744 = vmatpush2.msra.mxu0 0.0
      %7745 = vmatprep.subr.mxu0 0.0
      %7746 = vmatpush2.msra.mxu0 0.0
      %7747 = vmatprep.subr.mxu0 0.0
      %7748 = vmatpush2.msra.mxu0 0.0
      %7749 = vmatprep.subr.mxu0 0.0
      %7750 = vmatpush2.msra.mxu0 0.0
      %7751 = vmatprep.subr.mxu0 0.0
      %7752 = vmatpush2.msra.mxu0 0.0
      %7753 = vmatprep.subr.mxu0 0.0
      %7754 = vmatpush2.msra.mxu0 0.0
      %7755 = vmatprep.mubr.f32.mxu0 0.0
      %v7756 = vand.u32 %v6285, 4294901760
      %7757 = vmatmul.mubr.f32.gmra.mxu0 %v7756
      %v7758 = vpop.f32.mrf.mxu0
      %v7759 = vadd.f32 %v7684, %v7758
      %v7760 = vpop.f32.mrf.mxu0
      %7761 = vdwg.mxu0
      %v7762 = vmul.f32 %v7265, %v7759
      %v7763 = vadd.f32 %v7276, %v7762
      %v7764 = vtanh.pop %v7763
      %v7765 = vsub.f32 1.0, %v7274
      %v7766 = vmul.f32 %v7765, %v7764
      %v7767 = vmul.f32 %v7274, %v4794
      %v7768 = vadd.f32 %v7766, %v7767
      %s7769 = scalar_lea.vmem %s275, 4
      %7770 = vst.msk [vmem:[%s7769] sm:$0x3] %vm1815, %v7768
      %v7772 = vsel %vm330, %v6281, 0
      %7774 = vmatprep.subr.mxu0 0.0
      %7775 = vmatpush1.msra.mxu0 0.0
      %7776 = vmatprep.subr.mxu0 0.0
      %7777 = vmatpush1.msra.mxu0 0.0
      %7778 = vmatprep.subr.mxu0 0.0
      %7779 = vmatpush1.msra.mxu0 0.0
      %7780 = vmatprep.subr.mxu0 0.0
      %7781 = vmatpush1.msra.mxu0 0.0
      %7782 = vmatprep.subr.mxu0 0.0
      %7783 = vmatpush1.msra.mxu0 0.0
      %7784 = vmatprep.subr.mxu0 0.0
      %7785 = vmatpush1.msra.mxu0 0.0
      %7786 = vmatprep.subr.mxu0 0.0
      %7787 = vmatpush1.msra.mxu0 0.0
      %7788 = vmatprep.subr.mxu0 0.0
      %7789 = vmatpush1.msra.mxu0 0.0
      %7790 = vmatprep.subr.mxu0 0.0
      %7791 = vmatpush1.msra.mxu0 0.0
      %7792 = vmatprep.subr.mxu0 0.0
      %7793 = vmatpush1.msra.mxu0 0.0
      %7794 = vmatprep.subr.mxu0 0.0
      %7795 = vmatpush1.msra.mxu0 0.0
      %7796 = vmatprep.subr.mxu0 0.0
      %7797 = vmatpush1.msra.mxu0 0.0
      %7798 = vmatprep.subr.mxu0 0.0
      %v7799 = vand.u32 %v310, 4294901760
      %7800 = vmatpush1.msra.mxu0 %v7799
      %7801 = vmatprep.subr.mxu0 0.0
      %v7802 = vand.u32 %v309, 4294901760
      %7803 = vmatpush1.msra.mxu0 %v7802
      %7804 = vmatprep.subr.mxu0 0.0
      %v7805 = vand.u32 %v308, 4294901760
      %7806 = vmatpush1.msra.mxu0 %v7805
      %7807 = vmatprep.subr.mxu0 0.0
      %v7808 = vand.u32 %v307, 4294901760
      %7809 = vmatpush1.msra.mxu0 %v7808
      %7810 = vmatprep.subr.mxu0 0.0
      %7811 = vmatpush2.msra.mxu0 0.0
      %7812 = vmatprep.subr.mxu0 0.0
      %7813 = vmatpush2.msra.mxu0 0.0
      %7814 = vmatprep.subr.mxu0 0.0
      %7815 = vmatpush2.msra.mxu0 0.0
      %7816 = vmatprep.subr.mxu0 0.0
      %7817 = vmatpush2.msra.mxu0 0.0
      %7818 = vmatprep.subr.mxu0 0.0
      %7819 = vmatpush2.msra.mxu0 0.0
      %7820 = vmatprep.subr.mxu0 0.0
      %7821 = vmatpush2.msra.mxu0 0.0
      %7822 = vmatprep.subr.mxu0 0.0
      %7823 = vmatpush2.msra.mxu0 0.0
      %7824 = vmatprep.subr.mxu0 0.0
      %7825 = vmatpush2.msra.mxu0 0.0
      %7826 = vmatprep.subr.mxu0 0.0
      %7827 = vmatpush2.msra.mxu0 0.0
      %7828 = vmatprep.subr.mxu0 0.0
      %7829 = vmatpush2.msra.mxu0 0.0
      %7830 = vmatprep.subr.mxu0 0.0
      %7831 = vmatpush2.msra.mxu0 0.0
      %7832 = vmatprep.subr.mxu0 0.0
      %7833 = vmatpush2.msra.mxu0 0.0
      %7834 = vmatprep.subr.mxu0 0.0
      %7835 = vmatpush2.msra.mxu0 0.0
      %7836 = vmatprep.subr.mxu0 0.0
      %7837 = vmatpush2.msra.mxu0 0.0
      %7838 = vmatprep.subr.mxu0 0.0
      %7839 = vmatpush2.msra.mxu0 0.0
      %7840 = vmatprep.subr.mxu0 0.0
      %7841 = vmatpush2.msra.mxu0 0.0
      %7842 = vmatprep.mubr.f32.mxu0 0.0
      %v7843 = vand.u32 %v7772, 4294901760
      %v7844 = vsub.f32 %v7772, %v7843
      %v7845 = vand.u32 %v7844, 4294901760
      %v7846 = vsub.f32 %v7844, %v7845
      %v7847 = vand.u32 %v7846, 4294901760
      %7848 = vmatmul.mubr.f32.gmra.mxu0 %v7847
      %v7849 = vpop.f32.mrf.mxu0
      %v7850 = vadd.f32 0.0, %v7849
      %v7851 = vpop.f32.mrf.mxu0
      %7852 = vdwg.mxu0
      %7853 = vmatprep.subr.mxu0 0.0
      %7854 = vmatpush1.msra.mxu0 0.0
      %7855 = vmatprep.subr.mxu0 0.0
      %7856 = vmatpush1.msra.mxu0 0.0
      %7857 = vmatprep.subr.mxu0 0.0
      %7858 = vmatpush1.msra.mxu0 0.0
      %7859 = vmatprep.subr.mxu0 0.0
      %7860 = vmatpush1.msra.mxu0 0.0
      %7861 = vmatprep.subr.mxu0 0.0
      %7862 = vmatpush1.msra.mxu0 0.0
      %7863 = vmatprep.subr.mxu0 0.0
      %7864 = vmatpush1.msra.mxu0 0.0
      %7865 = vmatprep.subr.mxu0 0.0
      %7866 = vmatpush1.msra.mxu0 0.0
      %7867 = vmatprep.subr.mxu0 0.0
      %7868 = vmatpush1.msra.mxu0 0.0
      %7869 = vmatprep.subr.mxu0 0.0
      %7870 = vmatpush1.msra.mxu0 0.0
      %7871 = vmatprep.subr.mxu0 0.0
      %7872 = vmatpush1.msra.mxu0 0.0
      %7873 = vmatprep.subr.mxu0 0.0
      %7874 = vmatpush1.msra.mxu0 0.0
      %7875 = vmatprep.subr.mxu0 0.0
      %7876 = vmatpush1.msra.mxu0 0.0
      %7877 = vmatprep.subr.mxu0 0.0
      %v7878 = vand.u32 %v310, 4294901760
      %v7879 = vsub.f32 %v310, %v7878
      %v7880 = vand.u32 %v7879, 4294901760
      %v7881 = vsub.f32 %v7879, %v7880
      %v7882 = vand.u32 %v7881, 4294901760
      %7883 = vmatpush1.msra.mxu0 %v7882
      %7884 = vmatprep.subr.mxu0 0.0
      %v7885 = vand.u32 %v309, 4294901760
      %v7886 = vsub.f32 %v309, %v7885
      %v7887 = vand.u32 %v7886, 4294901760
      %v7888 = vsub.f32 %v7886, %v7887
      %v7889 = vand.u32 %v7888, 4294901760
      %7890 = vmatpush1.msra.mxu0 %v7889
      %7891 = vmatprep.subr.mxu0 0.0
      %v7892 = vand.u32 %v308, 4294901760
      %v7893 = vsub.f32 %v308, %v7892
      %v7894 = vand.u32 %v7893, 4294901760
      %v7895 = vsub.f32 %v7893, %v7894
      %v7896 = vand.u32 %v7895, 4294901760
      %7897 = vmatpush1.msra.mxu0 %v7896
      %7898 = vmatprep.subr.mxu0 0.0
      %v7899 = vand.u32 %v307, 4294901760
      %v7900 = vsub.f32 %v307, %v7899
      %v7901 = vand.u32 %v7900, 4294901760
      %v7902 = vsub.f32 %v7900, %v7901
      %v7903 = vand.u32 %v7902, 4294901760
      %7904 = vmatpush1.msra.mxu0 %v7903
      %7905 = vmatprep.subr.mxu0 0.0
      %7906 = vmatpush2.msra.mxu0 0.0
      %7907 = vmatprep.subr.mxu0 0.0
      %7908 = vmatpush2.msra.mxu0 0.0
      %7909 = vmatprep.subr.mxu0 0.0
      %7910 = vmatpush2.msra.mxu0 0.0
      %7911 = vmatprep.subr.mxu0 0.0
      %7912 = vmatpush2.msra.mxu0 0.0
      %7913 = vmatprep.subr.mxu0 0.0
      %7914 = vmatpush2.msra.mxu0 0.0
      %7915 = vmatprep.subr.mxu0 0.0
      %7916 = vmatpush2.msra.mxu0 0.0
      %7917 = vmatprep.subr.mxu0 0.0
      %7918 = vmatpush2.msra.mxu0 0.0
      %7919 = vmatprep.subr.mxu0 0.0
      %7920 = vmatpush2.msra.mxu0 0.0
      %7921 = vmatprep.subr.mxu0 0.0
      %7922 = vmatpush2.msra.mxu0 0.0
      %7923 = vmatprep.subr.mxu0 0.0
      %7924 = vmatpush2.msra.mxu0 0.0
      %7925 = vmatprep.subr.mxu0 0.0
      %7926 = vmatpush2.msra.mxu0 0.0
      %7927 = vmatprep.subr.mxu0 0.0
      %7928 = vmatpush2.msra.mxu0 0.0
      %7929 = vmatprep.subr.mxu0 0.0
      %7930 = vmatpush2.msra.mxu0 0.0
      %7931 = vmatprep.subr.mxu0 0.0
      %7932 = vmatpush2.msra.mxu0 0.0
      %7933 = vmatprep.subr.mxu0 0.0
      %7934 = vmatpush2.msra.mxu0 0.0
      %7935 = vmatprep.subr.mxu0 0.0
      %7936 = vmatpush2.msra.mxu0 0.0
      %7937 = vmatprep.mubr.f32.mxu0 0.0
      %v7938 = vand.u32 %v7772, 4294901760
      %7939 = vmatmul.mubr.f32.gmra.mxu0 %v7938
      %v7940 = vpop.f32.mrf.mxu0
      %v7941 = vadd.f32 %v7850, %v7940
      %v7942 = vpop.f32.mrf.mxu0
      %7943 = vdwg.mxu0
      %7944 = vmatprep.subr.mxu0 0.0
      %7945 = vmatpush1.msra.mxu0 0.0
      %7946 = vmatprep.subr.mxu0 0.0
      %7947 = vmatpush1.msra.mxu0 0.0
      %7948 = vmatprep.subr.mxu0 0.0
      %7949 = vmatpush1.msra.mxu0 0.0
      %7950 = vmatprep.subr.mxu0 0.0
      %7951 = vmatpush1.msra.mxu0 0.0
      %7952 = vmatprep.subr.mxu0 0.0
      %7953 = vmatpush1.msra.mxu0 0.0
      %7954 = vmatprep.subr.mxu0 0.0
      %7955 = vmatpush1.msra.mxu0 0.0
      %7956 = vmatprep.subr.mxu0 0.0
      %7957 = vmatpush1.msra.mxu0 0.0
      %7958 = vmatprep.subr.mxu0 0.0
      %7959 = vmatpush1.msra.mxu0 0.0
      %7960 = vmatprep.subr.mxu0 0.0
      %7961 = vmatpush1.msra.mxu0 0.0
      %7962 = vmatprep.subr.mxu0 0.0
      %7963 = vmatpush1.msra.mxu0 0.0
      %7964 = vmatprep.subr.mxu0 0.0
      %7965 = vmatpush1.msra.mxu0 0.0
      %7966 = vmatprep.subr.mxu0 0.0
      %7967 = vmatpush1.msra.mxu0 0.0
      %7968 = vmatprep.subr.mxu0 0.0
      %v7969 = vand.u32 %v310, 4294901760
      %v7970 = vsub.f32 %v310, %v7969
      %7971 = vmatpush1.msra.mxu0 %v7970
      %7972 = vmatprep.subr.mxu0 0.0
      %v7973 = vand.u32 %v309, 4294901760
      %v7974 = vsub.f32 %v309, %v7973
      %7975 = vmatpush1.msra.mxu0 %v7974
      %7976 = vmatprep.subr.mxu0 0.0
      %v7977 = vand.u32 %v308, 4294901760
      %v7978 = vsub.f32 %v308, %v7977
      %7979 = vmatpush1.msra.mxu0 %v7978
      %7980 = vmatprep.subr.mxu0 0.0
      %v7981 = vand.u32 %v307, 4294901760
      %v7982 = vsub.f32 %v307, %v7981
      %7983 = vmatpush1.msra.mxu0 %v7982
      %7984 = vmatprep.subr.mxu0 0.0
      %7985 = vmatpush2.msra.mxu0 0.0
      %7986 = vmatprep.subr.mxu0 0.0
      %7987 = vmatpush2.msra.mxu0 0.0
      %7988 = vmatprep.subr.mxu0 0.0
      %7989 = vmatpush2.msra.mxu0 0.0
      %7990 = vmatprep.subr.mxu0 0.0
      %7991 = vmatpush2.msra.mxu0 0.0
      %7992 = vmatprep.subr.mxu0 0.0
      %7993 = vmatpush2.msra.mxu0 0.0
      %7994 = vmatprep.subr.mxu0 0.0
      %7995 = vmatpush2.msra.mxu0 0.0
      %7996 = vmatprep.subr.mxu0 0.0
      %7997 = vmatpush2.msra.mxu0 0.0
      %7998 = vmatprep.subr.mxu0 0.0
      %7999 = vmatpush2.msra.mxu0 0.0
      %8000 = vmatprep.subr.mxu0 0.0
      %8001 = vmatpush2.msra.mxu0 0.0
      %8002 = vmatprep.subr.mxu0 0.0
      %8003 = vmatpush2.msra.mxu0 0.0
      %8004 = vmatprep.subr.mxu0 0.0
      %8005 = vmatpush2.msra.mxu0 0.0
      %8006 = vmatprep.subr.mxu0 0.0
      %8007 = vmatpush2.msra.mxu0 0.0
      %8008 = vmatprep.subr.mxu0 0.0
      %8009 = vmatpush2.msra.mxu0 0.0
      %8010 = vmatprep.subr.mxu0 0.0
      %8011 = vmatpush2.msra.mxu0 0.0
      %8012 = vmatprep.subr.mxu0 0.0
      %8013 = vmatpush2.msra.mxu0 0.0
      %8014 = vmatprep.subr.mxu0 0.0
      %8015 = vmatpush2.msra.mxu0 0.0
      %8016 = vmatprep.mubr.f32.mxu0 0.0
      %v8017 = vand.u32 %v7772, 4294901760
      %v8018 = vsub.f32 %v7772, %v8017
      %8019 = vmatmul.mubr.f32.gmra.mxu0 %v8018
      %v8020 = vpop.f32.mrf.mxu0
      %v8021 = vadd.f32 %v7941, %v8020
      %v8022 = vpop.f32.mrf.mxu0
      %8023 = vdwg.mxu0
      %8024 = vmatprep.subr.mxu0 0.0
      %8025 = vmatpush1.msra.mxu0 0.0
      %8026 = vmatprep.subr.mxu0 0.0
      %8027 = vmatpush1.msra.mxu0 0.0
      %8028 = vmatprep.subr.mxu0 0.0
      %8029 = vmatpush1.msra.mxu0 0.0
      %8030 = vmatprep.subr.mxu0 0.0
      %8031 = vmatpush1.msra.mxu0 0.0
      %8032 = vmatprep.subr.mxu0 0.0
      %8033 = vmatpush1.msra.mxu0 0.0
      %8034 = vmatprep.subr.mxu0 0.0
      %8035 = vmatpush1.msra.mxu0 0.0
      %8036 = vmatprep.subr.mxu0 0.0
      %8037 = vmatpush1.msra.mxu0 0.0
      %8038 = vmatprep.subr.mxu0 0.0
      %8039 = vmatpush1.msra.mxu0 0.0
      %8040 = vmatprep.subr.mxu0 0.0
      %8041 = vmatpush1.msra.mxu0 0.0
      %8042 = vmatprep.subr.mxu0 0.0
      %8043 = vmatpush1.msra.mxu0 0.0
      %8044 = vmatprep.subr.mxu0 0.0
      %8045 = vmatpush1.msra.mxu0 0.0
      %8046 = vmatprep.subr.mxu0 0.0
      %8047 = vmatpush1.msra.mxu0 0.0
      %8048 = vmatprep.subr.mxu0 0.0
      %v8049 = vand.u32 %v310, 4294901760
      %8050 = vmatpush1.msra.mxu0 %v8049
      %8051 = vmatprep.subr.mxu0 0.0
      %v8052 = vand.u32 %v309, 4294901760
      %8053 = vmatpush1.msra.mxu0 %v8052
      %8054 = vmatprep.subr.mxu0 0.0
      %v8055 = vand.u32 %v308, 4294901760
      %8056 = vmatpush1.msra.mxu0 %v8055
      %8057 = vmatprep.subr.mxu0 0.0
      %v8058 = vand.u32 %v307, 4294901760
      %8059 = vmatpush1.msra.mxu0 %v8058
      %8060 = vmatprep.subr.mxu0 0.0
      %8061 = vmatpush2.msra.mxu0 0.0
      %8062 = vmatprep.subr.mxu0 0.0
      %8063 = vmatpush2.msra.mxu0 0.0
      %8064 = vmatprep.subr.mxu0 0.0
      %8065 = vmatpush2.msra.mxu0 0.0
      %8066 = vmatprep.subr.mxu0 0.0
      %8067 = vmatpush2.msra.mxu0 0.0
      %8068 = vmatprep.subr.mxu0 0.0
      %8069 = vmatpush2.msra.mxu0 0.0
      %8070 = vmatprep.subr.mxu0 0.0
      %8071 = vmatpush2.msra.mxu0 0.0
      %8072 = vmatprep.subr.mxu0 0.0
      %8073 = vmatpush2.msra.mxu0 0.0
      %8074 = vmatprep.subr.mxu0 0.0
      %8075 = vmatpush2.msra.mxu0 0.0
      %8076 = vmatprep.subr.mxu0 0.0
      %8077 = vmatpush2.msra.mxu0 0.0
      %8078 = vmatprep.subr.mxu0 0.0
      %8079 = vmatpush2.msra.mxu0 0.0
      %8080 = vmatprep.subr.mxu0 0.0
      %8081 = vmatpush2.msra.mxu0 0.0
      %8082 = vmatprep.subr.mxu0 0.0
      %8083 = vmatpush2.msra.mxu0 0.0
      %8084 = vmatprep.subr.mxu0 0.0
      %8085 = vmatpush2.msra.mxu0 0.0
      %8086 = vmatprep.subr.mxu0 0.0
      %8087 = vmatpush2.msra.mxu0 0.0
      %8088 = vmatprep.subr.mxu0 0.0
      %8089 = vmatpush2.msra.mxu0 0.0
      %8090 = vmatprep.subr.mxu0 0.0
      %8091 = vmatpush2.msra.mxu0 0.0
      %8092 = vmatprep.mubr.f32.mxu0 0.0
      %v8093 = vand.u32 %v7772, 4294901760
      %v8094 = vsub.f32 %v7772, %v8093
      %v8095 = vand.u32 %v8094, 4294901760
      %8096 = vmatmul.mubr.f32.gmra.mxu0 %v8095
      %v8097 = vpop.f32.mrf.mxu0
      %v8098 = vadd.f32 %v8021, %v8097
      %v8099 = vpop.f32.mrf.mxu0
      %8100 = vdwg.mxu0
      %8101 = vmatprep.subr.mxu0 0.0
      %8102 = vmatpush1.msra.mxu0 0.0
      %8103 = vmatprep.subr.mxu0 0.0
      %8104 = vmatpush1.msra.mxu0 0.0
      %8105 = vmatprep.subr.mxu0 0.0
      %8106 = vmatpush1.msra.mxu0 0.0
      %8107 = vmatprep.subr.mxu0 0.0
      %8108 = vmatpush1.msra.mxu0 0.0
      %8109 = vmatprep.subr.mxu0 0.0
      %8110 = vmatpush1.msra.mxu0 0.0
      %8111 = vmatprep.subr.mxu0 0.0
      %8112 = vmatpush1.msra.mxu0 0.0
      %8113 = vmatprep.subr.mxu0 0.0
      %8114 = vmatpush1.msra.mxu0 0.0
      %8115 = vmatprep.subr.mxu0 0.0
      %8116 = vmatpush1.msra.mxu0 0.0
      %8117 = vmatprep.subr.mxu0 0.0
      %8118 = vmatpush1.msra.mxu0 0.0
      %8119 = vmatprep.subr.mxu0 0.0
      %8120 = vmatpush1.msra.mxu0 0.0
      %8121 = vmatprep.subr.mxu0 0.0
      %8122 = vmatpush1.msra.mxu0 0.0
      %8123 = vmatprep.subr.mxu0 0.0
      %8124 = vmatpush1.msra.mxu0 0.0
      %8125 = vmatprep.subr.mxu0 0.0
      %v8126 = vand.u32 %v310, 4294901760
      %v8127 = vsub.f32 %v310, %v8126
      %v8128 = vand.u32 %v8127, 4294901760
      %8129 = vmatpush1.msra.mxu0 %v8128
      %8130 = vmatprep.subr.mxu0 0.0
      %v8131 = vand.u32 %v309, 4294901760
      %v8132 = vsub.f32 %v309, %v8131
      %v8133 = vand.u32 %v8132, 4294901760
      %8134 = vmatpush1.msra.mxu0 %v8133
      %8135 = vmatprep.subr.mxu0 0.0
      %v8136 = vand.u32 %v308, 4294901760
      %v8137 = vsub.f32 %v308, %v8136
      %v8138 = vand.u32 %v8137, 4294901760
      %8139 = vmatpush1.msra.mxu0 %v8138
      %8140 = vmatprep.subr.mxu0 0.0
      %v8141 = vand.u32 %v307, 4294901760
      %v8142 = vsub.f32 %v307, %v8141
      %v8143 = vand.u32 %v8142, 4294901760
      %8144 = vmatpush1.msra.mxu0 %v8143
      %8145 = vmatprep.subr.mxu0 0.0
      %8146 = vmatpush2.msra.mxu0 0.0
      %8147 = vmatprep.subr.mxu0 0.0
      %8148 = vmatpush2.msra.mxu0 0.0
      %8149 = vmatprep.subr.mxu0 0.0
      %8150 = vmatpush2.msra.mxu0 0.0
      %8151 = vmatprep.subr.mxu0 0.0
      %8152 = vmatpush2.msra.mxu0 0.0
      %8153 = vmatprep.subr.mxu0 0.0
      %8154 = vmatpush2.msra.mxu0 0.0
      %8155 = vmatprep.subr.mxu0 0.0
      %8156 = vmatpush2.msra.mxu0 0.0
      %8157 = vmatprep.subr.mxu0 0.0
      %8158 = vmatpush2.msra.mxu0 0.0
      %8159 = vmatprep.subr.mxu0 0.0
      %8160 = vmatpush2.msra.mxu0 0.0
      %8161 = vmatprep.subr.mxu0 0.0
      %8162 = vmatpush2.msra.mxu0 0.0
      %8163 = vmatprep.subr.mxu0 0.0
      %8164 = vmatpush2.msra.mxu0 0.0
      %8165 = vmatprep.subr.mxu0 0.0
      %8166 = vmatpush2.msra.mxu0 0.0
      %8167 = vmatprep.subr.mxu0 0.0
      %8168 = vmatpush2.msra.mxu0 0.0
      %8169 = vmatprep.subr.mxu0 0.0
      %8170 = vmatpush2.msra.mxu0 0.0
      %8171 = vmatprep.subr.mxu0 0.0
      %8172 = vmatpush2.msra.mxu0 0.0
      %8173 = vmatprep.subr.mxu0 0.0
      %8174 = vmatpush2.msra.mxu0 0.0
      %8175 = vmatprep.subr.mxu0 0.0
      %8176 = vmatpush2.msra.mxu0 0.0
      %8177 = vmatprep.mubr.f32.mxu0 0.0
      %v8178 = vand.u32 %v7772, 4294901760
      %8179 = vmatmul.mubr.f32.gmra.mxu0 %v8178
      %v8180 = vpop.f32.mrf.mxu0
      %v8181 = vadd.f32 %v8098, %v8180
      %v8182 = vpop.f32.mrf.mxu0
      %8183 = vdwg.mxu0
      %8184 = vmatprep.subr.mxu0 0.0
      %8185 = vmatpush1.msra.mxu0 0.0
      %8186 = vmatprep.subr.mxu0 0.0
      %8187 = vmatpush1.msra.mxu0 0.0
      %8188 = vmatprep.subr.mxu0 0.0
      %8189 = vmatpush1.msra.mxu0 0.0
      %8190 = vmatprep.subr.mxu0 0.0
      %8191 = vmatpush1.msra.mxu0 0.0
      %8192 = vmatprep.subr.mxu0 0.0
      %8193 = vmatpush1.msra.mxu0 0.0
      %8194 = vmatprep.subr.mxu0 0.0
      %8195 = vmatpush1.msra.mxu0 0.0
      %8196 = vmatprep.subr.mxu0 0.0
      %8197 = vmatpush1.msra.mxu0 0.0
      %8198 = vmatprep.subr.mxu0 0.0
      %8199 = vmatpush1.msra.mxu0 0.0
      %8200 = vmatprep.subr.mxu0 0.0
      %8201 = vmatpush1.msra.mxu0 0.0
      %8202 = vmatprep.subr.mxu0 0.0
      %8203 = vmatpush1.msra.mxu0 0.0
      %8204 = vmatprep.subr.mxu0 0.0
      %8205 = vmatpush1.msra.mxu0 0.0
      %8206 = vmatprep.subr.mxu0 0.0
      %8207 = vmatpush1.msra.mxu0 0.0
      %8208 = vmatprep.subr.mxu0 0.0
      %v8209 = vand.u32 %v310, 4294901760
      %8210 = vmatpush1.msra.mxu0 %v8209
      %8211 = vmatprep.subr.mxu0 0.0
      %v8212 = vand.u32 %v309, 4294901760
      %8213 = vmatpush1.msra.mxu0 %v8212
      %8214 = vmatprep.subr.mxu0 0.0
      %v8215 = vand.u32 %v308, 4294901760
      %8216 = vmatpush1.msra.mxu0 %v8215
      %8217 = vmatprep.subr.mxu0 0.0
      %v8218 = vand.u32 %v307, 4294901760
      %8219 = vmatpush1.msra.mxu0 %v8218
      %8220 = vmatprep.subr.mxu0 0.0
      %8221 = vmatpush2.msra.mxu0 0.0
      %8222 = vmatprep.subr.mxu0 0.0
      %8223 = vmatpush2.msra.mxu0 0.0
      %8224 = vmatprep.subr.mxu0 0.0
      %8225 = vmatpush2.msra.mxu0 0.0
      %8226 = vmatprep.subr.mxu0 0.0
      %8227 = vmatpush2.msra.mxu0 0.0
      %8228 = vmatprep.subr.mxu0 0.0
      %8229 = vmatpush2.msra.mxu0 0.0
      %8230 = vmatprep.subr.mxu0 0.0
      %8231 = vmatpush2.msra.mxu0 0.0
      %8232 = vmatprep.subr.mxu0 0.0
      %8233 = vmatpush2.msra.mxu0 0.0
      %8234 = vmatprep.subr.mxu0 0.0
      %8235 = vmatpush2.msra.mxu0 0.0
      %8236 = vmatprep.subr.mxu0 0.0
      %8237 = vmatpush2.msra.mxu0 0.0
      %8238 = vmatprep.subr.mxu0 0.0
      %8239 = vmatpush2.msra.mxu0 0.0
      %8240 = vmatprep.subr.mxu0 0.0
      %8241 = vmatpush2.msra.mxu0 0.0
      %8242 = vmatprep.subr.mxu0 0.0
      %8243 = vmatpush2.msra.mxu0 0.0
      %8244 = vmatprep.subr.mxu0 0.0
      %8245 = vmatpush2.msra.mxu0 0.0
      %8246 = vmatprep.subr.mxu0 0.0
      %8247 = vmatpush2.msra.mxu0 0.0
      %8248 = vmatprep.subr.mxu0 0.0
      %8249 = vmatpush2.msra.mxu0 0.0
      %8250 = vmatprep.subr.mxu0 0.0
      %8251 = vmatpush2.msra.mxu0 0.0
      %8252 = vmatprep.mubr.f32.mxu0 0.0
      %v8253 = vand.u32 %v7772, 4294901760
      %8254 = vmatmul.mubr.f32.gmra.mxu0 %v8253
      %v8255 = vpop.f32.mrf.mxu0
      %v8256 = vadd.f32 %v8181, %v8255
      %v8257 = vpop.f32.mrf.mxu0
      %8258 = vdwg.mxu0
      %8259 = vmatprep.subr.mxu0 0.0
      %8260 = vmatpush1.msra.mxu0 0.0
      %8261 = vmatprep.subr.mxu0 0.0
      %8262 = vmatpush1.msra.mxu0 0.0
      %8263 = vmatprep.subr.mxu0 0.0
      %8264 = vmatpush1.msra.mxu0 0.0
      %8265 = vmatprep.subr.mxu0 0.0
      %8266 = vmatpush1.msra.mxu0 0.0
      %8267 = vmatprep.subr.mxu0 0.0
      %8268 = vmatpush1.msra.mxu0 0.0
      %8269 = vmatprep.subr.mxu0 0.0
      %8270 = vmatpush1.msra.mxu0 0.0
      %8271 = vmatprep.subr.mxu0 0.0
      %8272 = vmatpush1.msra.mxu0 0.0
      %8273 = vmatprep.subr.mxu0 0.0
      %8274 = vmatpush1.msra.mxu0 0.0
      %8275 = vmatprep.subr.mxu0 0.0
      %8276 = vmatpush1.msra.mxu0 0.0
      %8277 = vmatprep.subr.mxu0 0.0
      %8278 = vmatpush1.msra.mxu0 0.0
      %8279 = vmatprep.subr.mxu0 0.0
      %8280 = vmatpush1.msra.mxu0 0.0
      %8281 = vmatprep.subr.mxu0 0.0
      %8282 = vmatpush1.msra.mxu0 0.0
      %8283 = vmatprep.subr.mxu0 0.0
      %v8284 = vand.u32 %v315, 4294901760
      %8285 = vmatpush1.msra.mxu0 %v8284
      %8286 = vmatprep.subr.mxu0 0.0
      %v8287 = vand.u32 %v314, 4294901760
      %8288 = vmatpush1.msra.mxu0 %v8287
      %8289 = vmatprep.subr.mxu0 0.0
      %v8290 = vand.u32 %v313, 4294901760
      %8291 = vmatpush1.msra.mxu0 %v8290
      %8292 = vmatprep.subr.mxu0 0.0
      %v8293 = vand.u32 %v312, 4294901760
      %8294 = vmatpush1.msra.mxu0 %v8293
      %8295 = vmatprep.subr.mxu0 0.0
      %8296 = vmatpush2.msra.mxu0 0.0
      %8297 = vmatprep.subr.mxu0 0.0
      %8298 = vmatpush2.msra.mxu0 0.0
      %8299 = vmatprep.subr.mxu0 0.0
      %8300 = vmatpush2.msra.mxu0 0.0
      %8301 = vmatprep.subr.mxu0 0.0
      %8302 = vmatpush2.msra.mxu0 0.0
      %8303 = vmatprep.subr.mxu0 0.0
      %8304 = vmatpush2.msra.mxu0 0.0
      %8305 = vmatprep.subr.mxu0 0.0
      %8306 = vmatpush2.msra.mxu0 0.0
      %8307 = vmatprep.subr.mxu0 0.0
      %8308 = vmatpush2.msra.mxu0 0.0
      %8309 = vmatprep.subr.mxu0 0.0
      %8310 = vmatpush2.msra.mxu0 0.0
      %8311 = vmatprep.subr.mxu0 0.0
      %8312 = vmatpush2.msra.mxu0 0.0
      %8313 = vmatprep.subr.mxu0 0.0
      %8314 = vmatpush2.msra.mxu0 0.0
      %8315 = vmatprep.subr.mxu0 0.0
      %8316 = vmatpush2.msra.mxu0 0.0
      %8317 = vmatprep.subr.mxu0 0.0
      %8318 = vmatpush2.msra.mxu0 0.0
      %8319 = vmatprep.subr.mxu0 0.0
      %8320 = vmatpush2.msra.mxu0 0.0
      %8321 = vmatprep.subr.mxu0 0.0
      %8322 = vmatpush2.msra.mxu0 0.0
      %8323 = vmatprep.subr.mxu0 0.0
      %8324 = vmatpush2.msra.mxu0 0.0
      %8325 = vmatprep.subr.mxu0 0.0
      %8326 = vmatpush2.msra.mxu0 0.0
      %8327 = vmatprep.mubr.f32.mxu0 0.0
      %v8328 = vand.u32 %v7772, 4294901760
      %v8329 = vsub.f32 %v7772, %v8328
      %v8330 = vand.u32 %v8329, 4294901760
      %v8331 = vsub.f32 %v8329, %v8330
      %v8332 = vand.u32 %v8331, 4294901760
      %8333 = vmatmul.mubr.f32.gmra.mxu0 %v8332
      %v8334 = vpop.f32.mrf.mxu0
      %v8335 = vadd.f32 0.0, %v8334
      %v8336 = vpop.f32.mrf.mxu0
      %8337 = vdwg.mxu0
      %8338 = vmatprep.subr.mxu0 0.0
      %8339 = vmatpush1.msra.mxu0 0.0
      %8340 = vmatprep.subr.mxu0 0.0
      %8341 = vmatpush1.msra.mxu0 0.0
      %8342 = vmatprep.subr.mxu0 0.0
      %8343 = vmatpush1.msra.mxu0 0.0
      %8344 = vmatprep.subr.mxu0 0.0
      %8345 = vmatpush1.msra.mxu0 0.0
      %8346 = vmatprep.subr.mxu0 0.0
      %8347 = vmatpush1.msra.mxu0 0.0
      %8348 = vmatprep.subr.mxu0 0.0
      %8349 = vmatpush1.msra.mxu0 0.0
      %8350 = vmatprep.subr.mxu0 0.0
      %8351 = vmatpush1.msra.mxu0 0.0
      %8352 = vmatprep.subr.mxu0 0.0
      %8353 = vmatpush1.msra.mxu0 0.0
      %8354 = vmatprep.subr.mxu0 0.0
      %8355 = vmatpush1.msra.mxu0 0.0
      %8356 = vmatprep.subr.mxu0 0.0
      %8357 = vmatpush1.msra.mxu0 0.0
      %8358 = vmatprep.subr.mxu0 0.0
      %8359 = vmatpush1.msra.mxu0 0.0
      %8360 = vmatprep.subr.mxu0 0.0
      %8361 = vmatpush1.msra.mxu0 0.0
      %8362 = vmatprep.subr.mxu0 0.0
      %v8363 = vand.u32 %v315, 4294901760
      %v8364 = vsub.f32 %v315, %v8363
      %v8365 = vand.u32 %v8364, 4294901760
      %v8366 = vsub.f32 %v8364, %v8365
      %v8367 = vand.u32 %v8366, 4294901760
      %8368 = vmatpush1.msra.mxu0 %v8367
      %8369 = vmatprep.subr.mxu0 0.0
      %v8370 = vand.u32 %v314, 4294901760
      %v8371 = vsub.f32 %v314, %v8370
      %v8372 = vand.u32 %v8371, 4294901760
      %v8373 = vsub.f32 %v8371, %v8372
      %v8374 = vand.u32 %v8373, 4294901760
      %8375 = vmatpush1.msra.mxu0 %v8374
      %8376 = vmatprep.subr.mxu0 0.0
      %v8377 = vand.u32 %v313, 4294901760
      %v8378 = vsub.f32 %v313, %v8377
      %v8379 = vand.u32 %v8378, 4294901760
      %v8380 = vsub.f32 %v8378, %v8379
      %v8381 = vand.u32 %v8380, 4294901760
      %8382 = vmatpush1.msra.mxu0 %v8381
      %8383 = vmatprep.subr.mxu0 0.0
      %v8384 = vand.u32 %v312, 4294901760
      %v8385 = vsub.f32 %v312, %v8384
      %v8386 = vand.u32 %v8385, 4294901760
      %v8387 = vsub.f32 %v8385, %v8386
      %v8388 = vand.u32 %v8387, 4294901760
      %8389 = vmatpush1.msra.mxu0 %v8388
      %8390 = vmatprep.subr.mxu0 0.0
      %8391 = vmatpush2.msra.mxu0 0.0
      %8392 = vmatprep.subr.mxu0 0.0
      %8393 = vmatpush2.msra.mxu0 0.0
      %8394 = vmatprep.subr.mxu0 0.0
      %8395 = vmatpush2.msra.mxu0 0.0
      %8396 = vmatprep.subr.mxu0 0.0
      %8397 = vmatpush2.msra.mxu0 0.0
      %8398 = vmatprep.subr.mxu0 0.0
      %8399 = vmatpush2.msra.mxu0 0.0
      %8400 = vmatprep.subr.mxu0 0.0
      %8401 = vmatpush2.msra.mxu0 0.0
      %8402 = vmatprep.subr.mxu0 0.0
      %8403 = vmatpush2.msra.mxu0 0.0
      %8404 = vmatprep.subr.mxu0 0.0
      %8405 = vmatpush2.msra.mxu0 0.0
      %8406 = vmatprep.subr.mxu0 0.0
      %8407 = vmatpush2.msra.mxu0 0.0
      %8408 = vmatprep.subr.mxu0 0.0
      %8409 = vmatpush2.msra.mxu0 0.0
      %8410 = vmatprep.subr.mxu0 0.0
      %8411 = vmatpush2.msra.mxu0 0.0
      %8412 = vmatprep.subr.mxu0 0.0
      %8413 = vmatpush2.msra.mxu0 0.0
      %8414 = vmatprep.subr.mxu0 0.0
      %8415 = vmatpush2.msra.mxu0 0.0
      %8416 = vmatprep.subr.mxu0 0.0
      %8417 = vmatpush2.msra.mxu0 0.0
      %8418 = vmatprep.subr.mxu0 0.0
      %8419 = vmatpush2.msra.mxu0 0.0
      %8420 = vmatprep.subr.mxu0 0.0
      %8421 = vmatpush2.msra.mxu0 0.0
      %8422 = vmatprep.mubr.f32.mxu0 0.0
      %v8423 = vand.u32 %v7772, 4294901760
      %8424 = vmatmul.mubr.f32.gmra.mxu0 %v8423
      %v8425 = vpop.f32.mrf.mxu0
      %v8426 = vadd.f32 %v8335, %v8425
      %v8427 = vpop.f32.mrf.mxu0
      %8428 = vdwg.mxu0
      %8429 = vmatprep.subr.mxu0 0.0
      %8430 = vmatpush1.msra.mxu0 0.0
      %8431 = vmatprep.subr.mxu0 0.0
      %8432 = vmatpush1.msra.mxu0 0.0
      %8433 = vmatprep.subr.mxu0 0.0
      %8434 = vmatpush1.msra.mxu0 0.0
      %8435 = vmatprep.subr.mxu0 0.0
      %8436 = vmatpush1.msra.mxu0 0.0
      %8437 = vmatprep.subr.mxu0 0.0
      %8438 = vmatpush1.msra.mxu0 0.0
      %8439 = vmatprep.subr.mxu0 0.0
      %8440 = vmatpush1.msra.mxu0 0.0
      %8441 = vmatprep.subr.mxu0 0.0
      %8442 = vmatpush1.msra.mxu0 0.0
      %8443 = vmatprep.subr.mxu0 0.0
      %8444 = vmatpush1.msra.mxu0 0.0
      %8445 = vmatprep.subr.mxu0 0.0
      %8446 = vmatpush1.msra.mxu0 0.0
      %8447 = vmatprep.subr.mxu0 0.0
      %8448 = vmatpush1.msra.mxu0 0.0
      %8449 = vmatprep.subr.mxu0 0.0
      %8450 = vmatpush1.msra.mxu0 0.0
      %8451 = vmatprep.subr.mxu0 0.0
      %8452 = vmatpush1.msra.mxu0 0.0
      %8453 = vmatprep.subr.mxu0 0.0
      %v8454 = vand.u32 %v315, 4294901760
      %v8455 = vsub.f32 %v315, %v8454
      %8456 = vmatpush1.msra.mxu0 %v8455
      %8457 = vmatprep.subr.mxu0 0.0
      %v8458 = vand.u32 %v314, 4294901760
      %v8459 = vsub.f32 %v314, %v8458
      %8460 = vmatpush1.msra.mxu0 %v8459
      %8461 = vmatprep.subr.mxu0 0.0
      %v8462 = vand.u32 %v313, 4294901760
      %v8463 = vsub.f32 %v313, %v8462
      %8464 = vmatpush1.msra.mxu0 %v8463
      %8465 = vmatprep.subr.mxu0 0.0
      %v8466 = vand.u32 %v312, 4294901760
      %v8467 = vsub.f32 %v312, %v8466
      %8468 = vmatpush1.msra.mxu0 %v8467
      %8469 = vmatprep.subr.mxu0 0.0
      %8470 = vmatpush2.msra.mxu0 0.0
      %8471 = vmatprep.subr.mxu0 0.0
      %8472 = vmatpush2.msra.mxu0 0.0
      %8473 = vmatprep.subr.mxu0 0.0
      %8474 = vmatpush2.msra.mxu0 0.0
      %8475 = vmatprep.subr.mxu0 0.0
      %8476 = vmatpush2.msra.mxu0 0.0
      %8477 = vmatprep.subr.mxu0 0.0
      %8478 = vmatpush2.msra.mxu0 0.0
      %8479 = vmatprep.subr.mxu0 0.0
      %8480 = vmatpush2.msra.mxu0 0.0
      %8481 = vmatprep.subr.mxu0 0.0
      %8482 = vmatpush2.msra.mxu0 0.0
      %8483 = vmatprep.subr.mxu0 0.0
      %8484 = vmatpush2.msra.mxu0 0.0
      %8485 = vmatprep.subr.mxu0 0.0
      %8486 = vmatpush2.msra.mxu0 0.0
      %8487 = vmatprep.subr.mxu0 0.0
      %8488 = vmatpush2.msra.mxu0 0.0
      %8489 = vmatprep.subr.mxu0 0.0
      %8490 = vmatpush2.msra.mxu0 0.0
      %8491 = vmatprep.subr.mxu0 0.0
      %8492 = vmatpush2.msra.mxu0 0.0
      %8493 = vmatprep.subr.mxu0 0.0
      %8494 = vmatpush2.msra.mxu0 0.0
      %8495 = vmatprep.subr.mxu0 0.0
      %8496 = vmatpush2.msra.mxu0 0.0
      %8497 = vmatprep.subr.mxu0 0.0
      %8498 = vmatpush2.msra.mxu0 0.0
      %8499 = vmatprep.subr.mxu0 0.0
      %8500 = vmatpush2.msra.mxu0 0.0
      %8501 = vmatprep.mubr.f32.mxu0 0.0
      %v8502 = vand.u32 %v7772, 4294901760
      %v8503 = vsub.f32 %v7772, %v8502
      %8504 = vmatmul.mubr.f32.gmra.mxu0 %v8503
      %v8505 = vpop.f32.mrf.mxu0
      %v8506 = vadd.f32 %v8426, %v8505
      %v8507 = vpop.f32.mrf.mxu0
      %8508 = vdwg.mxu0
      %8509 = vmatprep.subr.mxu0 0.0
      %8510 = vmatpush1.msra.mxu0 0.0
      %8511 = vmatprep.subr.mxu0 0.0
      %8512 = vmatpush1.msra.mxu0 0.0
      %8513 = vmatprep.subr.mxu0 0.0
      %8514 = vmatpush1.msra.mxu0 0.0
      %8515 = vmatprep.subr.mxu0 0.0
      %8516 = vmatpush1.msra.mxu0 0.0
      %8517 = vmatprep.subr.mxu0 0.0
      %8518 = vmatpush1.msra.mxu0 0.0
      %8519 = vmatprep.subr.mxu0 0.0
      %8520 = vmatpush1.msra.mxu0 0.0
      %8521 = vmatprep.subr.mxu0 0.0
      %8522 = vmatpush1.msra.mxu0 0.0
      %8523 = vmatprep.subr.mxu0 0.0
      %8524 = vmatpush1.msra.mxu0 0.0
      %8525 = vmatprep.subr.mxu0 0.0
      %8526 = vmatpush1.msra.mxu0 0.0
      %8527 = vmatprep.subr.mxu0 0.0
      %8528 = vmatpush1.msra.mxu0 0.0
      %8529 = vmatprep.subr.mxu0 0.0
      %8530 = vmatpush1.msra.mxu0 0.0
      %8531 = vmatprep.subr.mxu0 0.0
      %8532 = vmatpush1.msra.mxu0 0.0
      %8533 = vmatprep.subr.mxu0 0.0
      %v8534 = vand.u32 %v315, 4294901760
      %8535 = vmatpush1.msra.mxu0 %v8534
      %8536 = vmatprep.subr.mxu0 0.0
      %v8537 = vand.u32 %v314, 4294901760
      %8538 = vmatpush1.msra.mxu0 %v8537
      %8539 = vmatprep.subr.mxu0 0.0
      %v8540 = vand.u32 %v313, 4294901760
      %8541 = vmatpush1.msra.mxu0 %v8540
      %8542 = vmatprep.subr.mxu0 0.0
      %v8543 = vand.u32 %v312, 4294901760
      %8544 = vmatpush1.msra.mxu0 %v8543
      %8545 = vmatprep.subr.mxu0 0.0
      %8546 = vmatpush2.msra.mxu0 0.0
      %8547 = vmatprep.subr.mxu0 0.0
      %8548 = vmatpush2.msra.mxu0 0.0
      %8549 = vmatprep.subr.mxu0 0.0
      %8550 = vmatpush2.msra.mxu0 0.0
      %8551 = vmatprep.subr.mxu0 0.0
      %8552 = vmatpush2.msra.mxu0 0.0
      %8553 = vmatprep.subr.mxu0 0.0
      %8554 = vmatpush2.msra.mxu0 0.0
      %8555 = vmatprep.subr.mxu0 0.0
      %8556 = vmatpush2.msra.mxu0 0.0
      %8557 = vmatprep.subr.mxu0 0.0
      %8558 = vmatpush2.msra.mxu0 0.0
      %8559 = vmatprep.subr.mxu0 0.0
      %8560 = vmatpush2.msra.mxu0 0.0
      %8561 = vmatprep.subr.mxu0 0.0
      %8562 = vmatpush2.msra.mxu0 0.0
      %8563 = vmatprep.subr.mxu0 0.0
      %8564 = vmatpush2.msra.mxu0 0.0
      %8565 = vmatprep.subr.mxu0 0.0
      %8566 = vmatpush2.msra.mxu0 0.0
      %8567 = vmatprep.subr.mxu0 0.0
      %8568 = vmatpush2.msra.mxu0 0.0
      %8569 = vmatprep.subr.mxu0 0.0
      %8570 = vmatpush2.msra.mxu0 0.0
      %8571 = vmatprep.subr.mxu0 0.0
      %8572 = vmatpush2.msra.mxu0 0.0
      %8573 = vmatprep.subr.mxu0 0.0
      %8574 = vmatpush2.msra.mxu0 0.0
      %8575 = vmatprep.subr.mxu0 0.0
      %8576 = vmatpush2.msra.mxu0 0.0
      %8577 = vmatprep.mubr.f32.mxu0 0.0
      %v8578 = vand.u32 %v7772, 4294901760
      %v8579 = vsub.f32 %v7772, %v8578
      %v8580 = vand.u32 %v8579, 4294901760
      %8581 = vmatmul.mubr.f32.gmra.mxu0 %v8580
      %v8582 = vpop.f32.mrf.mxu0
      %v8583 = vadd.f32 %v8506, %v8582
      %v8584 = vpop.f32.mrf.mxu0
      %8585 = vdwg.mxu0
      %8586 = vmatprep.subr.mxu0 0.0
      %8587 = vmatpush1.msra.mxu0 0.0
      %8588 = vmatprep.subr.mxu0 0.0
      %8589 = vmatpush1.msra.mxu0 0.0
      %8590 = vmatprep.subr.mxu0 0.0
      %8591 = vmatpush1.msra.mxu0 0.0
      %8592 = vmatprep.subr.mxu0 0.0
      %8593 = vmatpush1.msra.mxu0 0.0
      %8594 = vmatprep.subr.mxu0 0.0
      %8595 = vmatpush1.msra.mxu0 0.0
      %8596 = vmatprep.subr.mxu0 0.0
      %8597 = vmatpush1.msra.mxu0 0.0
      %8598 = vmatprep.subr.mxu0 0.0
      %8599 = vmatpush1.msra.mxu0 0.0
      %8600 = vmatprep.subr.mxu0 0.0
      %8601 = vmatpush1.msra.mxu0 0.0
      %8602 = vmatprep.subr.mxu0 0.0
      %8603 = vmatpush1.msra.mxu0 0.0
      %8604 = vmatprep.subr.mxu0 0.0
      %8605 = vmatpush1.msra.mxu0 0.0
      %8606 = vmatprep.subr.mxu0 0.0
      %8607 = vmatpush1.msra.mxu0 0.0
      %8608 = vmatprep.subr.mxu0 0.0
      %8609 = vmatpush1.msra.mxu0 0.0
      %8610 = vmatprep.subr.mxu0 0.0
      %v8611 = vand.u32 %v315, 4294901760
      %v8612 = vsub.f32 %v315, %v8611
      %v8613 = vand.u32 %v8612, 4294901760
      %8614 = vmatpush1.msra.mxu0 %v8613
      %8615 = vmatprep.subr.mxu0 0.0
      %v8616 = vand.u32 %v314, 4294901760
      %v8617 = vsub.f32 %v314, %v8616
      %v8618 = vand.u32 %v8617, 4294901760
      %8619 = vmatpush1.msra.mxu0 %v8618
      %8620 = vmatprep.subr.mxu0 0.0
      %v8621 = vand.u32 %v313, 4294901760
      %v8622 = vsub.f32 %v313, %v8621
      %v8623 = vand.u32 %v8622, 4294901760
      %8624 = vmatpush1.msra.mxu0 %v8623
      %8625 = vmatprep.subr.mxu0 0.0
      %v8626 = vand.u32 %v312, 4294901760
      %v8627 = vsub.f32 %v312, %v8626
      %v8628 = vand.u32 %v8627, 4294901760
      %8629 = vmatpush1.msra.mxu0 %v8628
      %8630 = vmatprep.subr.mxu0 0.0
      %8631 = vmatpush2.msra.mxu0 0.0
      %8632 = vmatprep.subr.mxu0 0.0
      %8633 = vmatpush2.msra.mxu0 0.0
      %8634 = vmatprep.subr.mxu0 0.0
      %8635 = vmatpush2.msra.mxu0 0.0
      %8636 = vmatprep.subr.mxu0 0.0
      %8637 = vmatpush2.msra.mxu0 0.0
      %8638 = vmatprep.subr.mxu0 0.0
      %8639 = vmatpush2.msra.mxu0 0.0
      %8640 = vmatprep.subr.mxu0 0.0
      %8641 = vmatpush2.msra.mxu0 0.0
      %8642 = vmatprep.subr.mxu0 0.0
      %8643 = vmatpush2.msra.mxu0 0.0
      %8644 = vmatprep.subr.mxu0 0.0
      %8645 = vmatpush2.msra.mxu0 0.0
      %8646 = vmatprep.subr.mxu0 0.0
      %8647 = vmatpush2.msra.mxu0 0.0
      %8648 = vmatprep.subr.mxu0 0.0
      %8649 = vmatpush2.msra.mxu0 0.0
      %8650 = vmatprep.subr.mxu0 0.0
      %8651 = vmatpush2.msra.mxu0 0.0
      %8652 = vmatprep.subr.mxu0 0.0
      %8653 = vmatpush2.msra.mxu0 0.0
      %8654 = vmatprep.subr.mxu0 0.0
      %8655 = vmatpush2.msra.mxu0 0.0
      %8656 = vmatprep.subr.mxu0 0.0
      %8657 = vmatpush2.msra.mxu0 0.0
      %8658 = vmatprep.subr.mxu0 0.0
      %8659 = vmatpush2.msra.mxu0 0.0
      %8660 = vmatprep.subr.mxu0 0.0
      %8661 = vmatpush2.msra.mxu0 0.0
      %8662 = vmatprep.mubr.f32.mxu0 0.0
      %v8663 = vand.u32 %v7772, 4294901760
      %8664 = vmatmul.mubr.f32.gmra.mxu0 %v8663
      %v8665 = vpop.f32.mrf.mxu0
      %v8666 = vadd.f32 %v8583, %v8665
      %v8667 = vpop.f32.mrf.mxu0
      %8668 = vdwg.mxu0
      %8669 = vmatprep.subr.mxu0 0.0
      %8670 = vmatpush1.msra.mxu0 0.0
      %8671 = vmatprep.subr.mxu0 0.0
      %8672 = vmatpush1.msra.mxu0 0.0
      %8673 = vmatprep.subr.mxu0 0.0
      %8674 = vmatpush1.msra.mxu0 0.0
      %8675 = vmatprep.subr.mxu0 0.0
      %8676 = vmatpush1.msra.mxu0 0.0
      %8677 = vmatprep.subr.mxu0 0.0
      %8678 = vmatpush1.msra.mxu0 0.0
      %8679 = vmatprep.subr.mxu0 0.0
      %8680 = vmatpush1.msra.mxu0 0.0
      %8681 = vmatprep.subr.mxu0 0.0
      %8682 = vmatpush1.msra.mxu0 0.0
      %8683 = vmatprep.subr.mxu0 0.0
      %8684 = vmatpush1.msra.mxu0 0.0
      %8685 = vmatprep.subr.mxu0 0.0
      %8686 = vmatpush1.msra.mxu0 0.0
      %8687 = vmatprep.subr.mxu0 0.0
      %8688 = vmatpush1.msra.mxu0 0.0
      %8689 = vmatprep.subr.mxu0 0.0
      %8690 = vmatpush1.msra.mxu0 0.0
      %8691 = vmatprep.subr.mxu0 0.0
      %8692 = vmatpush1.msra.mxu0 0.0
      %8693 = vmatprep.subr.mxu0 0.0
      %v8694 = vand.u32 %v315, 4294901760
      %8695 = vmatpush1.msra.mxu0 %v8694
      %8696 = vmatprep.subr.mxu0 0.0
      %v8697 = vand.u32 %v314, 4294901760
      %8698 = vmatpush1.msra.mxu0 %v8697
      %8699 = vmatprep.subr.mxu0 0.0
      %v8700 = vand.u32 %v313, 4294901760
      %8701 = vmatpush1.msra.mxu0 %v8700
      %8702 = vmatprep.subr.mxu0 0.0
      %v8703 = vand.u32 %v312, 4294901760
      %8704 = vmatpush1.msra.mxu0 %v8703
      %8705 = vmatprep.subr.mxu0 0.0
      %8706 = vmatpush2.msra.mxu0 0.0
      %8707 = vmatprep.subr.mxu0 0.0
      %8708 = vmatpush2.msra.mxu0 0.0
      %8709 = vmatprep.subr.mxu0 0.0
      %8710 = vmatpush2.msra.mxu0 0.0
      %8711 = vmatprep.subr.mxu0 0.0
      %8712 = vmatpush2.msra.mxu0 0.0
      %8713 = vmatprep.subr.mxu0 0.0
      %8714 = vmatpush2.msra.mxu0 0.0
      %8715 = vmatprep.subr.mxu0 0.0
      %8716 = vmatpush2.msra.mxu0 0.0
      %8717 = vmatprep.subr.mxu0 0.0
      %8718 = vmatpush2.msra.mxu0 0.0
      %8719 = vmatprep.subr.mxu0 0.0
      %8720 = vmatpush2.msra.mxu0 0.0
      %8721 = vmatprep.subr.mxu0 0.0
      %8722 = vmatpush2.msra.mxu0 0.0
      %8723 = vmatprep.subr.mxu0 0.0
      %8724 = vmatpush2.msra.mxu0 0.0
      %8725 = vmatprep.subr.mxu0 0.0
      %8726 = vmatpush2.msra.mxu0 0.0
      %8727 = vmatprep.subr.mxu0 0.0
      %8728 = vmatpush2.msra.mxu0 0.0
      %8729 = vmatprep.subr.mxu0 0.0
      %8730 = vmatpush2.msra.mxu0 0.0
      %8731 = vmatprep.subr.mxu0 0.0
      %8732 = vmatpush2.msra.mxu0 0.0
      %8733 = vmatprep.subr.mxu0 0.0
      %8734 = vmatpush2.msra.mxu0 0.0
      %8735 = vmatprep.subr.mxu0 0.0
      %8736 = vmatpush2.msra.mxu0 0.0
      %8737 = vmatprep.mubr.f32.mxu0 0.0
      %v8738 = vand.u32 %v7772, 4294901760
      %8739 = vmatmul.mubr.f32.gmra.mxu0 %v8738
      %v8740 = vpop.f32.mrf.mxu0
      %v8741 = vadd.f32 %v8666, %v8740
      %v8742 = vpop.f32.mrf.mxu0
      %8743 = vdwg.mxu0
      %v8744 = vld [vmem:[%s268] sm:$0x3]
      %v8745 = vadd.f32 %v8744, %v8256
      %v8746 = vxor.u32 %v8745, 2147483648
      %v8747 = vmul.f32 %v8746, 1.442695
      %v8748 = vpow.pop %v8747
      %v8749 = vadd.f32 %v8748, 1.0
      %v8750 = vrcp.pop %v8749
      %v8751 = vmul.f32 1.0, %v8750
      %s8752 = scalar_lea.vmem %s268, 2
      %v8753 = vld [vmem:[%s8752] sm:$0x3]
      %v8754 = vadd.f32 %v8753, %v8741
      %v8755 = vxor.u32 %v8754, 2147483648
      %v8756 = vmul.f32 %v8755, 1.442695
      %v8757 = vpow.pop %v8756
      %v8758 = vadd.f32 %v8757, 1.0
      %v8759 = vrcp.pop %v8758
      %v8760 = vmul.f32 1.0, %v8759
      %s8761 = scalar_lea.vmem %s268, 4
      %v8762 = vld [vmem:[%s8761] sm:$0x3]
      %8763 = vmatprep.subr.mxu0 0.0
      %8764 = vmatpush1.msra.mxu0 0.0
      %8765 = vmatprep.subr.mxu0 0.0
      %8766 = vmatpush1.msra.mxu0 0.0
      %8767 = vmatprep.subr.mxu0 0.0
      %8768 = vmatpush1.msra.mxu0 0.0
      %8769 = vmatprep.subr.mxu0 0.0
      %8770 = vmatpush1.msra.mxu0 0.0
      %8771 = vmatprep.subr.mxu0 0.0
      %8772 = vmatpush1.msra.mxu0 0.0
      %8773 = vmatprep.subr.mxu0 0.0
      %8774 = vmatpush1.msra.mxu0 0.0
      %8775 = vmatprep.subr.mxu0 0.0
      %8776 = vmatpush1.msra.mxu0 0.0
      %8777 = vmatprep.subr.mxu0 0.0
      %8778 = vmatpush1.msra.mxu0 0.0
      %8779 = vmatprep.subr.mxu0 0.0
      %8780 = vmatpush1.msra.mxu0 0.0
      %8781 = vmatprep.subr.mxu0 0.0
      %8782 = vmatpush1.msra.mxu0 0.0
      %8783 = vmatprep.subr.mxu0 0.0
      %8784 = vmatpush1.msra.mxu0 0.0
      %8785 = vmatprep.subr.mxu0 0.0
      %8786 = vmatpush1.msra.mxu0 0.0
      %8787 = vmatprep.subr.mxu0 0.0
      %v8788 = vand.u32 %v320, 4294901760
      %8789 = vmatpush1.msra.mxu0 %v8788
      %8790 = vmatprep.subr.mxu0 0.0
      %v8791 = vand.u32 %v319, 4294901760
      %8792 = vmatpush1.msra.mxu0 %v8791
      %8793 = vmatprep.subr.mxu0 0.0
      %v8794 = vand.u32 %v318, 4294901760
      %8795 = vmatpush1.msra.mxu0 %v8794
      %8796 = vmatprep.subr.mxu0 0.0
      %v8797 = vand.u32 %v317, 4294901760
      %8798 = vmatpush1.msra.mxu0 %v8797
      %8799 = vmatprep.subr.mxu0 0.0
      %8800 = vmatpush2.msra.mxu0 0.0
      %8801 = vmatprep.subr.mxu0 0.0
      %8802 = vmatpush2.msra.mxu0 0.0
      %8803 = vmatprep.subr.mxu0 0.0
      %8804 = vmatpush2.msra.mxu0 0.0
      %8805 = vmatprep.subr.mxu0 0.0
      %8806 = vmatpush2.msra.mxu0 0.0
      %8807 = vmatprep.subr.mxu0 0.0
      %8808 = vmatpush2.msra.mxu0 0.0
      %8809 = vmatprep.subr.mxu0 0.0
      %8810 = vmatpush2.msra.mxu0 0.0
      %8811 = vmatprep.subr.mxu0 0.0
      %8812 = vmatpush2.msra.mxu0 0.0
      %8813 = vmatprep.subr.mxu0 0.0
      %8814 = vmatpush2.msra.mxu0 0.0
      %8815 = vmatprep.subr.mxu0 0.0
      %8816 = vmatpush2.msra.mxu0 0.0
      %8817 = vmatprep.subr.mxu0 0.0
      %8818 = vmatpush2.msra.mxu0 0.0
      %8819 = vmatprep.subr.mxu0 0.0
      %8820 = vmatpush2.msra.mxu0 0.0
      %8821 = vmatprep.subr.mxu0 0.0
      %8822 = vmatpush2.msra.mxu0 0.0
      %8823 = vmatprep.subr.mxu0 0.0
      %8824 = vmatpush2.msra.mxu0 0.0
      %8825 = vmatprep.subr.mxu0 0.0
      %8826 = vmatpush2.msra.mxu0 0.0
      %8827 = vmatprep.subr.mxu0 0.0
      %8828 = vmatpush2.msra.mxu0 0.0
      %8829 = vmatprep.subr.mxu0 0.0
      %8830 = vmatpush2.msra.mxu0 0.0
      %8831 = vmatprep.mubr.f32.mxu0 0.0
      %v8832 = vand.u32 %v7772, 4294901760
      %v8833 = vsub.f32 %v7772, %v8832
      %v8834 = vand.u32 %v8833, 4294901760
      %v8835 = vsub.f32 %v8833, %v8834
      %v8836 = vand.u32 %v8835, 4294901760
      %8837 = vmatmul.mubr.f32.gmra.mxu0 %v8836
      %v8838 = vpop.f32.mrf.mxu0
      %v8839 = vadd.f32 %v323, %v8838
      %v8840 = vpop.f32.mrf.mxu0
      %8841 = vdwg.mxu0
      %8842 = vmatprep.subr.mxu0 0.0
      %8843 = vmatpush1.msra.mxu0 0.0
      %8844 = vmatprep.subr.mxu0 0.0
      %8845 = vmatpush1.msra.mxu0 0.0
      %8846 = vmatprep.subr.mxu0 0.0
      %8847 = vmatpush1.msra.mxu0 0.0
      %8848 = vmatprep.subr.mxu0 0.0
      %8849 = vmatpush1.msra.mxu0 0.0
      %8850 = vmatprep.subr.mxu0 0.0
      %8851 = vmatpush1.msra.mxu0 0.0
      %8852 = vmatprep.subr.mxu0 0.0
      %8853 = vmatpush1.msra.mxu0 0.0
      %8854 = vmatprep.subr.mxu0 0.0
      %8855 = vmatpush1.msra.mxu0 0.0
      %8856 = vmatprep.subr.mxu0 0.0
      %8857 = vmatpush1.msra.mxu0 0.0
      %8858 = vmatprep.subr.mxu0 0.0
      %8859 = vmatpush1.msra.mxu0 0.0
      %8860 = vmatprep.subr.mxu0 0.0
      %8861 = vmatpush1.msra.mxu0 0.0
      %8862 = vmatprep.subr.mxu0 0.0
      %8863 = vmatpush1.msra.mxu0 0.0
      %8864 = vmatprep.subr.mxu0 0.0
      %8865 = vmatpush1.msra.mxu0 0.0
      %8866 = vmatprep.subr.mxu0 0.0
      %v8867 = vand.u32 %v320, 4294901760
      %v8868 = vsub.f32 %v320, %v8867
      %v8869 = vand.u32 %v8868, 4294901760
      %v8870 = vsub.f32 %v8868, %v8869
      %v8871 = vand.u32 %v8870, 4294901760
      %8872 = vmatpush1.msra.mxu0 %v8871
      %8873 = vmatprep.subr.mxu0 0.0
      %v8874 = vand.u32 %v319, 4294901760
      %v8875 = vsub.f32 %v319, %v8874
      %v8876 = vand.u32 %v8875, 4294901760
      %v8877 = vsub.f32 %v8875, %v8876
      %v8878 = vand.u32 %v8877, 4294901760
      %8879 = vmatpush1.msra.mxu0 %v8878
      %8880 = vmatprep.subr.mxu0 0.0
      %v8881 = vand.u32 %v318, 4294901760
      %v8882 = vsub.f32 %v318, %v8881
      %v8883 = vand.u32 %v8882, 4294901760
      %v8884 = vsub.f32 %v8882, %v8883
      %v8885 = vand.u32 %v8884, 4294901760
      %8886 = vmatpush1.msra.mxu0 %v8885
      %8887 = vmatprep.subr.mxu0 0.0
      %v8888 = vand.u32 %v317, 4294901760
      %v8889 = vsub.f32 %v317, %v8888
      %v8890 = vand.u32 %v8889, 4294901760
      %v8891 = vsub.f32 %v8889, %v8890
      %v8892 = vand.u32 %v8891, 4294901760
      %8893 = vmatpush1.msra.mxu0 %v8892
      %8894 = vmatprep.subr.mxu0 0.0
      %8895 = vmatpush2.msra.mxu0 0.0
      %8896 = vmatprep.subr.mxu0 0.0
      %8897 = vmatpush2.msra.mxu0 0.0
      %8898 = vmatprep.subr.mxu0 0.0
      %8899 = vmatpush2.msra.mxu0 0.0
      %8900 = vmatprep.subr.mxu0 0.0
      %8901 = vmatpush2.msra.mxu0 0.0
      %8902 = vmatprep.subr.mxu0 0.0
      %8903 = vmatpush2.msra.mxu0 0.0
      %8904 = vmatprep.subr.mxu0 0.0
      %8905 = vmatpush2.msra.mxu0 0.0
      %8906 = vmatprep.subr.mxu0 0.0
      %8907 = vmatpush2.msra.mxu0 0.0
      %8908 = vmatprep.subr.mxu0 0.0
      %8909 = vmatpush2.msra.mxu0 0.0
      %8910 = vmatprep.subr.mxu0 0.0
      %8911 = vmatpush2.msra.mxu0 0.0
      %8912 = vmatprep.subr.mxu0 0.0
      %8913 = vmatpush2.msra.mxu0 0.0
      %8914 = vmatprep.subr.mxu0 0.0
      %8915 = vmatpush2.msra.mxu0 0.0
      %8916 = vmatprep.subr.mxu0 0.0
      %8917 = vmatpush2.msra.mxu0 0.0
      %8918 = vmatprep.subr.mxu0 0.0
      %8919 = vmatpush2.msra.mxu0 0.0
      %8920 = vmatprep.subr.mxu0 0.0
      %8921 = vmatpush2.msra.mxu0 0.0
      %8922 = vmatprep.subr.mxu0 0.0
      %8923 = vmatpush2.msra.mxu0 0.0
      %8924 = vmatprep.subr.mxu0 0.0
      %8925 = vmatpush2.msra.mxu0 0.0
      %8926 = vmatprep.mubr.f32.mxu0 0.0
      %v8927 = vand.u32 %v7772, 4294901760
      %8928 = vmatmul.mubr.f32.gmra.mxu0 %v8927
      %v8929 = vpop.f32.mrf.mxu0
      %v8930 = vadd.f32 %v8839, %v8929
      %v8931 = vpop.f32.mrf.mxu0
      %8932 = vdwg.mxu0
      %8933 = vmatprep.subr.mxu0 0.0
      %8934 = vmatpush1.msra.mxu0 0.0
      %8935 = vmatprep.subr.mxu0 0.0
      %8936 = vmatpush1.msra.mxu0 0.0
      %8937 = vmatprep.subr.mxu0 0.0
      %8938 = vmatpush1.msra.mxu0 0.0
      %8939 = vmatprep.subr.mxu0 0.0
      %8940 = vmatpush1.msra.mxu0 0.0
      %8941 = vmatprep.subr.mxu0 0.0
      %8942 = vmatpush1.msra.mxu0 0.0
      %8943 = vmatprep.subr.mxu0 0.0
      %8944 = vmatpush1.msra.mxu0 0.0
      %8945 = vmatprep.subr.mxu0 0.0
      %8946 = vmatpush1.msra.mxu0 0.0
      %8947 = vmatprep.subr.mxu0 0.0
      %8948 = vmatpush1.msra.mxu0 0.0
      %8949 = vmatprep.subr.mxu0 0.0
      %8950 = vmatpush1.msra.mxu0 0.0
      %8951 = vmatprep.subr.mxu0 0.0
      %8952 = vmatpush1.msra.mxu0 0.0
      %8953 = vmatprep.subr.mxu0 0.0
      %8954 = vmatpush1.msra.mxu0 0.0
      %8955 = vmatprep.subr.mxu0 0.0
      %8956 = vmatpush1.msra.mxu0 0.0
      %8957 = vmatprep.subr.mxu0 0.0
      %v8958 = vand.u32 %v320, 4294901760
      %v8959 = vsub.f32 %v320, %v8958
      %8960 = vmatpush1.msra.mxu0 %v8959
      %8961 = vmatprep.subr.mxu0 0.0
      %v8962 = vand.u32 %v319, 4294901760
      %v8963 = vsub.f32 %v319, %v8962
      %8964 = vmatpush1.msra.mxu0 %v8963
      %8965 = vmatprep.subr.mxu0 0.0
      %v8966 = vand.u32 %v318, 4294901760
      %v8967 = vsub.f32 %v318, %v8966
      %8968 = vmatpush1.msra.mxu0 %v8967
      %8969 = vmatprep.subr.mxu0 0.0
      %v8970 = vand.u32 %v317, 4294901760
      %v8971 = vsub.f32 %v317, %v8970
      %8972 = vmatpush1.msra.mxu0 %v8971
      %8973 = vmatprep.subr.mxu0 0.0
      %8974 = vmatpush2.msra.mxu0 0.0
      %8975 = vmatprep.subr.mxu0 0.0
      %8976 = vmatpush2.msra.mxu0 0.0
      %8977 = vmatprep.subr.mxu0 0.0
      %8978 = vmatpush2.msra.mxu0 0.0
      %8979 = vmatprep.subr.mxu0 0.0
      %8980 = vmatpush2.msra.mxu0 0.0
      %8981 = vmatprep.subr.mxu0 0.0
      %8982 = vmatpush2.msra.mxu0 0.0
      %8983 = vmatprep.subr.mxu0 0.0
      %8984 = vmatpush2.msra.mxu0 0.0
      %8985 = vmatprep.subr.mxu0 0.0
      %8986 = vmatpush2.msra.mxu0 0.0
      %8987 = vmatprep.subr.mxu0 0.0
      %8988 = vmatpush2.msra.mxu0 0.0
      %8989 = vmatprep.subr.mxu0 0.0
      %8990 = vmatpush2.msra.mxu0 0.0
      %8991 = vmatprep.subr.mxu0 0.0
      %8992 = vmatpush2.msra.mxu0 0.0
      %8993 = vmatprep.subr.mxu0 0.0
      %8994 = vmatpush2.msra.mxu0 0.0
      %8995 = vmatprep.subr.mxu0 0.0
      %8996 = vmatpush2.msra.mxu0 0.0
      %8997 = vmatprep.subr.mxu0 0.0
      %8998 = vmatpush2.msra.mxu0 0.0
      %8999 = vmatprep.subr.mxu0 0.0
      %9000 = vmatpush2.msra.mxu0 0.0
      %9001 = vmatprep.subr.mxu0 0.0
      %9002 = vmatpush2.msra.mxu0 0.0
      %9003 = vmatprep.subr.mxu0 0.0
      %9004 = vmatpush2.msra.mxu0 0.0
      %9005 = vmatprep.mubr.f32.mxu0 0.0
      %v9006 = vand.u32 %v7772, 4294901760
      %v9007 = vsub.f32 %v7772, %v9006
      %9008 = vmatmul.mubr.f32.gmra.mxu0 %v9007
      %v9009 = vpop.f32.mrf.mxu0
      %v9010 = vadd.f32 %v8930, %v9009
      %v9011 = vpop.f32.mrf.mxu0
      %9012 = vdwg.mxu0
      %9013 = vmatprep.subr.mxu0 0.0
      %9014 = vmatpush1.msra.mxu0 0.0
      %9015 = vmatprep.subr.mxu0 0.0
      %9016 = vmatpush1.msra.mxu0 0.0
      %9017 = vmatprep.subr.mxu0 0.0
      %9018 = vmatpush1.msra.mxu0 0.0
      %9019 = vmatprep.subr.mxu0 0.0
      %9020 = vmatpush1.msra.mxu0 0.0
      %9021 = vmatprep.subr.mxu0 0.0
      %9022 = vmatpush1.msra.mxu0 0.0
      %9023 = vmatprep.subr.mxu0 0.0
      %9024 = vmatpush1.msra.mxu0 0.0
      %9025 = vmatprep.subr.mxu0 0.0
      %9026 = vmatpush1.msra.mxu0 0.0
      %9027 = vmatprep.subr.mxu0 0.0
      %9028 = vmatpush1.msra.mxu0 0.0
      %9029 = vmatprep.subr.mxu0 0.0
      %9030 = vmatpush1.msra.mxu0 0.0
      %9031 = vmatprep.subr.mxu0 0.0
      %9032 = vmatpush1.msra.mxu0 0.0
      %9033 = vmatprep.subr.mxu0 0.0
      %9034 = vmatpush1.msra.mxu0 0.0
      %9035 = vmatprep.subr.mxu0 0.0
      %9036 = vmatpush1.msra.mxu0 0.0
      %9037 = vmatprep.subr.mxu0 0.0
      %v9038 = vand.u32 %v320, 4294901760
      %9039 = vmatpush1.msra.mxu0 %v9038
      %9040 = vmatprep.subr.mxu0 0.0
      %v9041 = vand.u32 %v319, 4294901760
      %9042 = vmatpush1.msra.mxu0 %v9041
      %9043 = vmatprep.subr.mxu0 0.0
      %v9044 = vand.u32 %v318, 4294901760
      %9045 = vmatpush1.msra.mxu0 %v9044
      %9046 = vmatprep.subr.mxu0 0.0
      %v9047 = vand.u32 %v317, 4294901760
      %9048 = vmatpush1.msra.mxu0 %v9047
      %9049 = vmatprep.subr.mxu0 0.0
      %9050 = vmatpush2.msra.mxu0 0.0
      %9051 = vmatprep.subr.mxu0 0.0
      %9052 = vmatpush2.msra.mxu0 0.0
      %9053 = vmatprep.subr.mxu0 0.0
      %9054 = vmatpush2.msra.mxu0 0.0
      %9055 = vmatprep.subr.mxu0 0.0
      %9056 = vmatpush2.msra.mxu0 0.0
      %9057 = vmatprep.subr.mxu0 0.0
      %9058 = vmatpush2.msra.mxu0 0.0
      %9059 = vmatprep.subr.mxu0 0.0
      %9060 = vmatpush2.msra.mxu0 0.0
      %9061 = vmatprep.subr.mxu0 0.0
      %9062 = vmatpush2.msra.mxu0 0.0
      %9063 = vmatprep.subr.mxu0 0.0
      %9064 = vmatpush2.msra.mxu0 0.0
      %9065 = vmatprep.subr.mxu0 0.0
      %9066 = vmatpush2.msra.mxu0 0.0
      %9067 = vmatprep.subr.mxu0 0.0
      %9068 = vmatpush2.msra.mxu0 0.0
      %9069 = vmatprep.subr.mxu0 0.0
      %9070 = vmatpush2.msra.mxu0 0.0
      %9071 = vmatprep.subr.mxu0 0.0
      %9072 = vmatpush2.msra.mxu0 0.0
      %9073 = vmatprep.subr.mxu0 0.0
      %9074 = vmatpush2.msra.mxu0 0.0
      %9075 = vmatprep.subr.mxu0 0.0
      %9076 = vmatpush2.msra.mxu0 0.0
      %9077 = vmatprep.subr.mxu0 0.0
      %9078 = vmatpush2.msra.mxu0 0.0
      %9079 = vmatprep.subr.mxu0 0.0
      %9080 = vmatpush2.msra.mxu0 0.0
      %9081 = vmatprep.mubr.f32.mxu0 0.0
      %v9082 = vand.u32 %v7772, 4294901760
      %v9083 = vsub.f32 %v7772, %v9082
      %v9084 = vand.u32 %v9083, 4294901760
      %9085 = vmatmul.mubr.f32.gmra.mxu0 %v9084
      %v9086 = vpop.f32.mrf.mxu0
      %v9087 = vadd.f32 %v9010, %v9086
      %v9088 = vpop.f32.mrf.mxu0
      %9089 = vdwg.mxu0
      %9090 = vmatprep.subr.mxu0 0.0
      %9091 = vmatpush1.msra.mxu0 0.0
      %9092 = vmatprep.subr.mxu0 0.0
      %9093 = vmatpush1.msra.mxu0 0.0
      %9094 = vmatprep.subr.mxu0 0.0
      %9095 = vmatpush1.msra.mxu0 0.0
      %9096 = vmatprep.subr.mxu0 0.0
      %9097 = vmatpush1.msra.mxu0 0.0
      %9098 = vmatprep.subr.mxu0 0.0
      %9099 = vmatpush1.msra.mxu0 0.0
      %9100 = vmatprep.subr.mxu0 0.0
      %9101 = vmatpush1.msra.mxu0 0.0
      %9102 = vmatprep.subr.mxu0 0.0
      %9103 = vmatpush1.msra.mxu0 0.0
      %9104 = vmatprep.subr.mxu0 0.0
      %9105 = vmatpush1.msra.mxu0 0.0
      %9106 = vmatprep.subr.mxu0 0.0
      %9107 = vmatpush1.msra.mxu0 0.0
      %9108 = vmatprep.subr.mxu0 0.0
      %9109 = vmatpush1.msra.mxu0 0.0
      %9110 = vmatprep.subr.mxu0 0.0
      %9111 = vmatpush1.msra.mxu0 0.0
      %9112 = vmatprep.subr.mxu0 0.0
      %9113 = vmatpush1.msra.mxu0 0.0
      %9114 = vmatprep.subr.mxu0 0.0
      %v9115 = vand.u32 %v320, 4294901760
      %v9116 = vsub.f32 %v320, %v9115
      %v9117 = vand.u32 %v9116, 4294901760
      %9118 = vmatpush1.msra.mxu0 %v9117
      %9119 = vmatprep.subr.mxu0 0.0
      %v9120 = vand.u32 %v319, 4294901760
      %v9121 = vsub.f32 %v319, %v9120
      %v9122 = vand.u32 %v9121, 4294901760
      %9123 = vmatpush1.msra.mxu0 %v9122
      %9124 = vmatprep.subr.mxu0 0.0
      %v9125 = vand.u32 %v318, 4294901760
      %v9126 = vsub.f32 %v318, %v9125
      %v9127 = vand.u32 %v9126, 4294901760
      %9128 = vmatpush1.msra.mxu0 %v9127
      %9129 = vmatprep.subr.mxu0 0.0
      %v9130 = vand.u32 %v317, 4294901760
      %v9131 = vsub.f32 %v317, %v9130
      %v9132 = vand.u32 %v9131, 4294901760
      %9133 = vmatpush1.msra.mxu0 %v9132
      %9134 = vmatprep.subr.mxu0 0.0
      %9135 = vmatpush2.msra.mxu0 0.0
      %9136 = vmatprep.subr.mxu0 0.0
      %9137 = vmatpush2.msra.mxu0 0.0
      %9138 = vmatprep.subr.mxu0 0.0
      %9139 = vmatpush2.msra.mxu0 0.0
      %9140 = vmatprep.subr.mxu0 0.0
      %9141 = vmatpush2.msra.mxu0 0.0
      %9142 = vmatprep.subr.mxu0 0.0
      %9143 = vmatpush2.msra.mxu0 0.0
      %9144 = vmatprep.subr.mxu0 0.0
      %9145 = vmatpush2.msra.mxu0 0.0
      %9146 = vmatprep.subr.mxu0 0.0
      %9147 = vmatpush2.msra.mxu0 0.0
      %9148 = vmatprep.subr.mxu0 0.0
      %9149 = vmatpush2.msra.mxu0 0.0
      %9150 = vmatprep.subr.mxu0 0.0
      %9151 = vmatpush2.msra.mxu0 0.0
      %9152 = vmatprep.subr.mxu0 0.0
      %9153 = vmatpush2.msra.mxu0 0.0
      %9154 = vmatprep.subr.mxu0 0.0
      %9155 = vmatpush2.msra.mxu0 0.0
      %9156 = vmatprep.subr.mxu0 0.0
      %9157 = vmatpush2.msra.mxu0 0.0
      %9158 = vmatprep.subr.mxu0 0.0
      %9159 = vmatpush2.msra.mxu0 0.0
      %9160 = vmatprep.subr.mxu0 0.0
      %9161 = vmatpush2.msra.mxu0 0.0
      %9162 = vmatprep.subr.mxu0 0.0
      %9163 = vmatpush2.msra.mxu0 0.0
      %9164 = vmatprep.subr.mxu0 0.0
      %9165 = vmatpush2.msra.mxu0 0.0
      %9166 = vmatprep.mubr.f32.mxu0 0.0
      %v9167 = vand.u32 %v7772, 4294901760
      %9168 = vmatmul.mubr.f32.gmra.mxu0 %v9167
      %v9169 = vpop.f32.mrf.mxu0
      %v9170 = vadd.f32 %v9087, %v9169
      %v9171 = vpop.f32.mrf.mxu0
      %9172 = vdwg.mxu0
      %9173 = vmatprep.subr.mxu0 0.0
      %9174 = vmatpush1.msra.mxu0 0.0
      %9175 = vmatprep.subr.mxu0 0.0
      %9176 = vmatpush1.msra.mxu0 0.0
      %9177 = vmatprep.subr.mxu0 0.0
      %9178 = vmatpush1.msra.mxu0 0.0
      %9179 = vmatprep.subr.mxu0 0.0
      %9180 = vmatpush1.msra.mxu0 0.0
      %9181 = vmatprep.subr.mxu0 0.0
      %9182 = vmatpush1.msra.mxu0 0.0
      %9183 = vmatprep.subr.mxu0 0.0
      %9184 = vmatpush1.msra.mxu0 0.0
      %9185 = vmatprep.subr.mxu0 0.0
      %9186 = vmatpush1.msra.mxu0 0.0
      %9187 = vmatprep.subr.mxu0 0.0
      %9188 = vmatpush1.msra.mxu0 0.0
      %9189 = vmatprep.subr.mxu0 0.0
      %9190 = vmatpush1.msra.mxu0 0.0
      %9191 = vmatprep.subr.mxu0 0.0
      %9192 = vmatpush1.msra.mxu0 0.0
      %9193 = vmatprep.subr.mxu0 0.0
      %9194 = vmatpush1.msra.mxu0 0.0
      %9195 = vmatprep.subr.mxu0 0.0
      %9196 = vmatpush1.msra.mxu0 0.0
      %9197 = vmatprep.subr.mxu0 0.0
      %v9198 = vand.u32 %v320, 4294901760
      %9199 = vmatpush1.msra.mxu0 %v9198
      %9200 = vmatprep.subr.mxu0 0.0
      %v9201 = vand.u32 %v319, 4294901760
      %9202 = vmatpush1.msra.mxu0 %v9201
      %9203 = vmatprep.subr.mxu0 0.0
      %v9204 = vand.u32 %v318, 4294901760
      %9205 = vmatpush1.msra.mxu0 %v9204
      %9206 = vmatprep.subr.mxu0 0.0
      %v9207 = vand.u32 %v317, 4294901760
      %9208 = vmatpush1.msra.mxu0 %v9207
      %9209 = vmatprep.subr.mxu0 0.0
      %9210 = vmatpush2.msra.mxu0 0.0
      %9211 = vmatprep.subr.mxu0 0.0
      %9212 = vmatpush2.msra.mxu0 0.0
      %9213 = vmatprep.subr.mxu0 0.0
      %9214 = vmatpush2.msra.mxu0 0.0
      %9215 = vmatprep.subr.mxu0 0.0
      %9216 = vmatpush2.msra.mxu0 0.0
      %9217 = vmatprep.subr.mxu0 0.0
      %9218 = vmatpush2.msra.mxu0 0.0
      %9219 = vmatprep.subr.mxu0 0.0
      %9220 = vmatpush2.msra.mxu0 0.0
      %9221 = vmatprep.subr.mxu0 0.0
      %9222 = vmatpush2.msra.mxu0 0.0
      %9223 = vmatprep.subr.mxu0 0.0
      %9224 = vmatpush2.msra.mxu0 0.0
      %9225 = vmatprep.subr.mxu0 0.0
      %9226 = vmatpush2.msra.mxu0 0.0
      %9227 = vmatprep.subr.mxu0 0.0
      %9228 = vmatpush2.msra.mxu0 0.0
      %9229 = vmatprep.subr.mxu0 0.0
      %9230 = vmatpush2.msra.mxu0 0.0
      %9231 = vmatprep.subr.mxu0 0.0
      %9232 = vmatpush2.msra.mxu0 0.0
      %9233 = vmatprep.subr.mxu0 0.0
      %9234 = vmatpush2.msra.mxu0 0.0
      %9235 = vmatprep.subr.mxu0 0.0
      %9236 = vmatpush2.msra.mxu0 0.0
      %9237 = vmatprep.subr.mxu0 0.0
      %9238 = vmatpush2.msra.mxu0 0.0
      %9239 = vmatprep.subr.mxu0 0.0
      %9240 = vmatpush2.msra.mxu0 0.0
      %9241 = vmatprep.mubr.f32.mxu0 0.0
      %v9242 = vand.u32 %v7772, 4294901760
      %9243 = vmatmul.mubr.f32.gmra.mxu0 %v9242
      %v9244 = vpop.f32.mrf.mxu0
      %v9245 = vadd.f32 %v9170, %v9244
      %v9246 = vpop.f32.mrf.mxu0
      %9247 = vdwg.mxu0
      %v9248 = vmul.f32 %v8751, %v9245
      %v9249 = vadd.f32 %v8762, %v9248
      %v9250 = vtanh.pop %v9249
      %v9251 = vsub.f32 1.0, %v8760
      %v9252 = vmul.f32 %v9251, %v9250
      %v9253 = vmul.f32 %v8760, %v6281
      %v9254 = vadd.f32 %v9252, %v9253
      %9255 = vst.msk [vmem:[%s282] sm:$0x3] %vm1815, %v9254
      %9256 = vst.msk [vmem:[#allocation2] sm:$0x3] %vm1815, %v7768
      %9257 = vst.msk [vmem:[%s325] sm:$0x3] %vm1815, %v9254
      %s9258 = smul.u32 3, %s17
      %p9259 = scmp.lt.s32.totalorder %s9258, 8
      %s9260 = scalar_select %p9259, %s9258, 8
      %s9261 = smul.addr %s9260, 2
      %s9262 = scalar_lea.vmem %s4, %s9261
      %s9263 = ssub.s32 2, %s17
      %s9264 = smul.u32 3, %s9263
      %p9265 = scmp.lt.s32.totalorder %s9264, 8
      %s9266 = scalar_select %p9265, %s9264, 8
      %s9267 = smul.addr %s9266, 2
      %s9268 = scalar_lea.vmem %s5, %s9267
      // Predicated region
      $region41: #{gru_cam_forward.2} parent=35 // pred_check
        %p9269 = pneg %p131
      $region42: #{gru_cam_forward.2} parent=35 // pred_check_branch
        %9271 = sbr.rel (%p9269) target = $region44
      $region43: #{gru_cam_forward.2} parent=35 // pred_region
        %s9272 = smul.u32 3, %s17
      $region44: #{gru_cam_forward.2} parent=35 // pred_fallthru
        _
      // Predicated region
      $region45: #{gru_cam_forward.2} parent=35 // pred_check
        %p9273 = pneg %p159
      $region46: #{gru_cam_forward.2} parent=35 // pred_check_branch
        %9275 = sbr.rel (%p9273) target = $region48
      $region47: #{gru_cam_forward.2} parent=35 // pred_region
        %s9276 = ssub.s32 2, %s17
        %s9277 = smul.u32 3, %s9276
      $region48: #{gru_cam_forward.2} parent=35 // pred_fallthru
        _
    $region36: #{gru_cam_forward.2} parent=5 // pred_fallthru
      _
    %p9278 = scmp.le.s32.totalorder 2, %s12
    // Predicated region
    $region49: #{gru_cam_forward.2} parent=5 // pred_check
      %p9279 = pneg %p9278
    $region50: #{gru_cam_forward.2} parent=5 // pred_check_branch
      %9281 = sbr.rel (%p9279) target = $region52
    $region51: #{gru_cam_forward.2} parent=5 // pred_region
      %s9282 = ssub.s32 %s12, 2
      // Predicated region
      $region53: #{gru_cam_forward.2} parent=51 // pred_check
        %p9283 = pneg %p137
      $region54: #{gru_cam_forward.2} parent=51 // pred_check_branch
        %9285 = sbr.rel (%p9283) target = $region56
      $region55: #{gru_cam_forward.2} parent=51 // pred_region
        %s9286 = smul.u32 3, %s18
        %p9287 = scmp.lt.s32.totalorder %s9286, 8
        %s9288 = scalar_select %p9287, %s9286, 8
        %s9289 = smul.addr %s9288, 2
        %s9290 = scalar_lea.vmem %s4, %s9289
      $region56: #{gru_cam_forward.2} parent=51 // pred_fallthru
        _
      // Predicated region
      $region57: #{gru_cam_forward.2} parent=51 // pred_check
        %p9291 = pneg %p165
      $region58: #{gru_cam_forward.2} parent=51 // pred_check_branch
        %9293 = sbr.rel (%p9291) target = $region60
      $region59: #{gru_cam_forward.2} parent=51 // pred_region
        %s9294 = ssub.s32 2, %s18
        %s9295 = smul.u32 3, %s9294
        %p9296 = scmp.lt.s32.totalorder %s9295, 8
        %s9297 = scalar_select %p9296, %s9295, 8
        %s9298 = smul.addr %s9297, 2
        %s9299 = scalar_lea.vmem %s5, %s9298
      $region60: #{gru_cam_forward.2} parent=51 // pred_fallthru
        _
    $region52: #{gru_cam_forward.2} parent=5 // pred_fallthru
      _
  $region6: #{gru_cam_forward.2} parent=0 // loop_footer
    %s16 = sadd.s32 1, %s12
  $region7: #{gru_cam_forward.2} parent=0 // loop_footer_branch
    %11 = sbr.rel target = $region3
  $region8: #{gru_cam_forward.2} parent=0 // loop_exit
    _

</llo_original>
